<compile_context>
chip_gen: v7x
topology: tpu7x:2x2x1
jax: 0.10.0
libtpu: 0.0.40
codegen_flags: <defaults>
</compile_context>

<pallas_src>
import functools

import jax
import jax.numpy as jnp
from jax import lax
from jax.experimental import pallas as pl
from jax.experimental.pallas import tpu as pltpu

_INV_SQRT2 = 0.7071067811865476
_SQRT_2_OVER_PI = 0.7978845608028654
_GELU_COEF = 0.044715
_BN_EPS = 1e-5


def _default_dw_dtype():
    """bf16 depthwise stage only on chips with a bf16 VPU (v6e / v7x)."""
    try:
        kind = jax.devices()[0].device_kind.lower()
    except Exception:  # pragma: no cover - conservative fallback
        return jnp.float32
    if ("v6" in kind) or ("v7" in kind) or ("7x" in kind):
        return jnp.bfloat16
    return jnp.float32   # v5e and older: no bf16 VALU -> packing would cost more


def _bn_gelu(x, gamma, beta, inv_n, approx):
    """Training-mode BatchNorm (biased stats over axis=1) fused with GELU.

    x: (C, tokens) f32; gamma/beta: (C, 1) f32.  Stats in f32, one pass (E[x],
    E[x^2]); fine at these post-BN O(1) activation scales — switch to a two-pass
    centred variance if magnitudes ever grow large.
    """
    s1 = jnp.sum(x, axis=1, keepdims=True)
    s2 = jnp.sum(x * x, axis=1, keepdims=True)
    mean = s1 * inv_n
    var = s2 * inv_n - mean * mean
    scale = gamma * lax.rsqrt(var + _BN_EPS)
    shift = beta - mean * scale
    y = x * scale + shift
    if approx:
        # tanh-approx GELU: the transcendental goes to the otherwise-idle EUP slot.
        inner = _SQRT_2_OVER_PI * (y + _GELU_COEF * (y * y * y))
        return 0.5 * y * (1.0 + jnp.tanh(inner))
    return 0.5 * y * (1.0 + lax.erf(y * _INV_SQRT2))   # nn.GELU() exact


def _leff_kernel(n, W, KS, dw_dtype, approx_gelu,
                 xt_ref, w1t_ref, dwt_ref, w2t_ref,
                 g1_ref, be1_ref, g2_ref, be2_ref, mask_ref,
                 out_ref):
    pad = (KS - 1) // 2
    inv_n = 1.0 / float(n)

    # bn1 params hoisted: the module applies bn1 twice.
    g1 = g1_ref[...]
    be1 = be1_ref[...]

    # ---- linear_proj: 1x1 conv C->hd (MXU).  Tokens arrive token-major (n, C);
    # contracting both operands on their C axis folds the (n,C)->(C,n) transpose
    # into the MXU operand orientation -> no wrapper-side transpose pass.
    h = lax.dot_general(
        w1t_ref[...], xt_ref[...],
        dimension_numbers=(((1,), (1,)), ((), ())),
        preferred_element_type=jnp.float32)                     # (hd, n) f32
    h = _bn_gelu(h, g1, be1, inv_n, approx_gelu)

    # ---- dw_conv: depthwise KSxKS (zero padded) on the (channels, tokens) layout.
    # Neighbour taps are pltpu.roll lane rotations (XLU); image borders and the
    # roll wrap-around / cross-image bleed (which only land on border positions)
    # are zeroed by the precomputed (KS*KS, n) masks.  Compute in dw_dtype
    # (bf16 on v6e/v7x, f32 on v5e); taps are summed per kernel row and then
    # tree-combined, so the accumulator is touched only a handful of times.
    h_dw = h.astype(dw_dtype)
    dwt = dwt_ref[...]                                          # (hd, KS*KS)
    masks = mask_ref[...]                                       # (KS*KS, n)

    row_sums = []
    for ky in range(KS):
        dy = ky - pad
        terms = []
        for kx in range(KS):
            dx = kx - pad
            k = ky * KS + kx
            wk = dwt[:, k:k + 1]                                # (hd, 1) per-channel
            if dy == 0 and dx == 0:
                terms.append(h_dw * wk)                         # centre: no shift/mask
            else:
                off = dy * W + dx                               # neighbour token offset
                src = pltpu.roll(h_dw, (-off) % n, 1)           # src[c,t] = h[c,t+off]
                terms.append((src * masks[k:k + 1, :]) * wk)
        row = terms[0]
        for t in terms[1:]:
            row = row + t
        row_sums.append(row)
    acc = row_sums[0]
    for r in row_sums[1:]:
        acc = acc + r

    # NOTE: the module applies bn1 (not a separate BN) after dw_conv; reproduced.
    h2 = _bn_gelu(acc.astype(jnp.float32), g1, be1, inv_n, approx_gelu)

    # ---- linear_proj_back: 1x1 conv hd->C (MXU), BN2 + GELU.
    # Output stays channels-major so the store is lane-dense (n lanes, not C < 128).
    o = jnp.dot(w2t_ref[...], h2.astype(jnp.bfloat16),
                preferred_element_type=jnp.float32)             # (C, n)
    o = _bn_gelu(o, g2_ref[...], be2_ref[...], inv_n, approx_gelu)
    out_ref[...] = o.astype(out_ref.dtype)


def leff_pallas(x, params, image_size, kernel_size=3, *,
                dw_dtype=None, approx_gelu=True):
    H, W = image_size
    B, Nt, C = x.shape
    assert Nt == 1 + H * W
    hd = params["w1"].shape[1]
    n = B * H * W
    pad = (kernel_size - 1) // 2
    if dw_dtype is None:
        dw_dtype = _default_dw_dtype()

    cls_tok = x[:, 0:1, :]
    # Token-major (n, C) view of the spatial tokens: one fused slice+reshape copy,
    # no wrapper transpose (folded into the kernel's first dot_general).  bf16 cast
    # here halves the input DMA bytes.
    feats = x[:, 1:, :].reshape(n, C).astype(jnp.bfloat16)

    # Weights in their native PyTorch conv layouts; bf16 for the MXU operands.
    w1_t = params["w1"].T.astype(jnp.bfloat16)       # (hd, C)
    w2_t = params["w2"].T.astype(jnp.bfloat16)       # (C, hd)
    dw_t = params["dw_w"].T.astype(dw_dtype)         # (hd, ks*ks)
    g1 = params["bn1_g"].reshape(hd, 1)
    be1 = params["bn1_b"].reshape(hd, 1)
    g2 = params["bn2_g"].reshape(C, 1)
    be2 = params["bn2_b"].reshape(C, 1)

    # Per-tap validity masks, precomputed once on the host side (no in-kernel
    # integer div/mod).  They zero both the image-border taps and the pltpu.roll
    # wrap-around / cross-image bleed — valid only because the entire flattened
    # token axis lives in a single block.
    # TODO(synk): if the kernel is later tiled over tokens, block-edge rolls read
    # the wrong tokens; a tiled version needs halos (or per-block padded buffers).
    tok = jnp.arange(n, dtype=jnp.int32)
    xpos = tok % W
    ypos = (tok // W) % H
    rows = []
    for ky in range(kernel_size):
        dy = ky - pad
        for kx in range(kernel_size):
            dx = kx - pad
            ok = ((ypos + dy >= 0) & (ypos + dy < H)
                  & (xpos + dx >= 0) & (xpos + dx < W))
            rows.append(ok)
    tap_masks = jnp.stack(rows).astype(dw_dtype)      # (ks*ks, n)

    vmem = pl.BlockSpec(memory_space=pltpu.MemorySpace.VMEM)
    kern = functools.partial(_leff_kernel, n, W, kernel_size, dw_dtype, approx_gelu)
    # TODO(synk): for v7x (2 TensorCores) and production B*H*W, split the hd axis
    # (matmul-1 + bn1 + dw-conv + bn1' are per-hd-channel independent) across a
    # grid with the hd->C matmul as an accumulating reduction and BN2 in a
    # pl.when finalize, or tile tokens with a two-pass BatchNorm; a single program
    # is the right call at these sizes since train-mode BN couples whole-batch
    # statistics and everything fits VMEM with large headroom.
    out_t = pl.pallas_call(
        kern,
        out_shape=jax.ShapeDtypeStruct((C, n), x.dtype),
        in_specs=[vmem] * 9,
        out_specs=vmem,
    )(feats, w1_t, dw_t, w2_t, g1, be1, g2, be2, tap_masks)

    out_feats = out_t.T.reshape(B, H * W, C)
    return jnp.concatenate([cls_tok, out_feats], axis=1)


def init_params(key, embed_dim, expand_ratio, kernel_size=3):
    """Deterministic synthetic parameters matching LeFF.__init__ shapes.

    PyTorch shapes -> host-side shapes used here:
      linear_proj.weight (hd, ed, 1, 1)      -> w1 (ed, hd)
      dw_conv.weight     (hd, 1, ks, ks)     -> dw_w (ks*ks, hd)
      linear_proj_back.weight (ed, hd, 1, 1) -> w2 (hd, ed)
      BN weights/biases  (hd,) / (ed,)       -> (1, hd) / (1, ed)
    Scales roughly follow PyTorch's fan-in defaults (dw_conv fan_in = ks*ks = 9).
    Conv biases are kept (and used by the f32 reference); the kernel drops them
    because they are cancelled by the training-mode BatchNorm mean subtraction.
    """
    hd = embed_dim * expand_ratio
    ks = kernel_size
    keys = jax.random.split(key, 10)
    return {
        "w1": 0.1 * jax.random.normal(keys[0], (embed_dim, hd), jnp.float32),
        "b1": 0.1 * jax.random.normal(keys[1], (1, hd), jnp.float32),
        "dw_w": 0.2 * jax.random.normal(keys[2], (ks * ks, hd), jnp.float32),
        "dw_b": 0.1 * jax.random.normal(keys[3], (1, hd), jnp.float32),
        "w2": 0.1 * jax.random.normal(keys[4], (hd, embed_dim), jnp.float32),
        "b2": 0.1 * jax.random.normal(keys[5], (1, embed_dim), jnp.float32),
        "bn1_g": 1.0 + 0.1 * jax.random.normal(keys[6], (1, hd), jnp.float32),
        "bn1_b": 0.1 * jax.random.normal(keys[7], (1, hd), jnp.float32),
        "bn2_g": 1.0 + 0.1 * jax.random.normal(keys[8], (1, embed_dim), jnp.float32),
        "bn2_b": 0.1 * jax.random.normal(keys[9], (1, embed_dim), jnp.float32),
    }


def leff_reference(x, params, image_size, kernel_size=3):
    """Plain-JAX f32 reference (different code path: einsum + lax.conv, with biases,
    exact-erf GELU)."""
    H, W = image_size
    B, Nt, C = x.shape
    hd = params["w1"].shape[1]
    cls_tok = x[:, 0:1, :]
    f = x[:, 1:, :].reshape(B, H, W, C)

    def bn(t, g, b):
        mean = jnp.mean(t, axis=(0, 1, 2), keepdims=True)
        var = jnp.mean((t - mean) ** 2, axis=(0, 1, 2), keepdims=True)
        return ((t - mean) * lax.rsqrt(var + _BN_EPS)
                * g.reshape(1, 1, 1, -1) + b.reshape(1, 1, 1, -1))

    def gelu(t):
        return jax.nn.gelu(t, approximate=False)

    h = jnp.einsum("bhwc,cd->bhwd", f, params["w1"]) + params["b1"].reshape(1, 1, 1, -1)
    h = gelu(bn(h, params["bn1_g"], params["bn1_b"]))

    dw = params["dw_w"].reshape(kernel_size, kernel_size, 1, hd)
    h = lax.conv_general_dilated(
        h, dw, window_strides=(1, 1), padding="SAME",
        dimension_numbers=("NHWC", "HWIO", "NHWC"),
        feature_group_count=hd) + params["dw_b"].reshape(1, 1, 1, -1)
    h = gelu(bn(h, params["bn1_g"], params["bn1_b"]))   # module reuses bn1

    o = jnp.einsum("bhwc,cd->bhwd", h, params["w2"]) + params["b2"].reshape(1, 1, 1, -1)
    o = gelu(bn(o, params["bn2_g"], params["bn2_b"]))
    o = o.reshape(B, H * W, C)
    return jnp.concatenate([cls_tok, o], axis=1)


if __name__ == "__main__":
    B, H, W = 2, 16, 16
    embed_dim, expand_ratio, kernel_size = 32, 4, 3   # hd = 128

    key = jax.random.PRNGKey(0)
    kx, kp = jax.random.split(key)
    x = jax.random.normal(kx, (B, 1 + H * W, embed_dim), jnp.float32)
    params = init_params(kp, embed_dim, expand_ratio, kernel_size)

    out = jax.block_until_ready(leff_pallas(x, params, (H, W), kernel_size))
    ref = jax.block_until_ready(leff_reference(x, params, (H, W), kernel_size))

    assert out.shape == (B, 1 + H * W, embed_dim)
    # 3e-2 tolerance covers: bf16 MXU operands for both 1x1 convs, the
    # chip-dependent bf16 depthwise stage, and the tanh-approx GELU; BatchNorm
    # statistics / normalisation and the BN/GELU math stay in f32.
    if not bool(jnp.allclose(out, ref, rtol=3e-2, atol=3e-2)):
        raise AssertionError(
            f"mismatch vs reference, max abs err {float(jnp.max(jnp.abs(out - ref)))}")
    print("KERNEL_OK")
</pallas_src>

<mosaic_0001>
module attributes {stable_mosaic.version = 11 : i64} {
  func.func @_leff_kernel(%arg0: memref<512x32xbf16, #tpu.memory_space<vmem>>, %arg1: memref<128x32xbf16, #tpu.memory_space<vmem>>, %arg2: memref<128x9xf32, #tpu.memory_space<vmem>>, %arg3: memref<32x128xbf16, #tpu.memory_space<vmem>>, %arg4: memref<128x1xf32, #tpu.memory_space<vmem>>, %arg5: memref<128x1xf32, #tpu.memory_space<vmem>>, %arg6: memref<32x1xf32, #tpu.memory_space<vmem>>, %arg7: memref<32x1xf32, #tpu.memory_space<vmem>>, %arg8: memref<9x512xf32, #tpu.memory_space<vmem>>, %arg9: memref<32x512xf32, #tpu.memory_space<vmem>>) attributes {dimension_semantics = [], scalar_prefetch = 0 : i64, scratch_operands = 0 : i64, tpu.core_type = #tpu.core_type<tc>} {
    %c0 = arith.constant 0 : index
    %c0_0 = arith.constant 0 : index
    %0 = vector.load %arg4[%c0, %c0_0] : memref<128x1xf32, #tpu.memory_space<vmem>>, vector<128x1xf32>
    %c0_1 = arith.constant 0 : index
    %c0_2 = arith.constant 0 : index
    %1 = vector.load %arg5[%c0_1, %c0_2] : memref<128x1xf32, #tpu.memory_space<vmem>>, vector<128x1xf32>
    %c0_3 = arith.constant 0 : index
    %c0_4 = arith.constant 0 : index
    %2 = vector.load %arg1[%c0_3, %c0_4] : memref<128x32xbf16, #tpu.memory_space<vmem>>, vector<128x32xbf16>
    %c0_5 = arith.constant 0 : index
    %c0_6 = arith.constant 0 : index
    %3 = vector.load %arg0[%c0_5, %c0_6] : memref<512x32xbf16, #tpu.memory_space<vmem>>, vector<512x32xbf16>
    %cst = arith.constant dense<0.000000e+00> : vector<128x512xf32>
    %4 = tpu.matmul %2, %3, %cst {dimension_numbers = #tpu.dot_dimension_numbers<[1], [1], [0], [0], [0, 0, 1, 0], [], []>} : vector<128x32xbf16>, vector<512x32xbf16>, vector<128x512xf32> -> vector<128x512xf32>
    %cst_7 = arith.constant dense<0.000000e+00> : vector<128xf32>
    %5 = vector.multi_reduction <add>, %4, %cst_7 [1] : vector<128x512xf32> to vector<128xf32>
    %6 = vector.shape_cast %5 : vector<128xf32> to vector<128x1xf32>
    %7 = arith.mulf %4, %4 : vector<128x512xf32>
    %cst_8 = arith.constant dense<0.000000e+00> : vector<128xf32>
    %8 = vector.multi_reduction <add>, %7, %cst_8 [1] : vector<128x512xf32> to vector<128xf32>
    %9 = vector.shape_cast %8 : vector<128xf32> to vector<128x1xf32>
    %cst_9 = arith.constant 0.001953125 : f32
    %10 = vector.broadcast %cst_9 : f32 to vector<128x1xf32>
    %11 = arith.mulf %6, %10 : vector<128x1xf32>
    %cst_10 = arith.constant 0.001953125 : f32
    %12 = vector.broadcast %cst_10 : f32 to vector<128x1xf32>
    %13 = arith.mulf %9, %12 : vector<128x1xf32>
    %14 = arith.mulf %11, %11 : vector<128x1xf32>
    %15 = arith.subf %13, %14 : vector<128x1xf32>
    %cst_11 = arith.constant 9.99999974E-6 : f32
    %16 = vector.broadcast %cst_11 : f32 to vector<128x1xf32>
    %17 = arith.addf %15, %16 : vector<128x1xf32>
    %18 = math.rsqrt %17 : vector<128x1xf32>
    %19 = arith.mulf %0, %18 : vector<128x1xf32>
    %20 = arith.mulf %11, %19 : vector<128x1xf32>
    %21 = arith.subf %1, %20 : vector<128x1xf32>
    %22 = vector.broadcast %19 : vector<128x1xf32> to vector<128x512xf32>
    %23 = arith.mulf %4, %22 : vector<128x512xf32>
    %24 = vector.broadcast %21 : vector<128x1xf32> to vector<128x512xf32>
    %25 = arith.addf %23, %24 : vector<128x512xf32>
    %26 = arith.mulf %25, %25 : vector<128x512xf32>
    %27 = arith.mulf %26, %25 : vector<128x512xf32>
    %cst_12 = arith.constant 4.471500e-02 : f32
    %28 = vector.broadcast %cst_12 : f32 to vector<128x512xf32>
    %29 = arith.mulf %28, %27 : vector<128x512xf32>
    %30 = arith.addf %25, %29 : vector<128x512xf32>
    %cst_13 = arith.constant 0.797884583 : f32
    %31 = vector.broadcast %cst_13 : f32 to vector<128x512xf32>
    %32 = arith.mulf %31, %30 : vector<128x512xf32>
    %cst_14 = arith.constant 5.000000e-01 : f32
    %33 = vector.broadcast %cst_14 : f32 to vector<128x512xf32>
    %34 = arith.mulf %33, %25 : vector<128x512xf32>
    %35 = math.tanh %32 : vector<128x512xf32>
    %cst_15 = arith.constant 1.000000e+00 : f32
    %36 = vector.broadcast %cst_15 : f32 to vector<128x512xf32>
    %37 = arith.addf %36, %35 : vector<128x512xf32>
    %38 = arith.mulf %34, %37 : vector<128x512xf32>
    %c0_16 = arith.constant 0 : index
    %c0_17 = arith.constant 0 : index
    %39 = vector.load %arg2[%c0_16, %c0_17] : memref<128x9xf32, #tpu.memory_space<vmem>>, vector<128x9xf32>
    %c0_18 = arith.constant 0 : index
    %c0_19 = arith.constant 0 : index
    %40 = vector.load %arg8[%c0_18, %c0_19] : memref<9x512xf32, #tpu.memory_space<vmem>>, vector<9x512xf32>
    %41 = vector.extract_strided_slice %39 {offsets = [0, 0], sizes = [128, 1], strides = [1, 1]} : vector<128x9xf32> to vector<128x1xf32>
    %c17_i32 = arith.constant 17 : i32
    %42 = tpu.dynamic_rotate %38 by %c17_i32 dim 1 : vector<128x512xf32>, i32 -> vector<128x512xf32>
    %43 = vector.extract_strided_slice %40 {offsets = [0, 0], sizes = [1, 512], strides = [1, 1]} : vector<9x512xf32> to vector<1x512xf32>
    %44 = vector.broadcast %43 : vector<1x512xf32> to vector<128x512xf32>
    %45 = arith.mulf %42, %44 : vector<128x512xf32>
    %46 = vector.broadcast %41 : vector<128x1xf32> to vector<128x512xf32>
    %47 = arith.mulf %45, %46 : vector<128x512xf32>
    %48 = vector.extract_strided_slice %39 {offsets = [0, 1], sizes = [128, 1], strides = [1, 1]} : vector<128x9xf32> to vector<128x1xf32>
    %c16_i32 = arith.constant 16 : i32
    %49 = tpu.dynamic_rotate %38 by %c16_i32 dim 1 : vector<128x512xf32>, i32 -> vector<128x512xf32>
    %50 = vector.extract_strided_slice %40 {offsets = [1, 0], sizes = [1, 512], strides = [1, 1]} : vector<9x512xf32> to vector<1x512xf32>
    %51 = vector.broadcast %50 : vector<1x512xf32> to vector<128x512xf32>
    %52 = arith.mulf %49, %51 : vector<128x512xf32>
    %53 = vector.broadcast %48 : vector<128x1xf32> to vector<128x512xf32>
    %54 = arith.mulf %52, %53 : vector<128x512xf32>
    %55 = vector.extract_strided_slice %39 {offsets = [0, 2], sizes = [128, 1], strides = [1, 1]} : vector<128x9xf32> to vector<128x1xf32>
    %c15_i32 = arith.constant 15 : i32
    %56 = tpu.dynamic_rotate %38 by %c15_i32 dim 1 : vector<128x512xf32>, i32 -> vector<128x512xf32>
    %57 = vector.extract_strided_slice %40 {offsets = [2, 0], sizes = [1, 512], strides = [1, 1]} : vector<9x512xf32> to vector<1x512xf32>
    %58 = vector.broadcast %57 : vector<1x512xf32> to vector<128x512xf32>
    %59 = arith.mulf %56, %58 : vector<128x512xf32>
    %60 = vector.broadcast %55 : vector<128x1xf32> to vector<128x512xf32>
    %61 = arith.mulf %59, %60 : vector<128x512xf32>
    %62 = arith.addf %47, %54 : vector<128x512xf32>
    %63 = arith.addf %62, %61 : vector<128x512xf32>
    %64 = vector.extract_strided_slice %39 {offsets = [0, 3], sizes = [128, 1], strides = [1, 1]} : vector<128x9xf32> to vector<128x1xf32>
    %c1_i32 = arith.constant 1 : i32
    %65 = tpu.dynamic_rotate %38 by %c1_i32 dim 1 : vector<128x512xf32>, i32 -> vector<128x512xf32>
    %66 = vector.extract_strided_slice %40 {offsets = [3, 0], sizes = [1, 512], strides = [1, 1]} : vector<9x512xf32> to vector<1x512xf32>
    %67 = vector.broadcast %66 : vector<1x512xf32> to vector<128x512xf32>
    %68 = arith.mulf %65, %67 : vector<128x512xf32>
    %69 = vector.broadcast %64 : vector<128x1xf32> to vector<128x512xf32>
    %70 = arith.mulf %68, %69 : vector<128x512xf32>
    %71 = vector.extract_strided_slice %39 {offsets = [0, 4], sizes = [128, 1], strides = [1, 1]} : vector<128x9xf32> to vector<128x1xf32>
    %72 = vector.broadcast %71 : vector<128x1xf32> to vector<128x512xf32>
    %73 = arith.mulf %38, %72 : vector<128x512xf32>
    %74 = vector.extract_strided_slice %39 {offsets = [0, 5], sizes = [128, 1], strides = [1, 1]} : vector<128x9xf32> to vector<128x1xf32>
    %c511_i32 = arith.constant 511 : i32
    %75 = tpu.dynamic_rotate %38 by %c511_i32 dim 1 : vector<128x512xf32>, i32 -> vector<128x512xf32>
    %76 = vector.extract_strided_slice %40 {offsets = [5, 0], sizes = [1, 512], strides = [1, 1]} : vector<9x512xf32> to vector<1x512xf32>
    %77 = vector.broadcast %76 : vector<1x512xf32> to vector<128x512xf32>
    %78 = arith.mulf %75, %77 : vector<128x512xf32>
    %79 = vector.broadcast %74 : vector<128x1xf32> to vector<128x512xf32>
    %80 = arith.mulf %78, %79 : vector<128x512xf32>
    %81 = arith.addf %70, %73 : vector<128x512xf32>
    %82 = arith.addf %81, %80 : vector<128x512xf32>
    %83 = vector.extract_strided_slice %39 {offsets = [0, 6], sizes = [128, 1], strides = [1, 1]} : vector<128x9xf32> to vector<128x1xf32>
    %c497_i32 = arith.constant 497 : i32
    %84 = tpu.dynamic_rotate %38 by %c497_i32 dim 1 : vector<128x512xf32>, i32 -> vector<128x512xf32>
    %85 = vector.extract_strided_slice %40 {offsets = [6, 0], sizes = [1, 512], strides = [1, 1]} : vector<9x512xf32> to vector<1x512xf32>
    %86 = vector.broadcast %85 : vector<1x512xf32> to vector<128x512xf32>
    %87 = arith.mulf %84, %86 : vector<128x512xf32>
    %88 = vector.broadcast %83 : vector<128x1xf32> to vector<128x512xf32>
    %89 = arith.mulf %87, %88 : vector<128x512xf32>
    %90 = vector.extract_strided_slice %39 {offsets = [0, 7], sizes = [128, 1], strides = [1, 1]} : vector<128x9xf32> to vector<128x1xf32>
    %c496_i32 = arith.constant 496 : i32
    %91 = tpu.dynamic_rotate %38 by %c496_i32 dim 1 : vector<128x512xf32>, i32 -> vector<128x512xf32>
    %92 = vector.extract_strided_slice %40 {offsets = [7, 0], sizes = [1, 512], strides = [1, 1]} : vector<9x512xf32> to vector<1x512xf32>
    %93 = vector.broadcast %92 : vector<1x512xf32> to vector<128x512xf32>
    %94 = arith.mulf %91, %93 : vector<128x512xf32>
    %95 = vector.broadcast %90 : vector<128x1xf32> to vector<128x512xf32>
    %96 = arith.mulf %94, %95 : vector<128x512xf32>
    %97 = vector.extract_strided_slice %39 {offsets = [0, 8], sizes = [128, 1], strides = [1, 1]} : vector<128x9xf32> to vector<128x1xf32>
    %c495_i32 = arith.constant 495 : i32
    %98 = tpu.dynamic_rotate %38 by %c495_i32 dim 1 : vector<128x512xf32>, i32 -> vector<128x512xf32>
    %99 = vector.extract_strided_slice %40 {offsets = [8, 0], sizes = [1, 512], strides = [1, 1]} : vector<9x512xf32> to vector<1x512xf32>
    %100 = vector.broadcast %99 : vector<1x512xf32> to vector<128x512xf32>
    %101 = arith.mulf %98, %100 : vector<128x512xf32>
    %102 = vector.broadcast %97 : vector<128x1xf32> to vector<128x512xf32>
    %103 = arith.mulf %101, %102 : vector<128x512xf32>
    %104 = arith.addf %89, %96 : vector<128x512xf32>
    %105 = arith.addf %104, %103 : vector<128x512xf32>
    %106 = arith.addf %63, %82 : vector<128x512xf32>
    %107 = arith.addf %106, %105 : vector<128x512xf32>
    %cst_20 = arith.constant dense<0.000000e+00> : vector<128xf32>
    %108 = vector.multi_reduction <add>, %107, %cst_20 [1] : vector<128x512xf32> to vector<128xf32>
    %109 = vector.shape_cast %108 : vector<128xf32> to vector<128x1xf32>
    %110 = arith.mulf %107, %107 : vector<128x512xf32>
    %cst_21 = arith.constant dense<0.000000e+00> : vector<128xf32>
    %111 = vector.multi_reduction <add>, %110, %cst_21 [1] : vector<128x512xf32> to vector<128xf32>
    %112 = vector.shape_cast %111 : vector<128xf32> to vector<128x1xf32>
    %cst_22 = arith.constant 0.001953125 : f32
    %113 = vector.broadcast %cst_22 : f32 to vector<128x1xf32>
    %114 = arith.mulf %109, %113 : vector<128x1xf32>
    %cst_23 = arith.constant 0.001953125 : f32
    %115 = vector.broadcast %cst_23 : f32 to vector<128x1xf32>
    %116 = arith.mulf %112, %115 : vector<128x1xf32>
    %117 = arith.mulf %114, %114 : vector<128x1xf32>
    %118 = arith.subf %116, %117 : vector<128x1xf32>
    %cst_24 = arith.constant 9.99999974E-6 : f32
    %119 = vector.broadcast %cst_24 : f32 to vector<128x1xf32>
    %120 = arith.addf %118, %119 : vector<128x1xf32>
    %121 = math.rsqrt %120 : vector<128x1xf32>
    %122 = arith.mulf %0, %121 : vector<128x1xf32>
    %123 = arith.mulf %114, %122 : vector<128x1xf32>
    %124 = arith.subf %1, %123 : vector<128x1xf32>
    %125 = vector.broadcast %122 : vector<128x1xf32> to vector<128x512xf32>
    %126 = arith.mulf %107, %125 : vector<128x512xf32>
    %127 = vector.broadcast %124 : vector<128x1xf32> to vector<128x512xf32>
    %128 = arith.addf %126, %127 : vector<128x512xf32>
    %129 = arith.mulf %128, %128 : vector<128x512xf32>
    %130 = arith.mulf %129, %128 : vector<128x512xf32>
    %cst_25 = arith.constant 4.471500e-02 : f32
    %131 = vector.broadcast %cst_25 : f32 to vector<128x512xf32>
    %132 = arith.mulf %131, %130 : vector<128x512xf32>
    %133 = arith.addf %128, %132 : vector<128x512xf32>
    %cst_26 = arith.constant 0.797884583 : f32
    %134 = vector.broadcast %cst_26 : f32 to vector<128x512xf32>
    %135 = arith.mulf %134, %133 : vector<128x512xf32>
    %cst_27 = arith.constant 5.000000e-01 : f32
    %136 = vector.broadcast %cst_27 : f32 to vector<128x512xf32>
    %137 = arith.mulf %136, %128 : vector<128x512xf32>
    %138 = math.tanh %135 : vector<128x512xf32>
    %cst_28 = arith.constant 1.000000e+00 : f32
    %139 = vector.broadcast %cst_28 : f32 to vector<128x512xf32>
    %140 = arith.addf %139, %138 : vector<128x512xf32>
    %141 = arith.mulf %137, %140 : vector<128x512xf32>
    %c0_29 = arith.constant 0 : index
    %c0_30 = arith.constant 0 : index
    %142 = vector.load %arg3[%c0_29, %c0_30] : memref<32x128xbf16, #tpu.memory_space<vmem>>, vector<32x128xbf16>
    %143 = arith.truncf %141 : vector<128x512xf32> to vector<128x512xbf16>
    %cst_31 = arith.constant dense<0.000000e+00> : vector<32x512xf32>
    %144 = tpu.matmul %142, %143, %cst_31 {dimension_numbers = #tpu.dot_dimension_numbers<[1], [0], [0], [1], [0, 0, 1, 1], [], []>} : vector<32x128xbf16>, vector<128x512xbf16>, vector<32x512xf32> -> vector<32x512xf32>
    %c0_32 = arith.constant 0 : index
    %c0_33 = arith.constant 0 : index
    %145 = vector.load %arg6[%c0_32, %c0_33] : memref<32x1xf32, #tpu.memory_space<vmem>>, vector<32x1xf32>
    %c0_34 = arith.constant 0 : index
    %c0_35 = arith.constant 0 : index
    %146 = vector.load %arg7[%c0_34, %c0_35] : memref<32x1xf32, #tpu.memory_space<vmem>>, vector<32x1xf32>
    %cst_36 = arith.constant dense<0.000000e+00> : vector<32xf32>
    %147 = vector.multi_reduction <add>, %144, %cst_36 [1] : vector<32x512xf32> to vector<32xf32>
    %148 = vector.shape_cast %147 : vector<32xf32> to vector<32x1xf32>
    %149 = arith.mulf %144, %144 : vector<32x512xf32>
    %cst_37 = arith.constant dense<0.000000e+00> : vector<32xf32>
    %150 = vector.multi_reduction <add>, %149, %cst_37 [1] : vector<32x512xf32> to vector<32xf32>
    %151 = vector.shape_cast %150 : vector<32xf32> to vector<32x1xf32>
    %cst_38 = arith.constant 0.001953125 : f32
    %152 = vector.broadcast %cst_38 : f32 to vector<32x1xf32>
    %153 = arith.mulf %148, %152 : vector<32x1xf32>
    %cst_39 = arith.constant 0.001953125 : f32
    %154 = vector.broadcast %cst_39 : f32 to vector<32x1xf32>
    %155 = arith.mulf %151, %154 : vector<32x1xf32>
    %156 = arith.mulf %153, %153 : vector<32x1xf32>
    %157 = arith.subf %155, %156 : vector<32x1xf32>
    %cst_40 = arith.constant 9.99999974E-6 : f32
    %158 = vector.broadcast %cst_40 : f32 to vector<32x1xf32>
    %159 = arith.addf %157, %158 : vector<32x1xf32>
    %160 = math.rsqrt %159 : vector<32x1xf32>
    %161 = arith.mulf %145, %160 : vector<32x1xf32>
    %162 = arith.mulf %153, %161 : vector<32x1xf32>
    %163 = arith.subf %146, %162 : vector<32x1xf32>
    %164 = vector.broadcast %161 : vector<32x1xf32> to vector<32x512xf32>
    %165 = arith.mulf %144, %164 : vector<32x512xf32>
    %166 = vector.broadcast %163 : vector<32x1xf32> to vector<32x512xf32>
    %167 = arith.addf %165, %166 : vector<32x512xf32>
    %168 = arith.mulf %167, %167 : vector<32x512xf32>
    %169 = arith.mulf %168, %167 : vector<32x512xf32>
    %cst_41 = arith.constant 4.471500e-02 : f32
    %170 = vector.broadcast %cst_41 : f32 to vector<32x512xf32>
    %171 = arith.mulf %170, %169 : vector<32x512xf32>
    %172 = arith.addf %167, %171 : vector<32x512xf32>
    %cst_42 = arith.constant 0.797884583 : f32
    %173 = vector.broadcast %cst_42 : f32 to vector<32x512xf32>
    %174 = arith.mulf %173, %172 : vector<32x512xf32>
    %cst_43 = arith.constant 5.000000e-01 : f32
    %175 = vector.broadcast %cst_43 : f32 to vector<32x512xf32>
    %176 = arith.mulf %175, %167 : vector<32x512xf32>
    %177 = math.tanh %174 : vector<32x512xf32>
    %cst_44 = arith.constant 1.000000e+00 : f32
    %178 = vector.broadcast %cst_44 : f32 to vector<32x512xf32>
    %179 = arith.addf %178, %177 : vector<32x512xf32>
    %180 = arith.mulf %176, %179 : vector<32x512xf32>
    %c0_45 = arith.constant 0 : index
    %c0_46 = arith.constant 0 : index
    %181 = vector.load %arg9[%c0_45, %c0_46] : memref<32x512xf32, #tpu.memory_space<vmem>>, vector<32x512xf32>
    tpu.vector_store %arg9[%c0_45, %c0_46], %180 {strides = array<i32>} : memref<32x512xf32, #tpu.memory_space<vmem>>, vector<32x512xf32>,
    return
  }
}

</mosaic_0001>

<llo_original>
// kernel: tpu_custom_call.1
$region0: #{tpu_custom_call.1}
  #allocation0 [shape = 'u32[]', space=smem, size = 0x4, offset = 0x4, fixed_abs, tag = 'smem constant byte address 0x4 - core index']
  #allocation1 [shape = 'u32[144,128]{1,0:T(1,128)}', space=vmem, size = 0x12000, scoped, tag = 'internal scratch']
  %s0 = inlined_call_operand.vmem [shape: bf16[512,32], index: 0, kind: input, shape index: {}]
  %s1 = inlined_call_operand.vmem [shape: bf16[128,32], index: 1, kind: input, shape index: {}]
  %s2 = inlined_call_operand.vmem [shape: f32[128,9], index: 2, kind: input, shape index: {}]
  %s3 = inlined_call_operand.vmem [shape: bf16[32,128], index: 3, kind: input, shape index: {}]
  %s4 = inlined_call_operand.vmem [shape: f32[128,1], index: 4, kind: input, shape index: {}]
  %s5 = inlined_call_operand.vmem [shape: f32[128,1], index: 5, kind: input, shape index: {}]
  %s6 = inlined_call_operand.vmem [shape: f32[32,1], index: 6, kind: input, shape index: {}]
  %s7 = inlined_call_operand.vmem [shape: f32[32,1], index: 7, kind: input, shape index: {}]
  %s8 = inlined_call_operand.vmem [shape: f32[9,512], index: 8, kind: input, shape index: {}]
  %s9 = inlined_call_operand.hbm [shape: f32[32,512], index: 9, kind: output, shape index: {}]
  %s10 = sld [smem:[#allocation0]]
  $region46: #{tpu_custom_call.1} parent=0
    _
  %s12 = ssub.s32 1, %s10
  %s13 = scalar_select 0, %s12, %s10
  $region1: #{tpu_custom_call.1} parent=0
    #allocation2 [shape = 'u8[65536]{0}', space=vmem, size = 0x10000, scoped, tag = 'output window, operand 0, single buffered']
    #allocation3 [shape = 's32[1]{0}', space=sflag, size = 0x4, scoped, tag = 'scoped memory for tpu_custom_call.1']
    %14 = vsyncpa [#allocation3], 0
    // Predicated region
    $region2: #{tpu_custom_call.1} parent=1 // pred_check
      _
    $region3: #{tpu_custom_call.1} parent=1 // pred_check_branch
      %16 = sbr.rel (0) target = $region5
    $region4: #{tpu_custom_call.1} parent=1 // pred_region
      _
    $region5: #{tpu_custom_call.1} parent=1 // pred_fallthru
      _
    // Predicated region
    $region6: #{tpu_custom_call.1} parent=1 // pred_check
      _
    $region7: #{tpu_custom_call.1} parent=1 // pred_check_branch
      %18 = sbr.rel (0) target = $region9
    $region8: #{tpu_custom_call.1} parent=1 // pred_region
      _
    $region9: #{tpu_custom_call.1} parent=1 // pred_fallthru
      _
    // Predicated region
    $region10: #{tpu_custom_call.1} parent=1 // pred_check
      _
    $region11: #{tpu_custom_call.1} parent=1 // pred_check_branch
      %20 = sbr.rel (0) target = $region13
    $region12: #{tpu_custom_call.1} parent=1 // pred_region
      _
    $region13: #{tpu_custom_call.1} parent=1 // pred_fallthru
      _
    // Predicated region
    $region14: #{tpu_custom_call.1} parent=1 // pred_check
      _
    $region15: #{tpu_custom_call.1} parent=1 // pred_check_branch
      %22 = sbr.rel (0) target = $region17
    $region16: #{tpu_custom_call.1} parent=1 // pred_region
      _
    $region17: #{tpu_custom_call.1} parent=1 // pred_fallthru
      _
    // Predicated region
    $region18: #{tpu_custom_call.1} parent=1 // pred_check
      _
    $region19: #{tpu_custom_call.1} parent=1 // pred_check_branch
      %24 = sbr.rel (0) target = $region21
    $region20: #{tpu_custom_call.1} parent=1 // pred_region
      _
    $region21: #{tpu_custom_call.1} parent=1 // pred_fallthru
      _
    // Predicated region
    $region22: #{tpu_custom_call.1} parent=1 // pred_check
      _
    $region23: #{tpu_custom_call.1} parent=1 // pred_check_branch
      %26 = sbr.rel (0) target = $region25
    $region24: #{tpu_custom_call.1} parent=1 // pred_region
      _
    $region25: #{tpu_custom_call.1} parent=1 // pred_fallthru
      _
    // Predicated region
    $region26: #{tpu_custom_call.1} parent=1 // pred_check
      _
    $region27: #{tpu_custom_call.1} parent=1 // pred_check_branch
      %28 = sbr.rel (0) target = $region29
    $region28: #{tpu_custom_call.1} parent=1 // pred_region
      _
    $region29: #{tpu_custom_call.1} parent=1 // pred_fallthru
      _
    // Predicated region
    $region30: #{tpu_custom_call.1} parent=1 // pred_check
      _
    $region31: #{tpu_custom_call.1} parent=1 // pred_check_branch
      %30 = sbr.rel (0) target = $region33
    $region32: #{tpu_custom_call.1} parent=1 // pred_region
      _
    $region33: #{tpu_custom_call.1} parent=1 // pred_fallthru
      _
    // Predicated region
    $region34: #{tpu_custom_call.1} parent=1 // pred_check
      _
    $region35: #{tpu_custom_call.1} parent=1 // pred_check_branch
      %32 = sbr.rel (0) target = $region37
    $region36: #{tpu_custom_call.1} parent=1 // pred_region
      _
    $region37: #{tpu_custom_call.1} parent=1 // pred_fallthru
      _
    %v34 = vld [vmem:[%s4] sm:$0xff]
    %v35 = vld [vmem:[%s4 + $0x8] sm:$0xff]
    %v36 = vld [vmem:[%s4 + $0x10] sm:$0xff]
    %v37 = vld [vmem:[%s4 + $0x18] sm:$0xff]
    %v38 = vld [vmem:[%s4 + $0x20] sm:$0xff]
    %v39 = vld [vmem:[%s4 + $0x28] sm:$0xff]
    %v40 = vld [vmem:[%s4 + $0x30] sm:$0xff]
    %v41 = vld [vmem:[%s4 + $0x38] sm:$0xff]
    %v42 = vld [vmem:[%s4 + $0x40] sm:$0xff]
    %v43 = vld [vmem:[%s4 + $0x48] sm:$0xff]
    %v44 = vld [vmem:[%s4 + $0x50] sm:$0xff]
    %v45 = vld [vmem:[%s4 + $0x58] sm:$0xff]
    %v46 = vld [vmem:[%s4 + $0x60] sm:$0xff]
    %v47 = vld [vmem:[%s4 + $0x68] sm:$0xff]
    %v48 = vld [vmem:[%s4 + $0x70] sm:$0xff]
    %v49 = vld [vmem:[%s4 + $0x78] sm:$0xff]
    %v50 = vld [vmem:[%s5] sm:$0xff]
    %v51 = vld [vmem:[%s5 + $0x8] sm:$0xff]
    %v52 = vld [vmem:[%s5 + $0x10] sm:$0xff]
    %v53 = vld [vmem:[%s5 + $0x18] sm:$0xff]
    %v54 = vld [vmem:[%s5 + $0x20] sm:$0xff]
    %v55 = vld [vmem:[%s5 + $0x28] sm:$0xff]
    %v56 = vld [vmem:[%s5 + $0x30] sm:$0xff]
    %v57 = vld [vmem:[%s5 + $0x38] sm:$0xff]
    %v58 = vld [vmem:[%s5 + $0x40] sm:$0xff]
    %v59 = vld [vmem:[%s5 + $0x48] sm:$0xff]
    %v60 = vld [vmem:[%s5 + $0x50] sm:$0xff]
    %v61 = vld [vmem:[%s5 + $0x58] sm:$0xff]
    %v62 = vld [vmem:[%s5 + $0x60] sm:$0xff]
    %v63 = vld [vmem:[%s5 + $0x68] sm:$0xff]
    %v64 = vld [vmem:[%s5 + $0x70] sm:$0xff]
    %v65 = vld [vmem:[%s5 + $0x78] sm:$0xff]
    %v66 = vld [vmem:[%s1] sm:$0xf]
    %v67 = vld [vmem:[%s1 + $0x4] sm:$0xf]
    %v68 = vld [vmem:[%s1 + $0x8] sm:$0xf]
    %v69 = vld [vmem:[%s1 + $0xc] sm:$0xf]
    %v70 = vld [vmem:[%s1 + $0x10] sm:$0xf]
    %v71 = vld [vmem:[%s1 + $0x14] sm:$0xf]
    %v72 = vld [vmem:[%s1 + $0x18] sm:$0xf]
    %v73 = vld [vmem:[%s1 + $0x1c] sm:$0xf]
    %v74 = vld [vmem:[%s1 + $0x20] sm:$0xf]
    %v75 = vld [vmem:[%s1 + $0x24] sm:$0xf]
    %v76 = vld [vmem:[%s1 + $0x28] sm:$0xf]
    %v77 = vld [vmem:[%s1 + $0x2c] sm:$0xf]
    %v78 = vld [vmem:[%s1 + $0x30] sm:$0xf]
    %v79 = vld [vmem:[%s1 + $0x34] sm:$0xf]
    %v80 = vld [vmem:[%s1 + $0x38] sm:$0xf]
    %v81 = vld [vmem:[%s1 + $0x3c] sm:$0xf]
    %v82 = vld [vmem:[%s0] sm:$0xf]
    %v83 = vld [vmem:[%s0 + $0x4] sm:$0xf]
    %v84 = vld [vmem:[%s0 + $0x8] sm:$0xf]
    %v85 = vld [vmem:[%s0 + $0xc] sm:$0xf]
    %v86 = vld [vmem:[%s0 + $0x10] sm:$0xf]
    %v87 = vld [vmem:[%s0 + $0x14] sm:$0xf]
    %v88 = vld [vmem:[%s0 + $0x18] sm:$0xf]
    %v89 = vld [vmem:[%s0 + $0x1c] sm:$0xf]
    %v90 = vld [vmem:[%s0 + $0x20] sm:$0xf]
    %v91 = vld [vmem:[%s0 + $0x24] sm:$0xf]
    %v92 = vld [vmem:[%s0 + $0x28] sm:$0xf]
    %v93 = vld [vmem:[%s0 + $0x2c] sm:$0xf]
    %v94 = vld [vmem:[%s0 + $0x30] sm:$0xf]
    %v95 = vld [vmem:[%s0 + $0x34] sm:$0xf]
    %v96 = vld [vmem:[%s0 + $0x38] sm:$0xf]
    %v97 = vld [vmem:[%s0 + $0x3c] sm:$0xf]
    %v98 = vld [vmem:[%s0 + $0x40] sm:$0xf]
    %v99 = vld [vmem:[%s0 + $0x44] sm:$0xf]
    %v100 = vld [vmem:[%s0 + $0x48] sm:$0xf]
    %v101 = vld [vmem:[%s0 + $0x4c] sm:$0xf]
    %v102 = vld [vmem:[%s0 + $0x50] sm:$0xf]
    %v103 = vld [vmem:[%s0 + $0x54] sm:$0xf]
    %v104 = vld [vmem:[%s0 + $0x58] sm:$0xf]
    %v105 = vld [vmem:[%s0 + $0x5c] sm:$0xf]
    %v106 = vld [vmem:[%s0 + $0x60] sm:$0xf]
    %v107 = vld [vmem:[%s0 + $0x64] sm:$0xf]
    %v108 = vld [vmem:[%s0 + $0x68] sm:$0xf]
    %v109 = vld [vmem:[%s0 + $0x6c] sm:$0xf]
    %v110 = vld [vmem:[%s0 + $0x70] sm:$0xf]
    %v111 = vld [vmem:[%s0 + $0x74] sm:$0xf]
    %v112 = vld [vmem:[%s0 + $0x78] sm:$0xf]
    %v113 = vld [vmem:[%s0 + $0x7c] sm:$0xf]
    %v114 = vld [vmem:[%s0 + $0x80] sm:$0xf]
    %v115 = vld [vmem:[%s0 + $0x84] sm:$0xf]
    %v116 = vld [vmem:[%s0 + $0x88] sm:$0xf]
    %v117 = vld [vmem:[%s0 + $0x8c] sm:$0xf]
    %v118 = vld [vmem:[%s0 + $0x90] sm:$0xf]
    %v119 = vld [vmem:[%s0 + $0x94] sm:$0xf]
    %v120 = vld [vmem:[%s0 + $0x98] sm:$0xf]
    %v121 = vld [vmem:[%s0 + $0x9c] sm:$0xf]
    %v122 = vld [vmem:[%s0 + $0xa0] sm:$0xf]
    %v123 = vld [vmem:[%s0 + $0xa4] sm:$0xf]
    %v124 = vld [vmem:[%s0 + $0xa8] sm:$0xf]
    %v125 = vld [vmem:[%s0 + $0xac] sm:$0xf]
    %v126 = vld [vmem:[%s0 + $0xb0] sm:$0xf]
    %v127 = vld [vmem:[%s0 + $0xb4] sm:$0xf]
    %v128 = vld [vmem:[%s0 + $0xb8] sm:$0xf]
    %v129 = vld [vmem:[%s0 + $0xbc] sm:$0xf]
    %v130 = vld [vmem:[%s0 + $0xc0] sm:$0xf]
    %v131 = vld [vmem:[%s0 + $0xc4] sm:$0xf]
    %v132 = vld [vmem:[%s0 + $0xc8] sm:$0xf]
    %v133 = vld [vmem:[%s0 + $0xcc] sm:$0xf]
    %v134 = vld [vmem:[%s0 + $0xd0] sm:$0xf]
    %v135 = vld [vmem:[%s0 + $0xd4] sm:$0xf]
    %v136 = vld [vmem:[%s0 + $0xd8] sm:$0xf]
    %v137 = vld [vmem:[%s0 + $0xdc] sm:$0xf]
    %v138 = vld [vmem:[%s0 + $0xe0] sm:$0xf]
    %v139 = vld [vmem:[%s0 + $0xe4] sm:$0xf]
    %v140 = vld [vmem:[%s0 + $0xe8] sm:$0xf]
    %v141 = vld [vmem:[%s0 + $0xec] sm:$0xf]
    %v142 = vld [vmem:[%s0 + $0xf0] sm:$0xf]
    %v143 = vld [vmem:[%s0 + $0xf4] sm:$0xf]
    %v144 = vld [vmem:[%s0 + $0xf8] sm:$0xf]
    %v145 = vld [vmem:[%s0 + $0xfc] sm:$0xf]
    %v162 = vunpack.c.l.b16 %v66
    %v163 = vunpack.c.l.b16 %v67
    %v164 = vunpack.c.l.b16 %v68
    %v165 = vunpack.c.l.b16 %v69
    %v166 = vunpack.c.l.b16 %v70
    %v167 = vunpack.c.l.b16 %v71
    %v168 = vunpack.c.l.b16 %v72
    %v169 = vunpack.c.l.b16 %v73
    %v170 = vunpack.c.l.b16 %v74
    %v171 = vunpack.c.l.b16 %v75
    %v172 = vunpack.c.l.b16 %v76
    %v173 = vunpack.c.l.b16 %v77
    %v174 = vunpack.c.l.b16 %v78
    %v175 = vunpack.c.l.b16 %v79
    %v176 = vunpack.c.l.b16 %v80
    %v177 = vunpack.c.l.b16 %v81
    %v178 = vpack.c.b16 %v163, %v162
    %v179 = vpack.c.b16 %v165, %v164
    %v180 = vpack.c.b16 %v167, %v166
    %v181 = vpack.c.b16 %v169, %v168
    %v182 = vpack.c.b16 %v171, %v170
    %v183 = vpack.c.b16 %v173, %v172
    %v184 = vpack.c.b16 %v175, %v174
    %v185 = vpack.c.b16 %v177, %v176
    %v250 = vunpack.c.l.b16 %v82
    %v251 = vunpack.c.l.b16 %v83
    %v252 = vunpack.c.l.b16 %v84
    %v253 = vunpack.c.l.b16 %v85
    %v254 = vunpack.c.l.b16 %v86
    %v255 = vunpack.c.l.b16 %v87
    %v256 = vunpack.c.l.b16 %v88
    %v257 = vunpack.c.l.b16 %v89
    %v258 = vunpack.c.l.b16 %v90
    %v259 = vunpack.c.l.b16 %v91
    %v260 = vunpack.c.l.b16 %v92
    %v261 = vunpack.c.l.b16 %v93
    %v262 = vunpack.c.l.b16 %v94
    %v263 = vunpack.c.l.b16 %v95
    %v264 = vunpack.c.l.b16 %v96
    %v265 = vunpack.c.l.b16 %v97
    %v266 = vunpack.c.l.b16 %v98
    %v267 = vunpack.c.l.b16 %v99
    %v268 = vunpack.c.l.b16 %v100
    %v269 = vunpack.c.l.b16 %v101
    %v270 = vunpack.c.l.b16 %v102
    %v271 = vunpack.c.l.b16 %v103
    %v272 = vunpack.c.l.b16 %v104
    %v273 = vunpack.c.l.b16 %v105
    %v274 = vunpack.c.l.b16 %v106
    %v275 = vunpack.c.l.b16 %v107
    %v276 = vunpack.c.l.b16 %v108
    %v277 = vunpack.c.l.b16 %v109
    %v278 = vunpack.c.l.b16 %v110
    %v279 = vunpack.c.l.b16 %v111
    %v280 = vunpack.c.l.b16 %v112
    %v281 = vunpack.c.l.b16 %v113
    %v282 = vunpack.c.l.b16 %v114
    %v283 = vunpack.c.l.b16 %v115
    %v284 = vunpack.c.l.b16 %v116
    %v285 = vunpack.c.l.b16 %v117
    %v286 = vunpack.c.l.b16 %v118
    %v287 = vunpack.c.l.b16 %v119
    %v288 = vunpack.c.l.b16 %v120
    %v289 = vunpack.c.l.b16 %v121
    %v290 = vunpack.c.l.b16 %v122
    %v291 = vunpack.c.l.b16 %v123
    %v292 = vunpack.c.l.b16 %v124
    %v293 = vunpack.c.l.b16 %v125
    %v294 = vunpack.c.l.b16 %v126
    %v295 = vunpack.c.l.b16 %v127
    %v296 = vunpack.c.l.b16 %v128
    %v297 = vunpack.c.l.b16 %v129
    %v298 = vunpack.c.l.b16 %v130
    %v299 = vunpack.c.l.b16 %v131
    %v300 = vunpack.c.l.b16 %v132
    %v301 = vunpack.c.l.b16 %v133
    %v302 = vunpack.c.l.b16 %v134
    %v303 = vunpack.c.l.b16 %v135
    %v304 = vunpack.c.l.b16 %v136
    %v305 = vunpack.c.l.b16 %v137
    %v306 = vunpack.c.l.b16 %v138
    %v307 = vunpack.c.l.b16 %v139
    %v308 = vunpack.c.l.b16 %v140
    %v309 = vunpack.c.l.b16 %v141
    %v310 = vunpack.c.l.b16 %v142
    %v311 = vunpack.c.l.b16 %v143
    %v312 = vunpack.c.l.b16 %v144
    %v313 = vunpack.c.l.b16 %v145
    %v314 = vpack.c.b16 %v251, %v250
    %v315 = vpack.c.b16 %v253, %v252
    %v316 = vpack.c.b16 %v255, %v254
    %v317 = vpack.c.b16 %v257, %v256
    %v318 = vpack.c.b16 %v259, %v258
    %v319 = vpack.c.b16 %v261, %v260
    %v320 = vpack.c.b16 %v263, %v262
    %v321 = vpack.c.b16 %v265, %v264
    %v322 = vpack.c.b16 %v267, %v266
    %v323 = vpack.c.b16 %v269, %v268
    %v324 = vpack.c.b16 %v271, %v270
    %v325 = vpack.c.b16 %v273, %v272
    %v326 = vpack.c.b16 %v275, %v274
    %v327 = vpack.c.b16 %v277, %v276
    %v328 = vpack.c.b16 %v279, %v278
    %v329 = vpack.c.b16 %v281, %v280
    %v330 = vpack.c.b16 %v283, %v282
    %v331 = vpack.c.b16 %v285, %v284
    %v332 = vpack.c.b16 %v287, %v286
    %v333 = vpack.c.b16 %v289, %v288
    %v334 = vpack.c.b16 %v291, %v290
    %v335 = vpack.c.b16 %v293, %v292
    %v336 = vpack.c.b16 %v295, %v294
    %v337 = vpack.c.b16 %v297, %v296
    %v338 = vpack.c.b16 %v299, %v298
    %v339 = vpack.c.b16 %v301, %v300
    %v340 = vpack.c.b16 %v303, %v302
    %v341 = vpack.c.b16 %v305, %v304
    %v342 = vpack.c.b16 %v307, %v306
    %v343 = vpack.c.b16 %v309, %v308
    %v344 = vpack.c.b16 %v311, %v310
    %v345 = vpack.c.b16 %v313, %v312
    %vm346 = vcmask 261120
    %v348 = vsel %vm346, %v178, 0
    %v351 = vsel %vm346, %v179, 0
    %v354 = vsel %vm346, %v180, 0
    %v357 = vsel %vm346, %v181, 0
    %v360 = vsel %vm346, %v182, 0
    %v363 = vsel %vm346, %v183, 0
    %v366 = vsel %vm346, %v184, 0
    %v369 = vsel %vm346, %v185, 0
    %v372 = vsel %vm346, %v314, 0
    %v375 = vsel %vm346, %v315, 0
    %v378 = vsel %vm346, %v316, 0
    %v381 = vsel %vm346, %v317, 0
    %v384 = vsel %vm346, %v318, 0
    %v387 = vsel %vm346, %v319, 0
    %v390 = vsel %vm346, %v320, 0
    %v393 = vsel %vm346, %v321, 0
    %v396 = vsel %vm346, %v322, 0
    %v399 = vsel %vm346, %v323, 0
    %v402 = vsel %vm346, %v324, 0
    %v405 = vsel %vm346, %v325, 0
    %v408 = vsel %vm346, %v326, 0
    %v411 = vsel %vm346, %v327, 0
    %v414 = vsel %vm346, %v328, 0
    %v417 = vsel %vm346, %v329, 0
    %v420 = vsel %vm346, %v330, 0
    %v423 = vsel %vm346, %v331, 0
    %v426 = vsel %vm346, %v332, 0
    %v429 = vsel %vm346, %v333, 0
    %v432 = vsel %vm346, %v334, 0
    %v435 = vsel %vm346, %v335, 0
    %v438 = vsel %vm346, %v336, 0
    %v441 = vsel %vm346, %v337, 0
    %v444 = vsel %vm346, %v338, 0
    %v447 = vsel %vm346, %v339, 0
    %v450 = vsel %vm346, %v340, 0
    %v453 = vsel %vm346, %v341, 0
    %v456 = vsel %vm346, %v342, 0
    %v459 = vsel %vm346, %v343, 0
    %v462 = vsel %vm346, %v344, 0
    %v465 = vsel %vm346, %v345, 0
    %467 = vmatprep.subr.bf16.mxu0 0
    %468 = vmatpush1.bf16.xpose.msra.mxu0 %v372
    %469 = vmatprep.subr.bf16.mxu0 0
    %470 = vmatpush1.bf16.xpose.msra.mxu0 %v375
    %471 = vmatprep.subr.bf16.mxu0 0
    %472 = vmatpush1.bf16.xpose.msra.mxu0 %v378
    %473 = vmatprep.subr.bf16.mxu0 0
    %474 = vmatpush1.bf16.xpose.msra.mxu0 %v381
    %475 = vmatprep.subr.bf16.mxu0 0
    %476 = vmatpush1.bf16.xpose.msra.mxu0 %v384
    %477 = vmatprep.subr.bf16.mxu0 0
    %478 = vmatpush1.bf16.xpose.msra.mxu0 %v387
    %479 = vmatprep.subr.bf16.mxu0 0
    %480 = vmatpush1.bf16.xpose.msra.mxu0 %v390
    %481 = vmatprep.subr.bf16.mxu0 0
    %482 = vmatpush1.bf16.xpose.msra.mxu0 %v393
    %483 = vmatprep.subr.bf16.mxu0 0
    %484 = vmatpush1.bf16.xpose.msra.mxu0 %v396
    %485 = vmatprep.subr.bf16.mxu0 0
    %486 = vmatpush1.bf16.xpose.msra.mxu0 %v399
    %487 = vmatprep.subr.bf16.mxu0 0
    %488 = vmatpush1.bf16.xpose.msra.mxu0 %v402
    %489 = vmatprep.subr.bf16.mxu0 0
    %490 = vmatpush1.bf16.xpose.msra.mxu0 %v405
    %491 = vmatprep.subr.bf16.mxu0 0
    %492 = vmatpush1.bf16.xpose.msra.mxu0 %v408
    %493 = vmatprep.subr.bf16.mxu0 0
    %494 = vmatpush1.bf16.xpose.msra.mxu0 %v411
    %495 = vmatprep.subr.bf16.mxu0 0
    %496 = vmatpush1.bf16.xpose.msra.mxu0 %v414
    %497 = vmatprep.subr.bf16.mxu0 0
    %498 = vmatpush1.bf16.xpose.msra.mxu0 %v417
    %499 = vmatprep.mubr.bf16.mxu0 0
    %500 = vmatmul.mubr.bf16.gmra.mrb[0].mxu0 %v348
    %v501 = vpop.f32.mrb[0].mxu0
    %v502 = vadd.f32 0.0, %v501
    %v503 = vpop.f32.mrb[0].mxu0
    %v504 = vadd.f32 0.0, %v503
    %v505 = vpop.f32.mrb[0].mxu0
    %v506 = vadd.f32 0.0, %v505
    %v507 = vpop.f32.mrb[0].mxu0
    %v508 = vadd.f32 0.0, %v507
    %509 = vmatprep.mubr.bf16.mxu0 0
    %510 = vmatmul.mubr.bf16.gmra.mrb[0].mxu0 %v351
    %v511 = vpop.f32.mrb[0].mxu0
    %v512 = vadd.f32 0.0, %v511
    %v513 = vpop.f32.mrb[0].mxu0
    %v514 = vadd.f32 0.0, %v513
    %v515 = vpop.f32.mrb[0].mxu0
    %v516 = vadd.f32 0.0, %v515
    %v517 = vpop.f32.mrb[0].mxu0
    %v518 = vadd.f32 0.0, %v517
    %519 = vmatprep.mubr.bf16.mxu0 0
    %520 = vmatmul.mubr.bf16.gmra.mrb[0].mxu0 %v354
    %v521 = vpop.f32.mrb[0].mxu0
    %v522 = vadd.f32 0.0, %v521
    %v523 = vpop.f32.mrb[0].mxu0
    %v524 = vadd.f32 0.0, %v523
    %v525 = vpop.f32.mrb[0].mxu0
    %v526 = vadd.f32 0.0, %v525
    %v527 = vpop.f32.mrb[0].mxu0
    %v528 = vadd.f32 0.0, %v527
    %529 = vmatprep.mubr.bf16.mxu0 0
    %530 = vmatmul.mubr.bf16.gmra.mrb[0].mxu0 %v357
    %v531 = vpop.f32.mrb[0].mxu0
    %v532 = vadd.f32 0.0, %v531
    %v533 = vpop.f32.mrb[0].mxu0
    %v534 = vadd.f32 0.0, %v533
    %v535 = vpop.f32.mrb[0].mxu0
    %v536 = vadd.f32 0.0, %v535
    %v537 = vpop.f32.mrb[0].mxu0
    %v538 = vadd.f32 0.0, %v537
    %539 = vmatprep.mubr.bf16.mxu0 0
    %540 = vmatmul.mubr.bf16.gmra.mrb[0].mxu0 %v360
    %v541 = vpop.f32.mrb[0].mxu0
    %v542 = vadd.f32 0.0, %v541
    %v543 = vpop.f32.mrb[0].mxu0
    %v544 = vadd.f32 0.0, %v543
    %v545 = vpop.f32.mrb[0].mxu0
    %v546 = vadd.f32 0.0, %v545
    %v547 = vpop.f32.mrb[0].mxu0
    %v548 = vadd.f32 0.0, %v547
    %549 = vmatprep.mubr.bf16.mxu0 0
    %550 = vmatmul.mubr.bf16.gmra.mrb[0].mxu0 %v363
    %v551 = vpop.f32.mrb[0].mxu0
    %v552 = vadd.f32 0.0, %v551
    %v553 = vpop.f32.mrb[0].mxu0
    %v554 = vadd.f32 0.0, %v553
    %v555 = vpop.f32.mrb[0].mxu0
    %v556 = vadd.f32 0.0, %v555
    %v557 = vpop.f32.mrb[0].mxu0
    %v558 = vadd.f32 0.0, %v557
    %559 = vmatprep.mubr.bf16.mxu0 0
    %560 = vmatmul.mubr.bf16.gmra.mrb[0].mxu0 %v366
    %v561 = vpop.f32.mrb[0].mxu0
    %v562 = vadd.f32 0.0, %v561
    %v563 = vpop.f32.mrb[0].mxu0
    %v564 = vadd.f32 0.0, %v563
    %v565 = vpop.f32.mrb[0].mxu0
    %v566 = vadd.f32 0.0, %v565
    %v567 = vpop.f32.mrb[0].mxu0
    %v568 = vadd.f32 0.0, %v567
    %569 = vmatprep.mubr.bf16.mxu0 0
    %570 = vmatmul.mubr.bf16.gmra.mrb[0].mxu0 %v369
    %v571 = vpop.f32.mrb[0].mxu0
    %v572 = vadd.f32 0.0, %v571
    %v573 = vpop.f32.mrb[0].mxu0
    %v574 = vadd.f32 0.0, %v573
    %v575 = vpop.f32.mrb[0].mxu0
    %v576 = vadd.f32 0.0, %v575
    %v577 = vpop.f32.mrb[0].mxu0
    %v578 = vadd.f32 0.0, %v577
    %579 = vdwg.mxu0
    %580 = vmatprep.subr.bf16.mxu0 0
    %581 = vmatpush1.bf16.xpose.msra.mxu0 %v420
    %582 = vmatprep.subr.bf16.mxu0 0
    %583 = vmatpush1.bf16.xpose.msra.mxu0 %v423
    %584 = vmatprep.subr.bf16.mxu0 0
    %585 = vmatpush1.bf16.xpose.msra.mxu0 %v426
    %586 = vmatprep.subr.bf16.mxu0 0
    %587 = vmatpush1.bf16.xpose.msra.mxu0 %v429
    %588 = vmatprep.subr.bf16.mxu0 0
    %589 = vmatpush1.bf16.xpose.msra.mxu0 %v432
    %590 = vmatprep.subr.bf16.mxu0 0
    %591 = vmatpush1.bf16.xpose.msra.mxu0 %v435
    %592 = vmatprep.subr.bf16.mxu0 0
    %593 = vmatpush1.bf16.xpose.msra.mxu0 %v438
    %594 = vmatprep.subr.bf16.mxu0 0
    %595 = vmatpush1.bf16.xpose.msra.mxu0 %v441
    %596 = vmatprep.subr.bf16.mxu0 0
    %597 = vmatpush1.bf16.xpose.msra.mxu0 %v444
    %598 = vmatprep.subr.bf16.mxu0 0
    %599 = vmatpush1.bf16.xpose.msra.mxu0 %v447
    %600 = vmatprep.subr.bf16.mxu0 0
    %601 = vmatpush1.bf16.xpose.msra.mxu0 %v450
    %602 = vmatprep.subr.bf16.mxu0 0
    %603 = vmatpush1.bf16.xpose.msra.mxu0 %v453
    %604 = vmatprep.subr.bf16.mxu0 0
    %605 = vmatpush1.bf16.xpose.msra.mxu0 %v456
    %606 = vmatprep.subr.bf16.mxu0 0
    %607 = vmatpush1.bf16.xpose.msra.mxu0 %v459
    %608 = vmatprep.subr.bf16.mxu0 0
    %609 = vmatpush1.bf16.xpose.msra.mxu0 %v462
    %610 = vmatprep.subr.bf16.mxu0 0
    %611 = vmatpush1.bf16.xpose.msra.mxu0 %v465
    %612 = vmatprep.mubr.bf16.mxu0 0
    %613 = vmatmul.mubr.bf16.gmra.mrb[0].mxu0 %v348
    %v614 = vpop.f32.mrb[0].mxu0
    %v615 = vadd.f32 0.0, %v614
    %v616 = vpop.f32.mrb[0].mxu0
    %v617 = vadd.f32 0.0, %v616
    %v618 = vpop.f32.mrb[0].mxu0
    %v619 = vadd.f32 0.0, %v618
    %v620 = vpop.f32.mrb[0].mxu0
    %v621 = vadd.f32 0.0, %v620
    %622 = vmatprep.mubr.bf16.mxu0 0
    %623 = vmatmul.mubr.bf16.gmra.mrb[0].mxu0 %v351
    %v624 = vpop.f32.mrb[0].mxu0
    %v625 = vadd.f32 0.0, %v624
    %v626 = vpop.f32.mrb[0].mxu0
    %v627 = vadd.f32 0.0, %v626
    %v628 = vpop.f32.mrb[0].mxu0
    %v629 = vadd.f32 0.0, %v628
    %v630 = vpop.f32.mrb[0].mxu0
    %v631 = vadd.f32 0.0, %v630
    %632 = vmatprep.mubr.bf16.mxu0 0
    %633 = vmatmul.mubr.bf16.gmra.mrb[0].mxu0 %v354
    %v634 = vpop.f32.mrb[0].mxu0
    %v635 = vadd.f32 0.0, %v634
    %v636 = vpop.f32.mrb[0].mxu0
    %v637 = vadd.f32 0.0, %v636
    %v638 = vpop.f32.mrb[0].mxu0
    %v639 = vadd.f32 0.0, %v638
    %v640 = vpop.f32.mrb[0].mxu0
    %v641 = vadd.f32 0.0, %v640
    %642 = vmatprep.mubr.bf16.mxu0 0
    %643 = vmatmul.mubr.bf16.gmra.mrb[0].mxu0 %v357
    %v644 = vpop.f32.mrb[0].mxu0
    %v645 = vadd.f32 0.0, %v644
    %v646 = vpop.f32.mrb[0].mxu0
    %v647 = vadd.f32 0.0, %v646
    %v648 = vpop.f32.mrb[0].mxu0
    %v649 = vadd.f32 0.0, %v648
    %v650 = vpop.f32.mrb[0].mxu0
    %v651 = vadd.f32 0.0, %v650
    %652 = vmatprep.mubr.bf16.mxu0 0
    %653 = vmatmul.mubr.bf16.gmra.mrb[0].mxu0 %v360
    %v654 = vpop.f32.mrb[0].mxu0
    %v655 = vadd.f32 0.0, %v654
    %v656 = vpop.f32.mrb[0].mxu0
    %v657 = vadd.f32 0.0, %v656
    %v658 = vpop.f32.mrb[0].mxu0
    %v659 = vadd.f32 0.0, %v658
    %v660 = vpop.f32.mrb[0].mxu0
    %v661 = vadd.f32 0.0, %v660
    %662 = vmatprep.mubr.bf16.mxu0 0
    %663 = vmatmul.mubr.bf16.gmra.mrb[0].mxu0 %v363
    %v664 = vpop.f32.mrb[0].mxu0
    %v665 = vadd.f32 0.0, %v664
    %v666 = vpop.f32.mrb[0].mxu0
    %v667 = vadd.f32 0.0, %v666
    %v668 = vpop.f32.mrb[0].mxu0
    %v669 = vadd.f32 0.0, %v668
    %v670 = vpop.f32.mrb[0].mxu0
    %v671 = vadd.f32 0.0, %v670
    %672 = vmatprep.mubr.bf16.mxu0 0
    %673 = vmatmul.mubr.bf16.gmra.mrb[0].mxu0 %v366
    %v674 = vpop.f32.mrb[0].mxu0
    %v675 = vadd.f32 0.0, %v674
    %v676 = vpop.f32.mrb[0].mxu0
    %v677 = vadd.f32 0.0, %v676
    %v678 = vpop.f32.mrb[0].mxu0
    %v679 = vadd.f32 0.0, %v678
    %v680 = vpop.f32.mrb[0].mxu0
    %v681 = vadd.f32 0.0, %v680
    %682 = vmatprep.mubr.bf16.mxu0 0
    %683 = vmatmul.mubr.bf16.gmra.mrb[0].mxu0 %v369
    %v684 = vpop.f32.mrb[0].mxu0
    %v685 = vadd.f32 0.0, %v684
    %v686 = vpop.f32.mrb[0].mxu0
    %v687 = vadd.f32 0.0, %v686
    %v688 = vpop.f32.mrb[0].mxu0
    %v689 = vadd.f32 0.0, %v688
    %v690 = vpop.f32.mrb[0].mxu0
    %v691 = vadd.f32 0.0, %v690
    %692 = vdwg.mxu0
    %v693 = vadd.f32 %v502, %v504
    %v694 = vadd.f32 %v693, %v615
    %v695 = vadd.f32 %v694, %v617
    %696 = vadd.xlane.f32.xlu0 %v695
    %v697 = vpop.xlane.xlu0 %696
    %v698 = vadd.f32 %v506, %v508
    %v699 = vadd.f32 %v698, %v619
    %v700 = vadd.f32 %v699, %v621
    %701 = vadd.xlane.f32.xlu0 %v700
    %v702 = vpop.xlane.xlu0 %701
    %v703 = vadd.f32 %v512, %v514
    %v704 = vadd.f32 %v703, %v625
    %v705 = vadd.f32 %v704, %v627
    %706 = vadd.xlane.f32.xlu0 %v705
    %v707 = vpop.xlane.xlu0 %706
    %v708 = vadd.f32 %v516, %v518
    %v709 = vadd.f32 %v708, %v629
    %v710 = vadd.f32 %v709, %v631
    %711 = vadd.xlane.f32.xlu0 %v710
    %v712 = vpop.xlane.xlu0 %711
    %v713 = vadd.f32 %v522, %v524
    %v714 = vadd.f32 %v713, %v635
    %v715 = vadd.f32 %v714, %v637
    %716 = vadd.xlane.f32.xlu0 %v715
    %v717 = vpop.xlane.xlu0 %716
    %v718 = vadd.f32 %v526, %v528
    %v719 = vadd.f32 %v718, %v639
    %v720 = vadd.f32 %v719, %v641
    %721 = vadd.xlane.f32.xlu0 %v720
    %v722 = vpop.xlane.xlu0 %721
    %v723 = vadd.f32 %v532, %v534
    %v724 = vadd.f32 %v723, %v645
    %v725 = vadd.f32 %v724, %v647
    %726 = vadd.xlane.f32.xlu0 %v725
    %v727 = vpop.xlane.xlu0 %726
    %v728 = vadd.f32 %v536, %v538
    %v729 = vadd.f32 %v728, %v649
    %v730 = vadd.f32 %v729, %v651
    %731 = vadd.xlane.f32.xlu0 %v730
    %v732 = vpop.xlane.xlu0 %731
    %v733 = vadd.f32 %v542, %v544
    %v734 = vadd.f32 %v733, %v655
    %v735 = vadd.f32 %v734, %v657
    %736 = vadd.xlane.f32.xlu0 %v735
    %v737 = vpop.xlane.xlu0 %736
    %v738 = vadd.f32 %v546, %v548
    %v739 = vadd.f32 %v738, %v659
    %v740 = vadd.f32 %v739, %v661
    %741 = vadd.xlane.f32.xlu0 %v740
    %v742 = vpop.xlane.xlu0 %741
    %v743 = vadd.f32 %v552, %v554
    %v744 = vadd.f32 %v743, %v665
    %v745 = vadd.f32 %v744, %v667
    %746 = vadd.xlane.f32.xlu0 %v745
    %v747 = vpop.xlane.xlu0 %746
    %v748 = vadd.f32 %v556, %v558
    %v749 = vadd.f32 %v748, %v669
    %v750 = vadd.f32 %v749, %v671
    %751 = vadd.xlane.f32.xlu0 %v750
    %v752 = vpop.xlane.xlu0 %751
    %v753 = vadd.f32 %v562, %v564
    %v754 = vadd.f32 %v753, %v675
    %v755 = vadd.f32 %v754, %v677
    %756 = vadd.xlane.f32.xlu0 %v755
    %v757 = vpop.xlane.xlu0 %756
    %v758 = vadd.f32 %v566, %v568
    %v759 = vadd.f32 %v758, %v679
    %v760 = vadd.f32 %v759, %v681
    %761 = vadd.xlane.f32.xlu0 %v760
    %v762 = vpop.xlane.xlu0 %761
    %v763 = vadd.f32 %v572, %v574
    %v764 = vadd.f32 %v763, %v685
    %v765 = vadd.f32 %v764, %v687
    %766 = vadd.xlane.f32.xlu0 %v765
    %v767 = vpop.xlane.xlu0 %766
    %v768 = vadd.f32 %v576, %v578
    %v769 = vadd.f32 %v768, %v689
    %v770 = vadd.f32 %v769, %v691
    %771 = vadd.xlane.f32.xlu0 %v770
    %v772 = vpop.xlane.xlu0 %771
    %v773 = vmul.f32 %v502, %v502
    %v774 = vmul.f32 %v504, %v504
    %v775 = vmul.f32 %v615, %v615
    %v776 = vmul.f32 %v617, %v617
    %v777 = vmul.f32 %v506, %v506
    %v778 = vmul.f32 %v508, %v508
    %v779 = vmul.f32 %v619, %v619
    %v780 = vmul.f32 %v621, %v621
    %v781 = vmul.f32 %v512, %v512
    %v782 = vmul.f32 %v514, %v514
    %v783 = vmul.f32 %v625, %v625
    %v784 = vmul.f32 %v627, %v627
    %v785 = vmul.f32 %v516, %v516
    %v786 = vmul.f32 %v518, %v518
    %v787 = vmul.f32 %v629, %v629
    %v788 = vmul.f32 %v631, %v631
    %v789 = vmul.f32 %v522, %v522
    %v790 = vmul.f32 %v524, %v524
    %v791 = vmul.f32 %v635, %v635
    %v792 = vmul.f32 %v637, %v637
    %v793 = vmul.f32 %v526, %v526
    %v794 = vmul.f32 %v528, %v528
    %v795 = vmul.f32 %v639, %v639
    %v796 = vmul.f32 %v641, %v641
    %v797 = vmul.f32 %v532, %v532
    %v798 = vmul.f32 %v534, %v534
    %v799 = vmul.f32 %v645, %v645
    %v800 = vmul.f32 %v647, %v647
    %v801 = vmul.f32 %v536, %v536
    %v802 = vmul.f32 %v538, %v538
    %v803 = vmul.f32 %v649, %v649
    %v804 = vmul.f32 %v651, %v651
    %v805 = vmul.f32 %v542, %v542
    %v806 = vmul.f32 %v544, %v544
    %v807 = vmul.f32 %v655, %v655
    %v808 = vmul.f32 %v657, %v657
    %v809 = vmul.f32 %v546, %v546
    %v810 = vmul.f32 %v548, %v548
    %v811 = vmul.f32 %v659, %v659
    %v812 = vmul.f32 %v661, %v661
    %v813 = vmul.f32 %v552, %v552
    %v814 = vmul.f32 %v554, %v554
    %v815 = vmul.f32 %v665, %v665
    %v816 = vmul.f32 %v667, %v667
    %v817 = vmul.f32 %v556, %v556
    %v818 = vmul.f32 %v558, %v558
    %v819 = vmul.f32 %v669, %v669
    %v820 = vmul.f32 %v671, %v671
    %v821 = vmul.f32 %v562, %v562
    %v822 = vmul.f32 %v564, %v564
    %v823 = vmul.f32 %v675, %v675
    %v824 = vmul.f32 %v677, %v677
    %v825 = vmul.f32 %v566, %v566
    %v826 = vmul.f32 %v568, %v568
    %v827 = vmul.f32 %v679, %v679
    %v828 = vmul.f32 %v681, %v681
    %v829 = vmul.f32 %v572, %v572
    %v830 = vmul.f32 %v574, %v574
    %v831 = vmul.f32 %v685, %v685
    %v832 = vmul.f32 %v687, %v687
    %v833 = vmul.f32 %v576, %v576
    %v834 = vmul.f32 %v578, %v578
    %v835 = vmul.f32 %v689, %v689
    %v836 = vmul.f32 %v691, %v691
    %v837 = vadd.f32 %v773, %v774
    %v838 = vadd.f32 %v837, %v775
    %v839 = vadd.f32 %v838, %v776
    %840 = vadd.xlane.f32.xlu0 %v839
    %v841 = vpop.xlane.xlu0 %840
    %v842 = vadd.f32 %v777, %v778
    %v843 = vadd.f32 %v842, %v779
    %v844 = vadd.f32 %v843, %v780
    %845 = vadd.xlane.f32.xlu0 %v844
    %v846 = vpop.xlane.xlu0 %845
    %v847 = vadd.f32 %v781, %v782
    %v848 = vadd.f32 %v847, %v783
    %v849 = vadd.f32 %v848, %v784
    %850 = vadd.xlane.f32.xlu0 %v849
    %v851 = vpop.xlane.xlu0 %850
    %v852 = vadd.f32 %v785, %v786
    %v853 = vadd.f32 %v852, %v787
    %v854 = vadd.f32 %v853, %v788
    %855 = vadd.xlane.f32.xlu0 %v854
    %v856 = vpop.xlane.xlu0 %855
    %v857 = vadd.f32 %v789, %v790
    %v858 = vadd.f32 %v857, %v791
    %v859 = vadd.f32 %v858, %v792
    %860 = vadd.xlane.f32.xlu0 %v859
    %v861 = vpop.xlane.xlu0 %860
    %v862 = vadd.f32 %v793, %v794
    %v863 = vadd.f32 %v862, %v795
    %v864 = vadd.f32 %v863, %v796
    %865 = vadd.xlane.f32.xlu0 %v864
    %v866 = vpop.xlane.xlu0 %865
    %v867 = vadd.f32 %v797, %v798
    %v868 = vadd.f32 %v867, %v799
    %v869 = vadd.f32 %v868, %v800
    %870 = vadd.xlane.f32.xlu0 %v869
    %v871 = vpop.xlane.xlu0 %870
    %v872 = vadd.f32 %v801, %v802
    %v873 = vadd.f32 %v872, %v803
    %v874 = vadd.f32 %v873, %v804
    %875 = vadd.xlane.f32.xlu0 %v874
    %v876 = vpop.xlane.xlu0 %875
    %v877 = vadd.f32 %v805, %v806
    %v878 = vadd.f32 %v877, %v807
    %v879 = vadd.f32 %v878, %v808
    %880 = vadd.xlane.f32.xlu0 %v879
    %v881 = vpop.xlane.xlu0 %880
    %v882 = vadd.f32 %v809, %v810
    %v883 = vadd.f32 %v882, %v811
    %v884 = vadd.f32 %v883, %v812
    %885 = vadd.xlane.f32.xlu0 %v884
    %v886 = vpop.xlane.xlu0 %885
    %v887 = vadd.f32 %v813, %v814
    %v888 = vadd.f32 %v887, %v815
    %v889 = vadd.f32 %v888, %v816
    %890 = vadd.xlane.f32.xlu0 %v889
    %v891 = vpop.xlane.xlu0 %890
    %v892 = vadd.f32 %v817, %v818
    %v893 = vadd.f32 %v892, %v819
    %v894 = vadd.f32 %v893, %v820
    %895 = vadd.xlane.f32.xlu0 %v894
    %v896 = vpop.xlane.xlu0 %895
    %v897 = vadd.f32 %v821, %v822
    %v898 = vadd.f32 %v897, %v823
    %v899 = vadd.f32 %v898, %v824
    %900 = vadd.xlane.f32.xlu0 %v899
    %v901 = vpop.xlane.xlu0 %900
    %v902 = vadd.f32 %v825, %v826
    %v903 = vadd.f32 %v902, %v827
    %v904 = vadd.f32 %v903, %v828
    %905 = vadd.xlane.f32.xlu0 %v904
    %v906 = vpop.xlane.xlu0 %905
    %v907 = vadd.f32 %v829, %v830
    %v908 = vadd.f32 %v907, %v831
    %v909 = vadd.f32 %v908, %v832
    %910 = vadd.xlane.f32.xlu0 %v909
    %v911 = vpop.xlane.xlu0 %910
    %v912 = vadd.f32 %v833, %v834
    %v913 = vadd.f32 %v912, %v835
    %v914 = vadd.f32 %v913, %v836
    %915 = vadd.xlane.f32.xlu0 %v914
    %v916 = vpop.xlane.xlu0 %915
    %v917 = vmul.f32 %v697, 0.001953125
    %v918 = vmul.f32 %v702, 0.001953125
    %v919 = vmul.f32 %v707, 0.001953125
    %v920 = vmul.f32 %v712, 0.001953125
    %v921 = vmul.f32 %v717, 0.001953125
    %v922 = vmul.f32 %v722, 0.001953125
    %v923 = vmul.f32 %v727, 0.001953125
    %v924 = vmul.f32 %v732, 0.001953125
    %v925 = vmul.f32 %v737, 0.001953125
    %v926 = vmul.f32 %v742, 0.001953125
    %v927 = vmul.f32 %v747, 0.001953125
    %v928 = vmul.f32 %v752, 0.001953125
    %v929 = vmul.f32 %v757, 0.001953125
    %v930 = vmul.f32 %v762, 0.001953125
    %v931 = vmul.f32 %v767, 0.001953125
    %v932 = vmul.f32 %v772, 0.001953125
    %v933 = vmul.f32 %v841, 0.001953125
    %v934 = vmul.f32 %v846, 0.001953125
    %v935 = vmul.f32 %v851, 0.001953125
    %v936 = vmul.f32 %v856, 0.001953125
    %v937 = vmul.f32 %v861, 0.001953125
    %v938 = vmul.f32 %v866, 0.001953125
    %v939 = vmul.f32 %v871, 0.001953125
    %v940 = vmul.f32 %v876, 0.001953125
    %v941 = vmul.f32 %v881, 0.001953125
    %v942 = vmul.f32 %v886, 0.001953125
    %v943 = vmul.f32 %v891, 0.001953125
    %v944 = vmul.f32 %v896, 0.001953125
    %v945 = vmul.f32 %v901, 0.001953125
    %v946 = vmul.f32 %v906, 0.001953125
    %v947 = vmul.f32 %v911, 0.001953125
    %v948 = vmul.f32 %v916, 0.001953125
    %v949 = vmul.f32 %v917, %v917
    %v950 = vmul.f32 %v918, %v918
    %v951 = vmul.f32 %v919, %v919
    %v952 = vmul.f32 %v920, %v920
    %v953 = vmul.f32 %v921, %v921
    %v954 = vmul.f32 %v922, %v922
    %v955 = vmul.f32 %v923, %v923
    %v956 = vmul.f32 %v924, %v924
    %v957 = vmul.f32 %v925, %v925
    %v958 = vmul.f32 %v926, %v926
    %v959 = vmul.f32 %v927, %v927
    %v960 = vmul.f32 %v928, %v928
    %v961 = vmul.f32 %v929, %v929
    %v962 = vmul.f32 %v930, %v930
    %v963 = vmul.f32 %v931, %v931
    %v964 = vmul.f32 %v932, %v932
    %v965 = vsub.f32 %v933, %v949
    %v966 = vsub.f32 %v934, %v950
    %v967 = vsub.f32 %v935, %v951
    %v968 = vsub.f32 %v936, %v952
    %v969 = vsub.f32 %v937, %v953
    %v970 = vsub.f32 %v938, %v954
    %v971 = vsub.f32 %v939, %v955
    %v972 = vsub.f32 %v940, %v956
    %v973 = vsub.f32 %v941, %v957
    %v974 = vsub.f32 %v942, %v958
    %v975 = vsub.f32 %v943, %v959
    %v976 = vsub.f32 %v944, %v960
    %v977 = vsub.f32 %v945, %v961
    %v978 = vsub.f32 %v946, %v962
    %v979 = vsub.f32 %v947, %v963
    %v980 = vsub.f32 %v948, %v964
    %v981 = vadd.f32 %v965, 1e-05
    %v982 = vadd.f32 %v966, 1e-05
    %v983 = vadd.f32 %v967, 1e-05
    %v984 = vadd.f32 %v968, 1e-05
    %v985 = vadd.f32 %v969, 1e-05
    %v986 = vadd.f32 %v970, 1e-05
    %v987 = vadd.f32 %v971, 1e-05
    %v988 = vadd.f32 %v972, 1e-05
    %v989 = vadd.f32 %v973, 1e-05
    %v990 = vadd.f32 %v974, 1e-05
    %v991 = vadd.f32 %v975, 1e-05
    %v992 = vadd.f32 %v976, 1e-05
    %v993 = vadd.f32 %v977, 1e-05
    %v994 = vadd.f32 %v978, 1e-05
    %v995 = vadd.f32 %v979, 1e-05
    %v996 = vadd.f32 %v980, 1e-05
    %v997 = vrsqrt.pop %v981
    %v998 = vrsqrt.pop %v982
    %v999 = vrsqrt.pop %v983
    %v1000 = vrsqrt.pop %v984
    %v1001 = vrsqrt.pop %v985
    %v1002 = vrsqrt.pop %v986
    %v1003 = vrsqrt.pop %v987
    %v1004 = vrsqrt.pop %v988
    %v1005 = vrsqrt.pop %v989
    %v1006 = vrsqrt.pop %v990
    %v1007 = vrsqrt.pop %v991
    %v1008 = vrsqrt.pop %v992
    %v1009 = vrsqrt.pop %v993
    %v1010 = vrsqrt.pop %v994
    %v1011 = vrsqrt.pop %v995
    %v1012 = vrsqrt.pop %v996
    %v1013 = vmul.f32 %v34, %v997
    %v1014 = vmul.f32 %v35, %v998
    %v1015 = vmul.f32 %v36, %v999
    %v1016 = vmul.f32 %v37, %v1000
    %v1017 = vmul.f32 %v38, %v1001
    %v1018 = vmul.f32 %v39, %v1002
    %v1019 = vmul.f32 %v40, %v1003
    %v1020 = vmul.f32 %v41, %v1004
    %v1021 = vmul.f32 %v42, %v1005
    %v1022 = vmul.f32 %v43, %v1006
    %v1023 = vmul.f32 %v44, %v1007
    %v1024 = vmul.f32 %v45, %v1008
    %v1025 = vmul.f32 %v46, %v1009
    %v1026 = vmul.f32 %v47, %v1010
    %v1027 = vmul.f32 %v48, %v1011
    %v1028 = vmul.f32 %v49, %v1012
    %v1029 = vmul.f32 %v917, %v1013
    %v1030 = vmul.f32 %v918, %v1014
    %v1031 = vmul.f32 %v919, %v1015
    %v1032 = vmul.f32 %v920, %v1016
    %v1033 = vmul.f32 %v921, %v1017
    %v1034 = vmul.f32 %v922, %v1018
    %v1035 = vmul.f32 %v923, %v1019
    %v1036 = vmul.f32 %v924, %v1020
    %v1037 = vmul.f32 %v925, %v1021
    %v1038 = vmul.f32 %v926, %v1022
    %v1039 = vmul.f32 %v927, %v1023
    %v1040 = vmul.f32 %v928, %v1024
    %v1041 = vmul.f32 %v929, %v1025
    %v1042 = vmul.f32 %v930, %v1026
    %v1043 = vmul.f32 %v931, %v1027
    %v1044 = vmul.f32 %v932, %v1028
    %v1045 = vsub.f32 %v50, %v1029
    %v1046 = vsub.f32 %v51, %v1030
    %v1047 = vsub.f32 %v52, %v1031
    %v1048 = vsub.f32 %v53, %v1032
    %v1049 = vsub.f32 %v54, %v1033
    %v1050 = vsub.f32 %v55, %v1034
    %v1051 = vsub.f32 %v56, %v1035
    %v1052 = vsub.f32 %v57, %v1036
    %v1053 = vsub.f32 %v58, %v1037
    %v1054 = vsub.f32 %v59, %v1038
    %v1055 = vsub.f32 %v60, %v1039
    %v1056 = vsub.f32 %v61, %v1040
    %v1057 = vsub.f32 %v62, %v1041
    %v1058 = vsub.f32 %v63, %v1042
    %v1059 = vsub.f32 %v64, %v1043
    %v1060 = vsub.f32 %v65, %v1044
    %1062 = vset.pattern.permute.xlu0 0
    %1063 = vperm.xlu0 %1062, %v1013
    %v1064 = vpop.permute.xlu0 %1063
    %1067 = vset.pattern.permute.xlu0 0
    %1068 = vperm.xlu0 %1067, %v1014
    %v1069 = vpop.permute.xlu0 %1068
    %1072 = vset.pattern.permute.xlu0 0
    %1073 = vperm.xlu0 %1072, %v1015
    %v1074 = vpop.permute.xlu0 %1073
    %1077 = vset.pattern.permute.xlu0 0
    %1078 = vperm.xlu0 %1077, %v1016
    %v1079 = vpop.permute.xlu0 %1078
    %1082 = vset.pattern.permute.xlu0 0
    %1083 = vperm.xlu0 %1082, %v1017
    %v1084 = vpop.permute.xlu0 %1083
    %1087 = vset.pattern.permute.xlu0 0
    %1088 = vperm.xlu0 %1087, %v1018
    %v1089 = vpop.permute.xlu0 %1088
    %1092 = vset.pattern.permute.xlu0 0
    %1093 = vperm.xlu0 %1092, %v1019
    %v1094 = vpop.permute.xlu0 %1093
    %1097 = vset.pattern.permute.xlu0 0
    %1098 = vperm.xlu0 %1097, %v1020
    %v1099 = vpop.permute.xlu0 %1098
    %1102 = vset.pattern.permute.xlu0 0
    %1103 = vperm.xlu0 %1102, %v1021
    %v1104 = vpop.permute.xlu0 %1103
    %1107 = vset.pattern.permute.xlu0 0
    %1108 = vperm.xlu0 %1107, %v1022
    %v1109 = vpop.permute.xlu0 %1108
    %1112 = vset.pattern.permute.xlu0 0
    %1113 = vperm.xlu0 %1112, %v1023
    %v1114 = vpop.permute.xlu0 %1113
    %1117 = vset.pattern.permute.xlu0 0
    %1118 = vperm.xlu0 %1117, %v1024
    %v1119 = vpop.permute.xlu0 %1118
    %1122 = vset.pattern.permute.xlu0 0
    %1123 = vperm.xlu0 %1122, %v1025
    %v1124 = vpop.permute.xlu0 %1123
    %1127 = vset.pattern.permute.xlu0 0
    %1128 = vperm.xlu0 %1127, %v1026
    %v1129 = vpop.permute.xlu0 %1128
    %1132 = vset.pattern.permute.xlu0 0
    %1133 = vperm.xlu0 %1132, %v1027
    %v1134 = vpop.permute.xlu0 %1133
    %1137 = vset.pattern.permute.xlu0 0
    %1138 = vperm.xlu0 %1137, %v1028
    %v1139 = vpop.permute.xlu0 %1138
    %v1141 = vmul.f32 %v502, %v1064
    %v1142 = vmul.f32 %v504, %v1064
    %v1143 = vmul.f32 %v615, %v1064
    %v1144 = vmul.f32 %v617, %v1064
    %v1145 = vmul.f32 %v506, %v1069
    %v1146 = vmul.f32 %v508, %v1069
    %v1147 = vmul.f32 %v619, %v1069
    %v1148 = vmul.f32 %v621, %v1069
    %v1149 = vmul.f32 %v512, %v1074
    %v1150 = vmul.f32 %v514, %v1074
    %v1151 = vmul.f32 %v625, %v1074
    %v1152 = vmul.f32 %v627, %v1074
    %v1153 = vmul.f32 %v516, %v1079
    %v1154 = vmul.f32 %v518, %v1079
    %v1155 = vmul.f32 %v629, %v1079
    %v1156 = vmul.f32 %v631, %v1079
    %v1157 = vmul.f32 %v522, %v1084
    %v1158 = vmul.f32 %v524, %v1084
    %v1159 = vmul.f32 %v635, %v1084
    %v1160 = vmul.f32 %v637, %v1084
    %v1161 = vmul.f32 %v526, %v1089
    %v1162 = vmul.f32 %v528, %v1089
    %v1163 = vmul.f32 %v639, %v1089
    %v1164 = vmul.f32 %v641, %v1089
    %v1165 = vmul.f32 %v532, %v1094
    %v1166 = vmul.f32 %v534, %v1094
    %v1167 = vmul.f32 %v645, %v1094
    %v1168 = vmul.f32 %v647, %v1094
    %v1169 = vmul.f32 %v536, %v1099
    %v1170 = vmul.f32 %v538, %v1099
    %v1171 = vmul.f32 %v649, %v1099
    %v1172 = vmul.f32 %v651, %v1099
    %v1173 = vmul.f32 %v542, %v1104
    %v1174 = vmul.f32 %v544, %v1104
    %v1175 = vmul.f32 %v655, %v1104
    %v1176 = vmul.f32 %v657, %v1104
    %v1177 = vmul.f32 %v546, %v1109
    %v1178 = vmul.f32 %v548, %v1109
    %v1179 = vmul.f32 %v659, %v1109
    %v1180 = vmul.f32 %v661, %v1109
    %v1181 = vmul.f32 %v552, %v1114
    %v1182 = vmul.f32 %v554, %v1114
    %v1183 = vmul.f32 %v665, %v1114
    %v1184 = vmul.f32 %v667, %v1114
    %v1185 = vmul.f32 %v556, %v1119
    %v1186 = vmul.f32 %v558, %v1119
    %v1187 = vmul.f32 %v669, %v1119
    %v1188 = vmul.f32 %v671, %v1119
    %v1189 = vmul.f32 %v562, %v1124
    %v1190 = vmul.f32 %v564, %v1124
    %v1191 = vmul.f32 %v675, %v1124
    %v1192 = vmul.f32 %v677, %v1124
    %v1193 = vmul.f32 %v566, %v1129
    %v1194 = vmul.f32 %v568, %v1129
    %v1195 = vmul.f32 %v679, %v1129
    %v1196 = vmul.f32 %v681, %v1129
    %v1197 = vmul.f32 %v572, %v1134
    %v1198 = vmul.f32 %v574, %v1134
    %v1199 = vmul.f32 %v685, %v1134
    %v1200 = vmul.f32 %v687, %v1134
    %v1201 = vmul.f32 %v576, %v1139
    %v1202 = vmul.f32 %v578, %v1139
    %v1203 = vmul.f32 %v689, %v1139
    %v1204 = vmul.f32 %v691, %v1139
    %1206 = vset.pattern.permute.xlu0 0
    %1207 = vperm.xlu0 %1206, %v1045
    %v1208 = vpop.permute.xlu0 %1207
    %1211 = vset.pattern.permute.xlu0 0
    %1212 = vperm.xlu0 %1211, %v1046
    %v1213 = vpop.permute.xlu0 %1212
    %1216 = vset.pattern.permute.xlu0 0
    %1217 = vperm.xlu0 %1216, %v1047
    %v1218 = vpop.permute.xlu0 %1217
    %1221 = vset.pattern.permute.xlu0 0
    %1222 = vperm.xlu0 %1221, %v1048
    %v1223 = vpop.permute.xlu0 %1222
    %1226 = vset.pattern.permute.xlu0 0
    %1227 = vperm.xlu0 %1226, %v1049
    %v1228 = vpop.permute.xlu0 %1227
    %1231 = vset.pattern.permute.xlu0 0
    %1232 = vperm.xlu0 %1231, %v1050
    %v1233 = vpop.permute.xlu0 %1232
    %1236 = vset.pattern.permute.xlu0 0
    %1237 = vperm.xlu0 %1236, %v1051
    %v1238 = vpop.permute.xlu0 %1237
    %1241 = vset.pattern.permute.xlu0 0
    %1242 = vperm.xlu0 %1241, %v1052
    %v1243 = vpop.permute.xlu0 %1242
    %1246 = vset.pattern.permute.xlu0 0
    %1247 = vperm.xlu0 %1246, %v1053
    %v1248 = vpop.permute.xlu0 %1247
    %1251 = vset.pattern.permute.xlu0 0
    %1252 = vperm.xlu0 %1251, %v1054
    %v1253 = vpop.permute.xlu0 %1252
    %1256 = vset.pattern.permute.xlu0 0
    %1257 = vperm.xlu0 %1256, %v1055
    %v1258 = vpop.permute.xlu0 %1257
    %1261 = vset.pattern.permute.xlu0 0
    %1262 = vperm.xlu0 %1261, %v1056
    %v1263 = vpop.permute.xlu0 %1262
    %1266 = vset.pattern.permute.xlu0 0
    %1267 = vperm.xlu0 %1266, %v1057
    %v1268 = vpop.permute.xlu0 %1267
    %1271 = vset.pattern.permute.xlu0 0
    %1272 = vperm.xlu0 %1271, %v1058
    %v1273 = vpop.permute.xlu0 %1272
    %1276 = vset.pattern.permute.xlu0 0
    %1277 = vperm.xlu0 %1276, %v1059
    %v1278 = vpop.permute.xlu0 %1277
    %1281 = vset.pattern.permute.xlu0 0
    %1282 = vperm.xlu0 %1281, %v1060
    %v1283 = vpop.permute.xlu0 %1282
    %v1285 = vadd.f32 %v1141, %v1208
    %v1286 = vadd.f32 %v1142, %v1208
    %v1287 = vadd.f32 %v1143, %v1208
    %v1288 = vadd.f32 %v1144, %v1208
    %v1289 = vadd.f32 %v1145, %v1213
    %v1290 = vadd.f32 %v1146, %v1213
    %v1291 = vadd.f32 %v1147, %v1213
    %v1292 = vadd.f32 %v1148, %v1213
    %v1293 = vadd.f32 %v1149, %v1218
    %v1294 = vadd.f32 %v1150, %v1218
    %v1295 = vadd.f32 %v1151, %v1218
    %v1296 = vadd.f32 %v1152, %v1218
    %v1297 = vadd.f32 %v1153, %v1223
    %v1298 = vadd.f32 %v1154, %v1223
    %v1299 = vadd.f32 %v1155, %v1223
    %v1300 = vadd.f32 %v1156, %v1223
    %v1301 = vadd.f32 %v1157, %v1228
    %v1302 = vadd.f32 %v1158, %v1228
    %v1303 = vadd.f32 %v1159, %v1228
    %v1304 = vadd.f32 %v1160, %v1228
    %v1305 = vadd.f32 %v1161, %v1233
    %v1306 = vadd.f32 %v1162, %v1233
    %v1307 = vadd.f32 %v1163, %v1233
    %v1308 = vadd.f32 %v1164, %v1233
    %v1309 = vadd.f32 %v1165, %v1238
    %v1310 = vadd.f32 %v1166, %v1238
    %v1311 = vadd.f32 %v1167, %v1238
    %v1312 = vadd.f32 %v1168, %v1238
    %v1313 = vadd.f32 %v1169, %v1243
    %v1314 = vadd.f32 %v1170, %v1243
    %v1315 = vadd.f32 %v1171, %v1243
    %v1316 = vadd.f32 %v1172, %v1243
    %v1317 = vadd.f32 %v1173, %v1248
    %v1318 = vadd.f32 %v1174, %v1248
    %v1319 = vadd.f32 %v1175, %v1248
    %v1320 = vadd.f32 %v1176, %v1248
    %v1321 = vadd.f32 %v1177, %v1253
    %v1322 = vadd.f32 %v1178, %v1253
    %v1323 = vadd.f32 %v1179, %v1253
    %v1324 = vadd.f32 %v1180, %v1253
    %v1325 = vadd.f32 %v1181, %v1258
    %v1326 = vadd.f32 %v1182, %v1258
    %v1327 = vadd.f32 %v1183, %v1258
    %v1328 = vadd.f32 %v1184, %v1258
    %v1329 = vadd.f32 %v1185, %v1263
    %v1330 = vadd.f32 %v1186, %v1263
    %v1331 = vadd.f32 %v1187, %v1263
    %v1332 = vadd.f32 %v1188, %v1263
    %v1333 = vadd.f32 %v1189, %v1268
    %v1334 = vadd.f32 %v1190, %v1268
    %v1335 = vadd.f32 %v1191, %v1268
    %v1336 = vadd.f32 %v1192, %v1268
    %v1337 = vadd.f32 %v1193, %v1273
    %v1338 = vadd.f32 %v1194, %v1273
    %v1339 = vadd.f32 %v1195, %v1273
    %v1340 = vadd.f32 %v1196, %v1273
    %v1341 = vadd.f32 %v1197, %v1278
    %v1342 = vadd.f32 %v1198, %v1278
    %v1343 = vadd.f32 %v1199, %v1278
    %v1344 = vadd.f32 %v1200, %v1278
    %v1345 = vadd.f32 %v1201, %v1283
    %v1346 = vadd.f32 %v1202, %v1283
    %v1347 = vadd.f32 %v1203, %v1283
    %v1348 = vadd.f32 %v1204, %v1283
    %v1349 = vmul.f32 %v1285, %v1285
    %v1350 = vmul.f32 %v1286, %v1286
    %v1351 = vmul.f32 %v1287, %v1287
    %v1352 = vmul.f32 %v1288, %v1288
    %v1353 = vmul.f32 %v1289, %v1289
    %v1354 = vmul.f32 %v1290, %v1290
    %v1355 = vmul.f32 %v1291, %v1291
    %v1356 = vmul.f32 %v1292, %v1292
    %v1357 = vmul.f32 %v1293, %v1293
    %v1358 = vmul.f32 %v1294, %v1294
    %v1359 = vmul.f32 %v1295, %v1295
    %v1360 = vmul.f32 %v1296, %v1296
    %v1361 = vmul.f32 %v1297, %v1297
    %v1362 = vmul.f32 %v1298, %v1298
    %v1363 = vmul.f32 %v1299, %v1299
    %v1364 = vmul.f32 %v1300, %v1300
    %v1365 = vmul.f32 %v1301, %v1301
    %v1366 = vmul.f32 %v1302, %v1302
    %v1367 = vmul.f32 %v1303, %v1303
    %v1368 = vmul.f32 %v1304, %v1304
    %v1369 = vmul.f32 %v1305, %v1305
    %v1370 = vmul.f32 %v1306, %v1306
    %v1371 = vmul.f32 %v1307, %v1307
    %v1372 = vmul.f32 %v1308, %v1308
    %v1373 = vmul.f32 %v1309, %v1309
    %v1374 = vmul.f32 %v1310, %v1310
    %v1375 = vmul.f32 %v1311, %v1311
    %v1376 = vmul.f32 %v1312, %v1312
    %v1377 = vmul.f32 %v1313, %v1313
    %v1378 = vmul.f32 %v1314, %v1314
    %v1379 = vmul.f32 %v1315, %v1315
    %v1380 = vmul.f32 %v1316, %v1316
    %v1381 = vmul.f32 %v1317, %v1317
    %v1382 = vmul.f32 %v1318, %v1318
    %v1383 = vmul.f32 %v1319, %v1319
    %v1384 = vmul.f32 %v1320, %v1320
    %v1385 = vmul.f32 %v1321, %v1321
    %v1386 = vmul.f32 %v1322, %v1322
    %v1387 = vmul.f32 %v1323, %v1323
    %v1388 = vmul.f32 %v1324, %v1324
    %v1389 = vmul.f32 %v1325, %v1325
    %v1390 = vmul.f32 %v1326, %v1326
    %v1391 = vmul.f32 %v1327, %v1327
    %v1392 = vmul.f32 %v1328, %v1328
    %v1393 = vmul.f32 %v1329, %v1329
    %v1394 = vmul.f32 %v1330, %v1330
    %v1395 = vmul.f32 %v1331, %v1331
    %v1396 = vmul.f32 %v1332, %v1332
    %v1397 = vmul.f32 %v1333, %v1333
    %v1398 = vmul.f32 %v1334, %v1334
    %v1399 = vmul.f32 %v1335, %v1335
    %v1400 = vmul.f32 %v1336, %v1336
    %v1401 = vmul.f32 %v1337, %v1337
    %v1402 = vmul.f32 %v1338, %v1338
    %v1403 = vmul.f32 %v1339, %v1339
    %v1404 = vmul.f32 %v1340, %v1340
    %v1405 = vmul.f32 %v1341, %v1341
    %v1406 = vmul.f32 %v1342, %v1342
    %v1407 = vmul.f32 %v1343, %v1343
    %v1408 = vmul.f32 %v1344, %v1344
    %v1409 = vmul.f32 %v1345, %v1345
    %v1410 = vmul.f32 %v1346, %v1346
    %v1411 = vmul.f32 %v1347, %v1347
    %v1412 = vmul.f32 %v1348, %v1348
    %v1413 = vmul.f32 %v1349, %v1285
    %v1414 = vmul.f32 %v1350, %v1286
    %v1415 = vmul.f32 %v1351, %v1287
    %v1416 = vmul.f32 %v1352, %v1288
    %v1417 = vmul.f32 %v1353, %v1289
    %v1418 = vmul.f32 %v1354, %v1290
    %v1419 = vmul.f32 %v1355, %v1291
    %v1420 = vmul.f32 %v1356, %v1292
    %v1421 = vmul.f32 %v1357, %v1293
    %v1422 = vmul.f32 %v1358, %v1294
    %v1423 = vmul.f32 %v1359, %v1295
    %v1424 = vmul.f32 %v1360, %v1296
    %v1425 = vmul.f32 %v1361, %v1297
    %v1426 = vmul.f32 %v1362, %v1298
    %v1427 = vmul.f32 %v1363, %v1299
    %v1428 = vmul.f32 %v1364, %v1300
    %v1429 = vmul.f32 %v1365, %v1301
    %v1430 = vmul.f32 %v1366, %v1302
    %v1431 = vmul.f32 %v1367, %v1303
    %v1432 = vmul.f32 %v1368, %v1304
    %v1433 = vmul.f32 %v1369, %v1305
    %v1434 = vmul.f32 %v1370, %v1306
    %v1435 = vmul.f32 %v1371, %v1307
    %v1436 = vmul.f32 %v1372, %v1308
    %v1437 = vmul.f32 %v1373, %v1309
    %v1438 = vmul.f32 %v1374, %v1310
    %v1439 = vmul.f32 %v1375, %v1311
    %v1440 = vmul.f32 %v1376, %v1312
    %v1441 = vmul.f32 %v1377, %v1313
    %v1442 = vmul.f32 %v1378, %v1314
    %v1443 = vmul.f32 %v1379, %v1315
    %v1444 = vmul.f32 %v1380, %v1316
    %v1445 = vmul.f32 %v1381, %v1317
    %v1446 = vmul.f32 %v1382, %v1318
    %v1447 = vmul.f32 %v1383, %v1319
    %v1448 = vmul.f32 %v1384, %v1320
    %v1449 = vmul.f32 %v1385, %v1321
    %v1450 = vmul.f32 %v1386, %v1322
    %v1451 = vmul.f32 %v1387, %v1323
    %v1452 = vmul.f32 %v1388, %v1324
    %v1453 = vmul.f32 %v1389, %v1325
    %v1454 = vmul.f32 %v1390, %v1326
    %v1455 = vmul.f32 %v1391, %v1327
    %v1456 = vmul.f32 %v1392, %v1328
    %v1457 = vmul.f32 %v1393, %v1329
    %v1458 = vmul.f32 %v1394, %v1330
    %v1459 = vmul.f32 %v1395, %v1331
    %v1460 = vmul.f32 %v1396, %v1332
    %v1461 = vmul.f32 %v1397, %v1333
    %v1462 = vmul.f32 %v1398, %v1334
    %v1463 = vmul.f32 %v1399, %v1335
    %v1464 = vmul.f32 %v1400, %v1336
    %v1465 = vmul.f32 %v1401, %v1337
    %v1466 = vmul.f32 %v1402, %v1338
    %v1467 = vmul.f32 %v1403, %v1339
    %v1468 = vmul.f32 %v1404, %v1340
    %v1469 = vmul.f32 %v1405, %v1341
    %v1470 = vmul.f32 %v1406, %v1342
    %v1471 = vmul.f32 %v1407, %v1343
    %v1472 = vmul.f32 %v1408, %v1344
    %v1473 = vmul.f32 %v1409, %v1345
    %v1474 = vmul.f32 %v1410, %v1346
    %v1475 = vmul.f32 %v1411, %v1347
    %v1476 = vmul.f32 %v1412, %v1348
    %v1477 = vmul.f32 %v1413, 0.044715
    %v1478 = vmul.f32 %v1414, 0.044715
    %v1479 = vmul.f32 %v1415, 0.044715
    %v1480 = vmul.f32 %v1416, 0.044715
    %v1481 = vmul.f32 %v1417, 0.044715
    %v1482 = vmul.f32 %v1418, 0.044715
    %v1483 = vmul.f32 %v1419, 0.044715
    %v1484 = vmul.f32 %v1420, 0.044715
    %v1485 = vmul.f32 %v1421, 0.044715
    %v1486 = vmul.f32 %v1422, 0.044715
    %v1487 = vmul.f32 %v1423, 0.044715
    %v1488 = vmul.f32 %v1424, 0.044715
    %v1489 = vmul.f32 %v1425, 0.044715
    %v1490 = vmul.f32 %v1426, 0.044715
    %v1491 = vmul.f32 %v1427, 0.044715
    %v1492 = vmul.f32 %v1428, 0.044715
    %v1493 = vmul.f32 %v1429, 0.044715
    %v1494 = vmul.f32 %v1430, 0.044715
    %v1495 = vmul.f32 %v1431, 0.044715
    %v1496 = vmul.f32 %v1432, 0.044715
    %v1497 = vmul.f32 %v1433, 0.044715
    %v1498 = vmul.f32 %v1434, 0.044715
    %v1499 = vmul.f32 %v1435, 0.044715
    %v1500 = vmul.f32 %v1436, 0.044715
    %v1501 = vmul.f32 %v1437, 0.044715
    %v1502 = vmul.f32 %v1438, 0.044715
    %v1503 = vmul.f32 %v1439, 0.044715
    %v1504 = vmul.f32 %v1440, 0.044715
    %v1505 = vmul.f32 %v1441, 0.044715
    %v1506 = vmul.f32 %v1442, 0.044715
    %v1507 = vmul.f32 %v1443, 0.044715
    %v1508 = vmul.f32 %v1444, 0.044715
    %v1509 = vmul.f32 %v1445, 0.044715
    %v1510 = vmul.f32 %v1446, 0.044715
    %v1511 = vmul.f32 %v1447, 0.044715
    %v1512 = vmul.f32 %v1448, 0.044715
    %v1513 = vmul.f32 %v1449, 0.044715
    %v1514 = vmul.f32 %v1450, 0.044715
    %v1515 = vmul.f32 %v1451, 0.044715
    %v1516 = vmul.f32 %v1452, 0.044715
    %v1517 = vmul.f32 %v1453, 0.044715
    %v1518 = vmul.f32 %v1454, 0.044715
    %v1519 = vmul.f32 %v1455, 0.044715
    %v1520 = vmul.f32 %v1456, 0.044715
    %v1521 = vmul.f32 %v1457, 0.044715
    %v1522 = vmul.f32 %v1458, 0.044715
    %v1523 = vmul.f32 %v1459, 0.044715
    %v1524 = vmul.f32 %v1460, 0.044715
    %v1525 = vmul.f32 %v1461, 0.044715
    %v1526 = vmul.f32 %v1462, 0.044715
    %v1527 = vmul.f32 %v1463, 0.044715
    %v1528 = vmul.f32 %v1464, 0.044715
    %v1529 = vmul.f32 %v1465, 0.044715
    %v1530 = vmul.f32 %v1466, 0.044715
    %v1531 = vmul.f32 %v1467, 0.044715
    %v1532 = vmul.f32 %v1468, 0.044715
    %v1533 = vmul.f32 %v1469, 0.044715
    %v1534 = vmul.f32 %v1470, 0.044715
    %v1535 = vmul.f32 %v1471, 0.044715
    %v1536 = vmul.f32 %v1472, 0.044715
    %v1537 = vmul.f32 %v1473, 0.044715
    %v1538 = vmul.f32 %v1474, 0.044715
    %v1539 = vmul.f32 %v1475, 0.044715
    %v1540 = vmul.f32 %v1476, 0.044715
    %v1541 = vadd.f32 %v1285, %v1477
    %v1542 = vadd.f32 %v1286, %v1478
    %v1543 = vadd.f32 %v1287, %v1479
    %v1544 = vadd.f32 %v1288, %v1480
    %v1545 = vadd.f32 %v1289, %v1481
    %v1546 = vadd.f32 %v1290, %v1482
    %v1547 = vadd.f32 %v1291, %v1483
    %v1548 = vadd.f32 %v1292, %v1484
    %v1549 = vadd.f32 %v1293, %v1485
    %v1550 = vadd.f32 %v1294, %v1486
    %v1551 = vadd.f32 %v1295, %v1487
    %v1552 = vadd.f32 %v1296, %v1488
    %v1553 = vadd.f32 %v1297, %v1489
    %v1554 = vadd.f32 %v1298, %v1490
    %v1555 = vadd.f32 %v1299, %v1491
    %v1556 = vadd.f32 %v1300, %v1492
    %v1557 = vadd.f32 %v1301, %v1493
    %v1558 = vadd.f32 %v1302, %v1494
    %v1559 = vadd.f32 %v1303, %v1495
    %v1560 = vadd.f32 %v1304, %v1496
    %v1561 = vadd.f32 %v1305, %v1497
    %v1562 = vadd.f32 %v1306, %v1498
    %v1563 = vadd.f32 %v1307, %v1499
    %v1564 = vadd.f32 %v1308, %v1500
    %v1565 = vadd.f32 %v1309, %v1501
    %v1566 = vadd.f32 %v1310, %v1502
    %v1567 = vadd.f32 %v1311, %v1503
    %v1568 = vadd.f32 %v1312, %v1504
    %v1569 = vadd.f32 %v1313, %v1505
    %v1570 = vadd.f32 %v1314, %v1506
    %v1571 = vadd.f32 %v1315, %v1507
    %v1572 = vadd.f32 %v1316, %v1508
    %v1573 = vadd.f32 %v1317, %v1509
    %v1574 = vadd.f32 %v1318, %v1510
    %v1575 = vadd.f32 %v1319, %v1511
    %v1576 = vadd.f32 %v1320, %v1512
    %v1577 = vadd.f32 %v1321, %v1513
    %v1578 = vadd.f32 %v1322, %v1514
    %v1579 = vadd.f32 %v1323, %v1515
    %v1580 = vadd.f32 %v1324, %v1516
    %v1581 = vadd.f32 %v1325, %v1517
    %v1582 = vadd.f32 %v1326, %v1518
    %v1583 = vadd.f32 %v1327, %v1519
    %v1584 = vadd.f32 %v1328, %v1520
    %v1585 = vadd.f32 %v1329, %v1521
    %v1586 = vadd.f32 %v1330, %v1522
    %v1587 = vadd.f32 %v1331, %v1523
    %v1588 = vadd.f32 %v1332, %v1524
    %v1589 = vadd.f32 %v1333, %v1525
    %v1590 = vadd.f32 %v1334, %v1526
    %v1591 = vadd.f32 %v1335, %v1527
    %v1592 = vadd.f32 %v1336, %v1528
    %v1593 = vadd.f32 %v1337, %v1529
    %v1594 = vadd.f32 %v1338, %v1530
    %v1595 = vadd.f32 %v1339, %v1531
    %v1596 = vadd.f32 %v1340, %v1532
    %v1597 = vadd.f32 %v1341, %v1533
    %v1598 = vadd.f32 %v1342, %v1534
    %v1599 = vadd.f32 %v1343, %v1535
    %v1600 = vadd.f32 %v1344, %v1536
    %v1601 = vadd.f32 %v1345, %v1537
    %v1602 = vadd.f32 %v1346, %v1538
    %v1603 = vadd.f32 %v1347, %v1539
    %v1604 = vadd.f32 %v1348, %v1540
    %v1605 = vmul.f32 %v1541, 0.7978846
    %v1606 = vmul.f32 %v1542, 0.7978846
    %v1607 = vmul.f32 %v1543, 0.7978846
    %v1608 = vmul.f32 %v1544, 0.7978846
    %v1609 = vmul.f32 %v1545, 0.7978846
    %v1610 = vmul.f32 %v1546, 0.7978846
    %v1611 = vmul.f32 %v1547, 0.7978846
    %v1612 = vmul.f32 %v1548, 0.7978846
    %v1613 = vmul.f32 %v1549, 0.7978846
    %v1614 = vmul.f32 %v1550, 0.7978846
    %v1615 = vmul.f32 %v1551, 0.7978846
    %v1616 = vmul.f32 %v1552, 0.7978846
    %v1617 = vmul.f32 %v1553, 0.7978846
    %v1618 = vmul.f32 %v1554, 0.7978846
    %v1619 = vmul.f32 %v1555, 0.7978846
    %v1620 = vmul.f32 %v1556, 0.7978846
    %v1621 = vmul.f32 %v1557, 0.7978846
    %v1622 = vmul.f32 %v1558, 0.7978846
    %v1623 = vmul.f32 %v1559, 0.7978846
    %v1624 = vmul.f32 %v1560, 0.7978846
    %v1625 = vmul.f32 %v1561, 0.7978846
    %v1626 = vmul.f32 %v1562, 0.7978846
    %v1627 = vmul.f32 %v1563, 0.7978846
    %v1628 = vmul.f32 %v1564, 0.7978846
    %v1629 = vmul.f32 %v1565, 0.7978846
    %v1630 = vmul.f32 %v1566, 0.7978846
    %v1631 = vmul.f32 %v1567, 0.7978846
    %v1632 = vmul.f32 %v1568, 0.7978846
    %v1633 = vmul.f32 %v1569, 0.7978846
    %v1634 = vmul.f32 %v1570, 0.7978846
    %v1635 = vmul.f32 %v1571, 0.7978846
    %v1636 = vmul.f32 %v1572, 0.7978846
    %v1637 = vmul.f32 %v1573, 0.7978846
    %v1638 = vmul.f32 %v1574, 0.7978846
    %v1639 = vmul.f32 %v1575, 0.7978846
    %v1640 = vmul.f32 %v1576, 0.7978846
    %v1641 = vmul.f32 %v1577, 0.7978846
    %v1642 = vmul.f32 %v1578, 0.7978846
    %v1643 = vmul.f32 %v1579, 0.7978846
    %v1644 = vmul.f32 %v1580, 0.7978846
    %v1645 = vmul.f32 %v1581, 0.7978846
    %v1646 = vmul.f32 %v1582, 0.7978846
    %v1647 = vmul.f32 %v1583, 0.7978846
    %v1648 = vmul.f32 %v1584, 0.7978846
    %v1649 = vmul.f32 %v1585, 0.7978846
    %v1650 = vmul.f32 %v1586, 0.7978846
    %v1651 = vmul.f32 %v1587, 0.7978846
    %v1652 = vmul.f32 %v1588, 0.7978846
    %v1653 = vmul.f32 %v1589, 0.7978846
    %v1654 = vmul.f32 %v1590, 0.7978846
    %v1655 = vmul.f32 %v1591, 0.7978846
    %v1656 = vmul.f32 %v1592, 0.7978846
    %v1657 = vmul.f32 %v1593, 0.7978846
    %v1658 = vmul.f32 %v1594, 0.7978846
    %v1659 = vmul.f32 %v1595, 0.7978846
    %v1660 = vmul.f32 %v1596, 0.7978846
    %v1661 = vmul.f32 %v1597, 0.7978846
    %v1662 = vmul.f32 %v1598, 0.7978846
    %v1663 = vmul.f32 %v1599, 0.7978846
    %v1664 = vmul.f32 %v1600, 0.7978846
    %v1665 = vmul.f32 %v1601, 0.7978846
    %v1666 = vmul.f32 %v1602, 0.7978846
    %v1667 = vmul.f32 %v1603, 0.7978846
    %v1668 = vmul.f32 %v1604, 0.7978846
    %v1669 = vmul.f32 %v1285, 0.5
    %v1670 = vmul.f32 %v1286, 0.5
    %v1671 = vmul.f32 %v1287, 0.5
    %v1672 = vmul.f32 %v1288, 0.5
    %v1673 = vmul.f32 %v1289, 0.5
    %v1674 = vmul.f32 %v1290, 0.5
    %v1675 = vmul.f32 %v1291, 0.5
    %v1676 = vmul.f32 %v1292, 0.5
    %v1677 = vmul.f32 %v1293, 0.5
    %v1678 = vmul.f32 %v1294, 0.5
    %v1679 = vmul.f32 %v1295, 0.5
    %v1680 = vmul.f32 %v1296, 0.5
    %v1681 = vmul.f32 %v1297, 0.5
    %v1682 = vmul.f32 %v1298, 0.5
    %v1683 = vmul.f32 %v1299, 0.5
    %v1684 = vmul.f32 %v1300, 0.5
    %v1685 = vmul.f32 %v1301, 0.5
    %v1686 = vmul.f32 %v1302, 0.5
    %v1687 = vmul.f32 %v1303, 0.5
    %v1688 = vmul.f32 %v1304, 0.5
    %v1689 = vmul.f32 %v1305, 0.5
    %v1690 = vmul.f32 %v1306, 0.5
    %v1691 = vmul.f32 %v1307, 0.5
    %v1692 = vmul.f32 %v1308, 0.5
    %v1693 = vmul.f32 %v1309, 0.5
    %v1694 = vmul.f32 %v1310, 0.5
    %v1695 = vmul.f32 %v1311, 0.5
    %v1696 = vmul.f32 %v1312, 0.5
    %v1697 = vmul.f32 %v1313, 0.5
    %v1698 = vmul.f32 %v1314, 0.5
    %v1699 = vmul.f32 %v1315, 0.5
    %v1700 = vmul.f32 %v1316, 0.5
    %v1701 = vmul.f32 %v1317, 0.5
    %v1702 = vmul.f32 %v1318, 0.5
    %v1703 = vmul.f32 %v1319, 0.5
    %v1704 = vmul.f32 %v1320, 0.5
    %v1705 = vmul.f32 %v1321, 0.5
    %v1706 = vmul.f32 %v1322, 0.5
    %v1707 = vmul.f32 %v1323, 0.5
    %v1708 = vmul.f32 %v1324, 0.5
    %v1709 = vmul.f32 %v1325, 0.5
    %v1710 = vmul.f32 %v1326, 0.5
    %v1711 = vmul.f32 %v1327, 0.5
    %v1712 = vmul.f32 %v1328, 0.5
    %v1713 = vmul.f32 %v1329, 0.5
    %v1714 = vmul.f32 %v1330, 0.5
    %v1715 = vmul.f32 %v1331, 0.5
    %v1716 = vmul.f32 %v1332, 0.5
    %v1717 = vmul.f32 %v1333, 0.5
    %v1718 = vmul.f32 %v1334, 0.5
    %v1719 = vmul.f32 %v1335, 0.5
    %v1720 = vmul.f32 %v1336, 0.5
    %v1721 = vmul.f32 %v1337, 0.5
    %v1722 = vmul.f32 %v1338, 0.5
    %v1723 = vmul.f32 %v1339, 0.5
    %v1724 = vmul.f32 %v1340, 0.5
    %v1725 = vmul.f32 %v1341, 0.5
    %v1726 = vmul.f32 %v1342, 0.5
    %v1727 = vmul.f32 %v1343, 0.5
    %v1728 = vmul.f32 %v1344, 0.5
    %v1729 = vmul.f32 %v1345, 0.5
    %v1730 = vmul.f32 %v1346, 0.5
    %v1731 = vmul.f32 %v1347, 0.5
    %v1732 = vmul.f32 %v1348, 0.5
    %v1733 = vtanh.pop %v1605
    %v1734 = vtanh.pop %v1606
    %v1735 = vtanh.pop %v1607
    %v1736 = vtanh.pop %v1608
    %v1737 = vtanh.pop %v1609
    %v1738 = vtanh.pop %v1610
    %v1739 = vtanh.pop %v1611
    %v1740 = vtanh.pop %v1612
    %v1741 = vtanh.pop %v1613
    %v1742 = vtanh.pop %v1614
    %v1743 = vtanh.pop %v1615
    %v1744 = vtanh.pop %v1616
    %v1745 = vtanh.pop %v1617
    %v1746 = vtanh.pop %v1618
    %v1747 = vtanh.pop %v1619
    %v1748 = vtanh.pop %v1620
    %v1749 = vtanh.pop %v1621
    %v1750 = vtanh.pop %v1622
    %v1751 = vtanh.pop %v1623
    %v1752 = vtanh.pop %v1624
    %v1753 = vtanh.pop %v1625
    %v1754 = vtanh.pop %v1626
    %v1755 = vtanh.pop %v1627
    %v1756 = vtanh.pop %v1628
    %v1757 = vtanh.pop %v1629
    %v1758 = vtanh.pop %v1630
    %v1759 = vtanh.pop %v1631
    %v1760 = vtanh.pop %v1632
    %v1761 = vtanh.pop %v1633
    %v1762 = vtanh.pop %v1634
    %v1763 = vtanh.pop %v1635
    %v1764 = vtanh.pop %v1636
    %v1765 = vtanh.pop %v1637
    %v1766 = vtanh.pop %v1638
    %v1767 = vtanh.pop %v1639
    %v1768 = vtanh.pop %v1640
    %v1769 = vtanh.pop %v1641
    %v1770 = vtanh.pop %v1642
    %v1771 = vtanh.pop %v1643
    %v1772 = vtanh.pop %v1644
    %v1773 = vtanh.pop %v1645
    %v1774 = vtanh.pop %v1646
    %v1775 = vtanh.pop %v1647
    %v1776 = vtanh.pop %v1648
    %v1777 = vtanh.pop %v1649
    %v1778 = vtanh.pop %v1650
    %v1779 = vtanh.pop %v1651
    %v1780 = vtanh.pop %v1652
    %v1781 = vtanh.pop %v1653
    %v1782 = vtanh.pop %v1654
    %v1783 = vtanh.pop %v1655
    %v1784 = vtanh.pop %v1656
    %v1785 = vtanh.pop %v1657
    %v1786 = vtanh.pop %v1658
    %v1787 = vtanh.pop %v1659
    %v1788 = vtanh.pop %v1660
    %v1789 = vtanh.pop %v1661
    %v1790 = vtanh.pop %v1662
    %v1791 = vtanh.pop %v1663
    %v1792 = vtanh.pop %v1664
    %v1793 = vtanh.pop %v1665
    %v1794 = vtanh.pop %v1666
    %v1795 = vtanh.pop %v1667
    %v1796 = vtanh.pop %v1668
    %v1797 = vadd.f32 %v1733, 1.0
    %v1798 = vadd.f32 %v1734, 1.0
    %v1799 = vadd.f32 %v1735, 1.0
    %v1800 = vadd.f32 %v1736, 1.0
    %v1801 = vadd.f32 %v1737, 1.0
    %v1802 = vadd.f32 %v1738, 1.0
    %v1803 = vadd.f32 %v1739, 1.0
    %v1804 = vadd.f32 %v1740, 1.0
    %v1805 = vadd.f32 %v1741, 1.0
    %v1806 = vadd.f32 %v1742, 1.0
    %v1807 = vadd.f32 %v1743, 1.0
    %v1808 = vadd.f32 %v1744, 1.0
    %v1809 = vadd.f32 %v1745, 1.0
    %v1810 = vadd.f32 %v1746, 1.0
    %v1811 = vadd.f32 %v1747, 1.0
    %v1812 = vadd.f32 %v1748, 1.0
    %v1813 = vadd.f32 %v1749, 1.0
    %v1814 = vadd.f32 %v1750, 1.0
    %v1815 = vadd.f32 %v1751, 1.0
    %v1816 = vadd.f32 %v1752, 1.0
    %v1817 = vadd.f32 %v1753, 1.0
    %v1818 = vadd.f32 %v1754, 1.0
    %v1819 = vadd.f32 %v1755, 1.0
    %v1820 = vadd.f32 %v1756, 1.0
    %v1821 = vadd.f32 %v1757, 1.0
    %v1822 = vadd.f32 %v1758, 1.0
    %v1823 = vadd.f32 %v1759, 1.0
    %v1824 = vadd.f32 %v1760, 1.0
    %v1825 = vadd.f32 %v1761, 1.0
    %v1826 = vadd.f32 %v1762, 1.0
    %v1827 = vadd.f32 %v1763, 1.0
    %v1828 = vadd.f32 %v1764, 1.0
    %v1829 = vadd.f32 %v1765, 1.0
    %v1830 = vadd.f32 %v1766, 1.0
    %v1831 = vadd.f32 %v1767, 1.0
    %v1832 = vadd.f32 %v1768, 1.0
    %v1833 = vadd.f32 %v1769, 1.0
    %v1834 = vadd.f32 %v1770, 1.0
    %v1835 = vadd.f32 %v1771, 1.0
    %v1836 = vadd.f32 %v1772, 1.0
    %v1837 = vadd.f32 %v1773, 1.0
    %v1838 = vadd.f32 %v1774, 1.0
    %v1839 = vadd.f32 %v1775, 1.0
    %v1840 = vadd.f32 %v1776, 1.0
    %v1841 = vadd.f32 %v1777, 1.0
    %v1842 = vadd.f32 %v1778, 1.0
    %v1843 = vadd.f32 %v1779, 1.0
    %v1844 = vadd.f32 %v1780, 1.0
    %v1845 = vadd.f32 %v1781, 1.0
    %v1846 = vadd.f32 %v1782, 1.0
    %v1847 = vadd.f32 %v1783, 1.0
    %v1848 = vadd.f32 %v1784, 1.0
    %v1849 = vadd.f32 %v1785, 1.0
    %v1850 = vadd.f32 %v1786, 1.0
    %v1851 = vadd.f32 %v1787, 1.0
    %v1852 = vadd.f32 %v1788, 1.0
    %v1853 = vadd.f32 %v1789, 1.0
    %v1854 = vadd.f32 %v1790, 1.0
    %v1855 = vadd.f32 %v1791, 1.0
    %v1856 = vadd.f32 %v1792, 1.0
    %v1857 = vadd.f32 %v1793, 1.0
    %v1858 = vadd.f32 %v1794, 1.0
    %v1859 = vadd.f32 %v1795, 1.0
    %v1860 = vadd.f32 %v1796, 1.0
    %v1861 = vmul.f32 %v1669, %v1797
    %v1862 = vmul.f32 %v1670, %v1798
    %v1863 = vmul.f32 %v1671, %v1799
    %v1864 = vmul.f32 %v1672, %v1800
    %v1865 = vmul.f32 %v1673, %v1801
    %v1866 = vmul.f32 %v1674, %v1802
    %v1867 = vmul.f32 %v1675, %v1803
    %v1868 = vmul.f32 %v1676, %v1804
    %v1869 = vmul.f32 %v1677, %v1805
    %v1870 = vmul.f32 %v1678, %v1806
    %v1871 = vmul.f32 %v1679, %v1807
    %v1872 = vmul.f32 %v1680, %v1808
    %v1873 = vmul.f32 %v1681, %v1809
    %v1874 = vmul.f32 %v1682, %v1810
    %v1875 = vmul.f32 %v1683, %v1811
    %v1876 = vmul.f32 %v1684, %v1812
    %v1877 = vmul.f32 %v1685, %v1813
    %v1878 = vmul.f32 %v1686, %v1814
    %v1879 = vmul.f32 %v1687, %v1815
    %v1880 = vmul.f32 %v1688, %v1816
    %v1881 = vmul.f32 %v1689, %v1817
    %v1882 = vmul.f32 %v1690, %v1818
    %v1883 = vmul.f32 %v1691, %v1819
    %v1884 = vmul.f32 %v1692, %v1820
    %v1885 = vmul.f32 %v1693, %v1821
    %v1886 = vmul.f32 %v1694, %v1822
    %v1887 = vmul.f32 %v1695, %v1823
    %v1888 = vmul.f32 %v1696, %v1824
    %v1889 = vmul.f32 %v1697, %v1825
    %v1890 = vmul.f32 %v1698, %v1826
    %v1891 = vmul.f32 %v1699, %v1827
    %v1892 = vmul.f32 %v1700, %v1828
    %v1893 = vmul.f32 %v1701, %v1829
    %v1894 = vmul.f32 %v1702, %v1830
    %v1895 = vmul.f32 %v1703, %v1831
    %v1896 = vmul.f32 %v1704, %v1832
    %v1897 = vmul.f32 %v1705, %v1833
    %v1898 = vmul.f32 %v1706, %v1834
    %v1899 = vmul.f32 %v1707, %v1835
    %v1900 = vmul.f32 %v1708, %v1836
    %v1901 = vmul.f32 %v1709, %v1837
    %v1902 = vmul.f32 %v1710, %v1838
    %v1903 = vmul.f32 %v1711, %v1839
    %v1904 = vmul.f32 %v1712, %v1840
    %v1905 = vmul.f32 %v1713, %v1841
    %v1906 = vmul.f32 %v1714, %v1842
    %v1907 = vmul.f32 %v1715, %v1843
    %v1908 = vmul.f32 %v1716, %v1844
    %v1909 = vmul.f32 %v1717, %v1845
    %v1910 = vmul.f32 %v1718, %v1846
    %v1911 = vmul.f32 %v1719, %v1847
    %v1912 = vmul.f32 %v1720, %v1848
    %v1913 = vmul.f32 %v1721, %v1849
    %v1914 = vmul.f32 %v1722, %v1850
    %v1915 = vmul.f32 %v1723, %v1851
    %v1916 = vmul.f32 %v1724, %v1852
    %v1917 = vmul.f32 %v1725, %v1853
    %v1918 = vmul.f32 %v1726, %v1854
    %v1919 = vmul.f32 %v1727, %v1855
    %v1920 = vmul.f32 %v1728, %v1856
    %v1921 = vmul.f32 %v1729, %v1857
    %v1922 = vmul.f32 %v1730, %v1858
    %v1923 = vmul.f32 %v1731, %v1859
    %v1924 = vmul.f32 %v1732, %v1860
    %v1925 = vld [vmem:[%s2] sm:$0xff]
    %v1926 = vld [vmem:[%s2 + $0x8] sm:$0xff]
    %v1927 = vld [vmem:[%s2 + $0x10] sm:$0xff]
    %v1928 = vld [vmem:[%s2 + $0x18] sm:$0xff]
    %v1929 = vld [vmem:[%s2 + $0x20] sm:$0xff]
    %v1930 = vld [vmem:[%s2 + $0x28] sm:$0xff]
    %v1931 = vld [vmem:[%s2 + $0x30] sm:$0xff]
    %v1932 = vld [vmem:[%s2 + $0x38] sm:$0xff]
    %v1933 = vld [vmem:[%s2 + $0x40] sm:$0xff]
    %v1934 = vld [vmem:[%s2 + $0x48] sm:$0xff]
    %v1935 = vld [vmem:[%s2 + $0x50] sm:$0xff]
    %v1936 = vld [vmem:[%s2 + $0x58] sm:$0xff]
    %v1937 = vld [vmem:[%s2 + $0x60] sm:$0xff]
    %v1938 = vld [vmem:[%s2 + $0x68] sm:$0xff]
    %v1939 = vld [vmem:[%s2 + $0x70] sm:$0xff]
    %v1940 = vld [vmem:[%s2 + $0x78] sm:$0xff]
    %v1941 = vld [vmem:[%s8] sm:$0xff]
    %v1942 = vld [vmem:[%s8 + $0x8] sm:$0xff]
    %v1943 = vld [vmem:[%s8 + $0x10] sm:$0xff]
    %v1944 = vld [vmem:[%s8 + $0x18] sm:$0xff]
    %v1945 = vld [vmem:[%s8 + $0x20] sm:$0x1]
    %v1946 = vld [vmem:[%s8 + $0x28] sm:$0x1]
    %v1947 = vld [vmem:[%s8 + $0x30] sm:$0x1]
    %v1948 = vld [vmem:[%s8 + $0x38] sm:$0x1]
    %1949 = vrot.lane.b32.xlu0 %v1861, 17
    %v1950 = vpop.permute.xlu0 %1949
    %1951 = vrot.lane.b32.xlu0 %v1865, 17
    %v1952 = vpop.permute.xlu0 %1951
    %1953 = vrot.lane.b32.xlu0 %v1869, 17
    %v1954 = vpop.permute.xlu0 %1953
    %1955 = vrot.lane.b32.xlu0 %v1873, 17
    %v1956 = vpop.permute.xlu0 %1955
    %1957 = vrot.lane.b32.xlu0 %v1877, 17
    %v1958 = vpop.permute.xlu0 %1957
    %1959 = vrot.lane.b32.xlu0 %v1881, 17
    %v1960 = vpop.permute.xlu0 %1959
    %1961 = vrot.lane.b32.xlu0 %v1885, 17
    %v1962 = vpop.permute.xlu0 %1961
    %1963 = vrot.lane.b32.xlu0 %v1889, 17
    %v1964 = vpop.permute.xlu0 %1963
    %1965 = vrot.lane.b32.xlu0 %v1893, 17
    %v1966 = vpop.permute.xlu0 %1965
    %1967 = vrot.lane.b32.xlu0 %v1897, 17
    %v1968 = vpop.permute.xlu0 %1967
    %1969 = vrot.lane.b32.xlu0 %v1901, 17
    %v1970 = vpop.permute.xlu0 %1969
    %1971 = vrot.lane.b32.xlu0 %v1905, 17
    %v1972 = vpop.permute.xlu0 %1971
    %1973 = vrot.lane.b32.xlu0 %v1909, 17
    %v1974 = vpop.permute.xlu0 %1973
    %1975 = vrot.lane.b32.xlu0 %v1913, 17
    %v1976 = vpop.permute.xlu0 %1975
    %1977 = vrot.lane.b32.xlu0 %v1917, 17
    %v1978 = vpop.permute.xlu0 %1977
    %1979 = vrot.lane.b32.xlu0 %v1921, 17
    %v1980 = vpop.permute.xlu0 %1979
    %1981 = vrot.lane.b32.xlu0 %v1862, 17
    %v1982 = vpop.permute.xlu0 %1981
    %1983 = vrot.lane.b32.xlu0 %v1866, 17
    %v1984 = vpop.permute.xlu0 %1983
    %1985 = vrot.lane.b32.xlu0 %v1870, 17
    %v1986 = vpop.permute.xlu0 %1985
    %1987 = vrot.lane.b32.xlu0 %v1874, 17
    %v1988 = vpop.permute.xlu0 %1987
    %1989 = vrot.lane.b32.xlu0 %v1878, 17
    %v1990 = vpop.permute.xlu0 %1989
    %1991 = vrot.lane.b32.xlu0 %v1882, 17
    %v1992 = vpop.permute.xlu0 %1991
    %1993 = vrot.lane.b32.xlu0 %v1886, 17
    %v1994 = vpop.permute.xlu0 %1993
    %1995 = vrot.lane.b32.xlu0 %v1890, 17
    %v1996 = vpop.permute.xlu0 %1995
    %1997 = vrot.lane.b32.xlu0 %v1894, 17
    %v1998 = vpop.permute.xlu0 %1997
    %1999 = vrot.lane.b32.xlu0 %v1898, 17
    %v2000 = vpop.permute.xlu0 %1999
    %2001 = vrot.lane.b32.xlu0 %v1902, 17
    %v2002 = vpop.permute.xlu0 %2001
    %2003 = vrot.lane.b32.xlu0 %v1906, 17
    %v2004 = vpop.permute.xlu0 %2003
    %2005 = vrot.lane.b32.xlu0 %v1910, 17
    %v2006 = vpop.permute.xlu0 %2005
    %2007 = vrot.lane.b32.xlu0 %v1914, 17
    %v2008 = vpop.permute.xlu0 %2007
    %2009 = vrot.lane.b32.xlu0 %v1918, 17
    %v2010 = vpop.permute.xlu0 %2009
    %2011 = vrot.lane.b32.xlu0 %v1922, 17
    %v2012 = vpop.permute.xlu0 %2011
    %2013 = vrot.lane.b32.xlu0 %v1863, 17
    %v2014 = vpop.permute.xlu0 %2013
    %2015 = vrot.lane.b32.xlu0 %v1867, 17
    %v2016 = vpop.permute.xlu0 %2015
    %2017 = vrot.lane.b32.xlu0 %v1871, 17
    %v2018 = vpop.permute.xlu0 %2017
    %2019 = vrot.lane.b32.xlu0 %v1875, 17
    %v2020 = vpop.permute.xlu0 %2019
    %2021 = vrot.lane.b32.xlu0 %v1879, 17
    %v2022 = vpop.permute.xlu0 %2021
    %2023 = vrot.lane.b32.xlu0 %v1883, 17
    %v2024 = vpop.permute.xlu0 %2023
    %2025 = vrot.lane.b32.xlu0 %v1887, 17
    %v2026 = vpop.permute.xlu0 %2025
    %2027 = vrot.lane.b32.xlu0 %v1891, 17
    %v2028 = vpop.permute.xlu0 %2027
    %2029 = vrot.lane.b32.xlu0 %v1895, 17
    %v2030 = vpop.permute.xlu0 %2029
    %2031 = vrot.lane.b32.xlu0 %v1899, 17
    %v2032 = vpop.permute.xlu0 %2031
    %2033 = vrot.lane.b32.xlu0 %v1903, 17
    %v2034 = vpop.permute.xlu0 %2033
    %2035 = vrot.lane.b32.xlu0 %v1907, 17
    %v2036 = vpop.permute.xlu0 %2035
    %2037 = vrot.lane.b32.xlu0 %v1911, 17
    %v2038 = vpop.permute.xlu0 %2037
    %2039 = vrot.lane.b32.xlu0 %v1915, 17
    %v2040 = vpop.permute.xlu0 %2039
    %2041 = vrot.lane.b32.xlu0 %v1919, 17
    %v2042 = vpop.permute.xlu0 %2041
    %2043 = vrot.lane.b32.xlu0 %v1923, 17
    %v2044 = vpop.permute.xlu0 %2043
    %2045 = vrot.lane.b32.xlu0 %v1864, 17
    %v2046 = vpop.permute.xlu0 %2045
    %2047 = vrot.lane.b32.xlu0 %v1868, 17
    %v2048 = vpop.permute.xlu0 %2047
    %2049 = vrot.lane.b32.xlu0 %v1872, 17
    %v2050 = vpop.permute.xlu0 %2049
    %2051 = vrot.lane.b32.xlu0 %v1876, 17
    %v2052 = vpop.permute.xlu0 %2051
    %2053 = vrot.lane.b32.xlu0 %v1880, 17
    %v2054 = vpop.permute.xlu0 %2053
    %2055 = vrot.lane.b32.xlu0 %v1884, 17
    %v2056 = vpop.permute.xlu0 %2055
    %2057 = vrot.lane.b32.xlu0 %v1888, 17
    %v2058 = vpop.permute.xlu0 %2057
    %2059 = vrot.lane.b32.xlu0 %v1892, 17
    %v2060 = vpop.permute.xlu0 %2059
    %2061 = vrot.lane.b32.xlu0 %v1896, 17
    %v2062 = vpop.permute.xlu0 %2061
    %2063 = vrot.lane.b32.xlu0 %v1900, 17
    %v2064 = vpop.permute.xlu0 %2063
    %2065 = vrot.lane.b32.xlu0 %v1904, 17
    %v2066 = vpop.permute.xlu0 %2065
    %2067 = vrot.lane.b32.xlu0 %v1908, 17
    %v2068 = vpop.permute.xlu0 %2067
    %2069 = vrot.lane.b32.xlu0 %v1912, 17
    %v2070 = vpop.permute.xlu0 %2069
    %2071 = vrot.lane.b32.xlu0 %v1916, 17
    %v2072 = vpop.permute.xlu0 %2071
    %2073 = vrot.lane.b32.xlu0 %v1920, 17
    %v2074 = vpop.permute.xlu0 %2073
    %2075 = vrot.lane.b32.xlu0 %v1924, 17
    %v2076 = vpop.permute.xlu0 %2075
    %v2077 = vlaneseq
    %v2078 = vand.u32 %v2077, 127
    %vm2079 = vcmp.lt.s32.totalorder %v2078, 17
    %v2080 = vsel %vm2079, %v2014, %v2046
    %v2081 = vsel %vm2079, %v2016, %v2048
    %v2082 = vsel %vm2079, %v2018, %v2050
    %v2083 = vsel %vm2079, %v2020, %v2052
    %v2084 = vsel %vm2079, %v2022, %v2054
    %v2085 = vsel %vm2079, %v2024, %v2056
    %v2086 = vsel %vm2079, %v2026, %v2058
    %v2087 = vsel %vm2079, %v2028, %v2060
    %v2088 = vsel %vm2079, %v2030, %v2062
    %v2089 = vsel %vm2079, %v2032, %v2064
    %v2090 = vsel %vm2079, %v2034, %v2066
    %v2091 = vsel %vm2079, %v2036, %v2068
    %v2092 = vsel %vm2079, %v2038, %v2070
    %v2093 = vsel %vm2079, %v2040, %v2072
    %v2094 = vsel %vm2079, %v2042, %v2074
    %v2095 = vsel %vm2079, %v2044, %v2076
    %v2096 = vsel %vm2079, %v1982, %v2014
    %v2097 = vsel %vm2079, %v1984, %v2016
    %v2098 = vsel %vm2079, %v1986, %v2018
    %v2099 = vsel %vm2079, %v1988, %v2020
    %v2100 = vsel %vm2079, %v1990, %v2022
    %v2101 = vsel %vm2079, %v1992, %v2024
    %v2102 = vsel %vm2079, %v1994, %v2026
    %v2103 = vsel %vm2079, %v1996, %v2028
    %v2104 = vsel %vm2079, %v1998, %v2030
    %v2105 = vsel %vm2079, %v2000, %v2032
    %v2106 = vsel %vm2079, %v2002, %v2034
    %v2107 = vsel %vm2079, %v2004, %v2036
    %v2108 = vsel %vm2079, %v2006, %v2038
    %v2109 = vsel %vm2079, %v2008, %v2040
    %v2110 = vsel %vm2079, %v2010, %v2042
    %v2111 = vsel %vm2079, %v2012, %v2044
    %v2112 = vsel %vm2079, %v1950, %v1982
    %v2113 = vsel %vm2079, %v1952, %v1984
    %v2114 = vsel %vm2079, %v1954, %v1986
    %v2115 = vsel %vm2079, %v1956, %v1988
    %v2116 = vsel %vm2079, %v1958, %v1990
    %v2117 = vsel %vm2079, %v1960, %v1992
    %v2118 = vsel %vm2079, %v1962, %v1994
    %v2119 = vsel %vm2079, %v1964, %v1996
    %v2120 = vsel %vm2079, %v1966, %v1998
    %v2121 = vsel %vm2079, %v1968, %v2000
    %v2122 = vsel %vm2079, %v1970, %v2002
    %v2123 = vsel %vm2079, %v1972, %v2004
    %v2124 = vsel %vm2079, %v1974, %v2006
    %v2125 = vsel %vm2079, %v1976, %v2008
    %v2126 = vsel %vm2079, %v1978, %v2010
    %v2127 = vsel %vm2079, %v1980, %v2012
    %v2128 = vsel %vm2079, %v2046, %v1950
    %v2129 = vsel %vm2079, %v2048, %v1952
    %v2130 = vsel %vm2079, %v2050, %v1954
    %v2131 = vsel %vm2079, %v2052, %v1956
    %v2132 = vsel %vm2079, %v2054, %v1958
    %v2133 = vsel %vm2079, %v2056, %v1960
    %v2134 = vsel %vm2079, %v2058, %v1962
    %v2135 = vsel %vm2079, %v2060, %v1964
    %v2136 = vsel %vm2079, %v2062, %v1966
    %v2137 = vsel %vm2079, %v2064, %v1968
    %v2138 = vsel %vm2079, %v2066, %v1970
    %v2139 = vsel %vm2079, %v2068, %v1972
    %v2140 = vsel %vm2079, %v2070, %v1974
    %v2141 = vsel %vm2079, %v2072, %v1976
    %v2142 = vsel %vm2079, %v2074, %v1978
    %v2143 = vsel %vm2079, %v2076, %v1980
    %v2144 = vlaneseq
    %v2145 = vshrl.u32 %v2144, 7
    %v2146 = vsub.s32 0, %v2145
    %v2147 = vrot.slane %v1941, %v2146
    %v2148 = vlaneseq
    %v2149 = vshrl.u32 %v2148, 7
    %v2150 = vsub.s32 0, %v2149
    %v2151 = vrot.slane %v1942, %v2150
    %v2152 = vlaneseq
    %v2153 = vshrl.u32 %v2152, 7
    %v2154 = vsub.s32 0, %v2153
    %v2155 = vrot.slane %v1943, %v2154
    %v2156 = vlaneseq
    %v2157 = vshrl.u32 %v2156, 7
    %v2158 = vsub.s32 0, %v2157
    %v2159 = vrot.slane %v1944, %v2158
    %v2160 = vmul.f32 %v2128, %v2147
    %v2161 = vmul.f32 %v2112, %v2151
    %v2162 = vmul.f32 %v2096, %v2155
    %v2163 = vmul.f32 %v2080, %v2159
    %v2164 = vmul.f32 %v2129, %v2147
    %v2165 = vmul.f32 %v2113, %v2151
    %v2166 = vmul.f32 %v2097, %v2155
    %v2167 = vmul.f32 %v2081, %v2159
    %v2168 = vmul.f32 %v2130, %v2147
    %v2169 = vmul.f32 %v2114, %v2151
    %v2170 = vmul.f32 %v2098, %v2155
    %v2171 = vmul.f32 %v2082, %v2159
    %v2172 = vmul.f32 %v2131, %v2147
    %v2173 = vmul.f32 %v2115, %v2151
    %v2174 = vmul.f32 %v2099, %v2155
    %v2175 = vmul.f32 %v2083, %v2159
    %v2176 = vmul.f32 %v2132, %v2147
    %v2177 = vmul.f32 %v2116, %v2151
    %v2178 = vmul.f32 %v2100, %v2155
    %v2179 = vmul.f32 %v2084, %v2159
    %v2180 = vmul.f32 %v2133, %v2147
    %v2181 = vmul.f32 %v2117, %v2151
    %v2182 = vmul.f32 %v2101, %v2155
    %v2183 = vmul.f32 %v2085, %v2159
    %v2184 = vmul.f32 %v2134, %v2147
    %v2185 = vmul.f32 %v2118, %v2151
    %v2186 = vmul.f32 %v2102, %v2155
    %v2187 = vmul.f32 %v2086, %v2159
    %v2188 = vmul.f32 %v2135, %v2147
    %v2189 = vmul.f32 %v2119, %v2151
    %v2190 = vmul.f32 %v2103, %v2155
    %v2191 = vmul.f32 %v2087, %v2159
    %v2192 = vmul.f32 %v2136, %v2147
    %v2193 = vmul.f32 %v2120, %v2151
    %v2194 = vmul.f32 %v2104, %v2155
    %v2195 = vmul.f32 %v2088, %v2159
    %v2196 = vmul.f32 %v2137, %v2147
    %v2197 = vmul.f32 %v2121, %v2151
    %v2198 = vmul.f32 %v2105, %v2155
    %v2199 = vmul.f32 %v2089, %v2159
    %v2200 = vmul.f32 %v2138, %v2147
    %v2201 = vmul.f32 %v2122, %v2151
    %v2202 = vmul.f32 %v2106, %v2155
    %v2203 = vmul.f32 %v2090, %v2159
    %v2204 = vmul.f32 %v2139, %v2147
    %v2205 = vmul.f32 %v2123, %v2151
    %v2206 = vmul.f32 %v2107, %v2155
    %v2207 = vmul.f32 %v2091, %v2159
    %v2208 = vmul.f32 %v2140, %v2147
    %v2209 = vmul.f32 %v2124, %v2151
    %v2210 = vmul.f32 %v2108, %v2155
    %v2211 = vmul.f32 %v2092, %v2159
    %v2212 = vmul.f32 %v2141, %v2147
    %v2213 = vmul.f32 %v2125, %v2151
    %v2214 = vmul.f32 %v2109, %v2155
    %v2215 = vmul.f32 %v2093, %v2159
    %v2216 = vmul.f32 %v2142, %v2147
    %v2217 = vmul.f32 %v2126, %v2151
    %v2218 = vmul.f32 %v2110, %v2155
    %v2219 = vmul.f32 %v2094, %v2159
    %v2220 = vmul.f32 %v2143, %v2147
    %v2221 = vmul.f32 %v2127, %v2151
    %v2222 = vmul.f32 %v2111, %v2155
    %v2223 = vmul.f32 %v2095, %v2159
    %2225 = vset.pattern.permute.xlu0 0
    %2226 = vperm.xlu0 %2225, %v1925
    %v2227 = vpop.permute.xlu0 %2226
    %2230 = vset.pattern.permute.xlu0 0
    %2231 = vperm.xlu0 %2230, %v1926
    %v2232 = vpop.permute.xlu0 %2231
    %2235 = vset.pattern.permute.xlu0 0
    %2236 = vperm.xlu0 %2235, %v1927
    %v2237 = vpop.permute.xlu0 %2236
    %2240 = vset.pattern.permute.xlu0 0
    %2241 = vperm.xlu0 %2240, %v1928
    %v2242 = vpop.permute.xlu0 %2241
    %2245 = vset.pattern.permute.xlu0 0
    %2246 = vperm.xlu0 %2245, %v1929
    %v2247 = vpop.permute.xlu0 %2246
    %2250 = vset.pattern.permute.xlu0 0
    %2251 = vperm.xlu0 %2250, %v1930
    %v2252 = vpop.permute.xlu0 %2251
    %2255 = vset.pattern.permute.xlu0 0
    %2256 = vperm.xlu0 %2255, %v1931
    %v2257 = vpop.permute.xlu0 %2256
    %2260 = vset.pattern.permute.xlu0 0
    %2261 = vperm.xlu0 %2260, %v1932
    %v2262 = vpop.permute.xlu0 %2261
    %2265 = vset.pattern.permute.xlu0 0
    %2266 = vperm.xlu0 %2265, %v1933
    %v2267 = vpop.permute.xlu0 %2266
    %2270 = vset.pattern.permute.xlu0 0
    %2271 = vperm.xlu0 %2270, %v1934
    %v2272 = vpop.permute.xlu0 %2271
    %2275 = vset.pattern.permute.xlu0 0
    %2276 = vperm.xlu0 %2275, %v1935
    %v2277 = vpop.permute.xlu0 %2276
    %2280 = vset.pattern.permute.xlu0 0
    %2281 = vperm.xlu0 %2280, %v1936
    %v2282 = vpop.permute.xlu0 %2281
    %2285 = vset.pattern.permute.xlu0 0
    %2286 = vperm.xlu0 %2285, %v1937
    %v2287 = vpop.permute.xlu0 %2286
    %2290 = vset.pattern.permute.xlu0 0
    %2291 = vperm.xlu0 %2290, %v1938
    %v2292 = vpop.permute.xlu0 %2291
    %2295 = vset.pattern.permute.xlu0 0
    %2296 = vperm.xlu0 %2295, %v1939
    %v2297 = vpop.permute.xlu0 %2296
    %2300 = vset.pattern.permute.xlu0 0
    %2301 = vperm.xlu0 %2300, %v1940
    %v2302 = vpop.permute.xlu0 %2301
    %v2304 = vmul.f32 %v2160, %v2227
    %v2305 = vmul.f32 %v2161, %v2227
    %v2306 = vmul.f32 %v2162, %v2227
    %v2307 = vmul.f32 %v2163, %v2227
    %v2308 = vmul.f32 %v2164, %v2232
    %v2309 = vmul.f32 %v2165, %v2232
    %v2310 = vmul.f32 %v2166, %v2232
    %v2311 = vmul.f32 %v2167, %v2232
    %v2312 = vmul.f32 %v2168, %v2237
    %v2313 = vmul.f32 %v2169, %v2237
    %v2314 = vmul.f32 %v2170, %v2237
    %v2315 = vmul.f32 %v2171, %v2237
    %v2316 = vmul.f32 %v2172, %v2242
    %v2317 = vmul.f32 %v2173, %v2242
    %v2318 = vmul.f32 %v2174, %v2242
    %v2319 = vmul.f32 %v2175, %v2242
    %v2320 = vmul.f32 %v2176, %v2247
    %v2321 = vmul.f32 %v2177, %v2247
    %v2322 = vmul.f32 %v2178, %v2247
    %v2323 = vmul.f32 %v2179, %v2247
    %v2324 = vmul.f32 %v2180, %v2252
    %v2325 = vmul.f32 %v2181, %v2252
    %v2326 = vmul.f32 %v2182, %v2252
    %v2327 = vmul.f32 %v2183, %v2252
    %v2328 = vmul.f32 %v2184, %v2257
    %v2329 = vmul.f32 %v2185, %v2257
    %v2330 = vmul.f32 %v2186, %v2257
    %v2331 = vmul.f32 %v2187, %v2257
    %v2332 = vmul.f32 %v2188, %v2262
    %v2333 = vmul.f32 %v2189, %v2262
    %v2334 = vmul.f32 %v2190, %v2262
    %v2335 = vmul.f32 %v2191, %v2262
    %v2336 = vmul.f32 %v2192, %v2267
    %v2337 = vmul.f32 %v2193, %v2267
    %v2338 = vmul.f32 %v2194, %v2267
    %v2339 = vmul.f32 %v2195, %v2267
    %v2340 = vmul.f32 %v2196, %v2272
    %v2341 = vmul.f32 %v2197, %v2272
    %v2342 = vmul.f32 %v2198, %v2272
    %v2343 = vmul.f32 %v2199, %v2272
    %v2344 = vmul.f32 %v2200, %v2277
    %v2345 = vmul.f32 %v2201, %v2277
    %v2346 = vmul.f32 %v2202, %v2277
    %v2347 = vmul.f32 %v2203, %v2277
    %v2348 = vmul.f32 %v2204, %v2282
    %v2349 = vmul.f32 %v2205, %v2282
    %v2350 = vmul.f32 %v2206, %v2282
    %v2351 = vmul.f32 %v2207, %v2282
    %v2352 = vmul.f32 %v2208, %v2287
    %v2353 = vmul.f32 %v2209, %v2287
    %v2354 = vmul.f32 %v2210, %v2287
    %v2355 = vmul.f32 %v2211, %v2287
    %v2356 = vmul.f32 %v2212, %v2292
    %v2357 = vmul.f32 %v2213, %v2292
    %v2358 = vmul.f32 %v2214, %v2292
    %v2359 = vmul.f32 %v2215, %v2292
    %v2360 = vmul.f32 %v2216, %v2297
    %v2361 = vmul.f32 %v2217, %v2297
    %v2362 = vmul.f32 %v2218, %v2297
    %v2363 = vmul.f32 %v2219, %v2297
    %v2364 = vmul.f32 %v2220, %v2302
    %v2365 = vmul.f32 %v2221, %v2302
    %v2366 = vmul.f32 %v2222, %v2302
    %v2367 = vmul.f32 %v2223, %v2302
    %2368 = vrot.lane.b32.xlu0 %v1861, 16
    %v2369 = vpop.permute.xlu0 %2368
    %2370 = vrot.lane.b32.xlu0 %v1865, 16
    %v2371 = vpop.permute.xlu0 %2370
    %2372 = vrot.lane.b32.xlu0 %v1869, 16
    %v2373 = vpop.permute.xlu0 %2372
    %2374 = vrot.lane.b32.xlu0 %v1873, 16
    %v2375 = vpop.permute.xlu0 %2374
    %2376 = vrot.lane.b32.xlu0 %v1877, 16
    %v2377 = vpop.permute.xlu0 %2376
    %2378 = vrot.lane.b32.xlu0 %v1881, 16
    %v2379 = vpop.permute.xlu0 %2378
    %2380 = vrot.lane.b32.xlu0 %v1885, 16
    %v2381 = vpop.permute.xlu0 %2380
    %2382 = vrot.lane.b32.xlu0 %v1889, 16
    %v2383 = vpop.permute.xlu0 %2382
    %2384 = vrot.lane.b32.xlu0 %v1893, 16
    %v2385 = vpop.permute.xlu0 %2384
    %2386 = vrot.lane.b32.xlu0 %v1897, 16
    %v2387 = vpop.permute.xlu0 %2386
    %2388 = vrot.lane.b32.xlu0 %v1901, 16
    %v2389 = vpop.permute.xlu0 %2388
    %2390 = vrot.lane.b32.xlu0 %v1905, 16
    %v2391 = vpop.permute.xlu0 %2390
    %2392 = vrot.lane.b32.xlu0 %v1909, 16
    %v2393 = vpop.permute.xlu0 %2392
    %2394 = vrot.lane.b32.xlu0 %v1913, 16
    %v2395 = vpop.permute.xlu0 %2394
    %2396 = vrot.lane.b32.xlu0 %v1917, 16
    %v2397 = vpop.permute.xlu0 %2396
    %2398 = vrot.lane.b32.xlu0 %v1921, 16
    %v2399 = vpop.permute.xlu0 %2398
    %2400 = vrot.lane.b32.xlu0 %v1862, 16
    %v2401 = vpop.permute.xlu0 %2400
    %2402 = vrot.lane.b32.xlu0 %v1866, 16
    %v2403 = vpop.permute.xlu0 %2402
    %2404 = vrot.lane.b32.xlu0 %v1870, 16
    %v2405 = vpop.permute.xlu0 %2404
    %2406 = vrot.lane.b32.xlu0 %v1874, 16
    %v2407 = vpop.permute.xlu0 %2406
    %2408 = vrot.lane.b32.xlu0 %v1878, 16
    %v2409 = vpop.permute.xlu0 %2408
    %2410 = vrot.lane.b32.xlu0 %v1882, 16
    %v2411 = vpop.permute.xlu0 %2410
    %2412 = vrot.lane.b32.xlu0 %v1886, 16
    %v2413 = vpop.permute.xlu0 %2412
    %2414 = vrot.lane.b32.xlu0 %v1890, 16
    %v2415 = vpop.permute.xlu0 %2414
    %2416 = vrot.lane.b32.xlu0 %v1894, 16
    %v2417 = vpop.permute.xlu0 %2416
    %2418 = vrot.lane.b32.xlu0 %v1898, 16
    %v2419 = vpop.permute.xlu0 %2418
    %2420 = vrot.lane.b32.xlu0 %v1902, 16
    %v2421 = vpop.permute.xlu0 %2420
    %2422 = vrot.lane.b32.xlu0 %v1906, 16
    %v2423 = vpop.permute.xlu0 %2422
    %2424 = vrot.lane.b32.xlu0 %v1910, 16
    %v2425 = vpop.permute.xlu0 %2424
    %2426 = vrot.lane.b32.xlu0 %v1914, 16
    %v2427 = vpop.permute.xlu0 %2426
    %2428 = vrot.lane.b32.xlu0 %v1918, 16
    %v2429 = vpop.permute.xlu0 %2428
    %2430 = vrot.lane.b32.xlu0 %v1922, 16
    %v2431 = vpop.permute.xlu0 %2430
    %2432 = vrot.lane.b32.xlu0 %v1863, 16
    %v2433 = vpop.permute.xlu0 %2432
    %2434 = vrot.lane.b32.xlu0 %v1867, 16
    %v2435 = vpop.permute.xlu0 %2434
    %2436 = vrot.lane.b32.xlu0 %v1871, 16
    %v2437 = vpop.permute.xlu0 %2436
    %2438 = vrot.lane.b32.xlu0 %v1875, 16
    %v2439 = vpop.permute.xlu0 %2438
    %2440 = vrot.lane.b32.xlu0 %v1879, 16
    %v2441 = vpop.permute.xlu0 %2440
    %2442 = vrot.lane.b32.xlu0 %v1883, 16
    %v2443 = vpop.permute.xlu0 %2442
    %2444 = vrot.lane.b32.xlu0 %v1887, 16
    %v2445 = vpop.permute.xlu0 %2444
    %2446 = vrot.lane.b32.xlu0 %v1891, 16
    %v2447 = vpop.permute.xlu0 %2446
    %2448 = vrot.lane.b32.xlu0 %v1895, 16
    %v2449 = vpop.permute.xlu0 %2448
    %2450 = vrot.lane.b32.xlu0 %v1899, 16
    %v2451 = vpop.permute.xlu0 %2450
    %2452 = vrot.lane.b32.xlu0 %v1903, 16
    %v2453 = vpop.permute.xlu0 %2452
    %2454 = vrot.lane.b32.xlu0 %v1907, 16
    %v2455 = vpop.permute.xlu0 %2454
    %2456 = vrot.lane.b32.xlu0 %v1911, 16
    %v2457 = vpop.permute.xlu0 %2456
    %2458 = vrot.lane.b32.xlu0 %v1915, 16
    %v2459 = vpop.permute.xlu0 %2458
    %2460 = vrot.lane.b32.xlu0 %v1919, 16
    %v2461 = vpop.permute.xlu0 %2460
    %2462 = vrot.lane.b32.xlu0 %v1923, 16
    %v2463 = vpop.permute.xlu0 %2462
    %2464 = vrot.lane.b32.xlu0 %v1864, 16
    %v2465 = vpop.permute.xlu0 %2464
    %2466 = vrot.lane.b32.xlu0 %v1868, 16
    %v2467 = vpop.permute.xlu0 %2466
    %2468 = vrot.lane.b32.xlu0 %v1872, 16
    %v2469 = vpop.permute.xlu0 %2468
    %2470 = vrot.lane.b32.xlu0 %v1876, 16
    %v2471 = vpop.permute.xlu0 %2470
    %2472 = vrot.lane.b32.xlu0 %v1880, 16
    %v2473 = vpop.permute.xlu0 %2472
    %2474 = vrot.lane.b32.xlu0 %v1884, 16
    %v2475 = vpop.permute.xlu0 %2474
    %2476 = vrot.lane.b32.xlu0 %v1888, 16
    %v2477 = vpop.permute.xlu0 %2476
    %2478 = vrot.lane.b32.xlu0 %v1892, 16
    %v2479 = vpop.permute.xlu0 %2478
    %2480 = vrot.lane.b32.xlu0 %v1896, 16
    %v2481 = vpop.permute.xlu0 %2480
    %2482 = vrot.lane.b32.xlu0 %v1900, 16
    %v2483 = vpop.permute.xlu0 %2482
    %2484 = vrot.lane.b32.xlu0 %v1904, 16
    %v2485 = vpop.permute.xlu0 %2484
    %2486 = vrot.lane.b32.xlu0 %v1908, 16
    %v2487 = vpop.permute.xlu0 %2486
    %2488 = vrot.lane.b32.xlu0 %v1912, 16
    %v2489 = vpop.permute.xlu0 %2488
    %2490 = vrot.lane.b32.xlu0 %v1916, 16
    %v2491 = vpop.permute.xlu0 %2490
    %2492 = vrot.lane.b32.xlu0 %v1920, 16
    %v2493 = vpop.permute.xlu0 %2492
    %2494 = vrot.lane.b32.xlu0 %v1924, 16
    %v2495 = vpop.permute.xlu0 %2494
    %vm2496 = vcmp.lt.s32.totalorder %v2078, 16
    %v2497 = vsel %vm2496, %v2433, %v2465
    %v2498 = vsel %vm2496, %v2435, %v2467
    %v2499 = vsel %vm2496, %v2437, %v2469
    %v2500 = vsel %vm2496, %v2439, %v2471
    %v2501 = vsel %vm2496, %v2441, %v2473
    %v2502 = vsel %vm2496, %v2443, %v2475
    %v2503 = vsel %vm2496, %v2445, %v2477
    %v2504 = vsel %vm2496, %v2447, %v2479
    %v2505 = vsel %vm2496, %v2449, %v2481
    %v2506 = vsel %vm2496, %v2451, %v2483
    %v2507 = vsel %vm2496, %v2453, %v2485
    %v2508 = vsel %vm2496, %v2455, %v2487
    %v2509 = vsel %vm2496, %v2457, %v2489
    %v2510 = vsel %vm2496, %v2459, %v2491
    %v2511 = vsel %vm2496, %v2461, %v2493
    %v2512 = vsel %vm2496, %v2463, %v2495
    %v2513 = vsel %vm2496, %v2401, %v2433
    %v2514 = vsel %vm2496, %v2403, %v2435
    %v2515 = vsel %vm2496, %v2405, %v2437
    %v2516 = vsel %vm2496, %v2407, %v2439
    %v2517 = vsel %vm2496, %v2409, %v2441
    %v2518 = vsel %vm2496, %v2411, %v2443
    %v2519 = vsel %vm2496, %v2413, %v2445
    %v2520 = vsel %vm2496, %v2415, %v2447
    %v2521 = vsel %vm2496, %v2417, %v2449
    %v2522 = vsel %vm2496, %v2419, %v2451
    %v2523 = vsel %vm2496, %v2421, %v2453
    %v2524 = vsel %vm2496, %v2423, %v2455
    %v2525 = vsel %vm2496, %v2425, %v2457
    %v2526 = vsel %vm2496, %v2427, %v2459
    %v2527 = vsel %vm2496, %v2429, %v2461
    %v2528 = vsel %vm2496, %v2431, %v2463
    %v2529 = vsel %vm2496, %v2369, %v2401
    %v2530 = vsel %vm2496, %v2371, %v2403
    %v2531 = vsel %vm2496, %v2373, %v2405
    %v2532 = vsel %vm2496, %v2375, %v2407
    %v2533 = vsel %vm2496, %v2377, %v2409
    %v2534 = vsel %vm2496, %v2379, %v2411
    %v2535 = vsel %vm2496, %v2381, %v2413
    %v2536 = vsel %vm2496, %v2383, %v2415
    %v2537 = vsel %vm2496, %v2385, %v2417
    %v2538 = vsel %vm2496, %v2387, %v2419
    %v2539 = vsel %vm2496, %v2389, %v2421
    %v2540 = vsel %vm2496, %v2391, %v2423
    %v2541 = vsel %vm2496, %v2393, %v2425
    %v2542 = vsel %vm2496, %v2395, %v2427
    %v2543 = vsel %vm2496, %v2397, %v2429
    %v2544 = vsel %vm2496, %v2399, %v2431
    %v2545 = vsel %vm2496, %v2465, %v2369
    %v2546 = vsel %vm2496, %v2467, %v2371
    %v2547 = vsel %vm2496, %v2469, %v2373
    %v2548 = vsel %vm2496, %v2471, %v2375
    %v2549 = vsel %vm2496, %v2473, %v2377
    %v2550 = vsel %vm2496, %v2475, %v2379
    %v2551 = vsel %vm2496, %v2477, %v2381
    %v2552 = vsel %vm2496, %v2479, %v2383
    %v2553 = vsel %vm2496, %v2481, %v2385
    %v2554 = vsel %vm2496, %v2483, %v2387
    %v2555 = vsel %vm2496, %v2485, %v2389
    %v2556 = vsel %vm2496, %v2487, %v2391
    %v2557 = vsel %vm2496, %v2489, %v2393
    %v2558 = vsel %vm2496, %v2491, %v2395
    %v2559 = vsel %vm2496, %v2493, %v2397
    %v2560 = vsel %vm2496, %v2495, %v2399
    %v2561 = vlaneseq
    %v2562 = vshrl.u32 %v2561, 7
    %v2563 = vsub.s32 1, %v2562
    %v2564 = vrot.slane %v1941, %v2563
    %v2565 = vlaneseq
    %v2566 = vshrl.u32 %v2565, 7
    %v2567 = vsub.s32 1, %v2566
    %v2568 = vrot.slane %v1942, %v2567
    %v2569 = vlaneseq
    %v2570 = vshrl.u32 %v2569, 7
    %v2571 = vsub.s32 1, %v2570
    %v2572 = vrot.slane %v1943, %v2571
    %v2573 = vlaneseq
    %v2574 = vshrl.u32 %v2573, 7
    %v2575 = vsub.s32 1, %v2574
    %v2576 = vrot.slane %v1944, %v2575
    %v2577 = vmul.f32 %v2545, %v2564
    %v2578 = vmul.f32 %v2529, %v2568
    %v2579 = vmul.f32 %v2513, %v2572
    %v2580 = vmul.f32 %v2497, %v2576
    %v2581 = vmul.f32 %v2546, %v2564
    %v2582 = vmul.f32 %v2530, %v2568
    %v2583 = vmul.f32 %v2514, %v2572
    %v2584 = vmul.f32 %v2498, %v2576
    %v2585 = vmul.f32 %v2547, %v2564
    %v2586 = vmul.f32 %v2531, %v2568
    %v2587 = vmul.f32 %v2515, %v2572
    %v2588 = vmul.f32 %v2499, %v2576
    %v2589 = vmul.f32 %v2548, %v2564
    %v2590 = vmul.f32 %v2532, %v2568
    %v2591 = vmul.f32 %v2516, %v2572
    %v2592 = vmul.f32 %v2500, %v2576
    %v2593 = vmul.f32 %v2549, %v2564
    %v2594 = vmul.f32 %v2533, %v2568
    %v2595 = vmul.f32 %v2517, %v2572
    %v2596 = vmul.f32 %v2501, %v2576
    %v2597 = vmul.f32 %v2550, %v2564
    %v2598 = vmul.f32 %v2534, %v2568
    %v2599 = vmul.f32 %v2518, %v2572
    %v2600 = vmul.f32 %v2502, %v2576
    %v2601 = vmul.f32 %v2551, %v2564
    %v2602 = vmul.f32 %v2535, %v2568
    %v2603 = vmul.f32 %v2519, %v2572
    %v2604 = vmul.f32 %v2503, %v2576
    %v2605 = vmul.f32 %v2552, %v2564
    %v2606 = vmul.f32 %v2536, %v2568
    %v2607 = vmul.f32 %v2520, %v2572
    %v2608 = vmul.f32 %v2504, %v2576
    %v2609 = vmul.f32 %v2553, %v2564
    %v2610 = vmul.f32 %v2537, %v2568
    %v2611 = vmul.f32 %v2521, %v2572
    %v2612 = vmul.f32 %v2505, %v2576
    %v2613 = vmul.f32 %v2554, %v2564
    %v2614 = vmul.f32 %v2538, %v2568
    %v2615 = vmul.f32 %v2522, %v2572
    %v2616 = vmul.f32 %v2506, %v2576
    %v2617 = vmul.f32 %v2555, %v2564
    %v2618 = vmul.f32 %v2539, %v2568
    %v2619 = vmul.f32 %v2523, %v2572
    %v2620 = vmul.f32 %v2507, %v2576
    %v2621 = vmul.f32 %v2556, %v2564
    %v2622 = vmul.f32 %v2540, %v2568
    %v2623 = vmul.f32 %v2524, %v2572
    %v2624 = vmul.f32 %v2508, %v2576
    %v2625 = vmul.f32 %v2557, %v2564
    %v2626 = vmul.f32 %v2541, %v2568
    %v2627 = vmul.f32 %v2525, %v2572
    %v2628 = vmul.f32 %v2509, %v2576
    %v2629 = vmul.f32 %v2558, %v2564
    %v2630 = vmul.f32 %v2542, %v2568
    %v2631 = vmul.f32 %v2526, %v2572
    %v2632 = vmul.f32 %v2510, %v2576
    %v2633 = vmul.f32 %v2559, %v2564
    %v2634 = vmul.f32 %v2543, %v2568
    %v2635 = vmul.f32 %v2527, %v2572
    %v2636 = vmul.f32 %v2511, %v2576
    %v2637 = vmul.f32 %v2560, %v2564
    %v2638 = vmul.f32 %v2544, %v2568
    %v2639 = vmul.f32 %v2528, %v2572
    %v2640 = vmul.f32 %v2512, %v2576
    %2641 = vset.pattern.permute.xlu0 1
    %2642 = vperm.xlu0 %2641, %v1925
    %v2643 = vpop.permute.xlu0 %2642
    %2645 = vset.pattern.permute.xlu0 1
    %2646 = vperm.xlu0 %2645, %v1926
    %v2647 = vpop.permute.xlu0 %2646
    %2649 = vset.pattern.permute.xlu0 1
    %2650 = vperm.xlu0 %2649, %v1927
    %v2651 = vpop.permute.xlu0 %2650
    %2653 = vset.pattern.permute.xlu0 1
    %2654 = vperm.xlu0 %2653, %v1928
    %v2655 = vpop.permute.xlu0 %2654
    %2657 = vset.pattern.permute.xlu0 1
    %2658 = vperm.xlu0 %2657, %v1929
    %v2659 = vpop.permute.xlu0 %2658
    %2661 = vset.pattern.permute.xlu0 1
    %2662 = vperm.xlu0 %2661, %v1930
    %v2663 = vpop.permute.xlu0 %2662
    %2665 = vset.pattern.permute.xlu0 1
    %2666 = vperm.xlu0 %2665, %v1931
    %v2667 = vpop.permute.xlu0 %2666
    %2669 = vset.pattern.permute.xlu0 1
    %2670 = vperm.xlu0 %2669, %v1932
    %v2671 = vpop.permute.xlu0 %2670
    %2673 = vset.pattern.permute.xlu0 1
    %2674 = vperm.xlu0 %2673, %v1933
    %v2675 = vpop.permute.xlu0 %2674
    %2677 = vset.pattern.permute.xlu0 1
    %2678 = vperm.xlu0 %2677, %v1934
    %v2679 = vpop.permute.xlu0 %2678
    %2681 = vset.pattern.permute.xlu0 1
    %2682 = vperm.xlu0 %2681, %v1935
    %v2683 = vpop.permute.xlu0 %2682
    %2685 = vset.pattern.permute.xlu0 1
    %2686 = vperm.xlu0 %2685, %v1936
    %v2687 = vpop.permute.xlu0 %2686
    %2689 = vset.pattern.permute.xlu0 1
    %2690 = vperm.xlu0 %2689, %v1937
    %v2691 = vpop.permute.xlu0 %2690
    %2693 = vset.pattern.permute.xlu0 1
    %2694 = vperm.xlu0 %2693, %v1938
    %v2695 = vpop.permute.xlu0 %2694
    %2697 = vset.pattern.permute.xlu0 1
    %2698 = vperm.xlu0 %2697, %v1939
    %v2699 = vpop.permute.xlu0 %2698
    %2701 = vset.pattern.permute.xlu0 1
    %2702 = vperm.xlu0 %2701, %v1940
    %v2703 = vpop.permute.xlu0 %2702
    %v2705 = vmul.f32 %v2577, %v2643
    %v2706 = vmul.f32 %v2578, %v2643
    %v2707 = vmul.f32 %v2579, %v2643
    %v2708 = vmul.f32 %v2580, %v2643
    %v2709 = vmul.f32 %v2581, %v2647
    %v2710 = vmul.f32 %v2582, %v2647
    %v2711 = vmul.f32 %v2583, %v2647
    %v2712 = vmul.f32 %v2584, %v2647
    %v2713 = vmul.f32 %v2585, %v2651
    %v2714 = vmul.f32 %v2586, %v2651
    %v2715 = vmul.f32 %v2587, %v2651
    %v2716 = vmul.f32 %v2588, %v2651
    %v2717 = vmul.f32 %v2589, %v2655
    %v2718 = vmul.f32 %v2590, %v2655
    %v2719 = vmul.f32 %v2591, %v2655
    %v2720 = vmul.f32 %v2592, %v2655
    %v2721 = vmul.f32 %v2593, %v2659
    %v2722 = vmul.f32 %v2594, %v2659
    %v2723 = vmul.f32 %v2595, %v2659
    %v2724 = vmul.f32 %v2596, %v2659
    %v2725 = vmul.f32 %v2597, %v2663
    %v2726 = vmul.f32 %v2598, %v2663
    %v2727 = vmul.f32 %v2599, %v2663
    %v2728 = vmul.f32 %v2600, %v2663
    %v2729 = vmul.f32 %v2601, %v2667
    %v2730 = vmul.f32 %v2602, %v2667
    %v2731 = vmul.f32 %v2603, %v2667
    %v2732 = vmul.f32 %v2604, %v2667
    %v2733 = vmul.f32 %v2605, %v2671
    %v2734 = vmul.f32 %v2606, %v2671
    %v2735 = vmul.f32 %v2607, %v2671
    %v2736 = vmul.f32 %v2608, %v2671
    %v2737 = vmul.f32 %v2609, %v2675
    %v2738 = vmul.f32 %v2610, %v2675
    %v2739 = vmul.f32 %v2611, %v2675
    %v2740 = vmul.f32 %v2612, %v2675
    %v2741 = vmul.f32 %v2613, %v2679
    %v2742 = vmul.f32 %v2614, %v2679
    %v2743 = vmul.f32 %v2615, %v2679
    %v2744 = vmul.f32 %v2616, %v2679
    %v2745 = vmul.f32 %v2617, %v2683
    %v2746 = vmul.f32 %v2618, %v2683
    %v2747 = vmul.f32 %v2619, %v2683
    %v2748 = vmul.f32 %v2620, %v2683
    %v2749 = vmul.f32 %v2621, %v2687
    %v2750 = vmul.f32 %v2622, %v2687
    %v2751 = vmul.f32 %v2623, %v2687
    %v2752 = vmul.f32 %v2624, %v2687
    %v2753 = vmul.f32 %v2625, %v2691
    %v2754 = vmul.f32 %v2626, %v2691
    %v2755 = vmul.f32 %v2627, %v2691
    %v2756 = vmul.f32 %v2628, %v2691
    %v2757 = vmul.f32 %v2629, %v2695
    %v2758 = vmul.f32 %v2630, %v2695
    %v2759 = vmul.f32 %v2631, %v2695
    %v2760 = vmul.f32 %v2632, %v2695
    %v2761 = vmul.f32 %v2633, %v2699
    %v2762 = vmul.f32 %v2634, %v2699
    %v2763 = vmul.f32 %v2635, %v2699
    %v2764 = vmul.f32 %v2636, %v2699
    %v2765 = vmul.f32 %v2637, %v2703
    %v2766 = vmul.f32 %v2638, %v2703
    %v2767 = vmul.f32 %v2639, %v2703
    %v2768 = vmul.f32 %v2640, %v2703
    %2769 = vrot.lane.b32.xlu0 %v1861, 15
    %v2770 = vpop.permute.xlu0 %2769
    %2771 = vrot.lane.b32.xlu0 %v1865, 15
    %v2772 = vpop.permute.xlu0 %2771
    %2773 = vrot.lane.b32.xlu0 %v1869, 15
    %v2774 = vpop.permute.xlu0 %2773
    %2775 = vrot.lane.b32.xlu0 %v1873, 15
    %v2776 = vpop.permute.xlu0 %2775
    %2777 = vrot.lane.b32.xlu0 %v1877, 15
    %v2778 = vpop.permute.xlu0 %2777
    %2779 = vrot.lane.b32.xlu0 %v1881, 15
    %v2780 = vpop.permute.xlu0 %2779
    %2781 = vrot.lane.b32.xlu0 %v1885, 15
    %v2782 = vpop.permute.xlu0 %2781
    %2783 = vrot.lane.b32.xlu0 %v1889, 15
    %v2784 = vpop.permute.xlu0 %2783
    %2785 = vrot.lane.b32.xlu0 %v1893, 15
    %v2786 = vpop.permute.xlu0 %2785
    %2787 = vrot.lane.b32.xlu0 %v1897, 15
    %v2788 = vpop.permute.xlu0 %2787
    %2789 = vrot.lane.b32.xlu0 %v1901, 15
    %v2790 = vpop.permute.xlu0 %2789
    %2791 = vrot.lane.b32.xlu0 %v1905, 15
    %v2792 = vpop.permute.xlu0 %2791
    %2793 = vrot.lane.b32.xlu0 %v1909, 15
    %v2794 = vpop.permute.xlu0 %2793
    %2795 = vrot.lane.b32.xlu0 %v1913, 15
    %v2796 = vpop.permute.xlu0 %2795
    %2797 = vrot.lane.b32.xlu0 %v1917, 15
    %v2798 = vpop.permute.xlu0 %2797
    %2799 = vrot.lane.b32.xlu0 %v1921, 15
    %v2800 = vpop.permute.xlu0 %2799
    %2801 = vrot.lane.b32.xlu0 %v1862, 15
    %v2802 = vpop.permute.xlu0 %2801
    %2803 = vrot.lane.b32.xlu0 %v1866, 15
    %v2804 = vpop.permute.xlu0 %2803
    %2805 = vrot.lane.b32.xlu0 %v1870, 15
    %v2806 = vpop.permute.xlu0 %2805
    %2807 = vrot.lane.b32.xlu0 %v1874, 15
    %v2808 = vpop.permute.xlu0 %2807
    %2809 = vrot.lane.b32.xlu0 %v1878, 15
    %v2810 = vpop.permute.xlu0 %2809
    %2811 = vrot.lane.b32.xlu0 %v1882, 15
    %v2812 = vpop.permute.xlu0 %2811
    %2813 = vrot.lane.b32.xlu0 %v1886, 15
    %v2814 = vpop.permute.xlu0 %2813
    %2815 = vrot.lane.b32.xlu0 %v1890, 15
    %v2816 = vpop.permute.xlu0 %2815
    %2817 = vrot.lane.b32.xlu0 %v1894, 15
    %v2818 = vpop.permute.xlu0 %2817
    %2819 = vrot.lane.b32.xlu0 %v1898, 15
    %v2820 = vpop.permute.xlu0 %2819
    %2821 = vrot.lane.b32.xlu0 %v1902, 15
    %v2822 = vpop.permute.xlu0 %2821
    %2823 = vrot.lane.b32.xlu0 %v1906, 15
    %v2824 = vpop.permute.xlu0 %2823
    %2825 = vrot.lane.b32.xlu0 %v1910, 15
    %v2826 = vpop.permute.xlu0 %2825
    %2827 = vrot.lane.b32.xlu0 %v1914, 15
    %v2828 = vpop.permute.xlu0 %2827
    %2829 = vrot.lane.b32.xlu0 %v1918, 15
    %v2830 = vpop.permute.xlu0 %2829
    %2831 = vrot.lane.b32.xlu0 %v1922, 15
    %v2832 = vpop.permute.xlu0 %2831
    %2833 = vrot.lane.b32.xlu0 %v1863, 15
    %v2834 = vpop.permute.xlu0 %2833
    %2835 = vrot.lane.b32.xlu0 %v1867, 15
    %v2836 = vpop.permute.xlu0 %2835
    %2837 = vrot.lane.b32.xlu0 %v1871, 15
    %v2838 = vpop.permute.xlu0 %2837
    %2839 = vrot.lane.b32.xlu0 %v1875, 15
    %v2840 = vpop.permute.xlu0 %2839
    %2841 = vrot.lane.b32.xlu0 %v1879, 15
    %v2842 = vpop.permute.xlu0 %2841
    %2843 = vrot.lane.b32.xlu0 %v1883, 15
    %v2844 = vpop.permute.xlu0 %2843
    %2845 = vrot.lane.b32.xlu0 %v1887, 15
    %v2846 = vpop.permute.xlu0 %2845
    %2847 = vrot.lane.b32.xlu0 %v1891, 15
    %v2848 = vpop.permute.xlu0 %2847
    %2849 = vrot.lane.b32.xlu0 %v1895, 15
    %v2850 = vpop.permute.xlu0 %2849
    %2851 = vrot.lane.b32.xlu0 %v1899, 15
    %v2852 = vpop.permute.xlu0 %2851
    %2853 = vrot.lane.b32.xlu0 %v1903, 15
    %v2854 = vpop.permute.xlu0 %2853
    %2855 = vrot.lane.b32.xlu0 %v1907, 15
    %v2856 = vpop.permute.xlu0 %2855
    %2857 = vrot.lane.b32.xlu0 %v1911, 15
    %v2858 = vpop.permute.xlu0 %2857
    %2859 = vrot.lane.b32.xlu0 %v1915, 15
    %v2860 = vpop.permute.xlu0 %2859
    %2861 = vrot.lane.b32.xlu0 %v1919, 15
    %v2862 = vpop.permute.xlu0 %2861
    %2863 = vrot.lane.b32.xlu0 %v1923, 15
    %v2864 = vpop.permute.xlu0 %2863
    %2865 = vrot.lane.b32.xlu0 %v1864, 15
    %v2866 = vpop.permute.xlu0 %2865
    %2867 = vrot.lane.b32.xlu0 %v1868, 15
    %v2868 = vpop.permute.xlu0 %2867
    %2869 = vrot.lane.b32.xlu0 %v1872, 15
    %v2870 = vpop.permute.xlu0 %2869
    %2871 = vrot.lane.b32.xlu0 %v1876, 15
    %v2872 = vpop.permute.xlu0 %2871
    %2873 = vrot.lane.b32.xlu0 %v1880, 15
    %v2874 = vpop.permute.xlu0 %2873
    %2875 = vrot.lane.b32.xlu0 %v1884, 15
    %v2876 = vpop.permute.xlu0 %2875
    %2877 = vrot.lane.b32.xlu0 %v1888, 15
    %v2878 = vpop.permute.xlu0 %2877
    %2879 = vrot.lane.b32.xlu0 %v1892, 15
    %v2880 = vpop.permute.xlu0 %2879
    %2881 = vrot.lane.b32.xlu0 %v1896, 15
    %v2882 = vpop.permute.xlu0 %2881
    %2883 = vrot.lane.b32.xlu0 %v1900, 15
    %v2884 = vpop.permute.xlu0 %2883
    %2885 = vrot.lane.b32.xlu0 %v1904, 15
    %v2886 = vpop.permute.xlu0 %2885
    %2887 = vrot.lane.b32.xlu0 %v1908, 15
    %v2888 = vpop.permute.xlu0 %2887
    %2889 = vrot.lane.b32.xlu0 %v1912, 15
    %v2890 = vpop.permute.xlu0 %2889
    %2891 = vrot.lane.b32.xlu0 %v1916, 15
    %v2892 = vpop.permute.xlu0 %2891
    %2893 = vrot.lane.b32.xlu0 %v1920, 15
    %v2894 = vpop.permute.xlu0 %2893
    %2895 = vrot.lane.b32.xlu0 %v1924, 15
    %v2896 = vpop.permute.xlu0 %2895
    %vm2897 = vcmp.lt.s32.totalorder %v2078, 15
    %v2898 = vsel %vm2897, %v2834, %v2866
    %v2899 = vsel %vm2897, %v2836, %v2868
    %v2900 = vsel %vm2897, %v2838, %v2870
    %v2901 = vsel %vm2897, %v2840, %v2872
    %v2902 = vsel %vm2897, %v2842, %v2874
    %v2903 = vsel %vm2897, %v2844, %v2876
    %v2904 = vsel %vm2897, %v2846, %v2878
    %v2905 = vsel %vm2897, %v2848, %v2880
    %v2906 = vsel %vm2897, %v2850, %v2882
    %v2907 = vsel %vm2897, %v2852, %v2884
    %v2908 = vsel %vm2897, %v2854, %v2886
    %v2909 = vsel %vm2897, %v2856, %v2888
    %v2910 = vsel %vm2897, %v2858, %v2890
    %v2911 = vsel %vm2897, %v2860, %v2892
    %v2912 = vsel %vm2897, %v2862, %v2894
    %v2913 = vsel %vm2897, %v2864, %v2896
    %v2914 = vsel %vm2897, %v2802, %v2834
    %v2915 = vsel %vm2897, %v2804, %v2836
    %v2916 = vsel %vm2897, %v2806, %v2838
    %v2917 = vsel %vm2897, %v2808, %v2840
    %v2918 = vsel %vm2897, %v2810, %v2842
    %v2919 = vsel %vm2897, %v2812, %v2844
    %v2920 = vsel %vm2897, %v2814, %v2846
    %v2921 = vsel %vm2897, %v2816, %v2848
    %v2922 = vsel %vm2897, %v2818, %v2850
    %v2923 = vsel %vm2897, %v2820, %v2852
    %v2924 = vsel %vm2897, %v2822, %v2854
    %v2925 = vsel %vm2897, %v2824, %v2856
    %v2926 = vsel %vm2897, %v2826, %v2858
    %v2927 = vsel %vm2897, %v2828, %v2860
    %v2928 = vsel %vm2897, %v2830, %v2862
    %v2929 = vsel %vm2897, %v2832, %v2864
    %v2930 = vsel %vm2897, %v2770, %v2802
    %v2931 = vsel %vm2897, %v2772, %v2804
    %v2932 = vsel %vm2897, %v2774, %v2806
    %v2933 = vsel %vm2897, %v2776, %v2808
    %v2934 = vsel %vm2897, %v2778, %v2810
    %v2935 = vsel %vm2897, %v2780, %v2812
    %v2936 = vsel %vm2897, %v2782, %v2814
    %v2937 = vsel %vm2897, %v2784, %v2816
    %v2938 = vsel %vm2897, %v2786, %v2818
    %v2939 = vsel %vm2897, %v2788, %v2820
    %v2940 = vsel %vm2897, %v2790, %v2822
    %v2941 = vsel %vm2897, %v2792, %v2824
    %v2942 = vsel %vm2897, %v2794, %v2826
    %v2943 = vsel %vm2897, %v2796, %v2828
    %v2944 = vsel %vm2897, %v2798, %v2830
    %v2945 = vsel %vm2897, %v2800, %v2832
    %v2946 = vsel %vm2897, %v2866, %v2770
    %v2947 = vsel %vm2897, %v2868, %v2772
    %v2948 = vsel %vm2897, %v2870, %v2774
    %v2949 = vsel %vm2897, %v2872, %v2776
    %v2950 = vsel %vm2897, %v2874, %v2778
    %v2951 = vsel %vm2897, %v2876, %v2780
    %v2952 = vsel %vm2897, %v2878, %v2782
    %v2953 = vsel %vm2897, %v2880, %v2784
    %v2954 = vsel %vm2897, %v2882, %v2786
    %v2955 = vsel %vm2897, %v2884, %v2788
    %v2956 = vsel %vm2897, %v2886, %v2790
    %v2957 = vsel %vm2897, %v2888, %v2792
    %v2958 = vsel %vm2897, %v2890, %v2794
    %v2959 = vsel %vm2897, %v2892, %v2796
    %v2960 = vsel %vm2897, %v2894, %v2798
    %v2961 = vsel %vm2897, %v2896, %v2800
    %v2962 = vlaneseq
    %v2963 = vshrl.u32 %v2962, 7
    %v2964 = vsub.s32 2, %v2963
    %v2965 = vrot.slane %v1941, %v2964
    %v2966 = vlaneseq
    %v2967 = vshrl.u32 %v2966, 7
    %v2968 = vsub.s32 2, %v2967
    %v2969 = vrot.slane %v1942, %v2968
    %v2970 = vlaneseq
    %v2971 = vshrl.u32 %v2970, 7
    %v2972 = vsub.s32 2, %v2971
    %v2973 = vrot.slane %v1943, %v2972
    %v2974 = vlaneseq
    %v2975 = vshrl.u32 %v2974, 7
    %v2976 = vsub.s32 2, %v2975
    %v2977 = vrot.slane %v1944, %v2976
    %v2978 = vmul.f32 %v2946, %v2965
    %v2979 = vmul.f32 %v2930, %v2969
    %v2980 = vmul.f32 %v2914, %v2973
    %v2981 = vmul.f32 %v2898, %v2977
    %v2982 = vmul.f32 %v2947, %v2965
    %v2983 = vmul.f32 %v2931, %v2969
    %v2984 = vmul.f32 %v2915, %v2973
    %v2985 = vmul.f32 %v2899, %v2977
    %v2986 = vmul.f32 %v2948, %v2965
    %v2987 = vmul.f32 %v2932, %v2969
    %v2988 = vmul.f32 %v2916, %v2973
    %v2989 = vmul.f32 %v2900, %v2977
    %v2990 = vmul.f32 %v2949, %v2965
    %v2991 = vmul.f32 %v2933, %v2969
    %v2992 = vmul.f32 %v2917, %v2973
    %v2993 = vmul.f32 %v2901, %v2977
    %v2994 = vmul.f32 %v2950, %v2965
    %v2995 = vmul.f32 %v2934, %v2969
    %v2996 = vmul.f32 %v2918, %v2973
    %v2997 = vmul.f32 %v2902, %v2977
    %v2998 = vmul.f32 %v2951, %v2965
    %v2999 = vmul.f32 %v2935, %v2969
    %v3000 = vmul.f32 %v2919, %v2973
    %v3001 = vmul.f32 %v2903, %v2977
    %v3002 = vmul.f32 %v2952, %v2965
    %v3003 = vmul.f32 %v2936, %v2969
    %v3004 = vmul.f32 %v2920, %v2973
    %v3005 = vmul.f32 %v2904, %v2977
    %v3006 = vmul.f32 %v2953, %v2965
    %v3007 = vmul.f32 %v2937, %v2969
    %v3008 = vmul.f32 %v2921, %v2973
    %v3009 = vmul.f32 %v2905, %v2977
    %v3010 = vmul.f32 %v2954, %v2965
    %v3011 = vmul.f32 %v2938, %v2969
    %v3012 = vmul.f32 %v2922, %v2973
    %v3013 = vmul.f32 %v2906, %v2977
    %v3014 = vmul.f32 %v2955, %v2965
    %v3015 = vmul.f32 %v2939, %v2969
    %v3016 = vmul.f32 %v2923, %v2973
    %v3017 = vmul.f32 %v2907, %v2977
    %v3018 = vmul.f32 %v2956, %v2965
    %v3019 = vmul.f32 %v2940, %v2969
    %v3020 = vmul.f32 %v2924, %v2973
    %v3021 = vmul.f32 %v2908, %v2977
    %v3022 = vmul.f32 %v2957, %v2965
    %v3023 = vmul.f32 %v2941, %v2969
    %v3024 = vmul.f32 %v2925, %v2973
    %v3025 = vmul.f32 %v2909, %v2977
    %v3026 = vmul.f32 %v2958, %v2965
    %v3027 = vmul.f32 %v2942, %v2969
    %v3028 = vmul.f32 %v2926, %v2973
    %v3029 = vmul.f32 %v2910, %v2977
    %v3030 = vmul.f32 %v2959, %v2965
    %v3031 = vmul.f32 %v2943, %v2969
    %v3032 = vmul.f32 %v2927, %v2973
    %v3033 = vmul.f32 %v2911, %v2977
    %v3034 = vmul.f32 %v2960, %v2965
    %v3035 = vmul.f32 %v2944, %v2969
    %v3036 = vmul.f32 %v2928, %v2973
    %v3037 = vmul.f32 %v2912, %v2977
    %v3038 = vmul.f32 %v2961, %v2965
    %v3039 = vmul.f32 %v2945, %v2969
    %v3040 = vmul.f32 %v2929, %v2973
    %v3041 = vmul.f32 %v2913, %v2977
    %3042 = vset.pattern.permute.xlu0 2
    %3043 = vperm.xlu0 %3042, %v1925
    %v3044 = vpop.permute.xlu0 %3043
    %3046 = vset.pattern.permute.xlu0 2
    %3047 = vperm.xlu0 %3046, %v1926
    %v3048 = vpop.permute.xlu0 %3047
    %3050 = vset.pattern.permute.xlu0 2
    %3051 = vperm.xlu0 %3050, %v1927
    %v3052 = vpop.permute.xlu0 %3051
    %3054 = vset.pattern.permute.xlu0 2
    %3055 = vperm.xlu0 %3054, %v1928
    %v3056 = vpop.permute.xlu0 %3055
    %3058 = vset.pattern.permute.xlu0 2
    %3059 = vperm.xlu0 %3058, %v1929
    %v3060 = vpop.permute.xlu0 %3059
    %3062 = vset.pattern.permute.xlu0 2
    %3063 = vperm.xlu0 %3062, %v1930
    %v3064 = vpop.permute.xlu0 %3063
    %3066 = vset.pattern.permute.xlu0 2
    %3067 = vperm.xlu0 %3066, %v1931
    %v3068 = vpop.permute.xlu0 %3067
    %3070 = vset.pattern.permute.xlu0 2
    %3071 = vperm.xlu0 %3070, %v1932
    %v3072 = vpop.permute.xlu0 %3071
    %3074 = vset.pattern.permute.xlu0 2
    %3075 = vperm.xlu0 %3074, %v1933
    %v3076 = vpop.permute.xlu0 %3075
    %3078 = vset.pattern.permute.xlu0 2
    %3079 = vperm.xlu0 %3078, %v1934
    %v3080 = vpop.permute.xlu0 %3079
    %3082 = vset.pattern.permute.xlu0 2
    %3083 = vperm.xlu0 %3082, %v1935
    %v3084 = vpop.permute.xlu0 %3083
    %3086 = vset.pattern.permute.xlu0 2
    %3087 = vperm.xlu0 %3086, %v1936
    %v3088 = vpop.permute.xlu0 %3087
    %3090 = vset.pattern.permute.xlu0 2
    %3091 = vperm.xlu0 %3090, %v1937
    %v3092 = vpop.permute.xlu0 %3091
    %3094 = vset.pattern.permute.xlu0 2
    %3095 = vperm.xlu0 %3094, %v1938
    %v3096 = vpop.permute.xlu0 %3095
    %3098 = vset.pattern.permute.xlu0 2
    %3099 = vperm.xlu0 %3098, %v1939
    %v3100 = vpop.permute.xlu0 %3099
    %3102 = vset.pattern.permute.xlu0 2
    %3103 = vperm.xlu0 %3102, %v1940
    %v3104 = vpop.permute.xlu0 %3103
    %v3106 = vmul.f32 %v2978, %v3044
    %v3107 = vmul.f32 %v2979, %v3044
    %v3108 = vmul.f32 %v2980, %v3044
    %v3109 = vmul.f32 %v2981, %v3044
    %v3110 = vmul.f32 %v2982, %v3048
    %v3111 = vmul.f32 %v2983, %v3048
    %v3112 = vmul.f32 %v2984, %v3048
    %v3113 = vmul.f32 %v2985, %v3048
    %v3114 = vmul.f32 %v2986, %v3052
    %v3115 = vmul.f32 %v2987, %v3052
    %v3116 = vmul.f32 %v2988, %v3052
    %v3117 = vmul.f32 %v2989, %v3052
    %v3118 = vmul.f32 %v2990, %v3056
    %v3119 = vmul.f32 %v2991, %v3056
    %v3120 = vmul.f32 %v2992, %v3056
    %v3121 = vmul.f32 %v2993, %v3056
    %v3122 = vmul.f32 %v2994, %v3060
    %v3123 = vmul.f32 %v2995, %v3060
    %v3124 = vmul.f32 %v2996, %v3060
    %v3125 = vmul.f32 %v2997, %v3060
    %v3126 = vmul.f32 %v2998, %v3064
    %v3127 = vmul.f32 %v2999, %v3064
    %v3128 = vmul.f32 %v3000, %v3064
    %v3129 = vmul.f32 %v3001, %v3064
    %v3130 = vmul.f32 %v3002, %v3068
    %v3131 = vmul.f32 %v3003, %v3068
    %v3132 = vmul.f32 %v3004, %v3068
    %v3133 = vmul.f32 %v3005, %v3068
    %v3134 = vmul.f32 %v3006, %v3072
    %v3135 = vmul.f32 %v3007, %v3072
    %v3136 = vmul.f32 %v3008, %v3072
    %v3137 = vmul.f32 %v3009, %v3072
    %v3138 = vmul.f32 %v3010, %v3076
    %v3139 = vmul.f32 %v3011, %v3076
    %v3140 = vmul.f32 %v3012, %v3076
    %v3141 = vmul.f32 %v3013, %v3076
    %v3142 = vmul.f32 %v3014, %v3080
    %v3143 = vmul.f32 %v3015, %v3080
    %v3144 = vmul.f32 %v3016, %v3080
    %v3145 = vmul.f32 %v3017, %v3080
    %v3146 = vmul.f32 %v3018, %v3084
    %v3147 = vmul.f32 %v3019, %v3084
    %v3148 = vmul.f32 %v3020, %v3084
    %v3149 = vmul.f32 %v3021, %v3084
    %v3150 = vmul.f32 %v3022, %v3088
    %v3151 = vmul.f32 %v3023, %v3088
    %v3152 = vmul.f32 %v3024, %v3088
    %v3153 = vmul.f32 %v3025, %v3088
    %v3154 = vmul.f32 %v3026, %v3092
    %v3155 = vmul.f32 %v3027, %v3092
    %v3156 = vmul.f32 %v3028, %v3092
    %v3157 = vmul.f32 %v3029, %v3092
    %v3158 = vmul.f32 %v3030, %v3096
    %v3159 = vmul.f32 %v3031, %v3096
    %v3160 = vmul.f32 %v3032, %v3096
    %v3161 = vmul.f32 %v3033, %v3096
    %v3162 = vmul.f32 %v3034, %v3100
    %v3163 = vmul.f32 %v3035, %v3100
    %v3164 = vmul.f32 %v3036, %v3100
    %v3165 = vmul.f32 %v3037, %v3100
    %v3166 = vmul.f32 %v3038, %v3104
    %v3167 = vmul.f32 %v3039, %v3104
    %v3168 = vmul.f32 %v3040, %v3104
    %v3169 = vmul.f32 %v3041, %v3104
    %v3170 = vadd.f32 %v2304, %v2705
    %v3171 = vadd.f32 %v2305, %v2706
    %v3172 = vadd.f32 %v2306, %v2707
    %v3173 = vadd.f32 %v2307, %v2708
    %v3174 = vadd.f32 %v2308, %v2709
    %v3175 = vadd.f32 %v2309, %v2710
    %v3176 = vadd.f32 %v2310, %v2711
    %v3177 = vadd.f32 %v2311, %v2712
    %v3178 = vadd.f32 %v2312, %v2713
    %v3179 = vadd.f32 %v2313, %v2714
    %v3180 = vadd.f32 %v2314, %v2715
    %v3181 = vadd.f32 %v2315, %v2716
    %v3182 = vadd.f32 %v2316, %v2717
    %v3183 = vadd.f32 %v2317, %v2718
    %v3184 = vadd.f32 %v2318, %v2719
    %v3185 = vadd.f32 %v2319, %v2720
    %v3186 = vadd.f32 %v2320, %v2721
    %v3187 = vadd.f32 %v2321, %v2722
    %v3188 = vadd.f32 %v2322, %v2723
    %v3189 = vadd.f32 %v2323, %v2724
    %v3190 = vadd.f32 %v2324, %v2725
    %v3191 = vadd.f32 %v2325, %v2726
    %v3192 = vadd.f32 %v2326, %v2727
    %v3193 = vadd.f32 %v2327, %v2728
    %v3194 = vadd.f32 %v2328, %v2729
    %v3195 = vadd.f32 %v2329, %v2730
    %v3196 = vadd.f32 %v2330, %v2731
    %v3197 = vadd.f32 %v2331, %v2732
    %v3198 = vadd.f32 %v2332, %v2733
    %v3199 = vadd.f32 %v2333, %v2734
    %v3200 = vadd.f32 %v2334, %v2735
    %v3201 = vadd.f32 %v2335, %v2736
    %v3202 = vadd.f32 %v2336, %v2737
    %v3203 = vadd.f32 %v2337, %v2738
    %v3204 = vadd.f32 %v2338, %v2739
    %v3205 = vadd.f32 %v2339, %v2740
    %v3206 = vadd.f32 %v2340, %v2741
    %v3207 = vadd.f32 %v2341, %v2742
    %v3208 = vadd.f32 %v2342, %v2743
    %v3209 = vadd.f32 %v2343, %v2744
    %v3210 = vadd.f32 %v2344, %v2745
    %v3211 = vadd.f32 %v2345, %v2746
    %v3212 = vadd.f32 %v2346, %v2747
    %v3213 = vadd.f32 %v2347, %v2748
    %v3214 = vadd.f32 %v2348, %v2749
    %v3215 = vadd.f32 %v2349, %v2750
    %v3216 = vadd.f32 %v2350, %v2751
    %v3217 = vadd.f32 %v2351, %v2752
    %v3218 = vadd.f32 %v2352, %v2753
    %v3219 = vadd.f32 %v2353, %v2754
    %v3220 = vadd.f32 %v2354, %v2755
    %v3221 = vadd.f32 %v2355, %v2756
    %v3222 = vadd.f32 %v2356, %v2757
    %v3223 = vadd.f32 %v2357, %v2758
    %v3224 = vadd.f32 %v2358, %v2759
    %v3225 = vadd.f32 %v2359, %v2760
    %v3226 = vadd.f32 %v2360, %v2761
    %v3227 = vadd.f32 %v2361, %v2762
    %v3228 = vadd.f32 %v2362, %v2763
    %v3229 = vadd.f32 %v2363, %v2764
    %v3230 = vadd.f32 %v2364, %v2765
    %v3231 = vadd.f32 %v2365, %v2766
    %v3232 = vadd.f32 %v2366, %v2767
    %v3233 = vadd.f32 %v2367, %v2768
    %v3234 = vadd.f32 %v3170, %v3106
    %v3235 = vadd.f32 %v3171, %v3107
    %v3236 = vadd.f32 %v3172, %v3108
    %v3237 = vadd.f32 %v3173, %v3109
    %v3238 = vadd.f32 %v3174, %v3110
    %v3239 = vadd.f32 %v3175, %v3111
    %v3240 = vadd.f32 %v3176, %v3112
    %v3241 = vadd.f32 %v3177, %v3113
    %v3242 = vadd.f32 %v3178, %v3114
    %v3243 = vadd.f32 %v3179, %v3115
    %v3244 = vadd.f32 %v3180, %v3116
    %v3245 = vadd.f32 %v3181, %v3117
    %v3246 = vadd.f32 %v3182, %v3118
    %v3247 = vadd.f32 %v3183, %v3119
    %v3248 = vadd.f32 %v3184, %v3120
    %v3249 = vadd.f32 %v3185, %v3121
    %v3250 = vadd.f32 %v3186, %v3122
    %v3251 = vadd.f32 %v3187, %v3123
    %v3252 = vadd.f32 %v3188, %v3124
    %v3253 = vadd.f32 %v3189, %v3125
    %v3254 = vadd.f32 %v3190, %v3126
    %v3255 = vadd.f32 %v3191, %v3127
    %v3256 = vadd.f32 %v3192, %v3128
    %v3257 = vadd.f32 %v3193, %v3129
    %v3258 = vadd.f32 %v3194, %v3130
    %v3259 = vadd.f32 %v3195, %v3131
    %v3260 = vadd.f32 %v3196, %v3132
    %v3261 = vadd.f32 %v3197, %v3133
    %v3262 = vadd.f32 %v3198, %v3134
    %v3263 = vadd.f32 %v3199, %v3135
    %v3264 = vadd.f32 %v3200, %v3136
    %v3265 = vadd.f32 %v3201, %v3137
    %v3266 = vadd.f32 %v3202, %v3138
    %v3267 = vadd.f32 %v3203, %v3139
    %v3268 = vadd.f32 %v3204, %v3140
    %v3269 = vadd.f32 %v3205, %v3141
    %v3270 = vadd.f32 %v3206, %v3142
    %v3271 = vadd.f32 %v3207, %v3143
    %v3272 = vadd.f32 %v3208, %v3144
    %v3273 = vadd.f32 %v3209, %v3145
    %v3274 = vadd.f32 %v3210, %v3146
    %v3275 = vadd.f32 %v3211, %v3147
    %v3276 = vadd.f32 %v3212, %v3148
    %v3277 = vadd.f32 %v3213, %v3149
    %v3278 = vadd.f32 %v3214, %v3150
    %v3279 = vadd.f32 %v3215, %v3151
    %v3280 = vadd.f32 %v3216, %v3152
    %v3281 = vadd.f32 %v3217, %v3153
    %v3282 = vadd.f32 %v3218, %v3154
    %v3283 = vadd.f32 %v3219, %v3155
    %v3284 = vadd.f32 %v3220, %v3156
    %v3285 = vadd.f32 %v3221, %v3157
    %v3286 = vadd.f32 %v3222, %v3158
    %v3287 = vadd.f32 %v3223, %v3159
    %v3288 = vadd.f32 %v3224, %v3160
    %v3289 = vadd.f32 %v3225, %v3161
    %v3290 = vadd.f32 %v3226, %v3162
    %v3291 = vadd.f32 %v3227, %v3163
    %v3292 = vadd.f32 %v3228, %v3164
    %v3293 = vadd.f32 %v3229, %v3165
    %v3294 = vadd.f32 %v3230, %v3166
    %v3295 = vadd.f32 %v3231, %v3167
    %v3296 = vadd.f32 %v3232, %v3168
    %v3297 = vadd.f32 %v3233, %v3169
    %3298 = vrot.lane.b32.xlu0 %v1861, 1
    %v3299 = vpop.permute.xlu0 %3298
    %3300 = vrot.lane.b32.xlu0 %v1865, 1
    %v3301 = vpop.permute.xlu0 %3300
    %3302 = vrot.lane.b32.xlu0 %v1869, 1
    %v3303 = vpop.permute.xlu0 %3302
    %3304 = vrot.lane.b32.xlu0 %v1873, 1
    %v3305 = vpop.permute.xlu0 %3304
    %3306 = vrot.lane.b32.xlu0 %v1877, 1
    %v3307 = vpop.permute.xlu0 %3306
    %3308 = vrot.lane.b32.xlu0 %v1881, 1
    %v3309 = vpop.permute.xlu0 %3308
    %3310 = vrot.lane.b32.xlu0 %v1885, 1
    %v3311 = vpop.permute.xlu0 %3310
    %3312 = vrot.lane.b32.xlu0 %v1889, 1
    %v3313 = vpop.permute.xlu0 %3312
    %3314 = vrot.lane.b32.xlu0 %v1893, 1
    %v3315 = vpop.permute.xlu0 %3314
    %3316 = vrot.lane.b32.xlu0 %v1897, 1
    %v3317 = vpop.permute.xlu0 %3316
    %3318 = vrot.lane.b32.xlu0 %v1901, 1
    %v3319 = vpop.permute.xlu0 %3318
    %3320 = vrot.lane.b32.xlu0 %v1905, 1
    %v3321 = vpop.permute.xlu0 %3320
    %3322 = vrot.lane.b32.xlu0 %v1909, 1
    %v3323 = vpop.permute.xlu0 %3322
    %3324 = vrot.lane.b32.xlu0 %v1913, 1
    %v3325 = vpop.permute.xlu0 %3324
    %3326 = vrot.lane.b32.xlu0 %v1917, 1
    %v3327 = vpop.permute.xlu0 %3326
    %3328 = vrot.lane.b32.xlu0 %v1921, 1
    %v3329 = vpop.permute.xlu0 %3328
    %3330 = vrot.lane.b32.xlu0 %v1862, 1
    %v3331 = vpop.permute.xlu0 %3330
    %3332 = vrot.lane.b32.xlu0 %v1866, 1
    %v3333 = vpop.permute.xlu0 %3332
    %3334 = vrot.lane.b32.xlu0 %v1870, 1
    %v3335 = vpop.permute.xlu0 %3334
    %3336 = vrot.lane.b32.xlu0 %v1874, 1
    %v3337 = vpop.permute.xlu0 %3336
    %3338 = vrot.lane.b32.xlu0 %v1878, 1
    %v3339 = vpop.permute.xlu0 %3338
    %3340 = vrot.lane.b32.xlu0 %v1882, 1
    %v3341 = vpop.permute.xlu0 %3340
    %3342 = vrot.lane.b32.xlu0 %v1886, 1
    %v3343 = vpop.permute.xlu0 %3342
    %3344 = vrot.lane.b32.xlu0 %v1890, 1
    %v3345 = vpop.permute.xlu0 %3344
    %3346 = vrot.lane.b32.xlu0 %v1894, 1
    %v3347 = vpop.permute.xlu0 %3346
    %3348 = vrot.lane.b32.xlu0 %v1898, 1
    %v3349 = vpop.permute.xlu0 %3348
    %3350 = vrot.lane.b32.xlu0 %v1902, 1
    %v3351 = vpop.permute.xlu0 %3350
    %3352 = vrot.lane.b32.xlu0 %v1906, 1
    %v3353 = vpop.permute.xlu0 %3352
    %3354 = vrot.lane.b32.xlu0 %v1910, 1
    %v3355 = vpop.permute.xlu0 %3354
    %3356 = vrot.lane.b32.xlu0 %v1914, 1
    %v3357 = vpop.permute.xlu0 %3356
    %3358 = vrot.lane.b32.xlu0 %v1918, 1
    %v3359 = vpop.permute.xlu0 %3358
    %3360 = vrot.lane.b32.xlu0 %v1922, 1
    %v3361 = vpop.permute.xlu0 %3360
    %3362 = vrot.lane.b32.xlu0 %v1863, 1
    %v3363 = vpop.permute.xlu0 %3362
    %3364 = vrot.lane.b32.xlu0 %v1867, 1
    %v3365 = vpop.permute.xlu0 %3364
    %3366 = vrot.lane.b32.xlu0 %v1871, 1
    %v3367 = vpop.permute.xlu0 %3366
    %3368 = vrot.lane.b32.xlu0 %v1875, 1
    %v3369 = vpop.permute.xlu0 %3368
    %3370 = vrot.lane.b32.xlu0 %v1879, 1
    %v3371 = vpop.permute.xlu0 %3370
    %3372 = vrot.lane.b32.xlu0 %v1883, 1
    %v3373 = vpop.permute.xlu0 %3372
    %3374 = vrot.lane.b32.xlu0 %v1887, 1
    %v3375 = vpop.permute.xlu0 %3374
    %3376 = vrot.lane.b32.xlu0 %v1891, 1
    %v3377 = vpop.permute.xlu0 %3376
    %3378 = vrot.lane.b32.xlu0 %v1895, 1
    %v3379 = vpop.permute.xlu0 %3378
    %3380 = vrot.lane.b32.xlu0 %v1899, 1
    %v3381 = vpop.permute.xlu0 %3380
    %3382 = vrot.lane.b32.xlu0 %v1903, 1
    %v3383 = vpop.permute.xlu0 %3382
    %3384 = vrot.lane.b32.xlu0 %v1907, 1
    %v3385 = vpop.permute.xlu0 %3384
    %3386 = vrot.lane.b32.xlu0 %v1911, 1
    %v3387 = vpop.permute.xlu0 %3386
    %3388 = vrot.lane.b32.xlu0 %v1915, 1
    %v3389 = vpop.permute.xlu0 %3388
    %3390 = vrot.lane.b32.xlu0 %v1919, 1
    %v3391 = vpop.permute.xlu0 %3390
    %3392 = vrot.lane.b32.xlu0 %v1923, 1
    %v3393 = vpop.permute.xlu0 %3392
    %3394 = vrot.lane.b32.xlu0 %v1864, 1
    %v3395 = vpop.permute.xlu0 %3394
    %3396 = vrot.lane.b32.xlu0 %v1868, 1
    %v3397 = vpop.permute.xlu0 %3396
    %3398 = vrot.lane.b32.xlu0 %v1872, 1
    %v3399 = vpop.permute.xlu0 %3398
    %3400 = vrot.lane.b32.xlu0 %v1876, 1
    %v3401 = vpop.permute.xlu0 %3400
    %3402 = vrot.lane.b32.xlu0 %v1880, 1
    %v3403 = vpop.permute.xlu0 %3402
    %3404 = vrot.lane.b32.xlu0 %v1884, 1
    %v3405 = vpop.permute.xlu0 %3404
    %3406 = vrot.lane.b32.xlu0 %v1888, 1
    %v3407 = vpop.permute.xlu0 %3406
    %3408 = vrot.lane.b32.xlu0 %v1892, 1
    %v3409 = vpop.permute.xlu0 %3408
    %3410 = vrot.lane.b32.xlu0 %v1896, 1
    %v3411 = vpop.permute.xlu0 %3410
    %3412 = vrot.lane.b32.xlu0 %v1900, 1
    %v3413 = vpop.permute.xlu0 %3412
    %3414 = vrot.lane.b32.xlu0 %v1904, 1
    %v3415 = vpop.permute.xlu0 %3414
    %3416 = vrot.lane.b32.xlu0 %v1908, 1
    %v3417 = vpop.permute.xlu0 %3416
    %3418 = vrot.lane.b32.xlu0 %v1912, 1
    %v3419 = vpop.permute.xlu0 %3418
    %3420 = vrot.lane.b32.xlu0 %v1916, 1
    %v3421 = vpop.permute.xlu0 %3420
    %3422 = vrot.lane.b32.xlu0 %v1920, 1
    %v3423 = vpop.permute.xlu0 %3422
    %3424 = vrot.lane.b32.xlu0 %v1924, 1
    %v3425 = vpop.permute.xlu0 %3424
    %vm3426 = vcmp.lt.s32.totalorder %v2078, 1
    %v3427 = vsel %vm3426, %v3363, %v3395
    %v3428 = vsel %vm3426, %v3365, %v3397
    %v3429 = vsel %vm3426, %v3367, %v3399
    %v3430 = vsel %vm3426, %v3369, %v3401
    %v3431 = vsel %vm3426, %v3371, %v3403
    %v3432 = vsel %vm3426, %v3373, %v3405
    %v3433 = vsel %vm3426, %v3375, %v3407
    %v3434 = vsel %vm3426, %v3377, %v3409
    %v3435 = vsel %vm3426, %v3379, %v3411
    %v3436 = vsel %vm3426, %v3381, %v3413
    %v3437 = vsel %vm3426, %v3383, %v3415
    %v3438 = vsel %vm3426, %v3385, %v3417
    %v3439 = vsel %vm3426, %v3387, %v3419
    %v3440 = vsel %vm3426, %v3389, %v3421
    %v3441 = vsel %vm3426, %v3391, %v3423
    %v3442 = vsel %vm3426, %v3393, %v3425
    %v3443 = vsel %vm3426, %v3331, %v3363
    %v3444 = vsel %vm3426, %v3333, %v3365
    %v3445 = vsel %vm3426, %v3335, %v3367
    %v3446 = vsel %vm3426, %v3337, %v3369
    %v3447 = vsel %vm3426, %v3339, %v3371
    %v3448 = vsel %vm3426, %v3341, %v3373
    %v3449 = vsel %vm3426, %v3343, %v3375
    %v3450 = vsel %vm3426, %v3345, %v3377
    %v3451 = vsel %vm3426, %v3347, %v3379
    %v3452 = vsel %vm3426, %v3349, %v3381
    %v3453 = vsel %vm3426, %v3351, %v3383
    %v3454 = vsel %vm3426, %v3353, %v3385
    %v3455 = vsel %vm3426, %v3355, %v3387
    %v3456 = vsel %vm3426, %v3357, %v3389
    %v3457 = vsel %vm3426, %v3359, %v3391
    %v3458 = vsel %vm3426, %v3361, %v3393
    %v3459 = vsel %vm3426, %v3299, %v3331
    %v3460 = vsel %vm3426, %v3301, %v3333
    %v3461 = vsel %vm3426, %v3303, %v3335
    %v3462 = vsel %vm3426, %v3305, %v3337
    %v3463 = vsel %vm3426, %v3307, %v3339
    %v3464 = vsel %vm3426, %v3309, %v3341
    %v3465 = vsel %vm3426, %v3311, %v3343
    %v3466 = vsel %vm3426, %v3313, %v3345
    %v3467 = vsel %vm3426, %v3315, %v3347
    %v3468 = vsel %vm3426, %v3317, %v3349
    %v3469 = vsel %vm3426, %v3319, %v3351
    %v3470 = vsel %vm3426, %v3321, %v3353
    %v3471 = vsel %vm3426, %v3323, %v3355
    %v3472 = vsel %vm3426, %v3325, %v3357
    %v3473 = vsel %vm3426, %v3327, %v3359
    %v3474 = vsel %vm3426, %v3329, %v3361
    %v3475 = vsel %vm3426, %v3395, %v3299
    %v3476 = vsel %vm3426, %v3397, %v3301
    %v3477 = vsel %vm3426, %v3399, %v3303
    %v3478 = vsel %vm3426, %v3401, %v3305
    %v3479 = vsel %vm3426, %v3403, %v3307
    %v3480 = vsel %vm3426, %v3405, %v3309
    %v3481 = vsel %vm3426, %v3407, %v3311
    %v3482 = vsel %vm3426, %v3409, %v3313
    %v3483 = vsel %vm3426, %v3411, %v3315
    %v3484 = vsel %vm3426, %v3413, %v3317
    %v3485 = vsel %vm3426, %v3415, %v3319
    %v3486 = vsel %vm3426, %v3417, %v3321
    %v3487 = vsel %vm3426, %v3419, %v3323
    %v3488 = vsel %vm3426, %v3421, %v3325
    %v3489 = vsel %vm3426, %v3423, %v3327
    %v3490 = vsel %vm3426, %v3425, %v3329
    %v3491 = vlaneseq
    %v3492 = vshrl.u32 %v3491, 7
    %v3493 = vsub.s32 3, %v3492
    %v3494 = vrot.slane %v1941, %v3493
    %v3495 = vlaneseq
    %v3496 = vshrl.u32 %v3495, 7
    %v3497 = vsub.s32 3, %v3496
    %v3498 = vrot.slane %v1942, %v3497
    %v3499 = vlaneseq
    %v3500 = vshrl.u32 %v3499, 7
    %v3501 = vsub.s32 3, %v3500
    %v3502 = vrot.slane %v1943, %v3501
    %v3503 = vlaneseq
    %v3504 = vshrl.u32 %v3503, 7
    %v3505 = vsub.s32 3, %v3504
    %v3506 = vrot.slane %v1944, %v3505
    %v3507 = vmul.f32 %v3475, %v3494
    %v3508 = vmul.f32 %v3459, %v3498
    %v3509 = vmul.f32 %v3443, %v3502
    %v3510 = vmul.f32 %v3427, %v3506
    %v3511 = vmul.f32 %v3476, %v3494
    %v3512 = vmul.f32 %v3460, %v3498
    %v3513 = vmul.f32 %v3444, %v3502
    %v3514 = vmul.f32 %v3428, %v3506
    %v3515 = vmul.f32 %v3477, %v3494
    %v3516 = vmul.f32 %v3461, %v3498
    %v3517 = vmul.f32 %v3445, %v3502
    %v3518 = vmul.f32 %v3429, %v3506
    %v3519 = vmul.f32 %v3478, %v3494
    %v3520 = vmul.f32 %v3462, %v3498
    %v3521 = vmul.f32 %v3446, %v3502
    %v3522 = vmul.f32 %v3430, %v3506
    %v3523 = vmul.f32 %v3479, %v3494
    %v3524 = vmul.f32 %v3463, %v3498
    %v3525 = vmul.f32 %v3447, %v3502
    %v3526 = vmul.f32 %v3431, %v3506
    %v3527 = vmul.f32 %v3480, %v3494
    %v3528 = vmul.f32 %v3464, %v3498
    %v3529 = vmul.f32 %v3448, %v3502
    %v3530 = vmul.f32 %v3432, %v3506
    %v3531 = vmul.f32 %v3481, %v3494
    %v3532 = vmul.f32 %v3465, %v3498
    %v3533 = vmul.f32 %v3449, %v3502
    %v3534 = vmul.f32 %v3433, %v3506
    %v3535 = vmul.f32 %v3482, %v3494
    %v3536 = vmul.f32 %v3466, %v3498
    %v3537 = vmul.f32 %v3450, %v3502
    %v3538 = vmul.f32 %v3434, %v3506
    %v3539 = vmul.f32 %v3483, %v3494
    %v3540 = vmul.f32 %v3467, %v3498
    %v3541 = vmul.f32 %v3451, %v3502
    %v3542 = vmul.f32 %v3435, %v3506
    %v3543 = vmul.f32 %v3484, %v3494
    %v3544 = vmul.f32 %v3468, %v3498
    %v3545 = vmul.f32 %v3452, %v3502
    %v3546 = vmul.f32 %v3436, %v3506
    %v3547 = vmul.f32 %v3485, %v3494
    %v3548 = vmul.f32 %v3469, %v3498
    %v3549 = vmul.f32 %v3453, %v3502
    %v3550 = vmul.f32 %v3437, %v3506
    %v3551 = vmul.f32 %v3486, %v3494
    %v3552 = vmul.f32 %v3470, %v3498
    %v3553 = vmul.f32 %v3454, %v3502
    %v3554 = vmul.f32 %v3438, %v3506
    %v3555 = vmul.f32 %v3487, %v3494
    %v3556 = vmul.f32 %v3471, %v3498
    %v3557 = vmul.f32 %v3455, %v3502
    %v3558 = vmul.f32 %v3439, %v3506
    %v3559 = vmul.f32 %v3488, %v3494
    %v3560 = vmul.f32 %v3472, %v3498
    %v3561 = vmul.f32 %v3456, %v3502
    %v3562 = vmul.f32 %v3440, %v3506
    %v3563 = vmul.f32 %v3489, %v3494
    %v3564 = vmul.f32 %v3473, %v3498
    %v3565 = vmul.f32 %v3457, %v3502
    %v3566 = vmul.f32 %v3441, %v3506
    %v3567 = vmul.f32 %v3490, %v3494
    %v3568 = vmul.f32 %v3474, %v3498
    %v3569 = vmul.f32 %v3458, %v3502
    %v3570 = vmul.f32 %v3442, %v3506
    %3571 = vset.pattern.permute.xlu0 3
    %3572 = vperm.xlu0 %3571, %v1925
    %v3573 = vpop.permute.xlu0 %3572
    %3575 = vset.pattern.permute.xlu0 3
    %3576 = vperm.xlu0 %3575, %v1926
    %v3577 = vpop.permute.xlu0 %3576
    %3579 = vset.pattern.permute.xlu0 3
    %3580 = vperm.xlu0 %3579, %v1927
    %v3581 = vpop.permute.xlu0 %3580
    %3583 = vset.pattern.permute.xlu0 3
    %3584 = vperm.xlu0 %3583, %v1928
    %v3585 = vpop.permute.xlu0 %3584
    %3587 = vset.pattern.permute.xlu0 3
    %3588 = vperm.xlu0 %3587, %v1929
    %v3589 = vpop.permute.xlu0 %3588
    %3591 = vset.pattern.permute.xlu0 3
    %3592 = vperm.xlu0 %3591, %v1930
    %v3593 = vpop.permute.xlu0 %3592
    %3595 = vset.pattern.permute.xlu0 3
    %3596 = vperm.xlu0 %3595, %v1931
    %v3597 = vpop.permute.xlu0 %3596
    %3599 = vset.pattern.permute.xlu0 3
    %3600 = vperm.xlu0 %3599, %v1932
    %v3601 = vpop.permute.xlu0 %3600
    %3603 = vset.pattern.permute.xlu0 3
    %3604 = vperm.xlu0 %3603, %v1933
    %v3605 = vpop.permute.xlu0 %3604
    %3607 = vset.pattern.permute.xlu0 3
    %3608 = vperm.xlu0 %3607, %v1934
    %v3609 = vpop.permute.xlu0 %3608
    %3611 = vset.pattern.permute.xlu0 3
    %3612 = vperm.xlu0 %3611, %v1935
    %v3613 = vpop.permute.xlu0 %3612
    %3615 = vset.pattern.permute.xlu0 3
    %3616 = vperm.xlu0 %3615, %v1936
    %v3617 = vpop.permute.xlu0 %3616
    %3619 = vset.pattern.permute.xlu0 3
    %3620 = vperm.xlu0 %3619, %v1937
    %v3621 = vpop.permute.xlu0 %3620
    %3623 = vset.pattern.permute.xlu0 3
    %3624 = vperm.xlu0 %3623, %v1938
    %v3625 = vpop.permute.xlu0 %3624
    %3627 = vset.pattern.permute.xlu0 3
    %3628 = vperm.xlu0 %3627, %v1939
    %v3629 = vpop.permute.xlu0 %3628
    %3631 = vset.pattern.permute.xlu0 3
    %3632 = vperm.xlu0 %3631, %v1940
    %v3633 = vpop.permute.xlu0 %3632
    %v3635 = vmul.f32 %v3507, %v3573
    %v3636 = vmul.f32 %v3508, %v3573
    %v3637 = vmul.f32 %v3509, %v3573
    %v3638 = vmul.f32 %v3510, %v3573
    %v3639 = vmul.f32 %v3511, %v3577
    %v3640 = vmul.f32 %v3512, %v3577
    %v3641 = vmul.f32 %v3513, %v3577
    %v3642 = vmul.f32 %v3514, %v3577
    %v3643 = vmul.f32 %v3515, %v3581
    %v3644 = vmul.f32 %v3516, %v3581
    %v3645 = vmul.f32 %v3517, %v3581
    %v3646 = vmul.f32 %v3518, %v3581
    %v3647 = vmul.f32 %v3519, %v3585
    %v3648 = vmul.f32 %v3520, %v3585
    %v3649 = vmul.f32 %v3521, %v3585
    %v3650 = vmul.f32 %v3522, %v3585
    %v3651 = vmul.f32 %v3523, %v3589
    %v3652 = vmul.f32 %v3524, %v3589
    %v3653 = vmul.f32 %v3525, %v3589
    %v3654 = vmul.f32 %v3526, %v3589
    %v3655 = vmul.f32 %v3527, %v3593
    %v3656 = vmul.f32 %v3528, %v3593
    %v3657 = vmul.f32 %v3529, %v3593
    %v3658 = vmul.f32 %v3530, %v3593
    %v3659 = vmul.f32 %v3531, %v3597
    %v3660 = vmul.f32 %v3532, %v3597
    %v3661 = vmul.f32 %v3533, %v3597
    %v3662 = vmul.f32 %v3534, %v3597
    %v3663 = vmul.f32 %v3535, %v3601
    %v3664 = vmul.f32 %v3536, %v3601
    %v3665 = vmul.f32 %v3537, %v3601
    %v3666 = vmul.f32 %v3538, %v3601
    %v3667 = vmul.f32 %v3539, %v3605
    %v3668 = vmul.f32 %v3540, %v3605
    %v3669 = vmul.f32 %v3541, %v3605
    %v3670 = vmul.f32 %v3542, %v3605
    %v3671 = vmul.f32 %v3543, %v3609
    %v3672 = vmul.f32 %v3544, %v3609
    %v3673 = vmul.f32 %v3545, %v3609
    %v3674 = vmul.f32 %v3546, %v3609
    %v3675 = vmul.f32 %v3547, %v3613
    %v3676 = vmul.f32 %v3548, %v3613
    %v3677 = vmul.f32 %v3549, %v3613
    %v3678 = vmul.f32 %v3550, %v3613
    %v3679 = vmul.f32 %v3551, %v3617
    %v3680 = vmul.f32 %v3552, %v3617
    %v3681 = vmul.f32 %v3553, %v3617
    %v3682 = vmul.f32 %v3554, %v3617
    %v3683 = vmul.f32 %v3555, %v3621
    %v3684 = vmul.f32 %v3556, %v3621
    %v3685 = vmul.f32 %v3557, %v3621
    %v3686 = vmul.f32 %v3558, %v3621
    %v3687 = vmul.f32 %v3559, %v3625
    %v3688 = vmul.f32 %v3560, %v3625
    %v3689 = vmul.f32 %v3561, %v3625
    %v3690 = vmul.f32 %v3562, %v3625
    %v3691 = vmul.f32 %v3563, %v3629
    %v3692 = vmul.f32 %v3564, %v3629
    %v3693 = vmul.f32 %v3565, %v3629
    %v3694 = vmul.f32 %v3566, %v3629
    %v3695 = vmul.f32 %v3567, %v3633
    %v3696 = vmul.f32 %v3568, %v3633
    %v3697 = vmul.f32 %v3569, %v3633
    %v3698 = vmul.f32 %v3570, %v3633
    %3699 = vset.pattern.permute.xlu0 4
    %3700 = vperm.xlu0 %3699, %v1925
    %v3701 = vpop.permute.xlu0 %3700
    %3703 = vset.pattern.permute.xlu0 4
    %3704 = vperm.xlu0 %3703, %v1926
    %v3705 = vpop.permute.xlu0 %3704
    %3707 = vset.pattern.permute.xlu0 4
    %3708 = vperm.xlu0 %3707, %v1927
    %v3709 = vpop.permute.xlu0 %3708
    %3711 = vset.pattern.permute.xlu0 4
    %3712 = vperm.xlu0 %3711, %v1928
    %v3713 = vpop.permute.xlu0 %3712
    %3715 = vset.pattern.permute.xlu0 4
    %3716 = vperm.xlu0 %3715, %v1929
    %v3717 = vpop.permute.xlu0 %3716
    %3719 = vset.pattern.permute.xlu0 4
    %3720 = vperm.xlu0 %3719, %v1930
    %v3721 = vpop.permute.xlu0 %3720
    %3723 = vset.pattern.permute.xlu0 4
    %3724 = vperm.xlu0 %3723, %v1931
    %v3725 = vpop.permute.xlu0 %3724
    %3727 = vset.pattern.permute.xlu0 4
    %3728 = vperm.xlu0 %3727, %v1932
    %v3729 = vpop.permute.xlu0 %3728
    %3731 = vset.pattern.permute.xlu0 4
    %3732 = vperm.xlu0 %3731, %v1933
    %v3733 = vpop.permute.xlu0 %3732
    %3735 = vset.pattern.permute.xlu0 4
    %3736 = vperm.xlu0 %3735, %v1934
    %v3737 = vpop.permute.xlu0 %3736
    %3739 = vset.pattern.permute.xlu0 4
    %3740 = vperm.xlu0 %3739, %v1935
    %v3741 = vpop.permute.xlu0 %3740
    %3743 = vset.pattern.permute.xlu0 4
    %3744 = vperm.xlu0 %3743, %v1936
    %v3745 = vpop.permute.xlu0 %3744
    %3747 = vset.pattern.permute.xlu0 4
    %3748 = vperm.xlu0 %3747, %v1937
    %v3749 = vpop.permute.xlu0 %3748
    %3751 = vset.pattern.permute.xlu0 4
    %3752 = vperm.xlu0 %3751, %v1938
    %v3753 = vpop.permute.xlu0 %3752
    %3755 = vset.pattern.permute.xlu0 4
    %3756 = vperm.xlu0 %3755, %v1939
    %v3757 = vpop.permute.xlu0 %3756
    %3759 = vset.pattern.permute.xlu0 4
    %3760 = vperm.xlu0 %3759, %v1940
    %v3761 = vpop.permute.xlu0 %3760
    %v3763 = vmul.f32 %v1861, %v3701
    %v3764 = vmul.f32 %v1862, %v3701
    %v3765 = vmul.f32 %v1863, %v3701
    %v3766 = vmul.f32 %v1864, %v3701
    %v3767 = vmul.f32 %v1865, %v3705
    %v3768 = vmul.f32 %v1866, %v3705
    %v3769 = vmul.f32 %v1867, %v3705
    %v3770 = vmul.f32 %v1868, %v3705
    %v3771 = vmul.f32 %v1869, %v3709
    %v3772 = vmul.f32 %v1870, %v3709
    %v3773 = vmul.f32 %v1871, %v3709
    %v3774 = vmul.f32 %v1872, %v3709
    %v3775 = vmul.f32 %v1873, %v3713
    %v3776 = vmul.f32 %v1874, %v3713
    %v3777 = vmul.f32 %v1875, %v3713
    %v3778 = vmul.f32 %v1876, %v3713
    %v3779 = vmul.f32 %v1877, %v3717
    %v3780 = vmul.f32 %v1878, %v3717
    %v3781 = vmul.f32 %v1879, %v3717
    %v3782 = vmul.f32 %v1880, %v3717
    %v3783 = vmul.f32 %v1881, %v3721
    %v3784 = vmul.f32 %v1882, %v3721
    %v3785 = vmul.f32 %v1883, %v3721
    %v3786 = vmul.f32 %v1884, %v3721
    %v3787 = vmul.f32 %v1885, %v3725
    %v3788 = vmul.f32 %v1886, %v3725
    %v3789 = vmul.f32 %v1887, %v3725
    %v3790 = vmul.f32 %v1888, %v3725
    %v3791 = vmul.f32 %v1889, %v3729
    %v3792 = vmul.f32 %v1890, %v3729
    %v3793 = vmul.f32 %v1891, %v3729
    %v3794 = vmul.f32 %v1892, %v3729
    %v3795 = vmul.f32 %v1893, %v3733
    %v3796 = vmul.f32 %v1894, %v3733
    %v3797 = vmul.f32 %v1895, %v3733
    %v3798 = vmul.f32 %v1896, %v3733
    %v3799 = vmul.f32 %v1897, %v3737
    %v3800 = vmul.f32 %v1898, %v3737
    %v3801 = vmul.f32 %v1899, %v3737
    %v3802 = vmul.f32 %v1900, %v3737
    %v3803 = vmul.f32 %v1901, %v3741
    %v3804 = vmul.f32 %v1902, %v3741
    %v3805 = vmul.f32 %v1903, %v3741
    %v3806 = vmul.f32 %v1904, %v3741
    %v3807 = vmul.f32 %v1905, %v3745
    %v3808 = vmul.f32 %v1906, %v3745
    %v3809 = vmul.f32 %v1907, %v3745
    %v3810 = vmul.f32 %v1908, %v3745
    %v3811 = vmul.f32 %v1909, %v3749
    %v3812 = vmul.f32 %v1910, %v3749
    %v3813 = vmul.f32 %v1911, %v3749
    %v3814 = vmul.f32 %v1912, %v3749
    %v3815 = vmul.f32 %v1913, %v3753
    %v3816 = vmul.f32 %v1914, %v3753
    %v3817 = vmul.f32 %v1915, %v3753
    %v3818 = vmul.f32 %v1916, %v3753
    %v3819 = vmul.f32 %v1917, %v3757
    %v3820 = vmul.f32 %v1918, %v3757
    %v3821 = vmul.f32 %v1919, %v3757
    %v3822 = vmul.f32 %v1920, %v3757
    %v3823 = vmul.f32 %v1921, %v3761
    %v3824 = vmul.f32 %v1922, %v3761
    %v3825 = vmul.f32 %v1923, %v3761
    %v3826 = vmul.f32 %v1924, %v3761
    %3827 = vrot.lane.b32.xlu0 %v1861, 127
    %v3828 = vpop.permute.xlu0 %3827
    %3829 = vrot.lane.b32.xlu0 %v1865, 127
    %v3830 = vpop.permute.xlu0 %3829
    %3831 = vrot.lane.b32.xlu0 %v1869, 127
    %v3832 = vpop.permute.xlu0 %3831
    %3833 = vrot.lane.b32.xlu0 %v1873, 127
    %v3834 = vpop.permute.xlu0 %3833
    %3835 = vrot.lane.b32.xlu0 %v1877, 127
    %v3836 = vpop.permute.xlu0 %3835
    %3837 = vrot.lane.b32.xlu0 %v1881, 127
    %v3838 = vpop.permute.xlu0 %3837
    %3839 = vrot.lane.b32.xlu0 %v1885, 127
    %v3840 = vpop.permute.xlu0 %3839
    %3841 = vrot.lane.b32.xlu0 %v1889, 127
    %v3842 = vpop.permute.xlu0 %3841
    %3843 = vrot.lane.b32.xlu0 %v1893, 127
    %v3844 = vpop.permute.xlu0 %3843
    %3845 = vrot.lane.b32.xlu0 %v1897, 127
    %v3846 = vpop.permute.xlu0 %3845
    %3847 = vrot.lane.b32.xlu0 %v1901, 127
    %v3848 = vpop.permute.xlu0 %3847
    %3849 = vrot.lane.b32.xlu0 %v1905, 127
    %v3850 = vpop.permute.xlu0 %3849
    %3851 = vrot.lane.b32.xlu0 %v1909, 127
    %v3852 = vpop.permute.xlu0 %3851
    %3853 = vrot.lane.b32.xlu0 %v1913, 127
    %v3854 = vpop.permute.xlu0 %3853
    %3855 = vrot.lane.b32.xlu0 %v1917, 127
    %v3856 = vpop.permute.xlu0 %3855
    %3857 = vrot.lane.b32.xlu0 %v1921, 127
    %v3858 = vpop.permute.xlu0 %3857
    %3859 = vrot.lane.b32.xlu0 %v1862, 127
    %v3860 = vpop.permute.xlu0 %3859
    %3861 = vrot.lane.b32.xlu0 %v1866, 127
    %v3862 = vpop.permute.xlu0 %3861
    %3863 = vrot.lane.b32.xlu0 %v1870, 127
    %v3864 = vpop.permute.xlu0 %3863
    %3865 = vrot.lane.b32.xlu0 %v1874, 127
    %v3866 = vpop.permute.xlu0 %3865
    %3867 = vrot.lane.b32.xlu0 %v1878, 127
    %v3868 = vpop.permute.xlu0 %3867
    %3869 = vrot.lane.b32.xlu0 %v1882, 127
    %v3870 = vpop.permute.xlu0 %3869
    %3871 = vrot.lane.b32.xlu0 %v1886, 127
    %v3872 = vpop.permute.xlu0 %3871
    %3873 = vrot.lane.b32.xlu0 %v1890, 127
    %v3874 = vpop.permute.xlu0 %3873
    %3875 = vrot.lane.b32.xlu0 %v1894, 127
    %v3876 = vpop.permute.xlu0 %3875
    %3877 = vrot.lane.b32.xlu0 %v1898, 127
    %v3878 = vpop.permute.xlu0 %3877
    %3879 = vrot.lane.b32.xlu0 %v1902, 127
    %v3880 = vpop.permute.xlu0 %3879
    %3881 = vrot.lane.b32.xlu0 %v1906, 127
    %v3882 = vpop.permute.xlu0 %3881
    %3883 = vrot.lane.b32.xlu0 %v1910, 127
    %v3884 = vpop.permute.xlu0 %3883
    %3885 = vrot.lane.b32.xlu0 %v1914, 127
    %v3886 = vpop.permute.xlu0 %3885
    %3887 = vrot.lane.b32.xlu0 %v1918, 127
    %v3888 = vpop.permute.xlu0 %3887
    %3889 = vrot.lane.b32.xlu0 %v1922, 127
    %v3890 = vpop.permute.xlu0 %3889
    %3891 = vrot.lane.b32.xlu0 %v1863, 127
    %v3892 = vpop.permute.xlu0 %3891
    %3893 = vrot.lane.b32.xlu0 %v1867, 127
    %v3894 = vpop.permute.xlu0 %3893
    %3895 = vrot.lane.b32.xlu0 %v1871, 127
    %v3896 = vpop.permute.xlu0 %3895
    %3897 = vrot.lane.b32.xlu0 %v1875, 127
    %v3898 = vpop.permute.xlu0 %3897
    %3899 = vrot.lane.b32.xlu0 %v1879, 127
    %v3900 = vpop.permute.xlu0 %3899
    %3901 = vrot.lane.b32.xlu0 %v1883, 127
    %v3902 = vpop.permute.xlu0 %3901
    %3903 = vrot.lane.b32.xlu0 %v1887, 127
    %v3904 = vpop.permute.xlu0 %3903
    %3905 = vrot.lane.b32.xlu0 %v1891, 127
    %v3906 = vpop.permute.xlu0 %3905
    %3907 = vrot.lane.b32.xlu0 %v1895, 127
    %v3908 = vpop.permute.xlu0 %3907
    %3909 = vrot.lane.b32.xlu0 %v1899, 127
    %v3910 = vpop.permute.xlu0 %3909
    %3911 = vrot.lane.b32.xlu0 %v1903, 127
    %v3912 = vpop.permute.xlu0 %3911
    %3913 = vrot.lane.b32.xlu0 %v1907, 127
    %v3914 = vpop.permute.xlu0 %3913
    %3915 = vrot.lane.b32.xlu0 %v1911, 127
    %v3916 = vpop.permute.xlu0 %3915
    %3917 = vrot.lane.b32.xlu0 %v1915, 127
    %v3918 = vpop.permute.xlu0 %3917
    %3919 = vrot.lane.b32.xlu0 %v1919, 127
    %v3920 = vpop.permute.xlu0 %3919
    %3921 = vrot.lane.b32.xlu0 %v1923, 127
    %v3922 = vpop.permute.xlu0 %3921
    %3923 = vrot.lane.b32.xlu0 %v1864, 127
    %v3924 = vpop.permute.xlu0 %3923
    %3925 = vrot.lane.b32.xlu0 %v1868, 127
    %v3926 = vpop.permute.xlu0 %3925
    %3927 = vrot.lane.b32.xlu0 %v1872, 127
    %v3928 = vpop.permute.xlu0 %3927
    %3929 = vrot.lane.b32.xlu0 %v1876, 127
    %v3930 = vpop.permute.xlu0 %3929
    %3931 = vrot.lane.b32.xlu0 %v1880, 127
    %v3932 = vpop.permute.xlu0 %3931
    %3933 = vrot.lane.b32.xlu0 %v1884, 127
    %v3934 = vpop.permute.xlu0 %3933
    %3935 = vrot.lane.b32.xlu0 %v1888, 127
    %v3936 = vpop.permute.xlu0 %3935
    %3937 = vrot.lane.b32.xlu0 %v1892, 127
    %v3938 = vpop.permute.xlu0 %3937
    %3939 = vrot.lane.b32.xlu0 %v1896, 127
    %v3940 = vpop.permute.xlu0 %3939
    %3941 = vrot.lane.b32.xlu0 %v1900, 127
    %v3942 = vpop.permute.xlu0 %3941
    %3943 = vrot.lane.b32.xlu0 %v1904, 127
    %v3944 = vpop.permute.xlu0 %3943
    %3945 = vrot.lane.b32.xlu0 %v1908, 127
    %v3946 = vpop.permute.xlu0 %3945
    %3947 = vrot.lane.b32.xlu0 %v1912, 127
    %v3948 = vpop.permute.xlu0 %3947
    %3949 = vrot.lane.b32.xlu0 %v1916, 127
    %v3950 = vpop.permute.xlu0 %3949
    %3951 = vrot.lane.b32.xlu0 %v1920, 127
    %v3952 = vpop.permute.xlu0 %3951
    %3953 = vrot.lane.b32.xlu0 %v1924, 127
    %v3954 = vpop.permute.xlu0 %3953
    %vm3955 = vcmp.lt.s32.totalorder %v2078, 127
    %v3956 = vsel %vm3955, %v3892, %v3924
    %v3957 = vsel %vm3955, %v3894, %v3926
    %v3958 = vsel %vm3955, %v3896, %v3928
    %v3959 = vsel %vm3955, %v3898, %v3930
    %v3960 = vsel %vm3955, %v3900, %v3932
    %v3961 = vsel %vm3955, %v3902, %v3934
    %v3962 = vsel %vm3955, %v3904, %v3936
    %v3963 = vsel %vm3955, %v3906, %v3938
    %v3964 = vsel %vm3955, %v3908, %v3940
    %v3965 = vsel %vm3955, %v3910, %v3942
    %v3966 = vsel %vm3955, %v3912, %v3944
    %v3967 = vsel %vm3955, %v3914, %v3946
    %v3968 = vsel %vm3955, %v3916, %v3948
    %v3969 = vsel %vm3955, %v3918, %v3950
    %v3970 = vsel %vm3955, %v3920, %v3952
    %v3971 = vsel %vm3955, %v3922, %v3954
    %v3972 = vsel %vm3955, %v3860, %v3892
    %v3973 = vsel %vm3955, %v3862, %v3894
    %v3974 = vsel %vm3955, %v3864, %v3896
    %v3975 = vsel %vm3955, %v3866, %v3898
    %v3976 = vsel %vm3955, %v3868, %v3900
    %v3977 = vsel %vm3955, %v3870, %v3902
    %v3978 = vsel %vm3955, %v3872, %v3904
    %v3979 = vsel %vm3955, %v3874, %v3906
    %v3980 = vsel %vm3955, %v3876, %v3908
    %v3981 = vsel %vm3955, %v3878, %v3910
    %v3982 = vsel %vm3955, %v3880, %v3912
    %v3983 = vsel %vm3955, %v3882, %v3914
    %v3984 = vsel %vm3955, %v3884, %v3916
    %v3985 = vsel %vm3955, %v3886, %v3918
    %v3986 = vsel %vm3955, %v3888, %v3920
    %v3987 = vsel %vm3955, %v3890, %v3922
    %v3988 = vsel %vm3955, %v3828, %v3860
    %v3989 = vsel %vm3955, %v3830, %v3862
    %v3990 = vsel %vm3955, %v3832, %v3864
    %v3991 = vsel %vm3955, %v3834, %v3866
    %v3992 = vsel %vm3955, %v3836, %v3868
    %v3993 = vsel %vm3955, %v3838, %v3870
    %v3994 = vsel %vm3955, %v3840, %v3872
    %v3995 = vsel %vm3955, %v3842, %v3874
    %v3996 = vsel %vm3955, %v3844, %v3876
    %v3997 = vsel %vm3955, %v3846, %v3878
    %v3998 = vsel %vm3955, %v3848, %v3880
    %v3999 = vsel %vm3955, %v3850, %v3882
    %v4000 = vsel %vm3955, %v3852, %v3884
    %v4001 = vsel %vm3955, %v3854, %v3886
    %v4002 = vsel %vm3955, %v3856, %v3888
    %v4003 = vsel %vm3955, %v3858, %v3890
    %v4004 = vsel %vm3955, %v3924, %v3828
    %v4005 = vsel %vm3955, %v3926, %v3830
    %v4006 = vsel %vm3955, %v3928, %v3832
    %v4007 = vsel %vm3955, %v3930, %v3834
    %v4008 = vsel %vm3955, %v3932, %v3836
    %v4009 = vsel %vm3955, %v3934, %v3838
    %v4010 = vsel %vm3955, %v3936, %v3840
    %v4011 = vsel %vm3955, %v3938, %v3842
    %v4012 = vsel %vm3955, %v3940, %v3844
    %v4013 = vsel %vm3955, %v3942, %v3846
    %v4014 = vsel %vm3955, %v3944, %v3848
    %v4015 = vsel %vm3955, %v3946, %v3850
    %v4016 = vsel %vm3955, %v3948, %v3852
    %v4017 = vsel %vm3955, %v3950, %v3854
    %v4018 = vsel %vm3955, %v3952, %v3856
    %v4019 = vsel %vm3955, %v3954, %v3858
    %v4020 = vlaneseq
    %v4021 = vshrl.u32 %v4020, 7
    %v4022 = vsub.s32 5, %v4021
    %v4023 = vrot.slane %v1941, %v4022
    %v4024 = vlaneseq
    %v4025 = vshrl.u32 %v4024, 7
    %v4026 = vsub.s32 5, %v4025
    %v4027 = vrot.slane %v1942, %v4026
    %v4028 = vlaneseq
    %v4029 = vshrl.u32 %v4028, 7
    %v4030 = vsub.s32 5, %v4029
    %v4031 = vrot.slane %v1943, %v4030
    %v4032 = vlaneseq
    %v4033 = vshrl.u32 %v4032, 7
    %v4034 = vsub.s32 5, %v4033
    %v4035 = vrot.slane %v1944, %v4034
    %v4036 = vmul.f32 %v3988, %v4023
    %v4037 = vmul.f32 %v3972, %v4027
    %v4038 = vmul.f32 %v3956, %v4031
    %v4039 = vmul.f32 %v4004, %v4035
    %v4040 = vmul.f32 %v3989, %v4023
    %v4041 = vmul.f32 %v3973, %v4027
    %v4042 = vmul.f32 %v3957, %v4031
    %v4043 = vmul.f32 %v4005, %v4035
    %v4044 = vmul.f32 %v3990, %v4023
    %v4045 = vmul.f32 %v3974, %v4027
    %v4046 = vmul.f32 %v3958, %v4031
    %v4047 = vmul.f32 %v4006, %v4035
    %v4048 = vmul.f32 %v3991, %v4023
    %v4049 = vmul.f32 %v3975, %v4027
    %v4050 = vmul.f32 %v3959, %v4031
    %v4051 = vmul.f32 %v4007, %v4035
    %v4052 = vmul.f32 %v3992, %v4023
    %v4053 = vmul.f32 %v3976, %v4027
    %v4054 = vmul.f32 %v3960, %v4031
    %v4055 = vmul.f32 %v4008, %v4035
    %v4056 = vmul.f32 %v3993, %v4023
    %v4057 = vmul.f32 %v3977, %v4027
    %v4058 = vmul.f32 %v3961, %v4031
    %v4059 = vmul.f32 %v4009, %v4035
    %v4060 = vmul.f32 %v3994, %v4023
    %v4061 = vmul.f32 %v3978, %v4027
    %v4062 = vmul.f32 %v3962, %v4031
    %v4063 = vmul.f32 %v4010, %v4035
    %v4064 = vmul.f32 %v3995, %v4023
    %v4065 = vmul.f32 %v3979, %v4027
    %v4066 = vmul.f32 %v3963, %v4031
    %v4067 = vmul.f32 %v4011, %v4035
    %v4068 = vmul.f32 %v3996, %v4023
    %v4069 = vmul.f32 %v3980, %v4027
    %v4070 = vmul.f32 %v3964, %v4031
    %v4071 = vmul.f32 %v4012, %v4035
    %v4072 = vmul.f32 %v3997, %v4023
    %v4073 = vmul.f32 %v3981, %v4027
    %v4074 = vmul.f32 %v3965, %v4031
    %v4075 = vmul.f32 %v4013, %v4035
    %v4076 = vmul.f32 %v3998, %v4023
    %v4077 = vmul.f32 %v3982, %v4027
    %v4078 = vmul.f32 %v3966, %v4031
    %v4079 = vmul.f32 %v4014, %v4035
    %v4080 = vmul.f32 %v3999, %v4023
    %v4081 = vmul.f32 %v3983, %v4027
    %v4082 = vmul.f32 %v3967, %v4031
    %v4083 = vmul.f32 %v4015, %v4035
    %v4084 = vmul.f32 %v4000, %v4023
    %v4085 = vmul.f32 %v3984, %v4027
    %v4086 = vmul.f32 %v3968, %v4031
    %v4087 = vmul.f32 %v4016, %v4035
    %v4088 = vmul.f32 %v4001, %v4023
    %v4089 = vmul.f32 %v3985, %v4027
    %v4090 = vmul.f32 %v3969, %v4031
    %v4091 = vmul.f32 %v4017, %v4035
    %v4092 = vmul.f32 %v4002, %v4023
    %v4093 = vmul.f32 %v3986, %v4027
    %v4094 = vmul.f32 %v3970, %v4031
    %v4095 = vmul.f32 %v4018, %v4035
    %v4096 = vmul.f32 %v4003, %v4023
    %v4097 = vmul.f32 %v3987, %v4027
    %v4098 = vmul.f32 %v3971, %v4031
    %v4099 = vmul.f32 %v4019, %v4035
    %4100 = vset.pattern.permute.xlu0 5
    %4101 = vperm.xlu0 %4100, %v1925
    %v4102 = vpop.permute.xlu0 %4101
    %4104 = vset.pattern.permute.xlu0 5
    %4105 = vperm.xlu0 %4104, %v1926
    %v4106 = vpop.permute.xlu0 %4105
    %4108 = vset.pattern.permute.xlu0 5
    %4109 = vperm.xlu0 %4108, %v1927
    %v4110 = vpop.permute.xlu0 %4109
    %4112 = vset.pattern.permute.xlu0 5
    %4113 = vperm.xlu0 %4112, %v1928
    %v4114 = vpop.permute.xlu0 %4113
    %4116 = vset.pattern.permute.xlu0 5
    %4117 = vperm.xlu0 %4116, %v1929
    %v4118 = vpop.permute.xlu0 %4117
    %4120 = vset.pattern.permute.xlu0 5
    %4121 = vperm.xlu0 %4120, %v1930
    %v4122 = vpop.permute.xlu0 %4121
    %4124 = vset.pattern.permute.xlu0 5
    %4125 = vperm.xlu0 %4124, %v1931
    %v4126 = vpop.permute.xlu0 %4125
    %4128 = vset.pattern.permute.xlu0 5
    %4129 = vperm.xlu0 %4128, %v1932
    %v4130 = vpop.permute.xlu0 %4129
    %4132 = vset.pattern.permute.xlu0 5
    %4133 = vperm.xlu0 %4132, %v1933
    %v4134 = vpop.permute.xlu0 %4133
    %4136 = vset.pattern.permute.xlu0 5
    %4137 = vperm.xlu0 %4136, %v1934
    %v4138 = vpop.permute.xlu0 %4137
    %4140 = vset.pattern.permute.xlu0 5
    %4141 = vperm.xlu0 %4140, %v1935
    %v4142 = vpop.permute.xlu0 %4141
    %4144 = vset.pattern.permute.xlu0 5
    %4145 = vperm.xlu0 %4144, %v1936
    %v4146 = vpop.permute.xlu0 %4145
    %4148 = vset.pattern.permute.xlu0 5
    %4149 = vperm.xlu0 %4148, %v1937
    %v4150 = vpop.permute.xlu0 %4149
    %4152 = vset.pattern.permute.xlu0 5
    %4153 = vperm.xlu0 %4152, %v1938
    %v4154 = vpop.permute.xlu0 %4153
    %4156 = vset.pattern.permute.xlu0 5
    %4157 = vperm.xlu0 %4156, %v1939
    %v4158 = vpop.permute.xlu0 %4157
    %4160 = vset.pattern.permute.xlu0 5
    %4161 = vperm.xlu0 %4160, %v1940
    %v4162 = vpop.permute.xlu0 %4161
    %v4164 = vmul.f32 %v4036, %v4102
    %v4165 = vmul.f32 %v4037, %v4102
    %v4166 = vmul.f32 %v4038, %v4102
    %v4167 = vmul.f32 %v4039, %v4102
    %v4168 = vmul.f32 %v4040, %v4106
    %v4169 = vmul.f32 %v4041, %v4106
    %v4170 = vmul.f32 %v4042, %v4106
    %v4171 = vmul.f32 %v4043, %v4106
    %v4172 = vmul.f32 %v4044, %v4110
    %v4173 = vmul.f32 %v4045, %v4110
    %v4174 = vmul.f32 %v4046, %v4110
    %v4175 = vmul.f32 %v4047, %v4110
    %v4176 = vmul.f32 %v4048, %v4114
    %v4177 = vmul.f32 %v4049, %v4114
    %v4178 = vmul.f32 %v4050, %v4114
    %v4179 = vmul.f32 %v4051, %v4114
    %v4180 = vmul.f32 %v4052, %v4118
    %v4181 = vmul.f32 %v4053, %v4118
    %v4182 = vmul.f32 %v4054, %v4118
    %v4183 = vmul.f32 %v4055, %v4118
    %v4184 = vmul.f32 %v4056, %v4122
    %v4185 = vmul.f32 %v4057, %v4122
    %v4186 = vmul.f32 %v4058, %v4122
    %v4187 = vmul.f32 %v4059, %v4122
    %v4188 = vmul.f32 %v4060, %v4126
    %v4189 = vmul.f32 %v4061, %v4126
    %v4190 = vmul.f32 %v4062, %v4126
    %v4191 = vmul.f32 %v4063, %v4126
    %v4192 = vmul.f32 %v4064, %v4130
    %v4193 = vmul.f32 %v4065, %v4130
    %v4194 = vmul.f32 %v4066, %v4130
    %v4195 = vmul.f32 %v4067, %v4130
    %v4196 = vmul.f32 %v4068, %v4134
    %v4197 = vmul.f32 %v4069, %v4134
    %v4198 = vmul.f32 %v4070, %v4134
    %v4199 = vmul.f32 %v4071, %v4134
    %v4200 = vmul.f32 %v4072, %v4138
    %v4201 = vmul.f32 %v4073, %v4138
    %v4202 = vmul.f32 %v4074, %v4138
    %v4203 = vmul.f32 %v4075, %v4138
    %v4204 = vmul.f32 %v4076, %v4142
    %v4205 = vmul.f32 %v4077, %v4142
    %v4206 = vmul.f32 %v4078, %v4142
    %v4207 = vmul.f32 %v4079, %v4142
    %v4208 = vmul.f32 %v4080, %v4146
    %v4209 = vmul.f32 %v4081, %v4146
    %v4210 = vmul.f32 %v4082, %v4146
    %v4211 = vmul.f32 %v4083, %v4146
    %v4212 = vmul.f32 %v4084, %v4150
    %v4213 = vmul.f32 %v4085, %v4150
    %v4214 = vmul.f32 %v4086, %v4150
    %v4215 = vmul.f32 %v4087, %v4150
    %v4216 = vmul.f32 %v4088, %v4154
    %v4217 = vmul.f32 %v4089, %v4154
    %v4218 = vmul.f32 %v4090, %v4154
    %v4219 = vmul.f32 %v4091, %v4154
    %v4220 = vmul.f32 %v4092, %v4158
    %v4221 = vmul.f32 %v4093, %v4158
    %v4222 = vmul.f32 %v4094, %v4158
    %v4223 = vmul.f32 %v4095, %v4158
    %v4224 = vmul.f32 %v4096, %v4162
    %v4225 = vmul.f32 %v4097, %v4162
    %v4226 = vmul.f32 %v4098, %v4162
    %v4227 = vmul.f32 %v4099, %v4162
    %v4228 = vadd.f32 %v3635, %v3763
    %v4229 = vadd.f32 %v3636, %v3764
    %v4230 = vadd.f32 %v3637, %v3765
    %v4231 = vadd.f32 %v3638, %v3766
    %v4232 = vadd.f32 %v3639, %v3767
    %v4233 = vadd.f32 %v3640, %v3768
    %v4234 = vadd.f32 %v3641, %v3769
    %v4235 = vadd.f32 %v3642, %v3770
    %v4236 = vadd.f32 %v3643, %v3771
    %v4237 = vadd.f32 %v3644, %v3772
    %v4238 = vadd.f32 %v3645, %v3773
    %v4239 = vadd.f32 %v3646, %v3774
    %v4240 = vadd.f32 %v3647, %v3775
    %v4241 = vadd.f32 %v3648, %v3776
    %v4242 = vadd.f32 %v3649, %v3777
    %v4243 = vadd.f32 %v3650, %v3778
    %v4244 = vadd.f32 %v3651, %v3779
    %v4245 = vadd.f32 %v3652, %v3780
    %v4246 = vadd.f32 %v3653, %v3781
    %v4247 = vadd.f32 %v3654, %v3782
    %v4248 = vadd.f32 %v3655, %v3783
    %v4249 = vadd.f32 %v3656, %v3784
    %v4250 = vadd.f32 %v3657, %v3785
    %v4251 = vadd.f32 %v3658, %v3786
    %v4252 = vadd.f32 %v3659, %v3787
    %v4253 = vadd.f32 %v3660, %v3788
    %v4254 = vadd.f32 %v3661, %v3789
    %v4255 = vadd.f32 %v3662, %v3790
    %v4256 = vadd.f32 %v3663, %v3791
    %v4257 = vadd.f32 %v3664, %v3792
    %v4258 = vadd.f32 %v3665, %v3793
    %v4259 = vadd.f32 %v3666, %v3794
    %v4260 = vadd.f32 %v3667, %v3795
    %v4261 = vadd.f32 %v3668, %v3796
    %v4262 = vadd.f32 %v3669, %v3797
    %v4263 = vadd.f32 %v3670, %v3798
    %v4264 = vadd.f32 %v3671, %v3799
    %v4265 = vadd.f32 %v3672, %v3800
    %v4266 = vadd.f32 %v3673, %v3801
    %v4267 = vadd.f32 %v3674, %v3802
    %v4268 = vadd.f32 %v3675, %v3803
    %v4269 = vadd.f32 %v3676, %v3804
    %v4270 = vadd.f32 %v3677, %v3805
    %v4271 = vadd.f32 %v3678, %v3806
    %v4272 = vadd.f32 %v3679, %v3807
    %v4273 = vadd.f32 %v3680, %v3808
    %v4274 = vadd.f32 %v3681, %v3809
    %v4275 = vadd.f32 %v3682, %v3810
    %v4276 = vadd.f32 %v3683, %v3811
    %v4277 = vadd.f32 %v3684, %v3812
    %v4278 = vadd.f32 %v3685, %v3813
    %v4279 = vadd.f32 %v3686, %v3814
    %v4280 = vadd.f32 %v3687, %v3815
    %v4281 = vadd.f32 %v3688, %v3816
    %v4282 = vadd.f32 %v3689, %v3817
    %v4283 = vadd.f32 %v3690, %v3818
    %v4284 = vadd.f32 %v3691, %v3819
    %v4285 = vadd.f32 %v3692, %v3820
    %v4286 = vadd.f32 %v3693, %v3821
    %v4287 = vadd.f32 %v3694, %v3822
    %v4288 = vadd.f32 %v3695, %v3823
    %v4289 = vadd.f32 %v3696, %v3824
    %v4290 = vadd.f32 %v3697, %v3825
    %v4291 = vadd.f32 %v3698, %v3826
    %v4292 = vadd.f32 %v4228, %v4164
    %v4293 = vadd.f32 %v4229, %v4165
    %v4294 = vadd.f32 %v4230, %v4166
    %v4295 = vadd.f32 %v4231, %v4167
    %v4296 = vadd.f32 %v4232, %v4168
    %v4297 = vadd.f32 %v4233, %v4169
    %v4298 = vadd.f32 %v4234, %v4170
    %v4299 = vadd.f32 %v4235, %v4171
    %v4300 = vadd.f32 %v4236, %v4172
    %v4301 = vadd.f32 %v4237, %v4173
    %v4302 = vadd.f32 %v4238, %v4174
    %v4303 = vadd.f32 %v4239, %v4175
    %v4304 = vadd.f32 %v4240, %v4176
    %v4305 = vadd.f32 %v4241, %v4177
    %v4306 = vadd.f32 %v4242, %v4178
    %v4307 = vadd.f32 %v4243, %v4179
    %v4308 = vadd.f32 %v4244, %v4180
    %v4309 = vadd.f32 %v4245, %v4181
    %v4310 = vadd.f32 %v4246, %v4182
    %v4311 = vadd.f32 %v4247, %v4183
    %v4312 = vadd.f32 %v4248, %v4184
    %v4313 = vadd.f32 %v4249, %v4185
    %v4314 = vadd.f32 %v4250, %v4186
    %v4315 = vadd.f32 %v4251, %v4187
    %v4316 = vadd.f32 %v4252, %v4188
    %v4317 = vadd.f32 %v4253, %v4189
    %v4318 = vadd.f32 %v4254, %v4190
    %v4319 = vadd.f32 %v4255, %v4191
    %v4320 = vadd.f32 %v4256, %v4192
    %v4321 = vadd.f32 %v4257, %v4193
    %v4322 = vadd.f32 %v4258, %v4194
    %v4323 = vadd.f32 %v4259, %v4195
    %v4324 = vadd.f32 %v4260, %v4196
    %v4325 = vadd.f32 %v4261, %v4197
    %v4326 = vadd.f32 %v4262, %v4198
    %v4327 = vadd.f32 %v4263, %v4199
    %v4328 = vadd.f32 %v4264, %v4200
    %v4329 = vadd.f32 %v4265, %v4201
    %v4330 = vadd.f32 %v4266, %v4202
    %v4331 = vadd.f32 %v4267, %v4203
    %v4332 = vadd.f32 %v4268, %v4204
    %v4333 = vadd.f32 %v4269, %v4205
    %v4334 = vadd.f32 %v4270, %v4206
    %v4335 = vadd.f32 %v4271, %v4207
    %v4336 = vadd.f32 %v4272, %v4208
    %v4337 = vadd.f32 %v4273, %v4209
    %v4338 = vadd.f32 %v4274, %v4210
    %v4339 = vadd.f32 %v4275, %v4211
    %v4340 = vadd.f32 %v4276, %v4212
    %v4341 = vadd.f32 %v4277, %v4213
    %v4342 = vadd.f32 %v4278, %v4214
    %v4343 = vadd.f32 %v4279, %v4215
    %v4344 = vadd.f32 %v4280, %v4216
    %v4345 = vadd.f32 %v4281, %v4217
    %v4346 = vadd.f32 %v4282, %v4218
    %v4347 = vadd.f32 %v4283, %v4219
    %v4348 = vadd.f32 %v4284, %v4220
    %v4349 = vadd.f32 %v4285, %v4221
    %v4350 = vadd.f32 %v4286, %v4222
    %v4351 = vadd.f32 %v4287, %v4223
    %v4352 = vadd.f32 %v4288, %v4224
    %v4353 = vadd.f32 %v4289, %v4225
    %v4354 = vadd.f32 %v4290, %v4226
    %v4355 = vadd.f32 %v4291, %v4227
    %4356 = vrot.lane.b32.xlu0 %v1861, 113
    %v4357 = vpop.permute.xlu0 %4356
    %4358 = vrot.lane.b32.xlu0 %v1865, 113
    %v4359 = vpop.permute.xlu0 %4358
    %4360 = vrot.lane.b32.xlu0 %v1869, 113
    %v4361 = vpop.permute.xlu0 %4360
    %4362 = vrot.lane.b32.xlu0 %v1873, 113
    %v4363 = vpop.permute.xlu0 %4362
    %4364 = vrot.lane.b32.xlu0 %v1877, 113
    %v4365 = vpop.permute.xlu0 %4364
    %4366 = vrot.lane.b32.xlu0 %v1881, 113
    %v4367 = vpop.permute.xlu0 %4366
    %4368 = vrot.lane.b32.xlu0 %v1885, 113
    %v4369 = vpop.permute.xlu0 %4368
    %4370 = vrot.lane.b32.xlu0 %v1889, 113
    %v4371 = vpop.permute.xlu0 %4370
    %4372 = vrot.lane.b32.xlu0 %v1893, 113
    %v4373 = vpop.permute.xlu0 %4372
    %4374 = vrot.lane.b32.xlu0 %v1897, 113
    %v4375 = vpop.permute.xlu0 %4374
    %4376 = vrot.lane.b32.xlu0 %v1901, 113
    %v4377 = vpop.permute.xlu0 %4376
    %4378 = vrot.lane.b32.xlu0 %v1905, 113
    %v4379 = vpop.permute.xlu0 %4378
    %4380 = vrot.lane.b32.xlu0 %v1909, 113
    %v4381 = vpop.permute.xlu0 %4380
    %4382 = vrot.lane.b32.xlu0 %v1913, 113
    %v4383 = vpop.permute.xlu0 %4382
    %4384 = vrot.lane.b32.xlu0 %v1917, 113
    %v4385 = vpop.permute.xlu0 %4384
    %4386 = vrot.lane.b32.xlu0 %v1921, 113
    %v4387 = vpop.permute.xlu0 %4386
    %4388 = vrot.lane.b32.xlu0 %v1862, 113
    %v4389 = vpop.permute.xlu0 %4388
    %4390 = vrot.lane.b32.xlu0 %v1866, 113
    %v4391 = vpop.permute.xlu0 %4390
    %4392 = vrot.lane.b32.xlu0 %v1870, 113
    %v4393 = vpop.permute.xlu0 %4392
    %4394 = vrot.lane.b32.xlu0 %v1874, 113
    %v4395 = vpop.permute.xlu0 %4394
    %4396 = vrot.lane.b32.xlu0 %v1878, 113
    %v4397 = vpop.permute.xlu0 %4396
    %4398 = vrot.lane.b32.xlu0 %v1882, 113
    %v4399 = vpop.permute.xlu0 %4398
    %4400 = vrot.lane.b32.xlu0 %v1886, 113
    %v4401 = vpop.permute.xlu0 %4400
    %4402 = vrot.lane.b32.xlu0 %v1890, 113
    %v4403 = vpop.permute.xlu0 %4402
    %4404 = vrot.lane.b32.xlu0 %v1894, 113
    %v4405 = vpop.permute.xlu0 %4404
    %4406 = vrot.lane.b32.xlu0 %v1898, 113
    %v4407 = vpop.permute.xlu0 %4406
    %4408 = vrot.lane.b32.xlu0 %v1902, 113
    %v4409 = vpop.permute.xlu0 %4408
    %4410 = vrot.lane.b32.xlu0 %v1906, 113
    %v4411 = vpop.permute.xlu0 %4410
    %4412 = vrot.lane.b32.xlu0 %v1910, 113
    %v4413 = vpop.permute.xlu0 %4412
    %4414 = vrot.lane.b32.xlu0 %v1914, 113
    %v4415 = vpop.permute.xlu0 %4414
    %4416 = vrot.lane.b32.xlu0 %v1918, 113
    %v4417 = vpop.permute.xlu0 %4416
    %4418 = vrot.lane.b32.xlu0 %v1922, 113
    %v4419 = vpop.permute.xlu0 %4418
    %4420 = vrot.lane.b32.xlu0 %v1863, 113
    %v4421 = vpop.permute.xlu0 %4420
    %4422 = vrot.lane.b32.xlu0 %v1867, 113
    %v4423 = vpop.permute.xlu0 %4422
    %4424 = vrot.lane.b32.xlu0 %v1871, 113
    %v4425 = vpop.permute.xlu0 %4424
    %4426 = vrot.lane.b32.xlu0 %v1875, 113
    %v4427 = vpop.permute.xlu0 %4426
    %4428 = vrot.lane.b32.xlu0 %v1879, 113
    %v4429 = vpop.permute.xlu0 %4428
    %4430 = vrot.lane.b32.xlu0 %v1883, 113
    %v4431 = vpop.permute.xlu0 %4430
    %4432 = vrot.lane.b32.xlu0 %v1887, 113
    %v4433 = vpop.permute.xlu0 %4432
    %4434 = vrot.lane.b32.xlu0 %v1891, 113
    %v4435 = vpop.permute.xlu0 %4434
    %4436 = vrot.lane.b32.xlu0 %v1895, 113
    %v4437 = vpop.permute.xlu0 %4436
    %4438 = vrot.lane.b32.xlu0 %v1899, 113
    %v4439 = vpop.permute.xlu0 %4438
    %4440 = vrot.lane.b32.xlu0 %v1903, 113
    %v4441 = vpop.permute.xlu0 %4440
    %4442 = vrot.lane.b32.xlu0 %v1907, 113
    %v4443 = vpop.permute.xlu0 %4442
    %4444 = vrot.lane.b32.xlu0 %v1911, 113
    %v4445 = vpop.permute.xlu0 %4444
    %4446 = vrot.lane.b32.xlu0 %v1915, 113
    %v4447 = vpop.permute.xlu0 %4446
    %4448 = vrot.lane.b32.xlu0 %v1919, 113
    %v4449 = vpop.permute.xlu0 %4448
    %4450 = vrot.lane.b32.xlu0 %v1923, 113
    %v4451 = vpop.permute.xlu0 %4450
    %4452 = vrot.lane.b32.xlu0 %v1864, 113
    %v4453 = vpop.permute.xlu0 %4452
    %4454 = vrot.lane.b32.xlu0 %v1868, 113
    %v4455 = vpop.permute.xlu0 %4454
    %4456 = vrot.lane.b32.xlu0 %v1872, 113
    %v4457 = vpop.permute.xlu0 %4456
    %4458 = vrot.lane.b32.xlu0 %v1876, 113
    %v4459 = vpop.permute.xlu0 %4458
    %4460 = vrot.lane.b32.xlu0 %v1880, 113
    %v4461 = vpop.permute.xlu0 %4460
    %4462 = vrot.lane.b32.xlu0 %v1884, 113
    %v4463 = vpop.permute.xlu0 %4462
    %4464 = vrot.lane.b32.xlu0 %v1888, 113
    %v4465 = vpop.permute.xlu0 %4464
    %4466 = vrot.lane.b32.xlu0 %v1892, 113
    %v4467 = vpop.permute.xlu0 %4466
    %4468 = vrot.lane.b32.xlu0 %v1896, 113
    %v4469 = vpop.permute.xlu0 %4468
    %4470 = vrot.lane.b32.xlu0 %v1900, 113
    %v4471 = vpop.permute.xlu0 %4470
    %4472 = vrot.lane.b32.xlu0 %v1904, 113
    %v4473 = vpop.permute.xlu0 %4472
    %4474 = vrot.lane.b32.xlu0 %v1908, 113
    %v4475 = vpop.permute.xlu0 %4474
    %4476 = vrot.lane.b32.xlu0 %v1912, 113
    %v4477 = vpop.permute.xlu0 %4476
    %4478 = vrot.lane.b32.xlu0 %v1916, 113
    %v4479 = vpop.permute.xlu0 %4478
    %4480 = vrot.lane.b32.xlu0 %v1920, 113
    %v4481 = vpop.permute.xlu0 %4480
    %4482 = vrot.lane.b32.xlu0 %v1924, 113
    %v4483 = vpop.permute.xlu0 %4482
    %vm4484 = vcmp.lt.s32.totalorder %v2078, 113
    %v4485 = vsel %vm4484, %v4421, %v4453
    %v4486 = vsel %vm4484, %v4423, %v4455
    %v4487 = vsel %vm4484, %v4425, %v4457
    %v4488 = vsel %vm4484, %v4427, %v4459
    %v4489 = vsel %vm4484, %v4429, %v4461
    %v4490 = vsel %vm4484, %v4431, %v4463
    %v4491 = vsel %vm4484, %v4433, %v4465
    %v4492 = vsel %vm4484, %v4435, %v4467
    %v4493 = vsel %vm4484, %v4437, %v4469
    %v4494 = vsel %vm4484, %v4439, %v4471
    %v4495 = vsel %vm4484, %v4441, %v4473
    %v4496 = vsel %vm4484, %v4443, %v4475
    %v4497 = vsel %vm4484, %v4445, %v4477
    %v4498 = vsel %vm4484, %v4447, %v4479
    %v4499 = vsel %vm4484, %v4449, %v4481
    %v4500 = vsel %vm4484, %v4451, %v4483
    %v4501 = vsel %vm4484, %v4389, %v4421
    %v4502 = vsel %vm4484, %v4391, %v4423
    %v4503 = vsel %vm4484, %v4393, %v4425
    %v4504 = vsel %vm4484, %v4395, %v4427
    %v4505 = vsel %vm4484, %v4397, %v4429
    %v4506 = vsel %vm4484, %v4399, %v4431
    %v4507 = vsel %vm4484, %v4401, %v4433
    %v4508 = vsel %vm4484, %v4403, %v4435
    %v4509 = vsel %vm4484, %v4405, %v4437
    %v4510 = vsel %vm4484, %v4407, %v4439
    %v4511 = vsel %vm4484, %v4409, %v4441
    %v4512 = vsel %vm4484, %v4411, %v4443
    %v4513 = vsel %vm4484, %v4413, %v4445
    %v4514 = vsel %vm4484, %v4415, %v4447
    %v4515 = vsel %vm4484, %v4417, %v4449
    %v4516 = vsel %vm4484, %v4419, %v4451
    %v4517 = vsel %vm4484, %v4357, %v4389
    %v4518 = vsel %vm4484, %v4359, %v4391
    %v4519 = vsel %vm4484, %v4361, %v4393
    %v4520 = vsel %vm4484, %v4363, %v4395
    %v4521 = vsel %vm4484, %v4365, %v4397
    %v4522 = vsel %vm4484, %v4367, %v4399
    %v4523 = vsel %vm4484, %v4369, %v4401
    %v4524 = vsel %vm4484, %v4371, %v4403
    %v4525 = vsel %vm4484, %v4373, %v4405
    %v4526 = vsel %vm4484, %v4375, %v4407
    %v4527 = vsel %vm4484, %v4377, %v4409
    %v4528 = vsel %vm4484, %v4379, %v4411
    %v4529 = vsel %vm4484, %v4381, %v4413
    %v4530 = vsel %vm4484, %v4383, %v4415
    %v4531 = vsel %vm4484, %v4385, %v4417
    %v4532 = vsel %vm4484, %v4387, %v4419
    %v4533 = vsel %vm4484, %v4453, %v4357
    %v4534 = vsel %vm4484, %v4455, %v4359
    %v4535 = vsel %vm4484, %v4457, %v4361
    %v4536 = vsel %vm4484, %v4459, %v4363
    %v4537 = vsel %vm4484, %v4461, %v4365
    %v4538 = vsel %vm4484, %v4463, %v4367
    %v4539 = vsel %vm4484, %v4465, %v4369
    %v4540 = vsel %vm4484, %v4467, %v4371
    %v4541 = vsel %vm4484, %v4469, %v4373
    %v4542 = vsel %vm4484, %v4471, %v4375
    %v4543 = vsel %vm4484, %v4473, %v4377
    %v4544 = vsel %vm4484, %v4475, %v4379
    %v4545 = vsel %vm4484, %v4477, %v4381
    %v4546 = vsel %vm4484, %v4479, %v4383
    %v4547 = vsel %vm4484, %v4481, %v4385
    %v4548 = vsel %vm4484, %v4483, %v4387
    %v4549 = vlaneseq
    %v4550 = vshrl.u32 %v4549, 7
    %v4551 = vsub.s32 6, %v4550
    %v4552 = vrot.slane %v1941, %v4551
    %v4553 = vlaneseq
    %v4554 = vshrl.u32 %v4553, 7
    %v4555 = vsub.s32 6, %v4554
    %v4556 = vrot.slane %v1942, %v4555
    %v4557 = vlaneseq
    %v4558 = vshrl.u32 %v4557, 7
    %v4559 = vsub.s32 6, %v4558
    %v4560 = vrot.slane %v1943, %v4559
    %v4561 = vlaneseq
    %v4562 = vshrl.u32 %v4561, 7
    %v4563 = vsub.s32 6, %v4562
    %v4564 = vrot.slane %v1944, %v4563
    %v4565 = vmul.f32 %v4517, %v4552
    %v4566 = vmul.f32 %v4501, %v4556
    %v4567 = vmul.f32 %v4485, %v4560
    %v4568 = vmul.f32 %v4533, %v4564
    %v4569 = vmul.f32 %v4518, %v4552
    %v4570 = vmul.f32 %v4502, %v4556
    %v4571 = vmul.f32 %v4486, %v4560
    %v4572 = vmul.f32 %v4534, %v4564
    %v4573 = vmul.f32 %v4519, %v4552
    %v4574 = vmul.f32 %v4503, %v4556
    %v4575 = vmul.f32 %v4487, %v4560
    %v4576 = vmul.f32 %v4535, %v4564
    %v4577 = vmul.f32 %v4520, %v4552
    %v4578 = vmul.f32 %v4504, %v4556
    %v4579 = vmul.f32 %v4488, %v4560
    %v4580 = vmul.f32 %v4536, %v4564
    %v4581 = vmul.f32 %v4521, %v4552
    %v4582 = vmul.f32 %v4505, %v4556
    %v4583 = vmul.f32 %v4489, %v4560
    %v4584 = vmul.f32 %v4537, %v4564
    %v4585 = vmul.f32 %v4522, %v4552
    %v4586 = vmul.f32 %v4506, %v4556
    %v4587 = vmul.f32 %v4490, %v4560
    %v4588 = vmul.f32 %v4538, %v4564
    %v4589 = vmul.f32 %v4523, %v4552
    %v4590 = vmul.f32 %v4507, %v4556
    %v4591 = vmul.f32 %v4491, %v4560
    %v4592 = vmul.f32 %v4539, %v4564
    %v4593 = vmul.f32 %v4524, %v4552
    %v4594 = vmul.f32 %v4508, %v4556
    %v4595 = vmul.f32 %v4492, %v4560
    %v4596 = vmul.f32 %v4540, %v4564
    %v4597 = vmul.f32 %v4525, %v4552
    %v4598 = vmul.f32 %v4509, %v4556
    %v4599 = vmul.f32 %v4493, %v4560
    %v4600 = vmul.f32 %v4541, %v4564
    %v4601 = vmul.f32 %v4526, %v4552
    %v4602 = vmul.f32 %v4510, %v4556
    %v4603 = vmul.f32 %v4494, %v4560
    %v4604 = vmul.f32 %v4542, %v4564
    %v4605 = vmul.f32 %v4527, %v4552
    %v4606 = vmul.f32 %v4511, %v4556
    %v4607 = vmul.f32 %v4495, %v4560
    %v4608 = vmul.f32 %v4543, %v4564
    %v4609 = vmul.f32 %v4528, %v4552
    %v4610 = vmul.f32 %v4512, %v4556
    %v4611 = vmul.f32 %v4496, %v4560
    %v4612 = vmul.f32 %v4544, %v4564
    %v4613 = vmul.f32 %v4529, %v4552
    %v4614 = vmul.f32 %v4513, %v4556
    %v4615 = vmul.f32 %v4497, %v4560
    %v4616 = vmul.f32 %v4545, %v4564
    %v4617 = vmul.f32 %v4530, %v4552
    %v4618 = vmul.f32 %v4514, %v4556
    %v4619 = vmul.f32 %v4498, %v4560
    %v4620 = vmul.f32 %v4546, %v4564
    %v4621 = vmul.f32 %v4531, %v4552
    %v4622 = vmul.f32 %v4515, %v4556
    %v4623 = vmul.f32 %v4499, %v4560
    %v4624 = vmul.f32 %v4547, %v4564
    %v4625 = vmul.f32 %v4532, %v4552
    %v4626 = vmul.f32 %v4516, %v4556
    %v4627 = vmul.f32 %v4500, %v4560
    %v4628 = vmul.f32 %v4548, %v4564
    %4629 = vset.pattern.permute.xlu0 6
    %4630 = vperm.xlu0 %4629, %v1925
    %v4631 = vpop.permute.xlu0 %4630
    %4633 = vset.pattern.permute.xlu0 6
    %4634 = vperm.xlu0 %4633, %v1926
    %v4635 = vpop.permute.xlu0 %4634
    %4637 = vset.pattern.permute.xlu0 6
    %4638 = vperm.xlu0 %4637, %v1927
    %v4639 = vpop.permute.xlu0 %4638
    %4641 = vset.pattern.permute.xlu0 6
    %4642 = vperm.xlu0 %4641, %v1928
    %v4643 = vpop.permute.xlu0 %4642
    %4645 = vset.pattern.permute.xlu0 6
    %4646 = vperm.xlu0 %4645, %v1929
    %v4647 = vpop.permute.xlu0 %4646
    %4649 = vset.pattern.permute.xlu0 6
    %4650 = vperm.xlu0 %4649, %v1930
    %v4651 = vpop.permute.xlu0 %4650
    %4653 = vset.pattern.permute.xlu0 6
    %4654 = vperm.xlu0 %4653, %v1931
    %v4655 = vpop.permute.xlu0 %4654
    %4657 = vset.pattern.permute.xlu0 6
    %4658 = vperm.xlu0 %4657, %v1932
    %v4659 = vpop.permute.xlu0 %4658
    %4661 = vset.pattern.permute.xlu0 6
    %4662 = vperm.xlu0 %4661, %v1933
    %v4663 = vpop.permute.xlu0 %4662
    %4665 = vset.pattern.permute.xlu0 6
    %4666 = vperm.xlu0 %4665, %v1934
    %v4667 = vpop.permute.xlu0 %4666
    %4669 = vset.pattern.permute.xlu0 6
    %4670 = vperm.xlu0 %4669, %v1935
    %v4671 = vpop.permute.xlu0 %4670
    %4673 = vset.pattern.permute.xlu0 6
    %4674 = vperm.xlu0 %4673, %v1936
    %v4675 = vpop.permute.xlu0 %4674
    %4677 = vset.pattern.permute.xlu0 6
    %4678 = vperm.xlu0 %4677, %v1937
    %v4679 = vpop.permute.xlu0 %4678
    %4681 = vset.pattern.permute.xlu0 6
    %4682 = vperm.xlu0 %4681, %v1938
    %v4683 = vpop.permute.xlu0 %4682
    %4685 = vset.pattern.permute.xlu0 6
    %4686 = vperm.xlu0 %4685, %v1939
    %v4687 = vpop.permute.xlu0 %4686
    %4689 = vset.pattern.permute.xlu0 6
    %4690 = vperm.xlu0 %4689, %v1940
    %v4691 = vpop.permute.xlu0 %4690
    %v4693 = vmul.f32 %v4565, %v4631
    %v4694 = vmul.f32 %v4566, %v4631
    %v4695 = vmul.f32 %v4567, %v4631
    %v4696 = vmul.f32 %v4568, %v4631
    %v4697 = vmul.f32 %v4569, %v4635
    %v4698 = vmul.f32 %v4570, %v4635
    %v4699 = vmul.f32 %v4571, %v4635
    %v4700 = vmul.f32 %v4572, %v4635
    %v4701 = vmul.f32 %v4573, %v4639
    %v4702 = vmul.f32 %v4574, %v4639
    %v4703 = vmul.f32 %v4575, %v4639
    %v4704 = vmul.f32 %v4576, %v4639
    %v4705 = vmul.f32 %v4577, %v4643
    %v4706 = vmul.f32 %v4578, %v4643
    %v4707 = vmul.f32 %v4579, %v4643
    %v4708 = vmul.f32 %v4580, %v4643
    %v4709 = vmul.f32 %v4581, %v4647
    %v4710 = vmul.f32 %v4582, %v4647
    %v4711 = vmul.f32 %v4583, %v4647
    %v4712 = vmul.f32 %v4584, %v4647
    %v4713 = vmul.f32 %v4585, %v4651
    %v4714 = vmul.f32 %v4586, %v4651
    %v4715 = vmul.f32 %v4587, %v4651
    %v4716 = vmul.f32 %v4588, %v4651
    %v4717 = vmul.f32 %v4589, %v4655
    %v4718 = vmul.f32 %v4590, %v4655
    %v4719 = vmul.f32 %v4591, %v4655
    %v4720 = vmul.f32 %v4592, %v4655
    %v4721 = vmul.f32 %v4593, %v4659
    %v4722 = vmul.f32 %v4594, %v4659
    %v4723 = vmul.f32 %v4595, %v4659
    %v4724 = vmul.f32 %v4596, %v4659
    %v4725 = vmul.f32 %v4597, %v4663
    %v4726 = vmul.f32 %v4598, %v4663
    %v4727 = vmul.f32 %v4599, %v4663
    %v4728 = vmul.f32 %v4600, %v4663
    %v4729 = vmul.f32 %v4601, %v4667
    %v4730 = vmul.f32 %v4602, %v4667
    %v4731 = vmul.f32 %v4603, %v4667
    %v4732 = vmul.f32 %v4604, %v4667
    %v4733 = vmul.f32 %v4605, %v4671
    %v4734 = vmul.f32 %v4606, %v4671
    %v4735 = vmul.f32 %v4607, %v4671
    %v4736 = vmul.f32 %v4608, %v4671
    %v4737 = vmul.f32 %v4609, %v4675
    %v4738 = vmul.f32 %v4610, %v4675
    %v4739 = vmul.f32 %v4611, %v4675
    %v4740 = vmul.f32 %v4612, %v4675
    %v4741 = vmul.f32 %v4613, %v4679
    %v4742 = vmul.f32 %v4614, %v4679
    %v4743 = vmul.f32 %v4615, %v4679
    %v4744 = vmul.f32 %v4616, %v4679
    %v4745 = vmul.f32 %v4617, %v4683
    %v4746 = vmul.f32 %v4618, %v4683
    %v4747 = vmul.f32 %v4619, %v4683
    %v4748 = vmul.f32 %v4620, %v4683
    %v4749 = vmul.f32 %v4621, %v4687
    %v4750 = vmul.f32 %v4622, %v4687
    %v4751 = vmul.f32 %v4623, %v4687
    %v4752 = vmul.f32 %v4624, %v4687
    %v4753 = vmul.f32 %v4625, %v4691
    %v4754 = vmul.f32 %v4626, %v4691
    %v4755 = vmul.f32 %v4627, %v4691
    %v4756 = vmul.f32 %v4628, %v4691
    %4757 = vrot.lane.b32.xlu0 %v1861, 112
    %v4758 = vpop.permute.xlu0 %4757
    %4759 = vrot.lane.b32.xlu0 %v1865, 112
    %v4760 = vpop.permute.xlu0 %4759
    %4761 = vrot.lane.b32.xlu0 %v1869, 112
    %v4762 = vpop.permute.xlu0 %4761
    %4763 = vrot.lane.b32.xlu0 %v1873, 112
    %v4764 = vpop.permute.xlu0 %4763
    %4765 = vrot.lane.b32.xlu0 %v1877, 112
    %v4766 = vpop.permute.xlu0 %4765
    %4767 = vrot.lane.b32.xlu0 %v1881, 112
    %v4768 = vpop.permute.xlu0 %4767
    %4769 = vrot.lane.b32.xlu0 %v1885, 112
    %v4770 = vpop.permute.xlu0 %4769
    %4771 = vrot.lane.b32.xlu0 %v1889, 112
    %v4772 = vpop.permute.xlu0 %4771
    %4773 = vrot.lane.b32.xlu0 %v1893, 112
    %v4774 = vpop.permute.xlu0 %4773
    %4775 = vrot.lane.b32.xlu0 %v1897, 112
    %v4776 = vpop.permute.xlu0 %4775
    %4777 = vrot.lane.b32.xlu0 %v1901, 112
    %v4778 = vpop.permute.xlu0 %4777
    %4779 = vrot.lane.b32.xlu0 %v1905, 112
    %v4780 = vpop.permute.xlu0 %4779
    %4781 = vrot.lane.b32.xlu0 %v1909, 112
    %v4782 = vpop.permute.xlu0 %4781
    %4783 = vrot.lane.b32.xlu0 %v1913, 112
    %v4784 = vpop.permute.xlu0 %4783
    %4785 = vrot.lane.b32.xlu0 %v1917, 112
    %v4786 = vpop.permute.xlu0 %4785
    %4787 = vrot.lane.b32.xlu0 %v1921, 112
    %v4788 = vpop.permute.xlu0 %4787
    %4789 = vrot.lane.b32.xlu0 %v1862, 112
    %v4790 = vpop.permute.xlu0 %4789
    %4791 = vrot.lane.b32.xlu0 %v1866, 112
    %v4792 = vpop.permute.xlu0 %4791
    %4793 = vrot.lane.b32.xlu0 %v1870, 112
    %v4794 = vpop.permute.xlu0 %4793
    %4795 = vrot.lane.b32.xlu0 %v1874, 112
    %v4796 = vpop.permute.xlu0 %4795
    %4797 = vrot.lane.b32.xlu0 %v1878, 112
    %v4798 = vpop.permute.xlu0 %4797
    %4799 = vrot.lane.b32.xlu0 %v1882, 112
    %v4800 = vpop.permute.xlu0 %4799
    %4801 = vrot.lane.b32.xlu0 %v1886, 112
    %v4802 = vpop.permute.xlu0 %4801
    %4803 = vrot.lane.b32.xlu0 %v1890, 112
    %v4804 = vpop.permute.xlu0 %4803
    %4805 = vrot.lane.b32.xlu0 %v1894, 112
    %v4806 = vpop.permute.xlu0 %4805
    %4807 = vrot.lane.b32.xlu0 %v1898, 112
    %v4808 = vpop.permute.xlu0 %4807
    %4809 = vrot.lane.b32.xlu0 %v1902, 112
    %v4810 = vpop.permute.xlu0 %4809
    %4811 = vrot.lane.b32.xlu0 %v1906, 112
    %v4812 = vpop.permute.xlu0 %4811
    %4813 = vrot.lane.b32.xlu0 %v1910, 112
    %v4814 = vpop.permute.xlu0 %4813
    %4815 = vrot.lane.b32.xlu0 %v1914, 112
    %v4816 = vpop.permute.xlu0 %4815
    %4817 = vrot.lane.b32.xlu0 %v1918, 112
    %v4818 = vpop.permute.xlu0 %4817
    %4819 = vrot.lane.b32.xlu0 %v1922, 112
    %v4820 = vpop.permute.xlu0 %4819
    %4821 = vrot.lane.b32.xlu0 %v1863, 112
    %v4822 = vpop.permute.xlu0 %4821
    %4823 = vrot.lane.b32.xlu0 %v1867, 112
    %v4824 = vpop.permute.xlu0 %4823
    %4825 = vrot.lane.b32.xlu0 %v1871, 112
    %v4826 = vpop.permute.xlu0 %4825
    %4827 = vrot.lane.b32.xlu0 %v1875, 112
    %v4828 = vpop.permute.xlu0 %4827
    %4829 = vrot.lane.b32.xlu0 %v1879, 112
    %v4830 = vpop.permute.xlu0 %4829
    %4831 = vrot.lane.b32.xlu0 %v1883, 112
    %v4832 = vpop.permute.xlu0 %4831
    %4833 = vrot.lane.b32.xlu0 %v1887, 112
    %v4834 = vpop.permute.xlu0 %4833
    %4835 = vrot.lane.b32.xlu0 %v1891, 112
    %v4836 = vpop.permute.xlu0 %4835
    %4837 = vrot.lane.b32.xlu0 %v1895, 112
    %v4838 = vpop.permute.xlu0 %4837
    %4839 = vrot.lane.b32.xlu0 %v1899, 112
    %v4840 = vpop.permute.xlu0 %4839
    %4841 = vrot.lane.b32.xlu0 %v1903, 112
    %v4842 = vpop.permute.xlu0 %4841
    %4843 = vrot.lane.b32.xlu0 %v1907, 112
    %v4844 = vpop.permute.xlu0 %4843
    %4845 = vrot.lane.b32.xlu0 %v1911, 112
    %v4846 = vpop.permute.xlu0 %4845
    %4847 = vrot.lane.b32.xlu0 %v1915, 112
    %v4848 = vpop.permute.xlu0 %4847
    %4849 = vrot.lane.b32.xlu0 %v1919, 112
    %v4850 = vpop.permute.xlu0 %4849
    %4851 = vrot.lane.b32.xlu0 %v1923, 112
    %v4852 = vpop.permute.xlu0 %4851
    %4853 = vrot.lane.b32.xlu0 %v1864, 112
    %v4854 = vpop.permute.xlu0 %4853
    %4855 = vrot.lane.b32.xlu0 %v1868, 112
    %v4856 = vpop.permute.xlu0 %4855
    %4857 = vrot.lane.b32.xlu0 %v1872, 112
    %v4858 = vpop.permute.xlu0 %4857
    %4859 = vrot.lane.b32.xlu0 %v1876, 112
    %v4860 = vpop.permute.xlu0 %4859
    %4861 = vrot.lane.b32.xlu0 %v1880, 112
    %v4862 = vpop.permute.xlu0 %4861
    %4863 = vrot.lane.b32.xlu0 %v1884, 112
    %v4864 = vpop.permute.xlu0 %4863
    %4865 = vrot.lane.b32.xlu0 %v1888, 112
    %v4866 = vpop.permute.xlu0 %4865
    %4867 = vrot.lane.b32.xlu0 %v1892, 112
    %v4868 = vpop.permute.xlu0 %4867
    %4869 = vrot.lane.b32.xlu0 %v1896, 112
    %v4870 = vpop.permute.xlu0 %4869
    %4871 = vrot.lane.b32.xlu0 %v1900, 112
    %v4872 = vpop.permute.xlu0 %4871
    %4873 = vrot.lane.b32.xlu0 %v1904, 112
    %v4874 = vpop.permute.xlu0 %4873
    %4875 = vrot.lane.b32.xlu0 %v1908, 112
    %v4876 = vpop.permute.xlu0 %4875
    %4877 = vrot.lane.b32.xlu0 %v1912, 112
    %v4878 = vpop.permute.xlu0 %4877
    %4879 = vrot.lane.b32.xlu0 %v1916, 112
    %v4880 = vpop.permute.xlu0 %4879
    %4881 = vrot.lane.b32.xlu0 %v1920, 112
    %v4882 = vpop.permute.xlu0 %4881
    %4883 = vrot.lane.b32.xlu0 %v1924, 112
    %v4884 = vpop.permute.xlu0 %4883
    %vm4885 = vcmp.lt.s32.totalorder %v2078, 112
    %v4886 = vsel %vm4885, %v4822, %v4854
    %v4887 = vsel %vm4885, %v4824, %v4856
    %v4888 = vsel %vm4885, %v4826, %v4858
    %v4889 = vsel %vm4885, %v4828, %v4860
    %v4890 = vsel %vm4885, %v4830, %v4862
    %v4891 = vsel %vm4885, %v4832, %v4864
    %v4892 = vsel %vm4885, %v4834, %v4866
    %v4893 = vsel %vm4885, %v4836, %v4868
    %v4894 = vsel %vm4885, %v4838, %v4870
    %v4895 = vsel %vm4885, %v4840, %v4872
    %v4896 = vsel %vm4885, %v4842, %v4874
    %v4897 = vsel %vm4885, %v4844, %v4876
    %v4898 = vsel %vm4885, %v4846, %v4878
    %v4899 = vsel %vm4885, %v4848, %v4880
    %v4900 = vsel %vm4885, %v4850, %v4882
    %v4901 = vsel %vm4885, %v4852, %v4884
    %v4902 = vsel %vm4885, %v4790, %v4822
    %v4903 = vsel %vm4885, %v4792, %v4824
    %v4904 = vsel %vm4885, %v4794, %v4826
    %v4905 = vsel %vm4885, %v4796, %v4828
    %v4906 = vsel %vm4885, %v4798, %v4830
    %v4907 = vsel %vm4885, %v4800, %v4832
    %v4908 = vsel %vm4885, %v4802, %v4834
    %v4909 = vsel %vm4885, %v4804, %v4836
    %v4910 = vsel %vm4885, %v4806, %v4838
    %v4911 = vsel %vm4885, %v4808, %v4840
    %v4912 = vsel %vm4885, %v4810, %v4842
    %v4913 = vsel %vm4885, %v4812, %v4844
    %v4914 = vsel %vm4885, %v4814, %v4846
    %v4915 = vsel %vm4885, %v4816, %v4848
    %v4916 = vsel %vm4885, %v4818, %v4850
    %v4917 = vsel %vm4885, %v4820, %v4852
    %v4918 = vsel %vm4885, %v4758, %v4790
    %v4919 = vsel %vm4885, %v4760, %v4792
    %v4920 = vsel %vm4885, %v4762, %v4794
    %v4921 = vsel %vm4885, %v4764, %v4796
    %v4922 = vsel %vm4885, %v4766, %v4798
    %v4923 = vsel %vm4885, %v4768, %v4800
    %v4924 = vsel %vm4885, %v4770, %v4802
    %v4925 = vsel %vm4885, %v4772, %v4804
    %v4926 = vsel %vm4885, %v4774, %v4806
    %v4927 = vsel %vm4885, %v4776, %v4808
    %v4928 = vsel %vm4885, %v4778, %v4810
    %v4929 = vsel %vm4885, %v4780, %v4812
    %v4930 = vsel %vm4885, %v4782, %v4814
    %v4931 = vsel %vm4885, %v4784, %v4816
    %v4932 = vsel %vm4885, %v4786, %v4818
    %v4933 = vsel %vm4885, %v4788, %v4820
    %v4934 = vsel %vm4885, %v4854, %v4758
    %v4935 = vsel %vm4885, %v4856, %v4760
    %v4936 = vsel %vm4885, %v4858, %v4762
    %v4937 = vsel %vm4885, %v4860, %v4764
    %v4938 = vsel %vm4885, %v4862, %v4766
    %v4939 = vsel %vm4885, %v4864, %v4768
    %v4940 = vsel %vm4885, %v4866, %v4770
    %v4941 = vsel %vm4885, %v4868, %v4772
    %v4942 = vsel %vm4885, %v4870, %v4774
    %v4943 = vsel %vm4885, %v4872, %v4776
    %v4944 = vsel %vm4885, %v4874, %v4778
    %v4945 = vsel %vm4885, %v4876, %v4780
    %v4946 = vsel %vm4885, %v4878, %v4782
    %v4947 = vsel %vm4885, %v4880, %v4784
    %v4948 = vsel %vm4885, %v4882, %v4786
    %v4949 = vsel %vm4885, %v4884, %v4788
    %v4950 = vlaneseq
    %v4951 = vshrl.u32 %v4950, 7
    %v4952 = vsub.s32 7, %v4951
    %v4953 = vrot.slane %v1941, %v4952
    %v4954 = vlaneseq
    %v4955 = vshrl.u32 %v4954, 7
    %v4956 = vsub.s32 7, %v4955
    %v4957 = vrot.slane %v1942, %v4956
    %v4958 = vlaneseq
    %v4959 = vshrl.u32 %v4958, 7
    %v4960 = vsub.s32 7, %v4959
    %v4961 = vrot.slane %v1943, %v4960
    %v4962 = vlaneseq
    %v4963 = vshrl.u32 %v4962, 7
    %v4964 = vsub.s32 7, %v4963
    %v4965 = vrot.slane %v1944, %v4964
    %v4966 = vmul.f32 %v4918, %v4953
    %v4967 = vmul.f32 %v4902, %v4957
    %v4968 = vmul.f32 %v4886, %v4961
    %v4969 = vmul.f32 %v4934, %v4965
    %v4970 = vmul.f32 %v4919, %v4953
    %v4971 = vmul.f32 %v4903, %v4957
    %v4972 = vmul.f32 %v4887, %v4961
    %v4973 = vmul.f32 %v4935, %v4965
    %v4974 = vmul.f32 %v4920, %v4953
    %v4975 = vmul.f32 %v4904, %v4957
    %v4976 = vmul.f32 %v4888, %v4961
    %v4977 = vmul.f32 %v4936, %v4965
    %v4978 = vmul.f32 %v4921, %v4953
    %v4979 = vmul.f32 %v4905, %v4957
    %v4980 = vmul.f32 %v4889, %v4961
    %v4981 = vmul.f32 %v4937, %v4965
    %v4982 = vmul.f32 %v4922, %v4953
    %v4983 = vmul.f32 %v4906, %v4957
    %v4984 = vmul.f32 %v4890, %v4961
    %v4985 = vmul.f32 %v4938, %v4965
    %v4986 = vmul.f32 %v4923, %v4953
    %v4987 = vmul.f32 %v4907, %v4957
    %v4988 = vmul.f32 %v4891, %v4961
    %v4989 = vmul.f32 %v4939, %v4965
    %v4990 = vmul.f32 %v4924, %v4953
    %v4991 = vmul.f32 %v4908, %v4957
    %v4992 = vmul.f32 %v4892, %v4961
    %v4993 = vmul.f32 %v4940, %v4965
    %v4994 = vmul.f32 %v4925, %v4953
    %v4995 = vmul.f32 %v4909, %v4957
    %v4996 = vmul.f32 %v4893, %v4961
    %v4997 = vmul.f32 %v4941, %v4965
    %v4998 = vmul.f32 %v4926, %v4953
    %v4999 = vmul.f32 %v4910, %v4957
    %v5000 = vmul.f32 %v4894, %v4961
    %v5001 = vmul.f32 %v4942, %v4965
    %v5002 = vmul.f32 %v4927, %v4953
    %v5003 = vmul.f32 %v4911, %v4957
    %v5004 = vmul.f32 %v4895, %v4961
    %v5005 = vmul.f32 %v4943, %v4965
    %v5006 = vmul.f32 %v4928, %v4953
    %v5007 = vmul.f32 %v4912, %v4957
    %v5008 = vmul.f32 %v4896, %v4961
    %v5009 = vmul.f32 %v4944, %v4965
    %v5010 = vmul.f32 %v4929, %v4953
    %v5011 = vmul.f32 %v4913, %v4957
    %v5012 = vmul.f32 %v4897, %v4961
    %v5013 = vmul.f32 %v4945, %v4965
    %v5014 = vmul.f32 %v4930, %v4953
    %v5015 = vmul.f32 %v4914, %v4957
    %v5016 = vmul.f32 %v4898, %v4961
    %v5017 = vmul.f32 %v4946, %v4965
    %v5018 = vmul.f32 %v4931, %v4953
    %v5019 = vmul.f32 %v4915, %v4957
    %v5020 = vmul.f32 %v4899, %v4961
    %v5021 = vmul.f32 %v4947, %v4965
    %v5022 = vmul.f32 %v4932, %v4953
    %v5023 = vmul.f32 %v4916, %v4957
    %v5024 = vmul.f32 %v4900, %v4961
    %v5025 = vmul.f32 %v4948, %v4965
    %v5026 = vmul.f32 %v4933, %v4953
    %v5027 = vmul.f32 %v4917, %v4957
    %v5028 = vmul.f32 %v4901, %v4961
    %v5029 = vmul.f32 %v4949, %v4965
    %5030 = vset.pattern.permute.xlu0 7
    %5031 = vperm.xlu0 %5030, %v1925
    %v5032 = vpop.permute.xlu0 %5031
    %5034 = vset.pattern.permute.xlu0 7
    %5035 = vperm.xlu0 %5034, %v1926
    %v5036 = vpop.permute.xlu0 %5035
    %5038 = vset.pattern.permute.xlu0 7
    %5039 = vperm.xlu0 %5038, %v1927
    %v5040 = vpop.permute.xlu0 %5039
    %5042 = vset.pattern.permute.xlu0 7
    %5043 = vperm.xlu0 %5042, %v1928
    %v5044 = vpop.permute.xlu0 %5043
    %5046 = vset.pattern.permute.xlu0 7
    %5047 = vperm.xlu0 %5046, %v1929
    %v5048 = vpop.permute.xlu0 %5047
    %5050 = vset.pattern.permute.xlu0 7
    %5051 = vperm.xlu0 %5050, %v1930
    %v5052 = vpop.permute.xlu0 %5051
    %5054 = vset.pattern.permute.xlu0 7
    %5055 = vperm.xlu0 %5054, %v1931
    %v5056 = vpop.permute.xlu0 %5055
    %5058 = vset.pattern.permute.xlu0 7
    %5059 = vperm.xlu0 %5058, %v1932
    %v5060 = vpop.permute.xlu0 %5059
    %5062 = vset.pattern.permute.xlu0 7
    %5063 = vperm.xlu0 %5062, %v1933
    %v5064 = vpop.permute.xlu0 %5063
    %5066 = vset.pattern.permute.xlu0 7
    %5067 = vperm.xlu0 %5066, %v1934
    %v5068 = vpop.permute.xlu0 %5067
    %5070 = vset.pattern.permute.xlu0 7
    %5071 = vperm.xlu0 %5070, %v1935
    %v5072 = vpop.permute.xlu0 %5071
    %5074 = vset.pattern.permute.xlu0 7
    %5075 = vperm.xlu0 %5074, %v1936
    %v5076 = vpop.permute.xlu0 %5075
    %5078 = vset.pattern.permute.xlu0 7
    %5079 = vperm.xlu0 %5078, %v1937
    %v5080 = vpop.permute.xlu0 %5079
    %5082 = vset.pattern.permute.xlu0 7
    %5083 = vperm.xlu0 %5082, %v1938
    %v5084 = vpop.permute.xlu0 %5083
    %5086 = vset.pattern.permute.xlu0 7
    %5087 = vperm.xlu0 %5086, %v1939
    %v5088 = vpop.permute.xlu0 %5087
    %5090 = vset.pattern.permute.xlu0 7
    %5091 = vperm.xlu0 %5090, %v1940
    %v5092 = vpop.permute.xlu0 %5091
    %v5094 = vmul.f32 %v4966, %v5032
    %v5095 = vmul.f32 %v4967, %v5032
    %v5096 = vmul.f32 %v4968, %v5032
    %v5097 = vmul.f32 %v4969, %v5032
    %v5098 = vmul.f32 %v4970, %v5036
    %v5099 = vmul.f32 %v4971, %v5036
    %v5100 = vmul.f32 %v4972, %v5036
    %v5101 = vmul.f32 %v4973, %v5036
    %v5102 = vmul.f32 %v4974, %v5040
    %v5103 = vmul.f32 %v4975, %v5040
    %v5104 = vmul.f32 %v4976, %v5040
    %v5105 = vmul.f32 %v4977, %v5040
    %v5106 = vmul.f32 %v4978, %v5044
    %v5107 = vmul.f32 %v4979, %v5044
    %v5108 = vmul.f32 %v4980, %v5044
    %v5109 = vmul.f32 %v4981, %v5044
    %v5110 = vmul.f32 %v4982, %v5048
    %v5111 = vmul.f32 %v4983, %v5048
    %v5112 = vmul.f32 %v4984, %v5048
    %v5113 = vmul.f32 %v4985, %v5048
    %v5114 = vmul.f32 %v4986, %v5052
    %v5115 = vmul.f32 %v4987, %v5052
    %v5116 = vmul.f32 %v4988, %v5052
    %v5117 = vmul.f32 %v4989, %v5052
    %v5118 = vmul.f32 %v4990, %v5056
    %v5119 = vmul.f32 %v4991, %v5056
    %v5120 = vmul.f32 %v4992, %v5056
    %v5121 = vmul.f32 %v4993, %v5056
    %v5122 = vmul.f32 %v4994, %v5060
    %v5123 = vmul.f32 %v4995, %v5060
    %v5124 = vmul.f32 %v4996, %v5060
    %v5125 = vmul.f32 %v4997, %v5060
    %v5126 = vmul.f32 %v4998, %v5064
    %v5127 = vmul.f32 %v4999, %v5064
    %v5128 = vmul.f32 %v5000, %v5064
    %v5129 = vmul.f32 %v5001, %v5064
    %v5130 = vmul.f32 %v5002, %v5068
    %v5131 = vmul.f32 %v5003, %v5068
    %v5132 = vmul.f32 %v5004, %v5068
    %v5133 = vmul.f32 %v5005, %v5068
    %v5134 = vmul.f32 %v5006, %v5072
    %v5135 = vmul.f32 %v5007, %v5072
    %v5136 = vmul.f32 %v5008, %v5072
    %v5137 = vmul.f32 %v5009, %v5072
    %v5138 = vmul.f32 %v5010, %v5076
    %v5139 = vmul.f32 %v5011, %v5076
    %v5140 = vmul.f32 %v5012, %v5076
    %v5141 = vmul.f32 %v5013, %v5076
    %v5142 = vmul.f32 %v5014, %v5080
    %v5143 = vmul.f32 %v5015, %v5080
    %v5144 = vmul.f32 %v5016, %v5080
    %v5145 = vmul.f32 %v5017, %v5080
    %v5146 = vmul.f32 %v5018, %v5084
    %v5147 = vmul.f32 %v5019, %v5084
    %v5148 = vmul.f32 %v5020, %v5084
    %v5149 = vmul.f32 %v5021, %v5084
    %v5150 = vmul.f32 %v5022, %v5088
    %v5151 = vmul.f32 %v5023, %v5088
    %v5152 = vmul.f32 %v5024, %v5088
    %v5153 = vmul.f32 %v5025, %v5088
    %v5154 = vmul.f32 %v5026, %v5092
    %v5155 = vmul.f32 %v5027, %v5092
    %v5156 = vmul.f32 %v5028, %v5092
    %v5157 = vmul.f32 %v5029, %v5092
    %5158 = vrot.lane.b32.xlu0 %v1861, 111
    %v5159 = vpop.permute.xlu0 %5158
    %5160 = vrot.lane.b32.xlu0 %v1865, 111
    %v5161 = vpop.permute.xlu0 %5160
    %5162 = vrot.lane.b32.xlu0 %v1869, 111
    %v5163 = vpop.permute.xlu0 %5162
    %5164 = vrot.lane.b32.xlu0 %v1873, 111
    %v5165 = vpop.permute.xlu0 %5164
    %5166 = vrot.lane.b32.xlu0 %v1877, 111
    %v5167 = vpop.permute.xlu0 %5166
    %5168 = vrot.lane.b32.xlu0 %v1881, 111
    %v5169 = vpop.permute.xlu0 %5168
    %5170 = vrot.lane.b32.xlu0 %v1885, 111
    %v5171 = vpop.permute.xlu0 %5170
    %5172 = vrot.lane.b32.xlu0 %v1889, 111
    %v5173 = vpop.permute.xlu0 %5172
    %5174 = vrot.lane.b32.xlu0 %v1893, 111
    %v5175 = vpop.permute.xlu0 %5174
    %5176 = vrot.lane.b32.xlu0 %v1897, 111
    %v5177 = vpop.permute.xlu0 %5176
    %5178 = vrot.lane.b32.xlu0 %v1901, 111
    %v5179 = vpop.permute.xlu0 %5178
    %5180 = vrot.lane.b32.xlu0 %v1905, 111
    %v5181 = vpop.permute.xlu0 %5180
    %5182 = vrot.lane.b32.xlu0 %v1909, 111
    %v5183 = vpop.permute.xlu0 %5182
    %5184 = vrot.lane.b32.xlu0 %v1913, 111
    %v5185 = vpop.permute.xlu0 %5184
    %5186 = vrot.lane.b32.xlu0 %v1917, 111
    %v5187 = vpop.permute.xlu0 %5186
    %5188 = vrot.lane.b32.xlu0 %v1921, 111
    %v5189 = vpop.permute.xlu0 %5188
    %5190 = vrot.lane.b32.xlu0 %v1862, 111
    %v5191 = vpop.permute.xlu0 %5190
    %5192 = vrot.lane.b32.xlu0 %v1866, 111
    %v5193 = vpop.permute.xlu0 %5192
    %5194 = vrot.lane.b32.xlu0 %v1870, 111
    %v5195 = vpop.permute.xlu0 %5194
    %5196 = vrot.lane.b32.xlu0 %v1874, 111
    %v5197 = vpop.permute.xlu0 %5196
    %5198 = vrot.lane.b32.xlu0 %v1878, 111
    %v5199 = vpop.permute.xlu0 %5198
    %5200 = vrot.lane.b32.xlu0 %v1882, 111
    %v5201 = vpop.permute.xlu0 %5200
    %5202 = vrot.lane.b32.xlu0 %v1886, 111
    %v5203 = vpop.permute.xlu0 %5202
    %5204 = vrot.lane.b32.xlu0 %v1890, 111
    %v5205 = vpop.permute.xlu0 %5204
    %5206 = vrot.lane.b32.xlu0 %v1894, 111
    %v5207 = vpop.permute.xlu0 %5206
    %5208 = vrot.lane.b32.xlu0 %v1898, 111
    %v5209 = vpop.permute.xlu0 %5208
    %5210 = vrot.lane.b32.xlu0 %v1902, 111
    %v5211 = vpop.permute.xlu0 %5210
    %5212 = vrot.lane.b32.xlu0 %v1906, 111
    %v5213 = vpop.permute.xlu0 %5212
    %5214 = vrot.lane.b32.xlu0 %v1910, 111
    %v5215 = vpop.permute.xlu0 %5214
    %5216 = vrot.lane.b32.xlu0 %v1914, 111
    %v5217 = vpop.permute.xlu0 %5216
    %5218 = vrot.lane.b32.xlu0 %v1918, 111
    %v5219 = vpop.permute.xlu0 %5218
    %5220 = vrot.lane.b32.xlu0 %v1922, 111
    %v5221 = vpop.permute.xlu0 %5220
    %5222 = vrot.lane.b32.xlu0 %v1863, 111
    %v5223 = vpop.permute.xlu0 %5222
    %5224 = vrot.lane.b32.xlu0 %v1867, 111
    %v5225 = vpop.permute.xlu0 %5224
    %5226 = vrot.lane.b32.xlu0 %v1871, 111
    %v5227 = vpop.permute.xlu0 %5226
    %5228 = vrot.lane.b32.xlu0 %v1875, 111
    %v5229 = vpop.permute.xlu0 %5228
    %5230 = vrot.lane.b32.xlu0 %v1879, 111
    %v5231 = vpop.permute.xlu0 %5230
    %5232 = vrot.lane.b32.xlu0 %v1883, 111
    %v5233 = vpop.permute.xlu0 %5232
    %5234 = vrot.lane.b32.xlu0 %v1887, 111
    %v5235 = vpop.permute.xlu0 %5234
    %5236 = vrot.lane.b32.xlu0 %v1891, 111
    %v5237 = vpop.permute.xlu0 %5236
    %5238 = vrot.lane.b32.xlu0 %v1895, 111
    %v5239 = vpop.permute.xlu0 %5238
    %5240 = vrot.lane.b32.xlu0 %v1899, 111
    %v5241 = vpop.permute.xlu0 %5240
    %5242 = vrot.lane.b32.xlu0 %v1903, 111
    %v5243 = vpop.permute.xlu0 %5242
    %5244 = vrot.lane.b32.xlu0 %v1907, 111
    %v5245 = vpop.permute.xlu0 %5244
    %5246 = vrot.lane.b32.xlu0 %v1911, 111
    %v5247 = vpop.permute.xlu0 %5246
    %5248 = vrot.lane.b32.xlu0 %v1915, 111
    %v5249 = vpop.permute.xlu0 %5248
    %5250 = vrot.lane.b32.xlu0 %v1919, 111
    %v5251 = vpop.permute.xlu0 %5250
    %5252 = vrot.lane.b32.xlu0 %v1923, 111
    %v5253 = vpop.permute.xlu0 %5252
    %5254 = vrot.lane.b32.xlu0 %v1864, 111
    %v5255 = vpop.permute.xlu0 %5254
    %5256 = vrot.lane.b32.xlu0 %v1868, 111
    %v5257 = vpop.permute.xlu0 %5256
    %5258 = vrot.lane.b32.xlu0 %v1872, 111
    %v5259 = vpop.permute.xlu0 %5258
    %5260 = vrot.lane.b32.xlu0 %v1876, 111
    %v5261 = vpop.permute.xlu0 %5260
    %5262 = vrot.lane.b32.xlu0 %v1880, 111
    %v5263 = vpop.permute.xlu0 %5262
    %5264 = vrot.lane.b32.xlu0 %v1884, 111
    %v5265 = vpop.permute.xlu0 %5264
    %5266 = vrot.lane.b32.xlu0 %v1888, 111
    %v5267 = vpop.permute.xlu0 %5266
    %5268 = vrot.lane.b32.xlu0 %v1892, 111
    %v5269 = vpop.permute.xlu0 %5268
    %5270 = vrot.lane.b32.xlu0 %v1896, 111
    %v5271 = vpop.permute.xlu0 %5270
    %5272 = vrot.lane.b32.xlu0 %v1900, 111
    %v5273 = vpop.permute.xlu0 %5272
    %5274 = vrot.lane.b32.xlu0 %v1904, 111
    %v5275 = vpop.permute.xlu0 %5274
    %5276 = vrot.lane.b32.xlu0 %v1908, 111
    %v5277 = vpop.permute.xlu0 %5276
    %5278 = vrot.lane.b32.xlu0 %v1912, 111
    %v5279 = vpop.permute.xlu0 %5278
    %5280 = vrot.lane.b32.xlu0 %v1916, 111
    %v5281 = vpop.permute.xlu0 %5280
    %5282 = vrot.lane.b32.xlu0 %v1920, 111
    %v5283 = vpop.permute.xlu0 %5282
    %5284 = vrot.lane.b32.xlu0 %v1924, 111
    %v5285 = vpop.permute.xlu0 %5284
    %vm5286 = vcmp.lt.s32.totalorder %v2078, 111
    %v5287 = vsel %vm5286, %v5223, %v5255
    %v5288 = vsel %vm5286, %v5225, %v5257
    %v5289 = vsel %vm5286, %v5227, %v5259
    %v5290 = vsel %vm5286, %v5229, %v5261
    %v5291 = vsel %vm5286, %v5231, %v5263
    %v5292 = vsel %vm5286, %v5233, %v5265
    %v5293 = vsel %vm5286, %v5235, %v5267
    %v5294 = vsel %vm5286, %v5237, %v5269
    %v5295 = vsel %vm5286, %v5239, %v5271
    %v5296 = vsel %vm5286, %v5241, %v5273
    %v5297 = vsel %vm5286, %v5243, %v5275
    %v5298 = vsel %vm5286, %v5245, %v5277
    %v5299 = vsel %vm5286, %v5247, %v5279
    %v5300 = vsel %vm5286, %v5249, %v5281
    %v5301 = vsel %vm5286, %v5251, %v5283
    %v5302 = vsel %vm5286, %v5253, %v5285
    %v5303 = vsel %vm5286, %v5191, %v5223
    %v5304 = vsel %vm5286, %v5193, %v5225
    %v5305 = vsel %vm5286, %v5195, %v5227
    %v5306 = vsel %vm5286, %v5197, %v5229
    %v5307 = vsel %vm5286, %v5199, %v5231
    %v5308 = vsel %vm5286, %v5201, %v5233
    %v5309 = vsel %vm5286, %v5203, %v5235
    %v5310 = vsel %vm5286, %v5205, %v5237
    %v5311 = vsel %vm5286, %v5207, %v5239
    %v5312 = vsel %vm5286, %v5209, %v5241
    %v5313 = vsel %vm5286, %v5211, %v5243
    %v5314 = vsel %vm5286, %v5213, %v5245
    %v5315 = vsel %vm5286, %v5215, %v5247
    %v5316 = vsel %vm5286, %v5217, %v5249
    %v5317 = vsel %vm5286, %v5219, %v5251
    %v5318 = vsel %vm5286, %v5221, %v5253
    %v5319 = vsel %vm5286, %v5159, %v5191
    %v5320 = vsel %vm5286, %v5161, %v5193
    %v5321 = vsel %vm5286, %v5163, %v5195
    %v5322 = vsel %vm5286, %v5165, %v5197
    %v5323 = vsel %vm5286, %v5167, %v5199
    %v5324 = vsel %vm5286, %v5169, %v5201
    %v5325 = vsel %vm5286, %v5171, %v5203
    %v5326 = vsel %vm5286, %v5173, %v5205
    %v5327 = vsel %vm5286, %v5175, %v5207
    %v5328 = vsel %vm5286, %v5177, %v5209
    %v5329 = vsel %vm5286, %v5179, %v5211
    %v5330 = vsel %vm5286, %v5181, %v5213
    %v5331 = vsel %vm5286, %v5183, %v5215
    %v5332 = vsel %vm5286, %v5185, %v5217
    %v5333 = vsel %vm5286, %v5187, %v5219
    %v5334 = vsel %vm5286, %v5189, %v5221
    %v5335 = vsel %vm5286, %v5255, %v5159
    %v5336 = vsel %vm5286, %v5257, %v5161
    %v5337 = vsel %vm5286, %v5259, %v5163
    %v5338 = vsel %vm5286, %v5261, %v5165
    %v5339 = vsel %vm5286, %v5263, %v5167
    %v5340 = vsel %vm5286, %v5265, %v5169
    %v5341 = vsel %vm5286, %v5267, %v5171
    %v5342 = vsel %vm5286, %v5269, %v5173
    %v5343 = vsel %vm5286, %v5271, %v5175
    %v5344 = vsel %vm5286, %v5273, %v5177
    %v5345 = vsel %vm5286, %v5275, %v5179
    %v5346 = vsel %vm5286, %v5277, %v5181
    %v5347 = vsel %vm5286, %v5279, %v5183
    %v5348 = vsel %vm5286, %v5281, %v5185
    %v5349 = vsel %vm5286, %v5283, %v5187
    %v5350 = vsel %vm5286, %v5285, %v5189
    %v5351 = vlaneseq
    %v5352 = vshrl.u32 %v5351, 7
    %v5353 = vsub.s32 0, %v5352
    %v5354 = vrot.slane %v1945, %v5353
    %v5355 = vlaneseq
    %v5356 = vshrl.u32 %v5355, 7
    %v5357 = vsub.s32 0, %v5356
    %v5358 = vrot.slane %v1946, %v5357
    %v5359 = vlaneseq
    %v5360 = vshrl.u32 %v5359, 7
    %v5361 = vsub.s32 0, %v5360
    %v5362 = vrot.slane %v1947, %v5361
    %v5363 = vlaneseq
    %v5364 = vshrl.u32 %v5363, 7
    %v5365 = vsub.s32 0, %v5364
    %v5366 = vrot.slane %v1948, %v5365
    %v5367 = vmul.f32 %v5319, %v5354
    %v5368 = vmul.f32 %v5303, %v5358
    %v5369 = vmul.f32 %v5287, %v5362
    %v5370 = vmul.f32 %v5335, %v5366
    %v5371 = vmul.f32 %v5320, %v5354
    %v5372 = vmul.f32 %v5304, %v5358
    %v5373 = vmul.f32 %v5288, %v5362
    %v5374 = vmul.f32 %v5336, %v5366
    %v5375 = vmul.f32 %v5321, %v5354
    %v5376 = vmul.f32 %v5305, %v5358
    %v5377 = vmul.f32 %v5289, %v5362
    %v5378 = vmul.f32 %v5337, %v5366
    %v5379 = vmul.f32 %v5322, %v5354
    %v5380 = vmul.f32 %v5306, %v5358
    %v5381 = vmul.f32 %v5290, %v5362
    %v5382 = vmul.f32 %v5338, %v5366
    %v5383 = vmul.f32 %v5323, %v5354
    %v5384 = vmul.f32 %v5307, %v5358
    %v5385 = vmul.f32 %v5291, %v5362
    %v5386 = vmul.f32 %v5339, %v5366
    %v5387 = vmul.f32 %v5324, %v5354
    %v5388 = vmul.f32 %v5308, %v5358
    %v5389 = vmul.f32 %v5292, %v5362
    %v5390 = vmul.f32 %v5340, %v5366
    %v5391 = vmul.f32 %v5325, %v5354
    %v5392 = vmul.f32 %v5309, %v5358
    %v5393 = vmul.f32 %v5293, %v5362
    %v5394 = vmul.f32 %v5341, %v5366
    %v5395 = vmul.f32 %v5326, %v5354
    %v5396 = vmul.f32 %v5310, %v5358
    %v5397 = vmul.f32 %v5294, %v5362
    %v5398 = vmul.f32 %v5342, %v5366
    %v5399 = vmul.f32 %v5327, %v5354
    %v5400 = vmul.f32 %v5311, %v5358
    %v5401 = vmul.f32 %v5295, %v5362
    %v5402 = vmul.f32 %v5343, %v5366
    %v5403 = vmul.f32 %v5328, %v5354
    %v5404 = vmul.f32 %v5312, %v5358
    %v5405 = vmul.f32 %v5296, %v5362
    %v5406 = vmul.f32 %v5344, %v5366
    %v5407 = vmul.f32 %v5329, %v5354
    %v5408 = vmul.f32 %v5313, %v5358
    %v5409 = vmul.f32 %v5297, %v5362
    %v5410 = vmul.f32 %v5345, %v5366
    %v5411 = vmul.f32 %v5330, %v5354
    %v5412 = vmul.f32 %v5314, %v5358
    %v5413 = vmul.f32 %v5298, %v5362
    %v5414 = vmul.f32 %v5346, %v5366
    %v5415 = vmul.f32 %v5331, %v5354
    %v5416 = vmul.f32 %v5315, %v5358
    %v5417 = vmul.f32 %v5299, %v5362
    %v5418 = vmul.f32 %v5347, %v5366
    %v5419 = vmul.f32 %v5332, %v5354
    %v5420 = vmul.f32 %v5316, %v5358
    %v5421 = vmul.f32 %v5300, %v5362
    %v5422 = vmul.f32 %v5348, %v5366
    %v5423 = vmul.f32 %v5333, %v5354
    %v5424 = vmul.f32 %v5317, %v5358
    %v5425 = vmul.f32 %v5301, %v5362
    %v5426 = vmul.f32 %v5349, %v5366
    %v5427 = vmul.f32 %v5334, %v5354
    %v5428 = vmul.f32 %v5318, %v5358
    %v5429 = vmul.f32 %v5302, %v5362
    %v5430 = vmul.f32 %v5350, %v5366
    %5431 = vset.pattern.permute.xlu0 8
    %5432 = vperm.xlu0 %5431, %v1925
    %v5433 = vpop.permute.xlu0 %5432
    %5435 = vset.pattern.permute.xlu0 8
    %5436 = vperm.xlu0 %5435, %v1926
    %v5437 = vpop.permute.xlu0 %5436
    %5439 = vset.pattern.permute.xlu0 8
    %5440 = vperm.xlu0 %5439, %v1927
    %v5441 = vpop.permute.xlu0 %5440
    %5443 = vset.pattern.permute.xlu0 8
    %5444 = vperm.xlu0 %5443, %v1928
    %v5445 = vpop.permute.xlu0 %5444
    %5447 = vset.pattern.permute.xlu0 8
    %5448 = vperm.xlu0 %5447, %v1929
    %v5449 = vpop.permute.xlu0 %5448
    %5451 = vset.pattern.permute.xlu0 8
    %5452 = vperm.xlu0 %5451, %v1930
    %v5453 = vpop.permute.xlu0 %5452
    %5455 = vset.pattern.permute.xlu0 8
    %5456 = vperm.xlu0 %5455, %v1931
    %v5457 = vpop.permute.xlu0 %5456
    %5459 = vset.pattern.permute.xlu0 8
    %5460 = vperm.xlu0 %5459, %v1932
    %v5461 = vpop.permute.xlu0 %5460
    %5463 = vset.pattern.permute.xlu0 8
    %5464 = vperm.xlu0 %5463, %v1933
    %v5465 = vpop.permute.xlu0 %5464
    %5467 = vset.pattern.permute.xlu0 8
    %5468 = vperm.xlu0 %5467, %v1934
    %v5469 = vpop.permute.xlu0 %5468
    %5471 = vset.pattern.permute.xlu0 8
    %5472 = vperm.xlu0 %5471, %v1935
    %v5473 = vpop.permute.xlu0 %5472
    %5475 = vset.pattern.permute.xlu0 8
    %5476 = vperm.xlu0 %5475, %v1936
    %v5477 = vpop.permute.xlu0 %5476
    %5479 = vset.pattern.permute.xlu0 8
    %5480 = vperm.xlu0 %5479, %v1937
    %v5481 = vpop.permute.xlu0 %5480
    %5483 = vset.pattern.permute.xlu0 8
    %5484 = vperm.xlu0 %5483, %v1938
    %v5485 = vpop.permute.xlu0 %5484
    %5487 = vset.pattern.permute.xlu0 8
    %5488 = vperm.xlu0 %5487, %v1939
    %v5489 = vpop.permute.xlu0 %5488
    %5491 = vset.pattern.permute.xlu0 8
    %5492 = vperm.xlu0 %5491, %v1940
    %v5493 = vpop.permute.xlu0 %5492
    %v5495 = vmul.f32 %v5367, %v5433
    %v5496 = vmul.f32 %v5368, %v5433
    %v5497 = vmul.f32 %v5369, %v5433
    %v5498 = vmul.f32 %v5370, %v5433
    %v5499 = vmul.f32 %v5371, %v5437
    %v5500 = vmul.f32 %v5372, %v5437
    %v5501 = vmul.f32 %v5373, %v5437
    %v5502 = vmul.f32 %v5374, %v5437
    %v5503 = vmul.f32 %v5375, %v5441
    %v5504 = vmul.f32 %v5376, %v5441
    %v5505 = vmul.f32 %v5377, %v5441
    %v5506 = vmul.f32 %v5378, %v5441
    %v5507 = vmul.f32 %v5379, %v5445
    %v5508 = vmul.f32 %v5380, %v5445
    %v5509 = vmul.f32 %v5381, %v5445
    %v5510 = vmul.f32 %v5382, %v5445
    %v5511 = vmul.f32 %v5383, %v5449
    %v5512 = vmul.f32 %v5384, %v5449
    %v5513 = vmul.f32 %v5385, %v5449
    %v5514 = vmul.f32 %v5386, %v5449
    %v5515 = vmul.f32 %v5387, %v5453
    %v5516 = vmul.f32 %v5388, %v5453
    %v5517 = vmul.f32 %v5389, %v5453
    %v5518 = vmul.f32 %v5390, %v5453
    %v5519 = vmul.f32 %v5391, %v5457
    %v5520 = vmul.f32 %v5392, %v5457
    %v5521 = vmul.f32 %v5393, %v5457
    %v5522 = vmul.f32 %v5394, %v5457
    %v5523 = vmul.f32 %v5395, %v5461
    %v5524 = vmul.f32 %v5396, %v5461
    %v5525 = vmul.f32 %v5397, %v5461
    %v5526 = vmul.f32 %v5398, %v5461
    %v5527 = vmul.f32 %v5399, %v5465
    %v5528 = vmul.f32 %v5400, %v5465
    %v5529 = vmul.f32 %v5401, %v5465
    %v5530 = vmul.f32 %v5402, %v5465
    %v5531 = vmul.f32 %v5403, %v5469
    %v5532 = vmul.f32 %v5404, %v5469
    %v5533 = vmul.f32 %v5405, %v5469
    %v5534 = vmul.f32 %v5406, %v5469
    %v5535 = vmul.f32 %v5407, %v5473
    %v5536 = vmul.f32 %v5408, %v5473
    %v5537 = vmul.f32 %v5409, %v5473
    %v5538 = vmul.f32 %v5410, %v5473
    %v5539 = vmul.f32 %v5411, %v5477
    %v5540 = vmul.f32 %v5412, %v5477
    %v5541 = vmul.f32 %v5413, %v5477
    %v5542 = vmul.f32 %v5414, %v5477
    %v5543 = vmul.f32 %v5415, %v5481
    %v5544 = vmul.f32 %v5416, %v5481
    %v5545 = vmul.f32 %v5417, %v5481
    %v5546 = vmul.f32 %v5418, %v5481
    %v5547 = vmul.f32 %v5419, %v5485
    %v5548 = vmul.f32 %v5420, %v5485
    %v5549 = vmul.f32 %v5421, %v5485
    %v5550 = vmul.f32 %v5422, %v5485
    %v5551 = vmul.f32 %v5423, %v5489
    %v5552 = vmul.f32 %v5424, %v5489
    %v5553 = vmul.f32 %v5425, %v5489
    %v5554 = vmul.f32 %v5426, %v5489
    %v5555 = vmul.f32 %v5427, %v5493
    %v5556 = vmul.f32 %v5428, %v5493
    %v5557 = vmul.f32 %v5429, %v5493
    %v5558 = vmul.f32 %v5430, %v5493
    %v5559 = vadd.f32 %v4693, %v5094
    %v5560 = vadd.f32 %v4694, %v5095
    %v5561 = vadd.f32 %v4695, %v5096
    %v5562 = vadd.f32 %v4696, %v5097
    %v5563 = vadd.f32 %v4697, %v5098
    %v5564 = vadd.f32 %v4698, %v5099
    %v5565 = vadd.f32 %v4699, %v5100
    %v5566 = vadd.f32 %v4700, %v5101
    %v5567 = vadd.f32 %v4701, %v5102
    %v5568 = vadd.f32 %v4702, %v5103
    %v5569 = vadd.f32 %v4703, %v5104
    %v5570 = vadd.f32 %v4704, %v5105
    %v5571 = vadd.f32 %v4705, %v5106
    %v5572 = vadd.f32 %v4706, %v5107
    %v5573 = vadd.f32 %v4707, %v5108
    %v5574 = vadd.f32 %v4708, %v5109
    %v5575 = vadd.f32 %v4709, %v5110
    %v5576 = vadd.f32 %v4710, %v5111
    %v5577 = vadd.f32 %v4711, %v5112
    %v5578 = vadd.f32 %v4712, %v5113
    %v5579 = vadd.f32 %v4713, %v5114
    %v5580 = vadd.f32 %v4714, %v5115
    %v5581 = vadd.f32 %v4715, %v5116
    %v5582 = vadd.f32 %v4716, %v5117
    %v5583 = vadd.f32 %v4717, %v5118
    %v5584 = vadd.f32 %v4718, %v5119
    %v5585 = vadd.f32 %v4719, %v5120
    %v5586 = vadd.f32 %v4720, %v5121
    %v5587 = vadd.f32 %v4721, %v5122
    %v5588 = vadd.f32 %v4722, %v5123
    %v5589 = vadd.f32 %v4723, %v5124
    %v5590 = vadd.f32 %v4724, %v5125
    %v5591 = vadd.f32 %v4725, %v5126
    %v5592 = vadd.f32 %v4726, %v5127
    %v5593 = vadd.f32 %v4727, %v5128
    %v5594 = vadd.f32 %v4728, %v5129
    %v5595 = vadd.f32 %v4729, %v5130
    %v5596 = vadd.f32 %v4730, %v5131
    %v5597 = vadd.f32 %v4731, %v5132
    %v5598 = vadd.f32 %v4732, %v5133
    %v5599 = vadd.f32 %v4733, %v5134
    %v5600 = vadd.f32 %v4734, %v5135
    %v5601 = vadd.f32 %v4735, %v5136
    %v5602 = vadd.f32 %v4736, %v5137
    %v5603 = vadd.f32 %v4737, %v5138
    %v5604 = vadd.f32 %v4738, %v5139
    %v5605 = vadd.f32 %v4739, %v5140
    %v5606 = vadd.f32 %v4740, %v5141
    %v5607 = vadd.f32 %v4741, %v5142
    %v5608 = vadd.f32 %v4742, %v5143
    %v5609 = vadd.f32 %v4743, %v5144
    %v5610 = vadd.f32 %v4744, %v5145
    %v5611 = vadd.f32 %v4745, %v5146
    %v5612 = vadd.f32 %v4746, %v5147
    %v5613 = vadd.f32 %v4747, %v5148
    %v5614 = vadd.f32 %v4748, %v5149
    %v5615 = vadd.f32 %v4749, %v5150
    %v5616 = vadd.f32 %v4750, %v5151
    %v5617 = vadd.f32 %v4751, %v5152
    %v5618 = vadd.f32 %v4752, %v5153
    %v5619 = vadd.f32 %v4753, %v5154
    %v5620 = vadd.f32 %v4754, %v5155
    %v5621 = vadd.f32 %v4755, %v5156
    %v5622 = vadd.f32 %v4756, %v5157
    %v5623 = vadd.f32 %v5559, %v5495
    %v5624 = vadd.f32 %v5560, %v5496
    %v5625 = vadd.f32 %v5561, %v5497
    %v5626 = vadd.f32 %v5562, %v5498
    %v5627 = vadd.f32 %v5563, %v5499
    %v5628 = vadd.f32 %v5564, %v5500
    %v5629 = vadd.f32 %v5565, %v5501
    %v5630 = vadd.f32 %v5566, %v5502
    %v5631 = vadd.f32 %v5567, %v5503
    %v5632 = vadd.f32 %v5568, %v5504
    %v5633 = vadd.f32 %v5569, %v5505
    %v5634 = vadd.f32 %v5570, %v5506
    %v5635 = vadd.f32 %v5571, %v5507
    %v5636 = vadd.f32 %v5572, %v5508
    %v5637 = vadd.f32 %v5573, %v5509
    %v5638 = vadd.f32 %v5574, %v5510
    %v5639 = vadd.f32 %v5575, %v5511
    %v5640 = vadd.f32 %v5576, %v5512
    %v5641 = vadd.f32 %v5577, %v5513
    %v5642 = vadd.f32 %v5578, %v5514
    %v5643 = vadd.f32 %v5579, %v5515
    %v5644 = vadd.f32 %v5580, %v5516
    %v5645 = vadd.f32 %v5581, %v5517
    %v5646 = vadd.f32 %v5582, %v5518
    %v5647 = vadd.f32 %v5583, %v5519
    %v5648 = vadd.f32 %v5584, %v5520
    %v5649 = vadd.f32 %v5585, %v5521
    %v5650 = vadd.f32 %v5586, %v5522
    %v5651 = vadd.f32 %v5587, %v5523
    %v5652 = vadd.f32 %v5588, %v5524
    %v5653 = vadd.f32 %v5589, %v5525
    %v5654 = vadd.f32 %v5590, %v5526
    %v5655 = vadd.f32 %v5591, %v5527
    %v5656 = vadd.f32 %v5592, %v5528
    %v5657 = vadd.f32 %v5593, %v5529
    %v5658 = vadd.f32 %v5594, %v5530
    %v5659 = vadd.f32 %v5595, %v5531
    %v5660 = vadd.f32 %v5596, %v5532
    %v5661 = vadd.f32 %v5597, %v5533
    %v5662 = vadd.f32 %v5598, %v5534
    %v5663 = vadd.f32 %v5599, %v5535
    %v5664 = vadd.f32 %v5600, %v5536
    %v5665 = vadd.f32 %v5601, %v5537
    %v5666 = vadd.f32 %v5602, %v5538
    %v5667 = vadd.f32 %v5603, %v5539
    %v5668 = vadd.f32 %v5604, %v5540
    %v5669 = vadd.f32 %v5605, %v5541
    %v5670 = vadd.f32 %v5606, %v5542
    %v5671 = vadd.f32 %v5607, %v5543
    %v5672 = vadd.f32 %v5608, %v5544
    %v5673 = vadd.f32 %v5609, %v5545
    %v5674 = vadd.f32 %v5610, %v5546
    %v5675 = vadd.f32 %v5611, %v5547
    %v5676 = vadd.f32 %v5612, %v5548
    %v5677 = vadd.f32 %v5613, %v5549
    %v5678 = vadd.f32 %v5614, %v5550
    %v5679 = vadd.f32 %v5615, %v5551
    %v5680 = vadd.f32 %v5616, %v5552
    %v5681 = vadd.f32 %v5617, %v5553
    %v5682 = vadd.f32 %v5618, %v5554
    %v5683 = vadd.f32 %v5619, %v5555
    %v5684 = vadd.f32 %v5620, %v5556
    %v5685 = vadd.f32 %v5621, %v5557
    %v5686 = vadd.f32 %v5622, %v5558
    %v5687 = vadd.f32 %v3234, %v4292
    %v5688 = vadd.f32 %v3235, %v4293
    %v5689 = vadd.f32 %v3236, %v4294
    %v5690 = vadd.f32 %v3237, %v4295
    %v5691 = vadd.f32 %v3238, %v4296
    %v5692 = vadd.f32 %v3239, %v4297
    %v5693 = vadd.f32 %v3240, %v4298
    %v5694 = vadd.f32 %v3241, %v4299
    %v5695 = vadd.f32 %v3242, %v4300
    %v5696 = vadd.f32 %v3243, %v4301
    %v5697 = vadd.f32 %v3244, %v4302
    %v5698 = vadd.f32 %v3245, %v4303
    %v5699 = vadd.f32 %v3246, %v4304
    %v5700 = vadd.f32 %v3247, %v4305
    %v5701 = vadd.f32 %v3248, %v4306
    %v5702 = vadd.f32 %v3249, %v4307
    %v5703 = vadd.f32 %v3250, %v4308
    %v5704 = vadd.f32 %v3251, %v4309
    %v5705 = vadd.f32 %v3252, %v4310
    %v5706 = vadd.f32 %v3253, %v4311
    %v5707 = vadd.f32 %v3254, %v4312
    %v5708 = vadd.f32 %v3255, %v4313
    %v5709 = vadd.f32 %v3256, %v4314
    %v5710 = vadd.f32 %v3257, %v4315
    %v5711 = vadd.f32 %v3258, %v4316
    %v5712 = vadd.f32 %v3259, %v4317
    %v5713 = vadd.f32 %v3260, %v4318
    %v5714 = vadd.f32 %v3261, %v4319
    %v5715 = vadd.f32 %v3262, %v4320
    %v5716 = vadd.f32 %v3263, %v4321
    %v5717 = vadd.f32 %v3264, %v4322
    %v5718 = vadd.f32 %v3265, %v4323
    %v5719 = vadd.f32 %v3266, %v4324
    %v5720 = vadd.f32 %v3267, %v4325
    %v5721 = vadd.f32 %v3268, %v4326
    %v5722 = vadd.f32 %v3269, %v4327
    %v5723 = vadd.f32 %v3270, %v4328
    %v5724 = vadd.f32 %v3271, %v4329
    %v5725 = vadd.f32 %v3272, %v4330
    %v5726 = vadd.f32 %v3273, %v4331
    %v5727 = vadd.f32 %v3274, %v4332
    %v5728 = vadd.f32 %v3275, %v4333
    %v5729 = vadd.f32 %v3276, %v4334
    %v5730 = vadd.f32 %v3277, %v4335
    %v5731 = vadd.f32 %v3278, %v4336
    %v5732 = vadd.f32 %v3279, %v4337
    %v5733 = vadd.f32 %v3280, %v4338
    %v5734 = vadd.f32 %v3281, %v4339
    %v5735 = vadd.f32 %v3282, %v4340
    %v5736 = vadd.f32 %v3283, %v4341
    %v5737 = vadd.f32 %v3284, %v4342
    %v5738 = vadd.f32 %v3285, %v4343
    %v5739 = vadd.f32 %v3286, %v4344
    %v5740 = vadd.f32 %v3287, %v4345
    %v5741 = vadd.f32 %v3288, %v4346
    %v5742 = vadd.f32 %v3289, %v4347
    %v5743 = vadd.f32 %v3290, %v4348
    %v5744 = vadd.f32 %v3291, %v4349
    %v5745 = vadd.f32 %v3292, %v4350
    %v5746 = vadd.f32 %v3293, %v4351
    %v5747 = vadd.f32 %v3294, %v4352
    %v5748 = vadd.f32 %v3295, %v4353
    %v5749 = vadd.f32 %v3296, %v4354
    %v5750 = vadd.f32 %v3297, %v4355
    %v5751 = vadd.f32 %v5687, %v5623
    %v5752 = vadd.f32 %v5688, %v5624
    %v5753 = vadd.f32 %v5689, %v5625
    %v5754 = vadd.f32 %v5690, %v5626
    %v5755 = vadd.f32 %v5691, %v5627
    %v5756 = vadd.f32 %v5692, %v5628
    %v5757 = vadd.f32 %v5693, %v5629
    %v5758 = vadd.f32 %v5694, %v5630
    %v5759 = vadd.f32 %v5695, %v5631
    %v5760 = vadd.f32 %v5696, %v5632
    %v5761 = vadd.f32 %v5697, %v5633
    %v5762 = vadd.f32 %v5698, %v5634
    %v5763 = vadd.f32 %v5699, %v5635
    %v5764 = vadd.f32 %v5700, %v5636
    %v5765 = vadd.f32 %v5701, %v5637
    %v5766 = vadd.f32 %v5702, %v5638
    %v5767 = vadd.f32 %v5703, %v5639
    %v5768 = vadd.f32 %v5704, %v5640
    %v5769 = vadd.f32 %v5705, %v5641
    %v5770 = vadd.f32 %v5706, %v5642
    %v5771 = vadd.f32 %v5707, %v5643
    %v5772 = vadd.f32 %v5708, %v5644
    %v5773 = vadd.f32 %v5709, %v5645
    %v5774 = vadd.f32 %v5710, %v5646
    %v5775 = vadd.f32 %v5711, %v5647
    %v5776 = vadd.f32 %v5712, %v5648
    %v5777 = vadd.f32 %v5713, %v5649
    %v5778 = vadd.f32 %v5714, %v5650
    %v5779 = vadd.f32 %v5715, %v5651
    %v5780 = vadd.f32 %v5716, %v5652
    %v5781 = vadd.f32 %v5717, %v5653
    %v5782 = vadd.f32 %v5718, %v5654
    %v5783 = vadd.f32 %v5719, %v5655
    %v5784 = vadd.f32 %v5720, %v5656
    %v5785 = vadd.f32 %v5721, %v5657
    %v5786 = vadd.f32 %v5722, %v5658
    %v5787 = vadd.f32 %v5723, %v5659
    %v5788 = vadd.f32 %v5724, %v5660
    %v5789 = vadd.f32 %v5725, %v5661
    %v5790 = vadd.f32 %v5726, %v5662
    %v5791 = vadd.f32 %v5727, %v5663
    %v5792 = vadd.f32 %v5728, %v5664
    %v5793 = vadd.f32 %v5729, %v5665
    %v5794 = vadd.f32 %v5730, %v5666
    %v5795 = vadd.f32 %v5731, %v5667
    %v5796 = vadd.f32 %v5732, %v5668
    %v5797 = vadd.f32 %v5733, %v5669
    %v5798 = vadd.f32 %v5734, %v5670
    %v5799 = vadd.f32 %v5735, %v5671
    %v5800 = vadd.f32 %v5736, %v5672
    %v5801 = vadd.f32 %v5737, %v5673
    %v5802 = vadd.f32 %v5738, %v5674
    %v5803 = vadd.f32 %v5739, %v5675
    %v5804 = vadd.f32 %v5740, %v5676
    %v5805 = vadd.f32 %v5741, %v5677
    %v5806 = vadd.f32 %v5742, %v5678
    %v5807 = vadd.f32 %v5743, %v5679
    %v5808 = vadd.f32 %v5744, %v5680
    %v5809 = vadd.f32 %v5745, %v5681
    %v5810 = vadd.f32 %v5746, %v5682
    %v5811 = vadd.f32 %v5747, %v5683
    %v5812 = vadd.f32 %v5748, %v5684
    %v5813 = vadd.f32 %v5749, %v5685
    %v5814 = vadd.f32 %v5750, %v5686
    %v5815 = vadd.f32 %v5751, %v5752
    %v5816 = vadd.f32 %v5815, %v5753
    %v5817 = vadd.f32 %v5816, %v5754
    %5818 = vadd.xlane.f32.xlu0 %v5817
    %v5819 = vpop.xlane.xlu0 %5818
    %v5820 = vadd.f32 %v5755, %v5756
    %v5821 = vadd.f32 %v5820, %v5757
    %v5822 = vadd.f32 %v5821, %v5758
    %5823 = vadd.xlane.f32.xlu0 %v5822
    %v5824 = vpop.xlane.xlu0 %5823
    %v5825 = vadd.f32 %v5759, %v5760
    %v5826 = vadd.f32 %v5825, %v5761
    %v5827 = vadd.f32 %v5826, %v5762
    %5828 = vadd.xlane.f32.xlu0 %v5827
    %v5829 = vpop.xlane.xlu0 %5828
    %v5830 = vadd.f32 %v5763, %v5764
    %v5831 = vadd.f32 %v5830, %v5765
    %v5832 = vadd.f32 %v5831, %v5766
    %5833 = vadd.xlane.f32.xlu0 %v5832
    %v5834 = vpop.xlane.xlu0 %5833
    %v5835 = vadd.f32 %v5767, %v5768
    %v5836 = vadd.f32 %v5835, %v5769
    %v5837 = vadd.f32 %v5836, %v5770
    %5838 = vadd.xlane.f32.xlu0 %v5837
    %v5839 = vpop.xlane.xlu0 %5838
    %v5840 = vadd.f32 %v5771, %v5772
    %v5841 = vadd.f32 %v5840, %v5773
    %v5842 = vadd.f32 %v5841, %v5774
    %5843 = vadd.xlane.f32.xlu0 %v5842
    %v5844 = vpop.xlane.xlu0 %5843
    %v5845 = vadd.f32 %v5775, %v5776
    %v5846 = vadd.f32 %v5845, %v5777
    %v5847 = vadd.f32 %v5846, %v5778
    %5848 = vadd.xlane.f32.xlu0 %v5847
    %v5849 = vpop.xlane.xlu0 %5848
    %v5850 = vadd.f32 %v5779, %v5780
    %v5851 = vadd.f32 %v5850, %v5781
    %v5852 = vadd.f32 %v5851, %v5782
    %5853 = vadd.xlane.f32.xlu0 %v5852
    %v5854 = vpop.xlane.xlu0 %5853
    %v5855 = vadd.f32 %v5783, %v5784
    %v5856 = vadd.f32 %v5855, %v5785
    %v5857 = vadd.f32 %v5856, %v5786
    %5858 = vadd.xlane.f32.xlu0 %v5857
    %v5859 = vpop.xlane.xlu0 %5858
    %v5860 = vadd.f32 %v5787, %v5788
    %v5861 = vadd.f32 %v5860, %v5789
    %v5862 = vadd.f32 %v5861, %v5790
    %5863 = vadd.xlane.f32.xlu0 %v5862
    %v5864 = vpop.xlane.xlu0 %5863
    %v5865 = vadd.f32 %v5791, %v5792
    %v5866 = vadd.f32 %v5865, %v5793
    %v5867 = vadd.f32 %v5866, %v5794
    %5868 = vadd.xlane.f32.xlu0 %v5867
    %v5869 = vpop.xlane.xlu0 %5868
    %v5870 = vadd.f32 %v5795, %v5796
    %v5871 = vadd.f32 %v5870, %v5797
    %v5872 = vadd.f32 %v5871, %v5798
    %5873 = vadd.xlane.f32.xlu0 %v5872
    %v5874 = vpop.xlane.xlu0 %5873
    %v5875 = vadd.f32 %v5799, %v5800
    %v5876 = vadd.f32 %v5875, %v5801
    %v5877 = vadd.f32 %v5876, %v5802
    %5878 = vadd.xlane.f32.xlu0 %v5877
    %v5879 = vpop.xlane.xlu0 %5878
    %v5880 = vadd.f32 %v5803, %v5804
    %v5881 = vadd.f32 %v5880, %v5805
    %v5882 = vadd.f32 %v5881, %v5806
    %5883 = vadd.xlane.f32.xlu0 %v5882
    %v5884 = vpop.xlane.xlu0 %5883
    %v5885 = vadd.f32 %v5807, %v5808
    %v5886 = vadd.f32 %v5885, %v5809
    %v5887 = vadd.f32 %v5886, %v5810
    %5888 = vadd.xlane.f32.xlu0 %v5887
    %v5889 = vpop.xlane.xlu0 %5888
    %v5890 = vadd.f32 %v5811, %v5812
    %v5891 = vadd.f32 %v5890, %v5813
    %v5892 = vadd.f32 %v5891, %v5814
    %5893 = vadd.xlane.f32.xlu0 %v5892
    %v5894 = vpop.xlane.xlu0 %5893
    %v5895 = vmul.f32 %v5751, %v5751
    %v5896 = vmul.f32 %v5752, %v5752
    %v5897 = vmul.f32 %v5753, %v5753
    %v5898 = vmul.f32 %v5754, %v5754
    %v5899 = vmul.f32 %v5755, %v5755
    %v5900 = vmul.f32 %v5756, %v5756
    %v5901 = vmul.f32 %v5757, %v5757
    %v5902 = vmul.f32 %v5758, %v5758
    %v5903 = vmul.f32 %v5759, %v5759
    %v5904 = vmul.f32 %v5760, %v5760
    %v5905 = vmul.f32 %v5761, %v5761
    %v5906 = vmul.f32 %v5762, %v5762
    %v5907 = vmul.f32 %v5763, %v5763
    %v5908 = vmul.f32 %v5764, %v5764
    %v5909 = vmul.f32 %v5765, %v5765
    %v5910 = vmul.f32 %v5766, %v5766
    %v5911 = vmul.f32 %v5767, %v5767
    %v5912 = vmul.f32 %v5768, %v5768
    %v5913 = vmul.f32 %v5769, %v5769
    %v5914 = vmul.f32 %v5770, %v5770
    %v5915 = vmul.f32 %v5771, %v5771
    %v5916 = vmul.f32 %v5772, %v5772
    %v5917 = vmul.f32 %v5773, %v5773
    %v5918 = vmul.f32 %v5774, %v5774
    %v5919 = vmul.f32 %v5775, %v5775
    %v5920 = vmul.f32 %v5776, %v5776
    %v5921 = vmul.f32 %v5777, %v5777
    %v5922 = vmul.f32 %v5778, %v5778
    %v5923 = vmul.f32 %v5779, %v5779
    %v5924 = vmul.f32 %v5780, %v5780
    %v5925 = vmul.f32 %v5781, %v5781
    %v5926 = vmul.f32 %v5782, %v5782
    %v5927 = vmul.f32 %v5783, %v5783
    %v5928 = vmul.f32 %v5784, %v5784
    %v5929 = vmul.f32 %v5785, %v5785
    %v5930 = vmul.f32 %v5786, %v5786
    %v5931 = vmul.f32 %v5787, %v5787
    %v5932 = vmul.f32 %v5788, %v5788
    %v5933 = vmul.f32 %v5789, %v5789
    %v5934 = vmul.f32 %v5790, %v5790
    %v5935 = vmul.f32 %v5791, %v5791
    %v5936 = vmul.f32 %v5792, %v5792
    %v5937 = vmul.f32 %v5793, %v5793
    %v5938 = vmul.f32 %v5794, %v5794
    %v5939 = vmul.f32 %v5795, %v5795
    %v5940 = vmul.f32 %v5796, %v5796
    %v5941 = vmul.f32 %v5797, %v5797
    %v5942 = vmul.f32 %v5798, %v5798
    %v5943 = vmul.f32 %v5799, %v5799
    %v5944 = vmul.f32 %v5800, %v5800
    %v5945 = vmul.f32 %v5801, %v5801
    %v5946 = vmul.f32 %v5802, %v5802
    %v5947 = vmul.f32 %v5803, %v5803
    %v5948 = vmul.f32 %v5804, %v5804
    %v5949 = vmul.f32 %v5805, %v5805
    %v5950 = vmul.f32 %v5806, %v5806
    %v5951 = vmul.f32 %v5807, %v5807
    %v5952 = vmul.f32 %v5808, %v5808
    %v5953 = vmul.f32 %v5809, %v5809
    %v5954 = vmul.f32 %v5810, %v5810
    %v5955 = vmul.f32 %v5811, %v5811
    %v5956 = vmul.f32 %v5812, %v5812
    %v5957 = vmul.f32 %v5813, %v5813
    %v5958 = vmul.f32 %v5814, %v5814
    %v5959 = vadd.f32 %v5895, %v5896
    %v5960 = vadd.f32 %v5959, %v5897
    %v5961 = vadd.f32 %v5960, %v5898
    %5962 = vadd.xlane.f32.xlu0 %v5961
    %v5963 = vpop.xlane.xlu0 %5962
    %v5964 = vadd.f32 %v5899, %v5900
    %v5965 = vadd.f32 %v5964, %v5901
    %v5966 = vadd.f32 %v5965, %v5902
    %5967 = vadd.xlane.f32.xlu0 %v5966
    %v5968 = vpop.xlane.xlu0 %5967
    %v5969 = vadd.f32 %v5903, %v5904
    %v5970 = vadd.f32 %v5969, %v5905
    %v5971 = vadd.f32 %v5970, %v5906
    %5972 = vadd.xlane.f32.xlu0 %v5971
    %v5973 = vpop.xlane.xlu0 %5972
    %v5974 = vadd.f32 %v5907, %v5908
    %v5975 = vadd.f32 %v5974, %v5909
    %v5976 = vadd.f32 %v5975, %v5910
    %5977 = vadd.xlane.f32.xlu0 %v5976
    %v5978 = vpop.xlane.xlu0 %5977
    %v5979 = vadd.f32 %v5911, %v5912
    %v5980 = vadd.f32 %v5979, %v5913
    %v5981 = vadd.f32 %v5980, %v5914
    %5982 = vadd.xlane.f32.xlu0 %v5981
    %v5983 = vpop.xlane.xlu0 %5982
    %v5984 = vadd.f32 %v5915, %v5916
    %v5985 = vadd.f32 %v5984, %v5917
    %v5986 = vadd.f32 %v5985, %v5918
    %5987 = vadd.xlane.f32.xlu0 %v5986
    %v5988 = vpop.xlane.xlu0 %5987
    %v5989 = vadd.f32 %v5919, %v5920
    %v5990 = vadd.f32 %v5989, %v5921
    %v5991 = vadd.f32 %v5990, %v5922
    %5992 = vadd.xlane.f32.xlu0 %v5991
    %v5993 = vpop.xlane.xlu0 %5992
    %v5994 = vadd.f32 %v5923, %v5924
    %v5995 = vadd.f32 %v5994, %v5925
    %v5996 = vadd.f32 %v5995, %v5926
    %5997 = vadd.xlane.f32.xlu0 %v5996
    %v5998 = vpop.xlane.xlu0 %5997
    %v5999 = vadd.f32 %v5927, %v5928
    %v6000 = vadd.f32 %v5999, %v5929
    %v6001 = vadd.f32 %v6000, %v5930
    %6002 = vadd.xlane.f32.xlu0 %v6001
    %v6003 = vpop.xlane.xlu0 %6002
    %v6004 = vadd.f32 %v5931, %v5932
    %v6005 = vadd.f32 %v6004, %v5933
    %v6006 = vadd.f32 %v6005, %v5934
    %6007 = vadd.xlane.f32.xlu0 %v6006
    %v6008 = vpop.xlane.xlu0 %6007
    %v6009 = vadd.f32 %v5935, %v5936
    %v6010 = vadd.f32 %v6009, %v5937
    %v6011 = vadd.f32 %v6010, %v5938
    %6012 = vadd.xlane.f32.xlu0 %v6011
    %v6013 = vpop.xlane.xlu0 %6012
    %v6014 = vadd.f32 %v5939, %v5940
    %v6015 = vadd.f32 %v6014, %v5941
    %v6016 = vadd.f32 %v6015, %v5942
    %6017 = vadd.xlane.f32.xlu0 %v6016
    %v6018 = vpop.xlane.xlu0 %6017
    %v6019 = vadd.f32 %v5943, %v5944
    %v6020 = vadd.f32 %v6019, %v5945
    %v6021 = vadd.f32 %v6020, %v5946
    %6022 = vadd.xlane.f32.xlu0 %v6021
    %v6023 = vpop.xlane.xlu0 %6022
    %v6024 = vadd.f32 %v5947, %v5948
    %v6025 = vadd.f32 %v6024, %v5949
    %v6026 = vadd.f32 %v6025, %v5950
    %6027 = vadd.xlane.f32.xlu0 %v6026
    %v6028 = vpop.xlane.xlu0 %6027
    %v6029 = vadd.f32 %v5951, %v5952
    %v6030 = vadd.f32 %v6029, %v5953
    %v6031 = vadd.f32 %v6030, %v5954
    %6032 = vadd.xlane.f32.xlu0 %v6031
    %v6033 = vpop.xlane.xlu0 %6032
    %v6034 = vadd.f32 %v5955, %v5956
    %v6035 = vadd.f32 %v6034, %v5957
    %v6036 = vadd.f32 %v6035, %v5958
    %6037 = vadd.xlane.f32.xlu0 %v6036
    %v6038 = vpop.xlane.xlu0 %6037
    %v6039 = vmul.f32 %v5819, 0.001953125
    %v6040 = vmul.f32 %v5824, 0.001953125
    %v6041 = vmul.f32 %v5829, 0.001953125
    %v6042 = vmul.f32 %v5834, 0.001953125
    %v6043 = vmul.f32 %v5839, 0.001953125
    %v6044 = vmul.f32 %v5844, 0.001953125
    %v6045 = vmul.f32 %v5849, 0.001953125
    %v6046 = vmul.f32 %v5854, 0.001953125
    %v6047 = vmul.f32 %v5859, 0.001953125
    %v6048 = vmul.f32 %v5864, 0.001953125
    %v6049 = vmul.f32 %v5869, 0.001953125
    %v6050 = vmul.f32 %v5874, 0.001953125
    %v6051 = vmul.f32 %v5879, 0.001953125
    %v6052 = vmul.f32 %v5884, 0.001953125
    %v6053 = vmul.f32 %v5889, 0.001953125
    %v6054 = vmul.f32 %v5894, 0.001953125
    %v6055 = vmul.f32 %v5963, 0.001953125
    %v6056 = vmul.f32 %v5968, 0.001953125
    %v6057 = vmul.f32 %v5973, 0.001953125
    %v6058 = vmul.f32 %v5978, 0.001953125
    %v6059 = vmul.f32 %v5983, 0.001953125
    %v6060 = vmul.f32 %v5988, 0.001953125
    %v6061 = vmul.f32 %v5993, 0.001953125
    %v6062 = vmul.f32 %v5998, 0.001953125
    %v6063 = vmul.f32 %v6003, 0.001953125
    %v6064 = vmul.f32 %v6008, 0.001953125
    %v6065 = vmul.f32 %v6013, 0.001953125
    %v6066 = vmul.f32 %v6018, 0.001953125
    %v6067 = vmul.f32 %v6023, 0.001953125
    %v6068 = vmul.f32 %v6028, 0.001953125
    %v6069 = vmul.f32 %v6033, 0.001953125
    %v6070 = vmul.f32 %v6038, 0.001953125
    %v6071 = vmul.f32 %v6039, %v6039
    %v6072 = vmul.f32 %v6040, %v6040
    %v6073 = vmul.f32 %v6041, %v6041
    %v6074 = vmul.f32 %v6042, %v6042
    %v6075 = vmul.f32 %v6043, %v6043
    %v6076 = vmul.f32 %v6044, %v6044
    %v6077 = vmul.f32 %v6045, %v6045
    %v6078 = vmul.f32 %v6046, %v6046
    %v6079 = vmul.f32 %v6047, %v6047
    %v6080 = vmul.f32 %v6048, %v6048
    %v6081 = vmul.f32 %v6049, %v6049
    %v6082 = vmul.f32 %v6050, %v6050
    %v6083 = vmul.f32 %v6051, %v6051
    %v6084 = vmul.f32 %v6052, %v6052
    %v6085 = vmul.f32 %v6053, %v6053
    %v6086 = vmul.f32 %v6054, %v6054
    %v6087 = vsub.f32 %v6055, %v6071
    %v6088 = vsub.f32 %v6056, %v6072
    %v6089 = vsub.f32 %v6057, %v6073
    %v6090 = vsub.f32 %v6058, %v6074
    %v6091 = vsub.f32 %v6059, %v6075
    %v6092 = vsub.f32 %v6060, %v6076
    %v6093 = vsub.f32 %v6061, %v6077
    %v6094 = vsub.f32 %v6062, %v6078
    %v6095 = vsub.f32 %v6063, %v6079
    %v6096 = vsub.f32 %v6064, %v6080
    %v6097 = vsub.f32 %v6065, %v6081
    %v6098 = vsub.f32 %v6066, %v6082
    %v6099 = vsub.f32 %v6067, %v6083
    %v6100 = vsub.f32 %v6068, %v6084
    %v6101 = vsub.f32 %v6069, %v6085
    %v6102 = vsub.f32 %v6070, %v6086
    %v6103 = vadd.f32 %v6087, 1e-05
    %v6104 = vadd.f32 %v6088, 1e-05
    %v6105 = vadd.f32 %v6089, 1e-05
    %v6106 = vadd.f32 %v6090, 1e-05
    %v6107 = vadd.f32 %v6091, 1e-05
    %v6108 = vadd.f32 %v6092, 1e-05
    %v6109 = vadd.f32 %v6093, 1e-05
    %v6110 = vadd.f32 %v6094, 1e-05
    %v6111 = vadd.f32 %v6095, 1e-05
    %v6112 = vadd.f32 %v6096, 1e-05
    %v6113 = vadd.f32 %v6097, 1e-05
    %v6114 = vadd.f32 %v6098, 1e-05
    %v6115 = vadd.f32 %v6099, 1e-05
    %v6116 = vadd.f32 %v6100, 1e-05
    %v6117 = vadd.f32 %v6101, 1e-05
    %v6118 = vadd.f32 %v6102, 1e-05
    %v6119 = vrsqrt.pop %v6103
    %v6120 = vrsqrt.pop %v6104
    %v6121 = vrsqrt.pop %v6105
    %v6122 = vrsqrt.pop %v6106
    %v6123 = vrsqrt.pop %v6107
    %v6124 = vrsqrt.pop %v6108
    %v6125 = vrsqrt.pop %v6109
    %v6126 = vrsqrt.pop %v6110
    %v6127 = vrsqrt.pop %v6111
    %v6128 = vrsqrt.pop %v6112
    %v6129 = vrsqrt.pop %v6113
    %v6130 = vrsqrt.pop %v6114
    %v6131 = vrsqrt.pop %v6115
    %v6132 = vrsqrt.pop %v6116
    %v6133 = vrsqrt.pop %v6117
    %v6134 = vrsqrt.pop %v6118
    %v6135 = vmul.f32 %v34, %v6119
    %v6136 = vmul.f32 %v35, %v6120
    %v6137 = vmul.f32 %v36, %v6121
    %v6138 = vmul.f32 %v37, %v6122
    %v6139 = vmul.f32 %v38, %v6123
    %v6140 = vmul.f32 %v39, %v6124
    %v6141 = vmul.f32 %v40, %v6125
    %v6142 = vmul.f32 %v41, %v6126
    %v6143 = vmul.f32 %v42, %v6127
    %v6144 = vmul.f32 %v43, %v6128
    %v6145 = vmul.f32 %v44, %v6129
    %v6146 = vmul.f32 %v45, %v6130
    %v6147 = vmul.f32 %v46, %v6131
    %v6148 = vmul.f32 %v47, %v6132
    %v6149 = vmul.f32 %v48, %v6133
    %v6150 = vmul.f32 %v49, %v6134
    %v6151 = vmul.f32 %v6039, %v6135
    %v6152 = vmul.f32 %v6040, %v6136
    %v6153 = vmul.f32 %v6041, %v6137
    %v6154 = vmul.f32 %v6042, %v6138
    %v6155 = vmul.f32 %v6043, %v6139
    %v6156 = vmul.f32 %v6044, %v6140
    %v6157 = vmul.f32 %v6045, %v6141
    %v6158 = vmul.f32 %v6046, %v6142
    %v6159 = vmul.f32 %v6047, %v6143
    %v6160 = vmul.f32 %v6048, %v6144
    %v6161 = vmul.f32 %v6049, %v6145
    %v6162 = vmul.f32 %v6050, %v6146
    %v6163 = vmul.f32 %v6051, %v6147
    %v6164 = vmul.f32 %v6052, %v6148
    %v6165 = vmul.f32 %v6053, %v6149
    %v6166 = vmul.f32 %v6054, %v6150
    %v6167 = vsub.f32 %v50, %v6151
    %v6168 = vsub.f32 %v51, %v6152
    %v6169 = vsub.f32 %v52, %v6153
    %v6170 = vsub.f32 %v53, %v6154
    %v6171 = vsub.f32 %v54, %v6155
    %v6172 = vsub.f32 %v55, %v6156
    %v6173 = vsub.f32 %v56, %v6157
    %v6174 = vsub.f32 %v57, %v6158
    %v6175 = vsub.f32 %v58, %v6159
    %v6176 = vsub.f32 %v59, %v6160
    %v6177 = vsub.f32 %v60, %v6161
    %v6178 = vsub.f32 %v61, %v6162
    %v6179 = vsub.f32 %v62, %v6163
    %v6180 = vsub.f32 %v63, %v6164
    %v6181 = vsub.f32 %v64, %v6165
    %v6182 = vsub.f32 %v65, %v6166
    %6184 = vset.pattern.permute.xlu0 0
    %6185 = vperm.xlu0 %6184, %v6135
    %v6186 = vpop.permute.xlu0 %6185
    %6189 = vset.pattern.permute.xlu0 0
    %6190 = vperm.xlu0 %6189, %v6136
    %v6191 = vpop.permute.xlu0 %6190
    %6194 = vset.pattern.permute.xlu0 0
    %6195 = vperm.xlu0 %6194, %v6137
    %v6196 = vpop.permute.xlu0 %6195
    %6199 = vset.pattern.permute.xlu0 0
    %6200 = vperm.xlu0 %6199, %v6138
    %v6201 = vpop.permute.xlu0 %6200
    %6204 = vset.pattern.permute.xlu0 0
    %6205 = vperm.xlu0 %6204, %v6139
    %v6206 = vpop.permute.xlu0 %6205
    %6209 = vset.pattern.permute.xlu0 0
    %6210 = vperm.xlu0 %6209, %v6140
    %v6211 = vpop.permute.xlu0 %6210
    %6214 = vset.pattern.permute.xlu0 0
    %6215 = vperm.xlu0 %6214, %v6141
    %v6216 = vpop.permute.xlu0 %6215
    %6219 = vset.pattern.permute.xlu0 0
    %6220 = vperm.xlu0 %6219, %v6142
    %v6221 = vpop.permute.xlu0 %6220
    %6224 = vset.pattern.permute.xlu0 0
    %6225 = vperm.xlu0 %6224, %v6143
    %v6226 = vpop.permute.xlu0 %6225
    %6229 = vset.pattern.permute.xlu0 0
    %6230 = vperm.xlu0 %6229, %v6144
    %v6231 = vpop.permute.xlu0 %6230
    %6234 = vset.pattern.permute.xlu0 0
    %6235 = vperm.xlu0 %6234, %v6145
    %v6236 = vpop.permute.xlu0 %6235
    %6239 = vset.pattern.permute.xlu0 0
    %6240 = vperm.xlu0 %6239, %v6146
    %v6241 = vpop.permute.xlu0 %6240
    %6244 = vset.pattern.permute.xlu0 0
    %6245 = vperm.xlu0 %6244, %v6147
    %v6246 = vpop.permute.xlu0 %6245
    %6249 = vset.pattern.permute.xlu0 0
    %6250 = vperm.xlu0 %6249, %v6148
    %v6251 = vpop.permute.xlu0 %6250
    %6254 = vset.pattern.permute.xlu0 0
    %6255 = vperm.xlu0 %6254, %v6149
    %v6256 = vpop.permute.xlu0 %6255
    %6259 = vset.pattern.permute.xlu0 0
    %6260 = vperm.xlu0 %6259, %v6150
    %v6261 = vpop.permute.xlu0 %6260
    %v6263 = vmul.f32 %v5751, %v6186
    %v6264 = vmul.f32 %v5752, %v6186
    %v6265 = vmul.f32 %v5753, %v6186
    %v6266 = vmul.f32 %v5754, %v6186
    %v6267 = vmul.f32 %v5755, %v6191
    %v6268 = vmul.f32 %v5756, %v6191
    %v6269 = vmul.f32 %v5757, %v6191
    %v6270 = vmul.f32 %v5758, %v6191
    %v6271 = vmul.f32 %v5759, %v6196
    %v6272 = vmul.f32 %v5760, %v6196
    %v6273 = vmul.f32 %v5761, %v6196
    %v6274 = vmul.f32 %v5762, %v6196
    %v6275 = vmul.f32 %v5763, %v6201
    %v6276 = vmul.f32 %v5764, %v6201
    %v6277 = vmul.f32 %v5765, %v6201
    %v6278 = vmul.f32 %v5766, %v6201
    %v6279 = vmul.f32 %v5767, %v6206
    %v6280 = vmul.f32 %v5768, %v6206
    %v6281 = vmul.f32 %v5769, %v6206
    %v6282 = vmul.f32 %v5770, %v6206
    %v6283 = vmul.f32 %v5771, %v6211
    %v6284 = vmul.f32 %v5772, %v6211
    %v6285 = vmul.f32 %v5773, %v6211
    %v6286 = vmul.f32 %v5774, %v6211
    %v6287 = vmul.f32 %v5775, %v6216
    %v6288 = vmul.f32 %v5776, %v6216
    %v6289 = vmul.f32 %v5777, %v6216
    %v6290 = vmul.f32 %v5778, %v6216
    %v6291 = vmul.f32 %v5779, %v6221
    %v6292 = vmul.f32 %v5780, %v6221
    %v6293 = vmul.f32 %v5781, %v6221
    %v6294 = vmul.f32 %v5782, %v6221
    %v6295 = vmul.f32 %v5783, %v6226
    %v6296 = vmul.f32 %v5784, %v6226
    %v6297 = vmul.f32 %v5785, %v6226
    %v6298 = vmul.f32 %v5786, %v6226
    %v6299 = vmul.f32 %v5787, %v6231
    %v6300 = vmul.f32 %v5788, %v6231
    %v6301 = vmul.f32 %v5789, %v6231
    %v6302 = vmul.f32 %v5790, %v6231
    %v6303 = vmul.f32 %v5791, %v6236
    %v6304 = vmul.f32 %v5792, %v6236
    %v6305 = vmul.f32 %v5793, %v6236
    %v6306 = vmul.f32 %v5794, %v6236
    %v6307 = vmul.f32 %v5795, %v6241
    %v6308 = vmul.f32 %v5796, %v6241
    %v6309 = vmul.f32 %v5797, %v6241
    %v6310 = vmul.f32 %v5798, %v6241
    %v6311 = vmul.f32 %v5799, %v6246
    %v6312 = vmul.f32 %v5800, %v6246
    %v6313 = vmul.f32 %v5801, %v6246
    %v6314 = vmul.f32 %v5802, %v6246
    %v6315 = vmul.f32 %v5803, %v6251
    %v6316 = vmul.f32 %v5804, %v6251
    %v6317 = vmul.f32 %v5805, %v6251
    %v6318 = vmul.f32 %v5806, %v6251
    %v6319 = vmul.f32 %v5807, %v6256
    %v6320 = vmul.f32 %v5808, %v6256
    %v6321 = vmul.f32 %v5809, %v6256
    %v6322 = vmul.f32 %v5810, %v6256
    %v6323 = vmul.f32 %v5811, %v6261
    %v6324 = vmul.f32 %v5812, %v6261
    %v6325 = vmul.f32 %v5813, %v6261
    %v6326 = vmul.f32 %v5814, %v6261
    %6328 = vset.pattern.permute.xlu0 0
    %6329 = vperm.xlu0 %6328, %v6167
    %v6330 = vpop.permute.xlu0 %6329
    %6333 = vset.pattern.permute.xlu0 0
    %6334 = vperm.xlu0 %6333, %v6168
    %v6335 = vpop.permute.xlu0 %6334
    %6338 = vset.pattern.permute.xlu0 0
    %6339 = vperm.xlu0 %6338, %v6169
    %v6340 = vpop.permute.xlu0 %6339
    %6343 = vset.pattern.permute.xlu0 0
    %6344 = vperm.xlu0 %6343, %v6170
    %v6345 = vpop.permute.xlu0 %6344
    %6348 = vset.pattern.permute.xlu0 0
    %6349 = vperm.xlu0 %6348, %v6171
    %v6350 = vpop.permute.xlu0 %6349
    %6353 = vset.pattern.permute.xlu0 0
    %6354 = vperm.xlu0 %6353, %v6172
    %v6355 = vpop.permute.xlu0 %6354
    %6358 = vset.pattern.permute.xlu0 0
    %6359 = vperm.xlu0 %6358, %v6173
    %v6360 = vpop.permute.xlu0 %6359
    %6363 = vset.pattern.permute.xlu0 0
    %6364 = vperm.xlu0 %6363, %v6174
    %v6365 = vpop.permute.xlu0 %6364
    %6368 = vset.pattern.permute.xlu0 0
    %6369 = vperm.xlu0 %6368, %v6175
    %v6370 = vpop.permute.xlu0 %6369
    %6373 = vset.pattern.permute.xlu0 0
    %6374 = vperm.xlu0 %6373, %v6176
    %v6375 = vpop.permute.xlu0 %6374
    %6378 = vset.pattern.permute.xlu0 0
    %6379 = vperm.xlu0 %6378, %v6177
    %v6380 = vpop.permute.xlu0 %6379
    %6383 = vset.pattern.permute.xlu0 0
    %6384 = vperm.xlu0 %6383, %v6178
    %v6385 = vpop.permute.xlu0 %6384
    %6388 = vset.pattern.permute.xlu0 0
    %6389 = vperm.xlu0 %6388, %v6179
    %v6390 = vpop.permute.xlu0 %6389
    %6393 = vset.pattern.permute.xlu0 0
    %6394 = vperm.xlu0 %6393, %v6180
    %v6395 = vpop.permute.xlu0 %6394
    %6398 = vset.pattern.permute.xlu0 0
    %6399 = vperm.xlu0 %6398, %v6181
    %v6400 = vpop.permute.xlu0 %6399
    %6403 = vset.pattern.permute.xlu0 0
    %6404 = vperm.xlu0 %6403, %v6182
    %v6405 = vpop.permute.xlu0 %6404
    %v6407 = vadd.f32 %v6263, %v6330
    %v6408 = vadd.f32 %v6264, %v6330
    %v6409 = vadd.f32 %v6265, %v6330
    %v6410 = vadd.f32 %v6266, %v6330
    %v6411 = vadd.f32 %v6267, %v6335
    %v6412 = vadd.f32 %v6268, %v6335
    %v6413 = vadd.f32 %v6269, %v6335
    %v6414 = vadd.f32 %v6270, %v6335
    %v6415 = vadd.f32 %v6271, %v6340
    %v6416 = vadd.f32 %v6272, %v6340
    %v6417 = vadd.f32 %v6273, %v6340
    %v6418 = vadd.f32 %v6274, %v6340
    %v6419 = vadd.f32 %v6275, %v6345
    %v6420 = vadd.f32 %v6276, %v6345
    %v6421 = vadd.f32 %v6277, %v6345
    %v6422 = vadd.f32 %v6278, %v6345
    %v6423 = vadd.f32 %v6279, %v6350
    %v6424 = vadd.f32 %v6280, %v6350
    %v6425 = vadd.f32 %v6281, %v6350
    %v6426 = vadd.f32 %v6282, %v6350
    %v6427 = vadd.f32 %v6283, %v6355
    %v6428 = vadd.f32 %v6284, %v6355
    %v6429 = vadd.f32 %v6285, %v6355
    %v6430 = vadd.f32 %v6286, %v6355
    %v6431 = vadd.f32 %v6287, %v6360
    %v6432 = vadd.f32 %v6288, %v6360
    %v6433 = vadd.f32 %v6289, %v6360
    %v6434 = vadd.f32 %v6290, %v6360
    %v6435 = vadd.f32 %v6291, %v6365
    %v6436 = vadd.f32 %v6292, %v6365
    %v6437 = vadd.f32 %v6293, %v6365
    %v6438 = vadd.f32 %v6294, %v6365
    %v6439 = vadd.f32 %v6295, %v6370
    %v6440 = vadd.f32 %v6296, %v6370
    %v6441 = vadd.f32 %v6297, %v6370
    %v6442 = vadd.f32 %v6298, %v6370
    %v6443 = vadd.f32 %v6299, %v6375
    %v6444 = vadd.f32 %v6300, %v6375
    %v6445 = vadd.f32 %v6301, %v6375
    %v6446 = vadd.f32 %v6302, %v6375
    %v6447 = vadd.f32 %v6303, %v6380
    %v6448 = vadd.f32 %v6304, %v6380
    %v6449 = vadd.f32 %v6305, %v6380
    %v6450 = vadd.f32 %v6306, %v6380
    %v6451 = vadd.f32 %v6307, %v6385
    %v6452 = vadd.f32 %v6308, %v6385
    %v6453 = vadd.f32 %v6309, %v6385
    %v6454 = vadd.f32 %v6310, %v6385
    %v6455 = vadd.f32 %v6311, %v6390
    %v6456 = vadd.f32 %v6312, %v6390
    %v6457 = vadd.f32 %v6313, %v6390
    %v6458 = vadd.f32 %v6314, %v6390
    %v6459 = vadd.f32 %v6315, %v6395
    %v6460 = vadd.f32 %v6316, %v6395
    %v6461 = vadd.f32 %v6317, %v6395
    %v6462 = vadd.f32 %v6318, %v6395
    %v6463 = vadd.f32 %v6319, %v6400
    %v6464 = vadd.f32 %v6320, %v6400
    %v6465 = vadd.f32 %v6321, %v6400
    %v6466 = vadd.f32 %v6322, %v6400
    %v6467 = vadd.f32 %v6323, %v6405
    %v6468 = vadd.f32 %v6324, %v6405
    %v6469 = vadd.f32 %v6325, %v6405
    %v6470 = vadd.f32 %v6326, %v6405
    %v6471 = vmul.f32 %v6407, %v6407
    %v6472 = vmul.f32 %v6408, %v6408
    %v6473 = vmul.f32 %v6409, %v6409
    %v6474 = vmul.f32 %v6410, %v6410
    %v6475 = vmul.f32 %v6411, %v6411
    %v6476 = vmul.f32 %v6412, %v6412
    %v6477 = vmul.f32 %v6413, %v6413
    %v6478 = vmul.f32 %v6414, %v6414
    %v6479 = vmul.f32 %v6415, %v6415
    %v6480 = vmul.f32 %v6416, %v6416
    %v6481 = vmul.f32 %v6417, %v6417
    %v6482 = vmul.f32 %v6418, %v6418
    %v6483 = vmul.f32 %v6419, %v6419
    %v6484 = vmul.f32 %v6420, %v6420
    %v6485 = vmul.f32 %v6421, %v6421
    %v6486 = vmul.f32 %v6422, %v6422
    %v6487 = vmul.f32 %v6423, %v6423
    %v6488 = vmul.f32 %v6424, %v6424
    %v6489 = vmul.f32 %v6425, %v6425
    %v6490 = vmul.f32 %v6426, %v6426
    %v6491 = vmul.f32 %v6427, %v6427
    %v6492 = vmul.f32 %v6428, %v6428
    %v6493 = vmul.f32 %v6429, %v6429
    %v6494 = vmul.f32 %v6430, %v6430
    %v6495 = vmul.f32 %v6431, %v6431
    %v6496 = vmul.f32 %v6432, %v6432
    %v6497 = vmul.f32 %v6433, %v6433
    %v6498 = vmul.f32 %v6434, %v6434
    %v6499 = vmul.f32 %v6435, %v6435
    %v6500 = vmul.f32 %v6436, %v6436
    %v6501 = vmul.f32 %v6437, %v6437
    %v6502 = vmul.f32 %v6438, %v6438
    %v6503 = vmul.f32 %v6439, %v6439
    %v6504 = vmul.f32 %v6440, %v6440
    %v6505 = vmul.f32 %v6441, %v6441
    %v6506 = vmul.f32 %v6442, %v6442
    %v6507 = vmul.f32 %v6443, %v6443
    %v6508 = vmul.f32 %v6444, %v6444
    %v6509 = vmul.f32 %v6445, %v6445
    %v6510 = vmul.f32 %v6446, %v6446
    %v6511 = vmul.f32 %v6447, %v6447
    %v6512 = vmul.f32 %v6448, %v6448
    %v6513 = vmul.f32 %v6449, %v6449
    %v6514 = vmul.f32 %v6450, %v6450
    %v6515 = vmul.f32 %v6451, %v6451
    %v6516 = vmul.f32 %v6452, %v6452
    %v6517 = vmul.f32 %v6453, %v6453
    %v6518 = vmul.f32 %v6454, %v6454
    %v6519 = vmul.f32 %v6455, %v6455
    %v6520 = vmul.f32 %v6456, %v6456
    %v6521 = vmul.f32 %v6457, %v6457
    %v6522 = vmul.f32 %v6458, %v6458
    %v6523 = vmul.f32 %v6459, %v6459
    %v6524 = vmul.f32 %v6460, %v6460
    %v6525 = vmul.f32 %v6461, %v6461
    %v6526 = vmul.f32 %v6462, %v6462
    %v6527 = vmul.f32 %v6463, %v6463
    %v6528 = vmul.f32 %v6464, %v6464
    %v6529 = vmul.f32 %v6465, %v6465
    %v6530 = vmul.f32 %v6466, %v6466
    %v6531 = vmul.f32 %v6467, %v6467
    %v6532 = vmul.f32 %v6468, %v6468
    %v6533 = vmul.f32 %v6469, %v6469
    %v6534 = vmul.f32 %v6470, %v6470
    %v6535 = vmul.f32 %v6471, %v6407
    %v6536 = vmul.f32 %v6472, %v6408
    %v6537 = vmul.f32 %v6473, %v6409
    %v6538 = vmul.f32 %v6474, %v6410
    %v6539 = vmul.f32 %v6475, %v6411
    %v6540 = vmul.f32 %v6476, %v6412
    %v6541 = vmul.f32 %v6477, %v6413
    %v6542 = vmul.f32 %v6478, %v6414
    %v6543 = vmul.f32 %v6479, %v6415
    %v6544 = vmul.f32 %v6480, %v6416
    %v6545 = vmul.f32 %v6481, %v6417
    %v6546 = vmul.f32 %v6482, %v6418
    %v6547 = vmul.f32 %v6483, %v6419
    %v6548 = vmul.f32 %v6484, %v6420
    %v6549 = vmul.f32 %v6485, %v6421
    %v6550 = vmul.f32 %v6486, %v6422
    %v6551 = vmul.f32 %v6487, %v6423
    %v6552 = vmul.f32 %v6488, %v6424
    %v6553 = vmul.f32 %v6489, %v6425
    %v6554 = vmul.f32 %v6490, %v6426
    %v6555 = vmul.f32 %v6491, %v6427
    %v6556 = vmul.f32 %v6492, %v6428
    %v6557 = vmul.f32 %v6493, %v6429
    %v6558 = vmul.f32 %v6494, %v6430
    %v6559 = vmul.f32 %v6495, %v6431
    %v6560 = vmul.f32 %v6496, %v6432
    %v6561 = vmul.f32 %v6497, %v6433
    %v6562 = vmul.f32 %v6498, %v6434
    %v6563 = vmul.f32 %v6499, %v6435
    %v6564 = vmul.f32 %v6500, %v6436
    %v6565 = vmul.f32 %v6501, %v6437
    %v6566 = vmul.f32 %v6502, %v6438
    %v6567 = vmul.f32 %v6503, %v6439
    %v6568 = vmul.f32 %v6504, %v6440
    %v6569 = vmul.f32 %v6505, %v6441
    %v6570 = vmul.f32 %v6506, %v6442
    %v6571 = vmul.f32 %v6507, %v6443
    %v6572 = vmul.f32 %v6508, %v6444
    %v6573 = vmul.f32 %v6509, %v6445
    %v6574 = vmul.f32 %v6510, %v6446
    %v6575 = vmul.f32 %v6511, %v6447
    %v6576 = vmul.f32 %v6512, %v6448
    %v6577 = vmul.f32 %v6513, %v6449
    %v6578 = vmul.f32 %v6514, %v6450
    %v6579 = vmul.f32 %v6515, %v6451
    %v6580 = vmul.f32 %v6516, %v6452
    %v6581 = vmul.f32 %v6517, %v6453
    %v6582 = vmul.f32 %v6518, %v6454
    %v6583 = vmul.f32 %v6519, %v6455
    %v6584 = vmul.f32 %v6520, %v6456
    %v6585 = vmul.f32 %v6521, %v6457
    %v6586 = vmul.f32 %v6522, %v6458
    %v6587 = vmul.f32 %v6523, %v6459
    %v6588 = vmul.f32 %v6524, %v6460
    %v6589 = vmul.f32 %v6525, %v6461
    %v6590 = vmul.f32 %v6526, %v6462
    %v6591 = vmul.f32 %v6527, %v6463
    %v6592 = vmul.f32 %v6528, %v6464
    %v6593 = vmul.f32 %v6529, %v6465
    %v6594 = vmul.f32 %v6530, %v6466
    %v6595 = vmul.f32 %v6531, %v6467
    %v6596 = vmul.f32 %v6532, %v6468
    %v6597 = vmul.f32 %v6533, %v6469
    %v6598 = vmul.f32 %v6534, %v6470
    %v6599 = vmul.f32 %v6535, 0.044715
    %v6600 = vmul.f32 %v6536, 0.044715
    %v6601 = vmul.f32 %v6537, 0.044715
    %v6602 = vmul.f32 %v6538, 0.044715
    %v6603 = vmul.f32 %v6539, 0.044715
    %v6604 = vmul.f32 %v6540, 0.044715
    %v6605 = vmul.f32 %v6541, 0.044715
    %v6606 = vmul.f32 %v6542, 0.044715
    %v6607 = vmul.f32 %v6543, 0.044715
    %v6608 = vmul.f32 %v6544, 0.044715
    %v6609 = vmul.f32 %v6545, 0.044715
    %v6610 = vmul.f32 %v6546, 0.044715
    %v6611 = vmul.f32 %v6547, 0.044715
    %v6612 = vmul.f32 %v6548, 0.044715
    %v6613 = vmul.f32 %v6549, 0.044715
    %v6614 = vmul.f32 %v6550, 0.044715
    %v6615 = vmul.f32 %v6551, 0.044715
    %v6616 = vmul.f32 %v6552, 0.044715
    %v6617 = vmul.f32 %v6553, 0.044715
    %v6618 = vmul.f32 %v6554, 0.044715
    %v6619 = vmul.f32 %v6555, 0.044715
    %v6620 = vmul.f32 %v6556, 0.044715
    %v6621 = vmul.f32 %v6557, 0.044715
    %v6622 = vmul.f32 %v6558, 0.044715
    %v6623 = vmul.f32 %v6559, 0.044715
    %v6624 = vmul.f32 %v6560, 0.044715
    %v6625 = vmul.f32 %v6561, 0.044715
    %v6626 = vmul.f32 %v6562, 0.044715
    %v6627 = vmul.f32 %v6563, 0.044715
    %v6628 = vmul.f32 %v6564, 0.044715
    %v6629 = vmul.f32 %v6565, 0.044715
    %v6630 = vmul.f32 %v6566, 0.044715
    %v6631 = vmul.f32 %v6567, 0.044715
    %v6632 = vmul.f32 %v6568, 0.044715
    %v6633 = vmul.f32 %v6569, 0.044715
    %v6634 = vmul.f32 %v6570, 0.044715
    %v6635 = vmul.f32 %v6571, 0.044715
    %v6636 = vmul.f32 %v6572, 0.044715
    %v6637 = vmul.f32 %v6573, 0.044715
    %v6638 = vmul.f32 %v6574, 0.044715
    %v6639 = vmul.f32 %v6575, 0.044715
    %v6640 = vmul.f32 %v6576, 0.044715
    %v6641 = vmul.f32 %v6577, 0.044715
    %v6642 = vmul.f32 %v6578, 0.044715
    %v6643 = vmul.f32 %v6579, 0.044715
    %v6644 = vmul.f32 %v6580, 0.044715
    %v6645 = vmul.f32 %v6581, 0.044715
    %v6646 = vmul.f32 %v6582, 0.044715
    %v6647 = vmul.f32 %v6583, 0.044715
    %v6648 = vmul.f32 %v6584, 0.044715
    %v6649 = vmul.f32 %v6585, 0.044715
    %v6650 = vmul.f32 %v6586, 0.044715
    %v6651 = vmul.f32 %v6587, 0.044715
    %v6652 = vmul.f32 %v6588, 0.044715
    %v6653 = vmul.f32 %v6589, 0.044715
    %v6654 = vmul.f32 %v6590, 0.044715
    %v6655 = vmul.f32 %v6591, 0.044715
    %v6656 = vmul.f32 %v6592, 0.044715
    %v6657 = vmul.f32 %v6593, 0.044715
    %v6658 = vmul.f32 %v6594, 0.044715
    %v6659 = vmul.f32 %v6595, 0.044715
    %v6660 = vmul.f32 %v6596, 0.044715
    %v6661 = vmul.f32 %v6597, 0.044715
    %v6662 = vmul.f32 %v6598, 0.044715
    %v6663 = vadd.f32 %v6407, %v6599
    %v6664 = vadd.f32 %v6408, %v6600
    %v6665 = vadd.f32 %v6409, %v6601
    %v6666 = vadd.f32 %v6410, %v6602
    %v6667 = vadd.f32 %v6411, %v6603
    %v6668 = vadd.f32 %v6412, %v6604
    %v6669 = vadd.f32 %v6413, %v6605
    %v6670 = vadd.f32 %v6414, %v6606
    %v6671 = vadd.f32 %v6415, %v6607
    %v6672 = vadd.f32 %v6416, %v6608
    %v6673 = vadd.f32 %v6417, %v6609
    %v6674 = vadd.f32 %v6418, %v6610
    %v6675 = vadd.f32 %v6419, %v6611
    %v6676 = vadd.f32 %v6420, %v6612
    %v6677 = vadd.f32 %v6421, %v6613
    %v6678 = vadd.f32 %v6422, %v6614
    %v6679 = vadd.f32 %v6423, %v6615
    %v6680 = vadd.f32 %v6424, %v6616
    %v6681 = vadd.f32 %v6425, %v6617
    %v6682 = vadd.f32 %v6426, %v6618
    %v6683 = vadd.f32 %v6427, %v6619
    %v6684 = vadd.f32 %v6428, %v6620
    %v6685 = vadd.f32 %v6429, %v6621
    %v6686 = vadd.f32 %v6430, %v6622
    %v6687 = vadd.f32 %v6431, %v6623
    %v6688 = vadd.f32 %v6432, %v6624
    %v6689 = vadd.f32 %v6433, %v6625
    %v6690 = vadd.f32 %v6434, %v6626
    %v6691 = vadd.f32 %v6435, %v6627
    %v6692 = vadd.f32 %v6436, %v6628
    %v6693 = vadd.f32 %v6437, %v6629
    %v6694 = vadd.f32 %v6438, %v6630
    %v6695 = vadd.f32 %v6439, %v6631
    %v6696 = vadd.f32 %v6440, %v6632
    %v6697 = vadd.f32 %v6441, %v6633
    %v6698 = vadd.f32 %v6442, %v6634
    %v6699 = vadd.f32 %v6443, %v6635
    %v6700 = vadd.f32 %v6444, %v6636
    %v6701 = vadd.f32 %v6445, %v6637
    %v6702 = vadd.f32 %v6446, %v6638
    %v6703 = vadd.f32 %v6447, %v6639
    %v6704 = vadd.f32 %v6448, %v6640
    %v6705 = vadd.f32 %v6449, %v6641
    %v6706 = vadd.f32 %v6450, %v6642
    %v6707 = vadd.f32 %v6451, %v6643
    %v6708 = vadd.f32 %v6452, %v6644
    %v6709 = vadd.f32 %v6453, %v6645
    %v6710 = vadd.f32 %v6454, %v6646
    %v6711 = vadd.f32 %v6455, %v6647
    %v6712 = vadd.f32 %v6456, %v6648
    %v6713 = vadd.f32 %v6457, %v6649
    %v6714 = vadd.f32 %v6458, %v6650
    %v6715 = vadd.f32 %v6459, %v6651
    %v6716 = vadd.f32 %v6460, %v6652
    %v6717 = vadd.f32 %v6461, %v6653
    %v6718 = vadd.f32 %v6462, %v6654
    %v6719 = vadd.f32 %v6463, %v6655
    %v6720 = vadd.f32 %v6464, %v6656
    %v6721 = vadd.f32 %v6465, %v6657
    %v6722 = vadd.f32 %v6466, %v6658
    %v6723 = vadd.f32 %v6467, %v6659
    %v6724 = vadd.f32 %v6468, %v6660
    %v6725 = vadd.f32 %v6469, %v6661
    %v6726 = vadd.f32 %v6470, %v6662
    %v6727 = vmul.f32 %v6663, 0.7978846
    %v6728 = vmul.f32 %v6664, 0.7978846
    %v6729 = vmul.f32 %v6665, 0.7978846
    %v6730 = vmul.f32 %v6666, 0.7978846
    %v6731 = vmul.f32 %v6667, 0.7978846
    %v6732 = vmul.f32 %v6668, 0.7978846
    %v6733 = vmul.f32 %v6669, 0.7978846
    %v6734 = vmul.f32 %v6670, 0.7978846
    %v6735 = vmul.f32 %v6671, 0.7978846
    %v6736 = vmul.f32 %v6672, 0.7978846
    %v6737 = vmul.f32 %v6673, 0.7978846
    %v6738 = vmul.f32 %v6674, 0.7978846
    %v6739 = vmul.f32 %v6675, 0.7978846
    %v6740 = vmul.f32 %v6676, 0.7978846
    %v6741 = vmul.f32 %v6677, 0.7978846
    %v6742 = vmul.f32 %v6678, 0.7978846
    %v6743 = vmul.f32 %v6679, 0.7978846
    %v6744 = vmul.f32 %v6680, 0.7978846
    %v6745 = vmul.f32 %v6681, 0.7978846
    %v6746 = vmul.f32 %v6682, 0.7978846
    %v6747 = vmul.f32 %v6683, 0.7978846
    %v6748 = vmul.f32 %v6684, 0.7978846
    %v6749 = vmul.f32 %v6685, 0.7978846
    %v6750 = vmul.f32 %v6686, 0.7978846
    %v6751 = vmul.f32 %v6687, 0.7978846
    %v6752 = vmul.f32 %v6688, 0.7978846
    %v6753 = vmul.f32 %v6689, 0.7978846
    %v6754 = vmul.f32 %v6690, 0.7978846
    %v6755 = vmul.f32 %v6691, 0.7978846
    %v6756 = vmul.f32 %v6692, 0.7978846
    %v6757 = vmul.f32 %v6693, 0.7978846
    %v6758 = vmul.f32 %v6694, 0.7978846
    %v6759 = vmul.f32 %v6695, 0.7978846
    %v6760 = vmul.f32 %v6696, 0.7978846
    %v6761 = vmul.f32 %v6697, 0.7978846
    %v6762 = vmul.f32 %v6698, 0.7978846
    %v6763 = vmul.f32 %v6699, 0.7978846
    %v6764 = vmul.f32 %v6700, 0.7978846
    %v6765 = vmul.f32 %v6701, 0.7978846
    %v6766 = vmul.f32 %v6702, 0.7978846
    %v6767 = vmul.f32 %v6703, 0.7978846
    %v6768 = vmul.f32 %v6704, 0.7978846
    %v6769 = vmul.f32 %v6705, 0.7978846
    %v6770 = vmul.f32 %v6706, 0.7978846
    %v6771 = vmul.f32 %v6707, 0.7978846
    %v6772 = vmul.f32 %v6708, 0.7978846
    %v6773 = vmul.f32 %v6709, 0.7978846
    %v6774 = vmul.f32 %v6710, 0.7978846
    %v6775 = vmul.f32 %v6711, 0.7978846
    %v6776 = vmul.f32 %v6712, 0.7978846
    %v6777 = vmul.f32 %v6713, 0.7978846
    %v6778 = vmul.f32 %v6714, 0.7978846
    %v6779 = vmul.f32 %v6715, 0.7978846
    %v6780 = vmul.f32 %v6716, 0.7978846
    %v6781 = vmul.f32 %v6717, 0.7978846
    %v6782 = vmul.f32 %v6718, 0.7978846
    %v6783 = vmul.f32 %v6719, 0.7978846
    %v6784 = vmul.f32 %v6720, 0.7978846
    %v6785 = vmul.f32 %v6721, 0.7978846
    %v6786 = vmul.f32 %v6722, 0.7978846
    %v6787 = vmul.f32 %v6723, 0.7978846
    %v6788 = vmul.f32 %v6724, 0.7978846
    %v6789 = vmul.f32 %v6725, 0.7978846
    %v6790 = vmul.f32 %v6726, 0.7978846
    %v6791 = vmul.f32 %v6407, 0.5
    %v6792 = vmul.f32 %v6408, 0.5
    %v6793 = vmul.f32 %v6409, 0.5
    %v6794 = vmul.f32 %v6410, 0.5
    %v6795 = vmul.f32 %v6411, 0.5
    %v6796 = vmul.f32 %v6412, 0.5
    %v6797 = vmul.f32 %v6413, 0.5
    %v6798 = vmul.f32 %v6414, 0.5
    %v6799 = vmul.f32 %v6415, 0.5
    %v6800 = vmul.f32 %v6416, 0.5
    %v6801 = vmul.f32 %v6417, 0.5
    %v6802 = vmul.f32 %v6418, 0.5
    %v6803 = vmul.f32 %v6419, 0.5
    %v6804 = vmul.f32 %v6420, 0.5
    %v6805 = vmul.f32 %v6421, 0.5
    %v6806 = vmul.f32 %v6422, 0.5
    %v6807 = vmul.f32 %v6423, 0.5
    %v6808 = vmul.f32 %v6424, 0.5
    %v6809 = vmul.f32 %v6425, 0.5
    %v6810 = vmul.f32 %v6426, 0.5
    %v6811 = vmul.f32 %v6427, 0.5
    %v6812 = vmul.f32 %v6428, 0.5
    %v6813 = vmul.f32 %v6429, 0.5
    %v6814 = vmul.f32 %v6430, 0.5
    %v6815 = vmul.f32 %v6431, 0.5
    %v6816 = vmul.f32 %v6432, 0.5
    %v6817 = vmul.f32 %v6433, 0.5
    %v6818 = vmul.f32 %v6434, 0.5
    %v6819 = vmul.f32 %v6435, 0.5
    %v6820 = vmul.f32 %v6436, 0.5
    %v6821 = vmul.f32 %v6437, 0.5
    %v6822 = vmul.f32 %v6438, 0.5
    %v6823 = vmul.f32 %v6439, 0.5
    %v6824 = vmul.f32 %v6440, 0.5
    %v6825 = vmul.f32 %v6441, 0.5
    %v6826 = vmul.f32 %v6442, 0.5
    %v6827 = vmul.f32 %v6443, 0.5
    %v6828 = vmul.f32 %v6444, 0.5
    %v6829 = vmul.f32 %v6445, 0.5
    %v6830 = vmul.f32 %v6446, 0.5
    %v6831 = vmul.f32 %v6447, 0.5
    %v6832 = vmul.f32 %v6448, 0.5
    %v6833 = vmul.f32 %v6449, 0.5
    %v6834 = vmul.f32 %v6450, 0.5
    %v6835 = vmul.f32 %v6451, 0.5
    %v6836 = vmul.f32 %v6452, 0.5
    %v6837 = vmul.f32 %v6453, 0.5
    %v6838 = vmul.f32 %v6454, 0.5
    %v6839 = vmul.f32 %v6455, 0.5
    %v6840 = vmul.f32 %v6456, 0.5
    %v6841 = vmul.f32 %v6457, 0.5
    %v6842 = vmul.f32 %v6458, 0.5
    %v6843 = vmul.f32 %v6459, 0.5
    %v6844 = vmul.f32 %v6460, 0.5
    %v6845 = vmul.f32 %v6461, 0.5
    %v6846 = vmul.f32 %v6462, 0.5
    %v6847 = vmul.f32 %v6463, 0.5
    %v6848 = vmul.f32 %v6464, 0.5
    %v6849 = vmul.f32 %v6465, 0.5
    %v6850 = vmul.f32 %v6466, 0.5
    %v6851 = vmul.f32 %v6467, 0.5
    %v6852 = vmul.f32 %v6468, 0.5
    %v6853 = vmul.f32 %v6469, 0.5
    %v6854 = vmul.f32 %v6470, 0.5
    %v6855 = vtanh.pop %v6727
    %v6856 = vtanh.pop %v6728
    %v6857 = vtanh.pop %v6729
    %v6858 = vtanh.pop %v6730
    %v6859 = vtanh.pop %v6731
    %v6860 = vtanh.pop %v6732
    %v6861 = vtanh.pop %v6733
    %v6862 = vtanh.pop %v6734
    %v6863 = vtanh.pop %v6735
    %v6864 = vtanh.pop %v6736
    %v6865 = vtanh.pop %v6737
    %v6866 = vtanh.pop %v6738
    %v6867 = vtanh.pop %v6739
    %v6868 = vtanh.pop %v6740
    %v6869 = vtanh.pop %v6741
    %v6870 = vtanh.pop %v6742
    %v6871 = vtanh.pop %v6743
    %v6872 = vtanh.pop %v6744
    %v6873 = vtanh.pop %v6745
    %v6874 = vtanh.pop %v6746
    %v6875 = vtanh.pop %v6747
    %v6876 = vtanh.pop %v6748
    %v6877 = vtanh.pop %v6749
    %v6878 = vtanh.pop %v6750
    %v6879 = vtanh.pop %v6751
    %v6880 = vtanh.pop %v6752
    %v6881 = vtanh.pop %v6753
    %v6882 = vtanh.pop %v6754
    %v6883 = vtanh.pop %v6755
    %v6884 = vtanh.pop %v6756
    %v6885 = vtanh.pop %v6757
    %v6886 = vtanh.pop %v6758
    %v6887 = vtanh.pop %v6759
    %v6888 = vtanh.pop %v6760
    %v6889 = vtanh.pop %v6761
    %v6890 = vtanh.pop %v6762
    %v6891 = vtanh.pop %v6763
    %v6892 = vtanh.pop %v6764
    %v6893 = vtanh.pop %v6765
    %v6894 = vtanh.pop %v6766
    %v6895 = vtanh.pop %v6767
    %v6896 = vtanh.pop %v6768
    %v6897 = vtanh.pop %v6769
    %v6898 = vtanh.pop %v6770
    %v6899 = vtanh.pop %v6771
    %v6900 = vtanh.pop %v6772
    %v6901 = vtanh.pop %v6773
    %v6902 = vtanh.pop %v6774
    %v6903 = vtanh.pop %v6775
    %v6904 = vtanh.pop %v6776
    %v6905 = vtanh.pop %v6777
    %v6906 = vtanh.pop %v6778
    %v6907 = vtanh.pop %v6779
    %v6908 = vtanh.pop %v6780
    %v6909 = vtanh.pop %v6781
    %v6910 = vtanh.pop %v6782
    %v6911 = vtanh.pop %v6783
    %v6912 = vtanh.pop %v6784
    %v6913 = vtanh.pop %v6785
    %v6914 = vtanh.pop %v6786
    %v6915 = vtanh.pop %v6787
    %v6916 = vtanh.pop %v6788
    %v6917 = vtanh.pop %v6789
    %v6918 = vtanh.pop %v6790
    %v6919 = vadd.f32 %v6855, 1.0
    %v6920 = vadd.f32 %v6856, 1.0
    %v6921 = vadd.f32 %v6857, 1.0
    %v6922 = vadd.f32 %v6858, 1.0
    %v6923 = vadd.f32 %v6859, 1.0
    %v6924 = vadd.f32 %v6860, 1.0
    %v6925 = vadd.f32 %v6861, 1.0
    %v6926 = vadd.f32 %v6862, 1.0
    %v6927 = vadd.f32 %v6863, 1.0
    %v6928 = vadd.f32 %v6864, 1.0
    %v6929 = vadd.f32 %v6865, 1.0
    %v6930 = vadd.f32 %v6866, 1.0
    %v6931 = vadd.f32 %v6867, 1.0
    %v6932 = vadd.f32 %v6868, 1.0
    %v6933 = vadd.f32 %v6869, 1.0
    %v6934 = vadd.f32 %v6870, 1.0
    %v6935 = vadd.f32 %v6871, 1.0
    %v6936 = vadd.f32 %v6872, 1.0
    %v6937 = vadd.f32 %v6873, 1.0
    %v6938 = vadd.f32 %v6874, 1.0
    %v6939 = vadd.f32 %v6875, 1.0
    %v6940 = vadd.f32 %v6876, 1.0
    %v6941 = vadd.f32 %v6877, 1.0
    %v6942 = vadd.f32 %v6878, 1.0
    %v6943 = vadd.f32 %v6879, 1.0
    %v6944 = vadd.f32 %v6880, 1.0
    %v6945 = vadd.f32 %v6881, 1.0
    %v6946 = vadd.f32 %v6882, 1.0
    %v6947 = vadd.f32 %v6883, 1.0
    %v6948 = vadd.f32 %v6884, 1.0
    %v6949 = vadd.f32 %v6885, 1.0
    %v6950 = vadd.f32 %v6886, 1.0
    %v6951 = vadd.f32 %v6887, 1.0
    %v6952 = vadd.f32 %v6888, 1.0
    %v6953 = vadd.f32 %v6889, 1.0
    %v6954 = vadd.f32 %v6890, 1.0
    %v6955 = vadd.f32 %v6891, 1.0
    %v6956 = vadd.f32 %v6892, 1.0
    %v6957 = vadd.f32 %v6893, 1.0
    %v6958 = vadd.f32 %v6894, 1.0
    %v6959 = vadd.f32 %v6895, 1.0
    %v6960 = vadd.f32 %v6896, 1.0
    %v6961 = vadd.f32 %v6897, 1.0
    %v6962 = vadd.f32 %v6898, 1.0
    %v6963 = vadd.f32 %v6899, 1.0
    %v6964 = vadd.f32 %v6900, 1.0
    %v6965 = vadd.f32 %v6901, 1.0
    %v6966 = vadd.f32 %v6902, 1.0
    %v6967 = vadd.f32 %v6903, 1.0
    %v6968 = vadd.f32 %v6904, 1.0
    %v6969 = vadd.f32 %v6905, 1.0
    %v6970 = vadd.f32 %v6906, 1.0
    %v6971 = vadd.f32 %v6907, 1.0
    %v6972 = vadd.f32 %v6908, 1.0
    %v6973 = vadd.f32 %v6909, 1.0
    %v6974 = vadd.f32 %v6910, 1.0
    %v6975 = vadd.f32 %v6911, 1.0
    %v6976 = vadd.f32 %v6912, 1.0
    %v6977 = vadd.f32 %v6913, 1.0
    %v6978 = vadd.f32 %v6914, 1.0
    %v6979 = vadd.f32 %v6915, 1.0
    %v6980 = vadd.f32 %v6916, 1.0
    %v6981 = vadd.f32 %v6917, 1.0
    %v6982 = vadd.f32 %v6918, 1.0
    %v6983 = vmul.f32 %v6791, %v6919
    %v6984 = vmul.f32 %v6792, %v6920
    %v6985 = vmul.f32 %v6793, %v6921
    %v6986 = vmul.f32 %v6794, %v6922
    %v6987 = vmul.f32 %v6795, %v6923
    %v6988 = vmul.f32 %v6796, %v6924
    %v6989 = vmul.f32 %v6797, %v6925
    %v6990 = vmul.f32 %v6798, %v6926
    %v6991 = vmul.f32 %v6799, %v6927
    %v6992 = vmul.f32 %v6800, %v6928
    %v6993 = vmul.f32 %v6801, %v6929
    %v6994 = vmul.f32 %v6802, %v6930
    %v6995 = vmul.f32 %v6803, %v6931
    %v6996 = vmul.f32 %v6804, %v6932
    %v6997 = vmul.f32 %v6805, %v6933
    %v6998 = vmul.f32 %v6806, %v6934
    %v6999 = vmul.f32 %v6807, %v6935
    %v7000 = vmul.f32 %v6808, %v6936
    %v7001 = vmul.f32 %v6809, %v6937
    %v7002 = vmul.f32 %v6810, %v6938
    %v7003 = vmul.f32 %v6811, %v6939
    %v7004 = vmul.f32 %v6812, %v6940
    %v7005 = vmul.f32 %v6813, %v6941
    %v7006 = vmul.f32 %v6814, %v6942
    %v7007 = vmul.f32 %v6815, %v6943
    %v7008 = vmul.f32 %v6816, %v6944
    %v7009 = vmul.f32 %v6817, %v6945
    %v7010 = vmul.f32 %v6818, %v6946
    %v7011 = vmul.f32 %v6819, %v6947
    %v7012 = vmul.f32 %v6820, %v6948
    %v7013 = vmul.f32 %v6821, %v6949
    %v7014 = vmul.f32 %v6822, %v6950
    %v7015 = vmul.f32 %v6823, %v6951
    %v7016 = vmul.f32 %v6824, %v6952
    %v7017 = vmul.f32 %v6825, %v6953
    %v7018 = vmul.f32 %v6826, %v6954
    %v7019 = vmul.f32 %v6827, %v6955
    %v7020 = vmul.f32 %v6828, %v6956
    %v7021 = vmul.f32 %v6829, %v6957
    %v7022 = vmul.f32 %v6830, %v6958
    %v7023 = vmul.f32 %v6831, %v6959
    %v7024 = vmul.f32 %v6832, %v6960
    %v7025 = vmul.f32 %v6833, %v6961
    %v7026 = vmul.f32 %v6834, %v6962
    %v7027 = vmul.f32 %v6835, %v6963
    %v7028 = vmul.f32 %v6836, %v6964
    %v7029 = vmul.f32 %v6837, %v6965
    %v7030 = vmul.f32 %v6838, %v6966
    %v7031 = vmul.f32 %v6839, %v6967
    %v7032 = vmul.f32 %v6840, %v6968
    %v7033 = vmul.f32 %v6841, %v6969
    %v7034 = vmul.f32 %v6842, %v6970
    %v7035 = vmul.f32 %v6843, %v6971
    %v7036 = vmul.f32 %v6844, %v6972
    %v7037 = vmul.f32 %v6845, %v6973
    %v7038 = vmul.f32 %v6846, %v6974
    %v7039 = vmul.f32 %v6847, %v6975
    %v7040 = vmul.f32 %v6848, %v6976
    %v7041 = vmul.f32 %v6849, %v6977
    %v7042 = vmul.f32 %v6850, %v6978
    %v7043 = vmul.f32 %v6851, %v6979
    %v7044 = vmul.f32 %v6852, %v6980
    %v7045 = vmul.f32 %v6853, %v6981
    %v7046 = vmul.f32 %v6854, %v6982
    %v7047 = vld [vmem:[%s3] sm:$0xf]
    %v7048 = vld [vmem:[%s3 + $0x4] sm:$0xf]
    %v7049 = vld [vmem:[%s3 + $0x8] sm:$0xf]
    %v7050 = vld [vmem:[%s3 + $0xc] sm:$0xf]
    %v7051 = vpack.c.bf16 %v6987, %v6983
    %v7052 = vpack.c.bf16 %v6988, %v6984
    %v7053 = vpack.c.bf16 %v6989, %v6985
    %v7054 = vpack.c.bf16 %v6990, %v6986
    %v7055 = vpack.c.bf16 %v6995, %v6991
    %v7056 = vpack.c.bf16 %v6996, %v6992
    %v7057 = vpack.c.bf16 %v6997, %v6993
    %v7058 = vpack.c.bf16 %v6998, %v6994
    %v7059 = vpack.c.bf16 %v7003, %v6999
    %v7060 = vpack.c.bf16 %v7004, %v7000
    %v7061 = vpack.c.bf16 %v7005, %v7001
    %v7062 = vpack.c.bf16 %v7006, %v7002
    %v7063 = vpack.c.bf16 %v7011, %v7007
    %v7064 = vpack.c.bf16 %v7012, %v7008
    %v7065 = vpack.c.bf16 %v7013, %v7009
    %v7066 = vpack.c.bf16 %v7014, %v7010
    %v7067 = vpack.c.bf16 %v7019, %v7015
    %v7068 = vpack.c.bf16 %v7020, %v7016
    %v7069 = vpack.c.bf16 %v7021, %v7017
    %v7070 = vpack.c.bf16 %v7022, %v7018
    %v7071 = vpack.c.bf16 %v7027, %v7023
    %v7072 = vpack.c.bf16 %v7028, %v7024
    %v7073 = vpack.c.bf16 %v7029, %v7025
    %v7074 = vpack.c.bf16 %v7030, %v7026
    %v7075 = vpack.c.bf16 %v7035, %v7031
    %v7076 = vpack.c.bf16 %v7036, %v7032
    %v7077 = vpack.c.bf16 %v7037, %v7033
    %v7078 = vpack.c.bf16 %v7038, %v7034
    %v7079 = vpack.c.bf16 %v7043, %v7039
    %v7080 = vpack.c.bf16 %v7044, %v7040
    %v7081 = vpack.c.bf16 %v7045, %v7041
    %v7082 = vpack.c.bf16 %v7046, %v7042
    %v7087 = vunpack.c.l.b16 %v7047
    %v7088 = vunpack.c.l.b16 %v7048
    %v7089 = vunpack.c.l.b16 %v7049
    %v7090 = vunpack.c.l.b16 %v7050
    %v7091 = vpack.c.b16 %v7088, %v7087
    %v7092 = vpack.c.b16 %v7090, %v7089
    %7095 = vmatprep.subr.bf16.mxu0 %v7052
    %7096 = vmatpush1.bf16.msra.mxu0 %v7051
    %7097 = vmatprep.subr.bf16.mxu0 %v7056
    %7098 = vmatpush1.bf16.msra.mxu0 %v7055
    %7099 = vmatprep.subr.bf16.mxu0 %v7060
    %7100 = vmatpush1.bf16.msra.mxu0 %v7059
    %7101 = vmatprep.subr.bf16.mxu0 %v7064
    %7102 = vmatpush1.bf16.msra.mxu0 %v7063
    %7103 = vmatprep.subr.bf16.mxu0 %v7068
    %7104 = vmatpush1.bf16.msra.mxu0 %v7067
    %7105 = vmatprep.subr.bf16.mxu0 %v7072
    %7106 = vmatpush1.bf16.msra.mxu0 %v7071
    %7107 = vmatprep.subr.bf16.mxu0 %v7076
    %7108 = vmatpush1.bf16.msra.mxu0 %v7075
    %7109 = vmatprep.subr.bf16.mxu0 %v7080
    %7110 = vmatpush1.bf16.msra.mxu0 %v7079
    %7111 = vmatprep.subr.bf16.mxu0 0
    %7112 = vmatpush1.bf16.msra.mxu0 0
    %7113 = vmatprep.subr.bf16.mxu0 0
    %7114 = vmatpush1.bf16.msra.mxu0 0
    %7115 = vmatprep.subr.bf16.mxu0 0
    %7116 = vmatpush1.bf16.msra.mxu0 0
    %7117 = vmatprep.subr.bf16.mxu0 0
    %7118 = vmatpush1.bf16.msra.mxu0 0
    %7119 = vmatprep.subr.bf16.mxu0 0
    %7120 = vmatpush1.bf16.msra.mxu0 0
    %7121 = vmatprep.subr.bf16.mxu0 0
    %7122 = vmatpush1.bf16.msra.mxu0 0
    %7123 = vmatprep.subr.bf16.mxu0 0
    %7124 = vmatpush1.bf16.msra.mxu0 0
    %7125 = vmatprep.subr.bf16.mxu0 0
    %7126 = vmatpush1.bf16.msra.mxu0 0
    %7127 = vmatprep.mubr.bf16.mxu0 0
    %7128 = vmatmul.mubr.bf16.gmra.mrb[0].mxu0 %v7091
    %v7129 = vpop.f32.mrb[0].mxu0
    %v7130 = vadd.f32 0.0, %v7129
    %v7131 = vpop.f32.mrb[0].mxu0
    %v7132 = vadd.f32 0.0, %v7131
    %v7133 = vpop.f32.mrb[0].mxu0
    %v7134 = vadd.f32 0.0, %v7133
    %v7135 = vpop.f32.mrb[0].mxu0
    %v7136 = vadd.f32 0.0, %v7135
    %7137 = vmatprep.mubr.bf16.mxu0 0
    %7138 = vmatmul.mubr.bf16.gmra.mrb[0].mxu0 %v7092
    %v7139 = vpop.f32.mrb[0].mxu0
    %v7140 = vadd.f32 0.0, %v7139
    %v7141 = vpop.f32.mrb[0].mxu0
    %v7142 = vadd.f32 0.0, %v7141
    %v7143 = vpop.f32.mrb[0].mxu0
    %v7144 = vadd.f32 0.0, %v7143
    %v7145 = vpop.f32.mrb[0].mxu0
    %v7146 = vadd.f32 0.0, %v7145
    %7147 = vdwg.mxu0
    %7148 = vmatprep.subr.bf16.mxu0 %v7054
    %7149 = vmatpush1.bf16.msra.mxu0 %v7053
    %7150 = vmatprep.subr.bf16.mxu0 %v7058
    %7151 = vmatpush1.bf16.msra.mxu0 %v7057
    %7152 = vmatprep.subr.bf16.mxu0 %v7062
    %7153 = vmatpush1.bf16.msra.mxu0 %v7061
    %7154 = vmatprep.subr.bf16.mxu0 %v7066
    %7155 = vmatpush1.bf16.msra.mxu0 %v7065
    %7156 = vmatprep.subr.bf16.mxu0 %v7070
    %7157 = vmatpush1.bf16.msra.mxu0 %v7069
    %7158 = vmatprep.subr.bf16.mxu0 %v7074
    %7159 = vmatpush1.bf16.msra.mxu0 %v7073
    %7160 = vmatprep.subr.bf16.mxu0 %v7078
    %7161 = vmatpush1.bf16.msra.mxu0 %v7077
    %7162 = vmatprep.subr.bf16.mxu0 %v7082
    %7163 = vmatpush1.bf16.msra.mxu0 %v7081
    %7164 = vmatprep.subr.bf16.mxu0 0
    %7165 = vmatpush1.bf16.msra.mxu0 0
    %7166 = vmatprep.subr.bf16.mxu0 0
    %7167 = vmatpush1.bf16.msra.mxu0 0
    %7168 = vmatprep.subr.bf16.mxu0 0
    %7169 = vmatpush1.bf16.msra.mxu0 0
    %7170 = vmatprep.subr.bf16.mxu0 0
    %7171 = vmatpush1.bf16.msra.mxu0 0
    %7172 = vmatprep.subr.bf16.mxu0 0
    %7173 = vmatpush1.bf16.msra.mxu0 0
    %7174 = vmatprep.subr.bf16.mxu0 0
    %7175 = vmatpush1.bf16.msra.mxu0 0
    %7176 = vmatprep.subr.bf16.mxu0 0
    %7177 = vmatpush1.bf16.msra.mxu0 0
    %7178 = vmatprep.subr.bf16.mxu0 0
    %7179 = vmatpush1.bf16.msra.mxu0 0
    %7180 = vmatprep.mubr.bf16.mxu0 0
    %7181 = vmatmul.mubr.bf16.gmra.mrb[0].mxu0 %v7091
    %v7182 = vpop.f32.mrb[0].mxu0
    %v7183 = vadd.f32 0.0, %v7182
    %v7184 = vpop.f32.mrb[0].mxu0
    %v7185 = vadd.f32 0.0, %v7184
    %v7186 = vpop.f32.mrb[0].mxu0
    %v7187 = vadd.f32 0.0, %v7186
    %v7188 = vpop.f32.mrb[0].mxu0
    %v7189 = vadd.f32 0.0, %v7188
    %7190 = vmatprep.mubr.bf16.mxu0 0
    %7191 = vmatmul.mubr.bf16.gmra.mrb[0].mxu0 %v7092
    %v7192 = vpop.f32.mrb[0].mxu0
    %v7193 = vadd.f32 0.0, %v7192
    %v7194 = vpop.f32.mrb[0].mxu0
    %v7195 = vadd.f32 0.0, %v7194
    %v7196 = vpop.f32.mrb[0].mxu0
    %v7197 = vadd.f32 0.0, %v7196
    %v7198 = vpop.f32.mrb[0].mxu0
    %v7199 = vadd.f32 0.0, %v7198
    %7200 = vdwg.mxu0
    %v7201 = vld [vmem:[%s6] sm:$0xff]
    %v7202 = vld [vmem:[%s6 + $0x8] sm:$0xff]
    %v7203 = vld [vmem:[%s6 + $0x10] sm:$0xff]
    %v7204 = vld [vmem:[%s6 + $0x18] sm:$0xff]
    %v7205 = vld [vmem:[%s7] sm:$0xff]
    %v7206 = vld [vmem:[%s7 + $0x8] sm:$0xff]
    %v7207 = vld [vmem:[%s7 + $0x10] sm:$0xff]
    %v7208 = vld [vmem:[%s7 + $0x18] sm:$0xff]
    %v7209 = vadd.f32 %v7130, %v7132
    %v7210 = vadd.f32 %v7209, %v7183
    %v7211 = vadd.f32 %v7210, %v7185
    %7212 = vadd.xlane.f32.xlu0 %v7211
    %v7213 = vpop.xlane.xlu0 %7212
    %v7214 = vadd.f32 %v7134, %v7136
    %v7215 = vadd.f32 %v7214, %v7187
    %v7216 = vadd.f32 %v7215, %v7189
    %7217 = vadd.xlane.f32.xlu0 %v7216
    %v7218 = vpop.xlane.xlu0 %7217
    %v7219 = vadd.f32 %v7140, %v7142
    %v7220 = vadd.f32 %v7219, %v7193
    %v7221 = vadd.f32 %v7220, %v7195
    %7222 = vadd.xlane.f32.xlu0 %v7221
    %v7223 = vpop.xlane.xlu0 %7222
    %v7224 = vadd.f32 %v7144, %v7146
    %v7225 = vadd.f32 %v7224, %v7197
    %v7226 = vadd.f32 %v7225, %v7199
    %7227 = vadd.xlane.f32.xlu0 %v7226
    %v7228 = vpop.xlane.xlu0 %7227
    %v7229 = vmul.f32 %v7130, %v7130
    %v7230 = vmul.f32 %v7132, %v7132
    %v7231 = vmul.f32 %v7183, %v7183
    %v7232 = vmul.f32 %v7185, %v7185
    %v7233 = vmul.f32 %v7134, %v7134
    %v7234 = vmul.f32 %v7136, %v7136
    %v7235 = vmul.f32 %v7187, %v7187
    %v7236 = vmul.f32 %v7189, %v7189
    %v7237 = vmul.f32 %v7140, %v7140
    %v7238 = vmul.f32 %v7142, %v7142
    %v7239 = vmul.f32 %v7193, %v7193
    %v7240 = vmul.f32 %v7195, %v7195
    %v7241 = vmul.f32 %v7144, %v7144
    %v7242 = vmul.f32 %v7146, %v7146
    %v7243 = vmul.f32 %v7197, %v7197
    %v7244 = vmul.f32 %v7199, %v7199
    %v7245 = vadd.f32 %v7229, %v7230
    %v7246 = vadd.f32 %v7245, %v7231
    %v7247 = vadd.f32 %v7246, %v7232
    %7248 = vadd.xlane.f32.xlu0 %v7247
    %v7249 = vpop.xlane.xlu0 %7248
    %v7250 = vadd.f32 %v7233, %v7234
    %v7251 = vadd.f32 %v7250, %v7235
    %v7252 = vadd.f32 %v7251, %v7236
    %7253 = vadd.xlane.f32.xlu0 %v7252
    %v7254 = vpop.xlane.xlu0 %7253
    %v7255 = vadd.f32 %v7237, %v7238
    %v7256 = vadd.f32 %v7255, %v7239
    %v7257 = vadd.f32 %v7256, %v7240
    %7258 = vadd.xlane.f32.xlu0 %v7257
    %v7259 = vpop.xlane.xlu0 %7258
    %v7260 = vadd.f32 %v7241, %v7242
    %v7261 = vadd.f32 %v7260, %v7243
    %v7262 = vadd.f32 %v7261, %v7244
    %7263 = vadd.xlane.f32.xlu0 %v7262
    %v7264 = vpop.xlane.xlu0 %7263
    %v7265 = vmul.f32 %v7213, 0.001953125
    %v7266 = vmul.f32 %v7218, 0.001953125
    %v7267 = vmul.f32 %v7223, 0.001953125
    %v7268 = vmul.f32 %v7228, 0.001953125
    %v7269 = vmul.f32 %v7249, 0.001953125
    %v7270 = vmul.f32 %v7254, 0.001953125
    %v7271 = vmul.f32 %v7259, 0.001953125
    %v7272 = vmul.f32 %v7264, 0.001953125
    %v7273 = vmul.f32 %v7265, %v7265
    %v7274 = vmul.f32 %v7266, %v7266
    %v7275 = vmul.f32 %v7267, %v7267
    %v7276 = vmul.f32 %v7268, %v7268
    %v7277 = vsub.f32 %v7269, %v7273
    %v7278 = vsub.f32 %v7270, %v7274
    %v7279 = vsub.f32 %v7271, %v7275
    %v7280 = vsub.f32 %v7272, %v7276
    %v7281 = vadd.f32 %v7277, 1e-05
    %v7282 = vadd.f32 %v7278, 1e-05
    %v7283 = vadd.f32 %v7279, 1e-05
    %v7284 = vadd.f32 %v7280, 1e-05
    %v7285 = vrsqrt.pop %v7281
    %v7286 = vrsqrt.pop %v7282
    %v7287 = vrsqrt.pop %v7283
    %v7288 = vrsqrt.pop %v7284
    %v7289 = vmul.f32 %v7201, %v7285
    %v7290 = vmul.f32 %v7202, %v7286
    %v7291 = vmul.f32 %v7203, %v7287
    %v7292 = vmul.f32 %v7204, %v7288
    %v7293 = vmul.f32 %v7265, %v7289
    %v7294 = vmul.f32 %v7266, %v7290
    %v7295 = vmul.f32 %v7267, %v7291
    %v7296 = vmul.f32 %v7268, %v7292
    %v7297 = vsub.f32 %v7205, %v7293
    %v7298 = vsub.f32 %v7206, %v7294
    %v7299 = vsub.f32 %v7207, %v7295
    %v7300 = vsub.f32 %v7208, %v7296
    %7302 = vset.pattern.permute.xlu0 0
    %7303 = vperm.xlu0 %7302, %v7289
    %v7304 = vpop.permute.xlu0 %7303
    %7307 = vset.pattern.permute.xlu0 0
    %7308 = vperm.xlu0 %7307, %v7290
    %v7309 = vpop.permute.xlu0 %7308
    %7312 = vset.pattern.permute.xlu0 0
    %7313 = vperm.xlu0 %7312, %v7291
    %v7314 = vpop.permute.xlu0 %7313
    %7317 = vset.pattern.permute.xlu0 0
    %7318 = vperm.xlu0 %7317, %v7292
    %v7319 = vpop.permute.xlu0 %7318
    %v7321 = vmul.f32 %v7130, %v7304
    %v7322 = vmul.f32 %v7132, %v7304
    %v7323 = vmul.f32 %v7183, %v7304
    %v7324 = vmul.f32 %v7185, %v7304
    %v7325 = vmul.f32 %v7134, %v7309
    %v7326 = vmul.f32 %v7136, %v7309
    %v7327 = vmul.f32 %v7187, %v7309
    %v7328 = vmul.f32 %v7189, %v7309
    %v7329 = vmul.f32 %v7140, %v7314
    %v7330 = vmul.f32 %v7142, %v7314
    %v7331 = vmul.f32 %v7193, %v7314
    %v7332 = vmul.f32 %v7195, %v7314
    %v7333 = vmul.f32 %v7144, %v7319
    %v7334 = vmul.f32 %v7146, %v7319
    %v7335 = vmul.f32 %v7197, %v7319
    %v7336 = vmul.f32 %v7199, %v7319
    %7338 = vset.pattern.permute.xlu0 0
    %7339 = vperm.xlu0 %7338, %v7297
    %v7340 = vpop.permute.xlu0 %7339
    %7343 = vset.pattern.permute.xlu0 0
    %7344 = vperm.xlu0 %7343, %v7298
    %v7345 = vpop.permute.xlu0 %7344
    %7348 = vset.pattern.permute.xlu0 0
    %7349 = vperm.xlu0 %7348, %v7299
    %v7350 = vpop.permute.xlu0 %7349
    %7353 = vset.pattern.permute.xlu0 0
    %7354 = vperm.xlu0 %7353, %v7300
    %v7355 = vpop.permute.xlu0 %7354
    %v7357 = vadd.f32 %v7321, %v7340
    %v7358 = vadd.f32 %v7322, %v7340
    %v7359 = vadd.f32 %v7323, %v7340
    %v7360 = vadd.f32 %v7324, %v7340
    %v7361 = vadd.f32 %v7325, %v7345
    %v7362 = vadd.f32 %v7326, %v7345
    %v7363 = vadd.f32 %v7327, %v7345
    %v7364 = vadd.f32 %v7328, %v7345
    %v7365 = vadd.f32 %v7329, %v7350
    %v7366 = vadd.f32 %v7330, %v7350
    %v7367 = vadd.f32 %v7331, %v7350
    %v7368 = vadd.f32 %v7332, %v7350
    %v7369 = vadd.f32 %v7333, %v7355
    %v7370 = vadd.f32 %v7334, %v7355
    %v7371 = vadd.f32 %v7335, %v7355
    %v7372 = vadd.f32 %v7336, %v7355
    %v7373 = vmul.f32 %v7357, %v7357
    %v7374 = vmul.f32 %v7358, %v7358
    %v7375 = vmul.f32 %v7359, %v7359
    %v7376 = vmul.f32 %v7360, %v7360
    %v7377 = vmul.f32 %v7361, %v7361
    %v7378 = vmul.f32 %v7362, %v7362
    %v7379 = vmul.f32 %v7363, %v7363
    %v7380 = vmul.f32 %v7364, %v7364
    %v7381 = vmul.f32 %v7365, %v7365
    %v7382 = vmul.f32 %v7366, %v7366
    %v7383 = vmul.f32 %v7367, %v7367
    %v7384 = vmul.f32 %v7368, %v7368
    %v7385 = vmul.f32 %v7369, %v7369
    %v7386 = vmul.f32 %v7370, %v7370
    %v7387 = vmul.f32 %v7371, %v7371
    %v7388 = vmul.f32 %v7372, %v7372
    %v7389 = vmul.f32 %v7373, %v7357
    %v7390 = vmul.f32 %v7374, %v7358
    %v7391 = vmul.f32 %v7375, %v7359
    %v7392 = vmul.f32 %v7376, %v7360
    %v7393 = vmul.f32 %v7377, %v7361
    %v7394 = vmul.f32 %v7378, %v7362
    %v7395 = vmul.f32 %v7379, %v7363
    %v7396 = vmul.f32 %v7380, %v7364
    %v7397 = vmul.f32 %v7381, %v7365
    %v7398 = vmul.f32 %v7382, %v7366
    %v7399 = vmul.f32 %v7383, %v7367
    %v7400 = vmul.f32 %v7384, %v7368
    %v7401 = vmul.f32 %v7385, %v7369
    %v7402 = vmul.f32 %v7386, %v7370
    %v7403 = vmul.f32 %v7387, %v7371
    %v7404 = vmul.f32 %v7388, %v7372
    %v7405 = vmul.f32 %v7389, 0.044715
    %v7406 = vmul.f32 %v7390, 0.044715
    %v7407 = vmul.f32 %v7391, 0.044715
    %v7408 = vmul.f32 %v7392, 0.044715
    %v7409 = vmul.f32 %v7393, 0.044715
    %v7410 = vmul.f32 %v7394, 0.044715
    %v7411 = vmul.f32 %v7395, 0.044715
    %v7412 = vmul.f32 %v7396, 0.044715
    %v7413 = vmul.f32 %v7397, 0.044715
    %v7414 = vmul.f32 %v7398, 0.044715
    %v7415 = vmul.f32 %v7399, 0.044715
    %v7416 = vmul.f32 %v7400, 0.044715
    %v7417 = vmul.f32 %v7401, 0.044715
    %v7418 = vmul.f32 %v7402, 0.044715
    %v7419 = vmul.f32 %v7403, 0.044715
    %v7420 = vmul.f32 %v7404, 0.044715
    %v7421 = vadd.f32 %v7357, %v7405
    %v7422 = vadd.f32 %v7358, %v7406
    %v7423 = vadd.f32 %v7359, %v7407
    %v7424 = vadd.f32 %v7360, %v7408
    %v7425 = vadd.f32 %v7361, %v7409
    %v7426 = vadd.f32 %v7362, %v7410
    %v7427 = vadd.f32 %v7363, %v7411
    %v7428 = vadd.f32 %v7364, %v7412
    %v7429 = vadd.f32 %v7365, %v7413
    %v7430 = vadd.f32 %v7366, %v7414
    %v7431 = vadd.f32 %v7367, %v7415
    %v7432 = vadd.f32 %v7368, %v7416
    %v7433 = vadd.f32 %v7369, %v7417
    %v7434 = vadd.f32 %v7370, %v7418
    %v7435 = vadd.f32 %v7371, %v7419
    %v7436 = vadd.f32 %v7372, %v7420
    %v7437 = vmul.f32 %v7421, 0.7978846
    %v7438 = vmul.f32 %v7422, 0.7978846
    %v7439 = vmul.f32 %v7423, 0.7978846
    %v7440 = vmul.f32 %v7424, 0.7978846
    %v7441 = vmul.f32 %v7425, 0.7978846
    %v7442 = vmul.f32 %v7426, 0.7978846
    %v7443 = vmul.f32 %v7427, 0.7978846
    %v7444 = vmul.f32 %v7428, 0.7978846
    %v7445 = vmul.f32 %v7429, 0.7978846
    %v7446 = vmul.f32 %v7430, 0.7978846
    %v7447 = vmul.f32 %v7431, 0.7978846
    %v7448 = vmul.f32 %v7432, 0.7978846
    %v7449 = vmul.f32 %v7433, 0.7978846
    %v7450 = vmul.f32 %v7434, 0.7978846
    %v7451 = vmul.f32 %v7435, 0.7978846
    %v7452 = vmul.f32 %v7436, 0.7978846
    %v7453 = vmul.f32 %v7357, 0.5
    %v7454 = vmul.f32 %v7358, 0.5
    %v7455 = vmul.f32 %v7359, 0.5
    %v7456 = vmul.f32 %v7360, 0.5
    %v7457 = vmul.f32 %v7361, 0.5
    %v7458 = vmul.f32 %v7362, 0.5
    %v7459 = vmul.f32 %v7363, 0.5
    %v7460 = vmul.f32 %v7364, 0.5
    %v7461 = vmul.f32 %v7365, 0.5
    %v7462 = vmul.f32 %v7366, 0.5
    %v7463 = vmul.f32 %v7367, 0.5
    %v7464 = vmul.f32 %v7368, 0.5
    %v7465 = vmul.f32 %v7369, 0.5
    %v7466 = vmul.f32 %v7370, 0.5
    %v7467 = vmul.f32 %v7371, 0.5
    %v7468 = vmul.f32 %v7372, 0.5
    %v7469 = vtanh.pop %v7437
    %v7470 = vtanh.pop %v7438
    %v7471 = vtanh.pop %v7439
    %v7472 = vtanh.pop %v7440
    %v7473 = vtanh.pop %v7441
    %v7474 = vtanh.pop %v7442
    %v7475 = vtanh.pop %v7443
    %v7476 = vtanh.pop %v7444
    %v7477 = vtanh.pop %v7445
    %v7478 = vtanh.pop %v7446
    %v7479 = vtanh.pop %v7447
    %v7480 = vtanh.pop %v7448
    %v7481 = vtanh.pop %v7449
    %v7482 = vtanh.pop %v7450
    %v7483 = vtanh.pop %v7451
    %v7484 = vtanh.pop %v7452
    %v7485 = vadd.f32 %v7469, 1.0
    %v7486 = vadd.f32 %v7470, 1.0
    %v7487 = vadd.f32 %v7471, 1.0
    %v7488 = vadd.f32 %v7472, 1.0
    %v7489 = vadd.f32 %v7473, 1.0
    %v7490 = vadd.f32 %v7474, 1.0
    %v7491 = vadd.f32 %v7475, 1.0
    %v7492 = vadd.f32 %v7476, 1.0
    %v7493 = vadd.f32 %v7477, 1.0
    %v7494 = vadd.f32 %v7478, 1.0
    %v7495 = vadd.f32 %v7479, 1.0
    %v7496 = vadd.f32 %v7480, 1.0
    %v7497 = vadd.f32 %v7481, 1.0
    %v7498 = vadd.f32 %v7482, 1.0
    %v7499 = vadd.f32 %v7483, 1.0
    %v7500 = vadd.f32 %v7484, 1.0
    %v7501 = vmul.f32 %v7453, %v7485
    %v7502 = vmul.f32 %v7454, %v7486
    %v7503 = vmul.f32 %v7455, %v7487
    %v7504 = vmul.f32 %v7456, %v7488
    %v7505 = vmul.f32 %v7457, %v7489
    %v7506 = vmul.f32 %v7458, %v7490
    %v7507 = vmul.f32 %v7459, %v7491
    %v7508 = vmul.f32 %v7460, %v7492
    %v7509 = vmul.f32 %v7461, %v7493
    %v7510 = vmul.f32 %v7462, %v7494
    %v7511 = vmul.f32 %v7463, %v7495
    %v7512 = vmul.f32 %v7464, %v7496
    %v7513 = vmul.f32 %v7465, %v7497
    %v7514 = vmul.f32 %v7466, %v7498
    %v7515 = vmul.f32 %v7467, %v7499
    %v7516 = vmul.f32 %v7468, %v7500
    %7517 = vst [vmem:[#allocation2] sm:$0xff] %v7501
    %7518 = vst [vmem:[#allocation2 + $0x8] sm:$0xff] %v7502
    %7519 = vst [vmem:[#allocation2 + $0x10] sm:$0xff] %v7503
    %7520 = vst [vmem:[#allocation2 + $0x18] sm:$0xff] %v7504
    %7521 = vst [vmem:[#allocation2 + $0x20] sm:$0xff] %v7505
    %7522 = vst [vmem:[#allocation2 + $0x28] sm:$0xff] %v7506
    %7523 = vst [vmem:[#allocation2 + $0x30] sm:$0xff] %v7507
    %7524 = vst [vmem:[#allocation2 + $0x38] sm:$0xff] %v7508
    %7525 = vst [vmem:[#allocation2 + $0x40] sm:$0xff] %v7509
    %7526 = vst [vmem:[#allocation2 + $0x48] sm:$0xff] %v7510
    %7527 = vst [vmem:[#allocation2 + $0x50] sm:$0xff] %v7511
    %7528 = vst [vmem:[#allocation2 + $0x58] sm:$0xff] %v7512
    %7529 = vst [vmem:[#allocation2 + $0x60] sm:$0xff] %v7513
    %7530 = vst [vmem:[#allocation2 + $0x68] sm:$0xff] %v7514
    %7531 = vst [vmem:[#allocation2 + $0x70] sm:$0xff] %v7515
    %7532 = vst [vmem:[#allocation2 + $0x78] sm:$0xff] %v7516
    // Predicated region
    $region38: #{tpu_custom_call.1} parent=1 // pred_check
      _
    $region39: #{tpu_custom_call.1} parent=1 // pred_check_branch
      %7534 = sbr.rel (0) target = $region41
    $region40: #{tpu_custom_call.1} parent=1 // pred_region
      %s7536 = ssub.s32 2048, 2048
      %7537 = vsyncadd [#allocation3], %s7536
      %s7538 = sshll.u32 [#allocation2], 4
      %s7539 = int_to_ptr.vmem [resolvable:$true] %s7538
      %7544 = dma.vmem_to_hbm [thread:$0]  %s7539, 2048, %s9, [#allocation3], 512, 512, 32
    $region41: #{tpu_custom_call.1} parent=1 // pred_fallthru
      _
    // Predicated region
    $region42: #{tpu_custom_call.1} parent=1 // pred_check
      _
    $region43: #{tpu_custom_call.1} parent=1 // pred_check_branch
      %7546 = sbr.rel (0) target = $region45
    $region44: #{tpu_custom_call.1} parent=1 // pred_region
      %7547 = dma.done [#allocation3], 2048
    $region45: #{tpu_custom_call.1} parent=1 // pred_fallthru
      _
    %7548 = vsyncpa [#allocation3], 1

</llo_original>
